<compile_context>
chip_gen: v7x
topology: tpu7x:2x2x1
jax: 0.10.0
libtpu: 0.0.40
codegen_flags: <defaults>
</compile_context>

<pallas_src>
import functools

import jax
import jax.numpy as jnp
import numpy as np
from jax import lax
from jax.experimental import pallas as pl
from jax.experimental.pallas import tpu as pltpu

LANE = 128        # last-dim tile (lanes)
SUBLANE = 8       # second-to-last-dim tile (sublanes)
TIME_BLOCK = 8    # LSTM timesteps per grid step
_VMEM_LIMIT = 32 * 1024 * 1024   # safe on v5e/v6e/v7x


def _round_up(x, m):
    return ((x + m - 1) // m) * m


# ----------------------------------------------------------------------------- kernels


def _matmul_bias_kernel(x_ref, w_ref, b_ref, o_ref):
    acc = jnp.dot(x_ref[...], w_ref[...], preferred_element_type=jnp.float32)
    o_ref[...] = (acc + b_ref[...]).astype(o_ref.dtype)


def _sigmoid(x):
    # One EUP op (tanh) per gate instead of exp + divide.
    return 0.5 * jnp.tanh(0.5 * x) + 0.5


def _lstm_block_kernel(hidden_p, t_block, has_hbias, l2norm_final, pad_val, *refs):
    """Tb timesteps of a masked (packed-sequence) LSTM; grid axis 0 = time block.

    len_ref : [Bp, 1] int32   true lengths (padded batch rows carry 0)
    g_ref   : [Tb, Bp, 4Hp]   bf16 precomputed x_t @ W_ih + b for this block
    hb_ref  : [Bp, 4Hp] f32   constant additive gate bias (decoder h_n fold-in),
                              only present when has_hbias
    whh_ref : [Hp, 4Hp] bf16  hidden->gate weights (gate-aligned, zero padded)
    h0/c0   : [Bp, Hp]  f32   initial state
    y_ref   : [Tb, Bp, Hp]    per-step hidden output (pad_val where t >= length)
    hn/cn   : [Bp, Hp]        running state (resident output blocks)
    """
    Hp, Tb = hidden_p, t_block
    if has_hbias:
        (len_ref, g_ref, hb_ref, whh_ref, h0_ref, c0_ref,
         y_ref, hn_ref, cn_ref) = refs
    else:
        (len_ref, g_ref, whh_ref, h0_ref, c0_ref,
         y_ref, hn_ref, cn_ref) = refs
        hb_ref = None

    tb = pl.program_id(0)

    @pl.when(tb == 0)
    def _():
        hn_ref[...] = h0_ref[...]
        cn_ref[...] = c0_ref[...]

    h = hn_ref[...]                       # f32 [Bp, Hp]
    c = cn_ref[...]
    whh = whh_ref[...]                    # bf16 [Hp, 4Hp], resident
    lens = len_ref[...]                   # int32 [Bp, 1]
    hb = hb_ref[...] if has_hbias else None
    t0 = tb * Tb

    for s in range(Tb):                   # statically unrolled time sub-loop
        gates = g_ref[s].astype(jnp.float32)                     # [Bp, 4Hp]
        if has_hbias:
            gates = gates + hb
        gates = gates + jnp.dot(h.astype(jnp.bfloat16), whh,
                                preferred_element_type=jnp.float32)
        i_g = _sigmoid(gates[:, 0 * Hp:1 * Hp])    # lane-aligned slices
        f_g = _sigmoid(gates[:, 1 * Hp:2 * Hp])
        g_g = jnp.tanh(gates[:, 2 * Hp:3 * Hp])
        o_g = _sigmoid(gates[:, 3 * Hp:4 * Hp])
        c_new = f_g * c + i_g * g_g
        h_new = o_g * jnp.tanh(c_new)
        valid = lens > (t0 + s)                     # [Bp, 1] bool
        h = jnp.where(valid, h_new, h)
        c = jnp.where(valid, c_new, c)
        y_ref[s] = jnp.where(valid, h_new, jnp.float32(pad_val))

    hn_ref[...] = h
    cn_ref[...] = c

    if l2norm_final:
        @pl.when(tb == pl.num_programs(0) - 1)
        def _():
            hh = hn_ref[...]
            cc = cn_ref[...]
            ssh = jnp.sum(hh * hh, axis=-1, keepdims=True)
            ssc = jnp.sum(cc * cc, axis=-1, keepdims=True)
            # rsqrt uses the EUP slot; guard only all-zero padded rows.
            hn_ref[...] = hh * lax.rsqrt(jnp.where(ssh > 0, ssh, 1.0))
            cn_ref[...] = cc * lax.rsqrt(jnp.where(ssc > 0, ssc, 1.0))


# ----------------------------------------------------------------------------- wrappers


def matmul_bias(x, w, b, *, tm=512, tn=512, out_dtype=jnp.float32):
    """Tiled y = x @ w + b on the MXU with bf16 operands, f32 accumulation.

    x:[M,K], w:[K,N], b:[1,N] -> [M,N] (out_dtype).  M is padded to a multiple
    of 16 (bf16 sublane packing), N to a lane multiple; K stays whole per block.
    """
    x = x.astype(jnp.bfloat16)
    w = w.astype(jnp.bfloat16)
    b = jnp.reshape(b, (1, -1)).astype(jnp.float32)
    M, K = x.shape
    N = w.shape[1]
    tm = min(tm, _round_up(M, 16))
    tn = min(tn, _round_up(N, LANE))
    Mp = _round_up(M, tm)
    Np = _round_up(N, tn)
    xp = jnp.pad(x, ((0, Mp - M), (0, 0)))
    wp = jnp.pad(w, ((0, 0), (0, Np - N)))
    bp = jnp.pad(b, ((0, 0), (0, Np - N)))
    out = pl.pallas_call(
        _matmul_bias_kernel,
        out_shape=jax.ShapeDtypeStruct((Mp, Np), out_dtype),
        grid=(Mp // tm, Np // tn),
        in_specs=[pl.BlockSpec((tm, K), lambda i, j: (i, 0)),
                  pl.BlockSpec((K, tn), lambda i, j: (0, j)),
                  pl.BlockSpec((1, tn), lambda i, j: (0, j))],
        out_specs=pl.BlockSpec((tm, tn), lambda i, j: (i, j)),
        compiler_params=pltpu.CompilerParams(
            dimension_semantics=("parallel", "parallel"),
            vmem_limit_bytes=_VMEM_LIMIT),
    )(xp, wp, bp)
    return out[:M, :N]


def lstm_layer(gates_pre, whh, lengths_col, h0, c0, pad_val, *,
               hbias=None, l2norm_final=False, time_block=TIME_BLOCK):
    """gates_pre: [Lp, Bp, 4Hp] bf16 time-major precomputed x@W_ih + b.
    Returns (y [Lp, Bp, Hp] f32, h_n [Bp, Hp], c_n [Bp, Hp])."""
    Lp, Bp, G = gates_pre.shape
    Hp = G // 4
    Tb = time_block
    assert Lp % Tb == 0
    has_hbias = hbias is not None
    kern = functools.partial(_lstm_block_kernel, Hp, Tb, has_hbias,
                             bool(l2norm_final), float(pad_val))

    in_specs = [pl.BlockSpec((Bp, 1), lambda t: (0, 0)),            # lengths
                pl.BlockSpec((Tb, Bp, G), lambda t: (t, 0, 0))]     # gate slab
    args = [lengths_col, gates_pre]
    if has_hbias:
        in_specs.append(pl.BlockSpec((Bp, G), lambda t: (0, 0)))    # hbias
        args.append(hbias)
    in_specs += [pl.BlockSpec((Hp, G), lambda t: (0, 0)),           # whh (bf16)
                 pl.BlockSpec((Bp, Hp), lambda t: (0, 0)),          # h0
                 pl.BlockSpec((Bp, Hp), lambda t: (0, 0))]          # c0
    args += [whh, h0, c0]

    y, hn, cn = pl.pallas_call(
        kern,
        out_shape=(jax.ShapeDtypeStruct((Lp, Bp, Hp), jnp.float32),
                   jax.ShapeDtypeStruct((Bp, Hp), jnp.float32),
                   jax.ShapeDtypeStruct((Bp, Hp), jnp.float32)),
        grid=(Lp // Tb,),
        in_specs=in_specs,
        out_specs=(pl.BlockSpec((Tb, Bp, Hp), lambda t: (t, 0, 0)),
                   pl.BlockSpec((Bp, Hp), lambda t: (0, 0)),
                   pl.BlockSpec((Bp, Hp), lambda t: (0, 0))),
        compiler_params=pltpu.CompilerParams(
            dimension_semantics=("arbitrary",),      # sequential recurrence
            vmem_limit_bytes=_VMEM_LIMIT),
    )(*args)
    return y, hn, cn


# ----------------------------------------------------------------------------- parameter prep


def _gate_align_cols(w, H, Hp):
    """[R, 4H] -> [R, 4Hp]: gate g's H columns placed at [g*Hp, g*Hp + H)."""
    R = w.shape[0]
    out = jnp.zeros((R, 4 * Hp), jnp.float32)
    for g in range(4):
        out = out.at[:, g * Hp:g * Hp + H].set(w[:, g * H:(g + 1) * H])
    return out


def _gate_align_rows_cols(w, H, Hp):
    """[H, 4H] -> [Hp, 4Hp]: zero rows past H, gate-aligned columns."""
    return jnp.pad(_gate_align_cols(w, H, Hp), ((0, Hp - H), (0, 0)))


def init_params(key, emsize, nhidden, ntokens, nlayers, tie_enc_dec_embedding=False):
    """Mirror Seq2Seq.__init__ + init_weights (uniform(-0.1, 0.1), linear bias 0)."""
    initrange = 0.1

    def unif(k, shape):
        return jax.random.uniform(k, shape, jnp.float32, -initrange, initrange)

    keys = iter(jax.random.split(key, 4 * nlayers + 16))
    enc_emb = unif(next(keys), (ntokens, emsize))
    dec_emb = enc_emb if tie_enc_dec_embedding else unif(next(keys), (ntokens, emsize))

    def lstm_layer_params(k, in_size, hid):
        k1, k2, k3, k4 = jax.random.split(k, 4)
        w_ih = unif(k1, (4 * hid, in_size))   # PyTorch layout [4H, in]
        w_hh = unif(k2, (4 * hid, hid))
        b_ih = unif(k3, (4 * hid,))
        b_hh = unif(k4, (4 * hid,))
        return {"wih": w_ih.T,                       # [in, 4H]
                "whh": w_hh.T,                       # [H, 4H]
                "b": (b_ih + b_hh).reshape(1, 4 * hid)}

    enc_lstm = []
    for layer in range(nlayers):
        in_size = emsize if layer == 0 else nhidden
        enc_lstm.append(lstm_layer_params(next(keys), in_size, nhidden))

    dec_lstm = lstm_layer_params(next(keys), emsize + nhidden, nhidden)
    lin_w = unif(next(keys), (ntokens, nhidden)).T   # [H, V]
    lin_b = jnp.zeros((1, ntokens), jnp.float32)

    return {"enc_emb": enc_emb, "dec_emb": dec_emb, "enc_lstm": enc_lstm,
            "dec_lstm": dec_lstm, "lin_w": lin_w, "lin_b": lin_b}


def prepare_params(params):
    """One-time repack: gate-aligned lane padding + bf16 casts for MXU operands.
    Hoisted out of the jitted forward (pure glue, no per-call HBM traffic)."""
    E = params["enc_emb"].shape[1]
    H = params["lin_w"].shape[0]
    Hp = _round_up(H, LANE)

    enc_layers = []
    for li, layer in enumerate(params["enc_lstm"]):
        if li == 0:
            wih_p = _gate_align_cols(layer["wih"], H, Hp)            # [E, 4Hp]
        else:
            wih_p = _gate_align_rows_cols(layer["wih"], H, Hp)       # [Hp, 4Hp]
        enc_layers.append({
            "wih": wih_p.astype(jnp.bfloat16),
            "whh": _gate_align_rows_cols(layer["whh"], H, Hp).astype(jnp.bfloat16),
            "b": _gate_align_cols(layer["b"], H, Hp),                # f32 [1, 4Hp]
        })

    d = params["dec_lstm"]
    dec = {
        "wih_emb": _gate_align_cols(d["wih"][:E], H, Hp).astype(jnp.bfloat16),
        "wih_h": _gate_align_rows_cols(d["wih"][E:], H, Hp).astype(jnp.bfloat16),
        "whh": _gate_align_rows_cols(d["whh"], H, Hp).astype(jnp.bfloat16),
        "b": _gate_align_cols(d["b"], H, Hp),
    }
    lin_w = jnp.pad(params["lin_w"], ((0, Hp - H), (0, 0))).astype(jnp.bfloat16)

    return {"enc_emb": params["enc_emb"].astype(jnp.float32),
            "dec_emb": params["dec_emb"].astype(jnp.float32),
            "enc_lstm": enc_layers, "dec_lstm": dec,
            "lin_w": lin_w, "lin_b": params["lin_b"].astype(jnp.float32)}


# ----------------------------------------------------------------------------- model


def seq2seq_forward(params, inp, dec_inp, lengths, *, pad_idx, nhidden,
                    noise=False, noise_r=0.2, noise_key=None):
    """Equivalent of Seq2Seq.forward(inp, dec_inp, lengths, pad_idx, noise)."""
    B, L = inp.shape
    Ld = dec_inp.shape[1]
    E = params["enc_emb"].shape[1]
    V = params["lin_b"].shape[1]
    H = nhidden                               # static Python int (via partial)
    Hp = _round_up(H, LANE)
    Bp = _round_up(B, SUBLANE)
    Lp = _round_up(L, TIME_BLOCK)
    Lpd = _round_up(Ld, TIME_BLOCK)

    # ---------------- encode ----------------
    embs = jnp.take(params["enc_emb"], inp, axis=0)                   # [B,L,E]
    x = jnp.transpose(embs, (1, 0, 2))                                # [L,B,E]
    x = jnp.pad(x, ((0, Lp - L), (0, Bp - B), (0, 0)))                # [Lp,Bp,E]
    lengths_col = jnp.pad(lengths.astype(jnp.int32).reshape(-1, 1),
                          ((0, Bp - B), (0, 0)))       # padded rows -> length 0
    zeros_state = jnp.zeros((Bp, Hp), jnp.float32)

    nlayers = len(params["enc_lstm"])
    h_seq = x
    hn = cn = zeros_state
    for li, layer in enumerate(params["enc_lstm"]):
        Din = h_seq.shape[-1]
        # Input projection for ALL timesteps at once; bf16 gate slab in HBM.
        gates_pre = matmul_bias(h_seq.reshape(Lp * Bp, Din), layer["wih"],
                                layer["b"], out_dtype=jnp.bfloat16
                                ).reshape(Lp, Bp, 4 * Hp)
        # Packed-sequence semantics: state frozen / outputs = pad_idx beyond each
        # sequence's length.  L2-norm of (h_n, c_n) fused into last layer epilogue.
        h_seq, hn, cn = lstm_layer(gates_pre, layer["whh"], lengths_col,
                                   zeros_state, zeros_state, float(pad_idx),
                                   l2norm_final=(li == nlayers - 1))

    # TODO(synk): pad_packed_sequence trims the time axis to max(lengths); with a
    # static-shape kernel we return full length L (identical when max(lengths)==L).
    encoder_outputs = jnp.transpose(h_seq[:L, :B, :H], (1, 0, 2))     # [B,L,H]
    hn_l = hn[:B, :H]                 # already L2-normalized in the epilogue
    cn_l = cn[:B, :H]

    if noise:
        assert noise_key is not None
        gauss = noise_r * jax.random.normal(noise_key, (B, H), jnp.float32)
        hn_l = hn_l + gauss           # same sample added to both, as in the module
        cn_l = cn_l + gauss

    # ---------------- decode ----------------
    d = params["dec_lstm"]
    hn_p = jnp.zeros((Bp, Hp), jnp.float32).at[:B, :H].set(hn_l)
    cn_p = jnp.zeros((Bp, Hp), jnp.float32).at[:B, :H].set(cn_l)

    dec_embs = jnp.take(params["dec_emb"], dec_inp, axis=0)           # [B,Ld,E]
    de = jnp.pad(jnp.transpose(dec_embs, (1, 0, 2)),
                 ((0, Lpd - Ld), (0, Bp - B), (0, 0)))                # [Lpd,Bp,E]
    gates_pre = matmul_bias(de.reshape(Lpd * Bp, E), d["wih_emb"], d["b"],
                            out_dtype=jnp.bfloat16).reshape(Lpd, Bp, 4 * Hp)
    # Hidden-state augmentation folded into an additive per-batch gate bias
    # instead of concatenating h_n to every timestep.
    hbias = matmul_bias(hn_p, d["wih_h"],
                        jnp.zeros((1, 4 * Hp), jnp.float32))          # [Bp,4Hp] f32
    dec_len = jnp.full((Bp, 1), Ld, jnp.int32)

    dec_y, dec_hn, dec_cn = lstm_layer(gates_pre, d["whh"], dec_len,
                                       hn_p, cn_p, 0.0, hbias=hbias,
                                       l2norm_final=False)
    dec_out = jnp.transpose(dec_y[:Ld, :B, :], (1, 0, 2))             # [B,Ld,Hp]
    logits = matmul_bias(dec_out.reshape(B * Ld, Hp), params["lin_w"],
                         params["lin_b"]).reshape(B, Ld, V)

    return encoder_outputs, (hn_l, cn_l), logits, (dec_hn[:B, :H], dec_cn[:B, :H])


# ----------------------------------------------------------------------------- numpy reference


def _np_sigmoid(x):
    return 1.0 / (1.0 + np.exp(-x))


def _np_lstm(x_bld, lengths, wih, whh, b, h0, c0, pad_val):
    B, L, _ = x_bld.shape
    H = h0.shape[1]
    h, c = h0.copy(), c0.copy()
    y = np.full((B, L, H), pad_val, np.float32)
    for t in range(L):
        g = x_bld[:, t] @ wih + h @ whh + b
        i = _np_sigmoid(g[:, :H]); f = _np_sigmoid(g[:, H:2 * H])
        gg = np.tanh(g[:, 2 * H:3 * H]); o = _np_sigmoid(g[:, 3 * H:])
        c_new = f * c + i * gg
        h_new = o * np.tanh(c_new)
        m = (t < lengths)[:, None]
        h = np.where(m, h_new, h)
        c = np.where(m, c_new, c)
        y[:, t] = np.where(m, h_new, pad_val)
    return y, h, c


def _np_forward(params, inp, dec_inp, lengths, pad_idx):
    p = jax.tree_util.tree_map(np.asarray, params)
    B, L = inp.shape
    H, V = p["lin_w"].shape
    x = p["enc_emb"][np.asarray(inp)]
    hn = cn = np.zeros((B, H), np.float32)
    for layer in p["enc_lstm"]:
        x, hn, cn = _np_lstm(x, np.asarray(lengths), layer["wih"], layer["whh"],
                             layer["b"], np.zeros((B, H), np.float32),
                             np.zeros((B, H), np.float32), float(pad_idx))
    enc_out = x
    hn = hn / np.linalg.norm(hn, axis=1, keepdims=True)
    cn = cn / np.linalg.norm(cn, axis=1, keepdims=True)
    Ld = dec_inp.shape[1]
    aug = np.concatenate([p["dec_emb"][np.asarray(dec_inp)],
                          np.repeat(hn[:, None, :], Ld, axis=1)], axis=-1)
    d = p["dec_lstm"]
    dy, dhn, dcn = _np_lstm(aug, np.full((B,), Ld), d["wih"], d["whh"], d["b"],
                            hn, cn, 0.0)
    logits = dy.reshape(B * Ld, H) @ p["lin_w"] + p["lin_b"]
    return enc_out, (hn, cn), logits.reshape(B, Ld, V), (dhn, dcn)


# ----------------------------------------------------------------------------- main

if __name__ == "__main__":
    emsize, nhidden, ntokens, nlayers = 16, 32, 50, 2
    B, L = 2, 8
    pad_idx = 0

    key = jax.random.PRNGKey(0)
    k_param, k_inp, k_dec = jax.random.split(key, 3)
    raw_params = init_params(k_param, emsize, nhidden, ntokens, nlayers)
    params = prepare_params(raw_params)        # one-time gate-aligned bf16 repack

    inp = jax.random.randint(k_inp, (B, L), 0, ntokens, dtype=jnp.int32)
    dec_inp = jax.random.randint(k_dec, (B, L), 0, ntokens, dtype=jnp.int32)
    lengths = jnp.array([L, 5], dtype=jnp.int32)

    fwd = jax.jit(functools.partial(seq2seq_forward, pad_idx=pad_idx,
                                    nhidden=nhidden))
    enc_out, (hn, cn), logits, (dhn, dcn) = fwd(params, inp, dec_inp, lengths)
    jax.block_until_ready((enc_out, hn, cn, logits, dhn, dcn))

    # Numerical check against a pure-numpy f32 reference.  Tolerance is loosened
    # vs. the f32-only version because MXU operands and the streamed gate
    # pre-activations are bf16 (accumulation stays f32).
    r_enc, (r_hn, r_cn), r_logits, (r_dhn, r_dcn) = _np_forward(
        raw_params, inp, dec_inp, lengths, pad_idx)
    tol = dict(atol=4e-2, rtol=4e-2)
    np.testing.assert_allclose(np.asarray(enc_out), r_enc, **tol)
    np.testing.assert_allclose(np.asarray(hn), r_hn, **tol)
    np.testing.assert_allclose(np.asarray(cn), r_cn, **tol)
    np.testing.assert_allclose(np.asarray(logits), r_logits, **tol)
    np.testing.assert_allclose(np.asarray(dhn), r_dhn, **tol)
    np.testing.assert_allclose(np.asarray(dcn), r_dcn, **tol)

    print("KERNEL_OK")
</pallas_src>

<mosaic_0001>
module attributes {stable_mosaic.version = 11 : i64} {
  func.func @_matmul_bias_kernel(%arg0: i32, %arg1: i32, %arg2: memref<64x16xbf16, #tpu.memory_space<vmem>>, %arg3: memref<16x512xbf16, #tpu.memory_space<vmem>>, %arg4: memref<1x512xf32, #tpu.memory_space<vmem>>, %arg5: memref<64x512xbf16, #tpu.memory_space<vmem>>) attributes {dimension_semantics = [#tpu.dimension_semantics<parallel>, #tpu.dimension_semantics<parallel>], iteration_bounds = array<i64: 1, 1>, scalar_prefetch = 0 : i64, scratch_operands = 0 : i64, tpu.core_type = #tpu.core_type<tc>, window_params = [{transform_indices = @transform_0, window_bounds = array<i64: 64, 16>}, {transform_indices = @transform_1, window_bounds = array<i64: 16, 512>}, {transform_indices = @transform_2, window_bounds = array<i64: 1, 512>}, {transform_indices = @transform_3, window_bounds = array<i64: 64, 512>}]} {
    %c0 = arith.constant 0 : index
    %c0_0 = arith.constant 0 : index
    %0 = vector.load %arg2[%c0, %c0_0] : memref<64x16xbf16, #tpu.memory_space<vmem>>, vector<64x16xbf16>
    %c0_1 = arith.constant 0 : index
    %c0_2 = arith.constant 0 : index
    %1 = vector.load %arg3[%c0_1, %c0_2] : memref<16x512xbf16, #tpu.memory_space<vmem>>, vector<16x512xbf16>
    %cst = arith.constant dense<0.000000e+00> : vector<64x512xf32>
    %2 = tpu.matmul %0, %1, %cst {dimension_numbers = #tpu.dot_dimension_numbers<[1], [0], [0], [1], [0, 0, 1, 1], [], []>} : vector<64x16xbf16>, vector<16x512xbf16>, vector<64x512xf32> -> vector<64x512xf32>
    %c0_3 = arith.constant 0 : index
    %c0_4 = arith.constant 0 : index
    %3 = vector.load %arg4[%c0_3, %c0_4] : memref<1x512xf32, #tpu.memory_space<vmem>>, vector<1x512xf32>
    %4 = vector.broadcast %3 : vector<1x512xf32> to vector<64x512xf32>
    %5 = arith.addf %2, %4 : vector<64x512xf32>
    %6 = arith.truncf %5 : vector<64x512xf32> to vector<64x512xbf16>
    %c0_5 = arith.constant 0 : index
    %c0_6 = arith.constant 0 : index
    %7 = vector.load %arg5[%c0_5, %c0_6] : memref<64x512xbf16, #tpu.memory_space<vmem>>, vector<64x512xbf16>
    tpu.vector_store %arg5[%c0_5, %c0_6], %6 {strides = array<i32>} : memref<64x512xbf16, #tpu.memory_space<vmem>>, vector<64x512xbf16>,
    return
  }
  func.func @transform_0(%arg0: i32, %arg1: i32) -> (i32, i32) {
    %c0_i32 = arith.constant 0 : i32
    %c0_i32_0 = arith.constant 0 : i32
    return %arg0, %c0_i32 : i32, i32
  }
  func.func @transform_1(%arg0: i32, %arg1: i32) -> (i32, i32) {
    %c0_i32 = arith.constant 0 : i32
    %c0_i32_0 = arith.constant 0 : i32
    return %c0_i32, %arg1 : i32, i32
  }
  func.func @transform_2(%arg0: i32, %arg1: i32) -> (i32, i32) {
    %c0_i32 = arith.constant 0 : i32
    %c0_i32_0 = arith.constant 0 : i32
    return %c0_i32, %arg1 : i32, i32
  }
  func.func @transform_3(%arg0: i32, %arg1: i32) -> (i32, i32) {
    %c0_i32 = arith.constant 0 : i32
    return %arg0, %arg1 : i32, i32
  }
}

module attributes {stable_mosaic.version = 11 : i64} {
  func.func @_matmul_bias_kernel(%arg0: i32, %arg1: i32, %arg2: memref<64x128xbf16, #tpu.memory_space<vmem>>, %arg3: memref<128x512xbf16, #tpu.memory_space<vmem>>, %arg4: memref<1x512xf32, #tpu.memory_space<vmem>>, %arg5: memref<64x512xbf16, #tpu.memory_space<vmem>>) attributes {dimension_semantics = [#tpu.dimension_semantics<parallel>, #tpu.dimension_semantics<parallel>], iteration_bounds = array<i64: 1, 1>, scalar_prefetch = 0 : i64, scratch_operands = 0 : i64, tpu.core_type = #tpu.core_type<tc>, window_params = [{transform_indices = @transform_0, window_bounds = array<i64: 64, 128>}, {transform_indices = @transform_1, window_bounds = array<i64: 128, 512>}, {transform_indices = @transform_2, window_bounds = array<i64: 1, 512>}, {transform_indices = @transform_3, window_bounds = array<i64: 64, 512>}]} {
    %c0 = arith.constant 0 : index
    %c0_0 = arith.constant 0 : index
    %0 = vector.load %arg2[%c0, %c0_0] : memref<64x128xbf16, #tpu.memory_space<vmem>>, vector<64x128xbf16>
    %c0_1 = arith.constant 0 : index
    %c0_2 = arith.constant 0 : index
    %1 = vector.load %arg3[%c0_1, %c0_2] : memref<128x512xbf16, #tpu.memory_space<vmem>>, vector<128x512xbf16>
    %cst = arith.constant dense<0.000000e+00> : vector<64x512xf32>
    %2 = tpu.matmul %0, %1, %cst {dimension_numbers = #tpu.dot_dimension_numbers<[1], [0], [0], [1], [0, 0, 1, 1], [], []>} : vector<64x128xbf16>, vector<128x512xbf16>, vector<64x512xf32> -> vector<64x512xf32>
    %c0_3 = arith.constant 0 : index
    %c0_4 = arith.constant 0 : index
    %3 = vector.load %arg4[%c0_3, %c0_4] : memref<1x512xf32, #tpu.memory_space<vmem>>, vector<1x512xf32>
    %4 = vector.broadcast %3 : vector<1x512xf32> to vector<64x512xf32>
    %5 = arith.addf %2, %4 : vector<64x512xf32>
    %6 = arith.truncf %5 : vector<64x512xf32> to vector<64x512xbf16>
    %c0_5 = arith.constant 0 : index
    %c0_6 = arith.constant 0 : index
    %7 = vector.load %arg5[%c0_5, %c0_6] : memref<64x512xbf16, #tpu.memory_space<vmem>>, vector<64x512xbf16>
    tpu.vector_store %arg5[%c0_5, %c0_6], %6 {strides = array<i32>} : memref<64x512xbf16, #tpu.memory_space<vmem>>, vector<64x512xbf16>,
    return
  }
  func.func @transform_0(%arg0: i32, %arg1: i32) -> (i32, i32) {
    %c0_i32 = arith.constant 0 : i32
    %c0_i32_0 = arith.constant 0 : i32
    return %arg0, %c0_i32 : i32, i32
  }
  func.func @transform_1(%arg0: i32, %arg1: i32) -> (i32, i32) {
    %c0_i32 = arith.constant 0 : i32
    %c0_i32_0 = arith.constant 0 : i32
    return %c0_i32, %arg1 : i32, i32
  }
  func.func @transform_2(%arg0: i32, %arg1: i32) -> (i32, i32) {
    %c0_i32 = arith.constant 0 : i32
    %c0_i32_0 = arith.constant 0 : i32
    return %c0_i32, %arg1 : i32, i32
  }
  func.func @transform_3(%arg0: i32, %arg1: i32) -> (i32, i32) {
    %c0_i32 = arith.constant 0 : i32
    return %arg0, %arg1 : i32, i32
  }
}

module attributes {stable_mosaic.version = 11 : i64} {
  func.func @_lstm_block_kernel(%arg0: i32, %arg1: memref<8x1xi32, #tpu.memory_space<vmem>>, %arg2: memref<8x8x512xbf16, #tpu.memory_space<vmem>>, %arg3: memref<128x512xbf16, #tpu.memory_space<vmem>>, %arg4: memref<8x128xf32, #tpu.memory_space<vmem>>, %arg5: memref<8x128xf32, #tpu.memory_space<vmem>>, %arg6: memref<8x8x128xf32, #tpu.memory_space<vmem>>, %arg7: memref<8x128xf32, #tpu.memory_space<vmem>>, %arg8: memref<8x128xf32, #tpu.memory_space<vmem>>) attributes {dimension_semantics = [#tpu.dimension_semantics<arbitrary>], iteration_bounds = array<i64: 1>, scalar_prefetch = 0 : i64, scratch_operands = 0 : i64, tpu.core_type = #tpu.core_type<tc>, window_params = [{pipeline_mode = #tpu.pipeline_mode<synchronous>, transform_indices = @transform_0, window_bounds = array<i64: 8, 1>}, {transform_indices = @transform_1, window_bounds = array<i64: 8, 8, 512>}, {pipeline_mode = #tpu.pipeline_mode<synchronous>, transform_indices = @transform_2, window_bounds = array<i64: 128, 512>}, {pipeline_mode = #tpu.pipeline_mode<synchronous>, transform_indices = @transform_3, window_bounds = array<i64: 8, 128>}, {pipeline_mode = #tpu.pipeline_mode<synchronous>, transform_indices = @transform_4, window_bounds = array<i64: 8, 128>}, {transform_indices = @transform_5, window_bounds = array<i64: 8, 8, 128>}, {pipeline_mode = #tpu.pipeline_mode<synchronous>, transform_indices = @transform_6, window_bounds = array<i64: 8, 128>}, {pipeline_mode = #tpu.pipeline_mode<synchronous>, transform_indices = @transform_7, window_bounds = array<i64: 8, 128>}]} {
    %c0_i32 = arith.constant 0 : i32
    %0 = arith.cmpi eq, %arg0, %c0_i32 : i32
    %1 = arith.extui %0 : i1 to i32
    %c0_i32_0 = arith.constant 0 : i32
    %2 = arith.cmpi ne, %1, %c0_i32_0 : i32
    scf.if %2 {
      %c0_141 = arith.constant 0 : index
      %c0_142 = arith.constant 0 : index
      %434 = vector.load %arg4[%c0_141, %c0_142] : memref<8x128xf32, #tpu.memory_space<vmem>>, vector<8x128xf32>
      %c0_143 = arith.constant 0 : index
      %c0_144 = arith.constant 0 : index
      %435 = vector.load %arg7[%c0_143, %c0_144] : memref<8x128xf32, #tpu.memory_space<vmem>>, vector<8x128xf32>
      tpu.vector_store %arg7[%c0_143, %c0_144], %434 {strides = array<i32>} : memref<8x128xf32, #tpu.memory_space<vmem>>, vector<8x128xf32>,
      %c0_145 = arith.constant 0 : index
      %c0_146 = arith.constant 0 : index
      %436 = vector.load %arg5[%c0_145, %c0_146] : memref<8x128xf32, #tpu.memory_space<vmem>>, vector<8x128xf32>
      %c0_147 = arith.constant 0 : index
      %c0_148 = arith.constant 0 : index
      %437 = vector.load %arg8[%c0_147, %c0_148] : memref<8x128xf32, #tpu.memory_space<vmem>>, vector<8x128xf32>
      tpu.vector_store %arg8[%c0_147, %c0_148], %436 {strides = array<i32>} : memref<8x128xf32, #tpu.memory_space<vmem>>, vector<8x128xf32>,
    } else {
    }
    %c0 = arith.constant 0 : index
    %c0_1 = arith.constant 0 : index
    %3 = vector.load %arg7[%c0, %c0_1] : memref<8x128xf32, #tpu.memory_space<vmem>>, vector<8x128xf32>
    %c0_2 = arith.constant 0 : index
    %c0_3 = arith.constant 0 : index
    %4 = vector.load %arg8[%c0_2, %c0_3] : memref<8x128xf32, #tpu.memory_space<vmem>>, vector<8x128xf32>
    %c0_4 = arith.constant 0 : index
    %c0_5 = arith.constant 0 : index
    %5 = vector.load %arg3[%c0_4, %c0_5] : memref<128x512xbf16, #tpu.memory_space<vmem>>, vector<128x512xbf16>
    %c0_6 = arith.constant 0 : index
    %c0_7 = arith.constant 0 : index
    %6 = vector.load %arg1[%c0_6, %c0_7] : memref<8x1xi32, #tpu.memory_space<vmem>>, vector<8x1xi32>
    %c8_i32 = arith.constant 8 : i32
    %7 = arith.muli %arg0, %c8_i32 : i32
    %c0_8 = arith.constant 0 : index
    %c0_9 = arith.constant 0 : index
    %c0_10 = arith.constant 0 : index
    %8 = vector.load %arg2[%c0_8, %c0_9, %c0_10] : memref<8x8x512xbf16, #tpu.memory_space<vmem>>, vector<1x8x512xbf16>
    %9 = vector.shape_cast %8 : vector<1x8x512xbf16> to vector<8x512xbf16>
    %10 = arith.extf %9 : vector<8x512xbf16> to vector<8x512xf32>
    %11 = arith.truncf %3 : vector<8x128xf32> to vector<8x128xbf16>
    %cst = arith.constant dense<0.000000e+00> : vector<8x512xf32>
    %12 = tpu.matmul %11, %5, %cst {dimension_numbers = #tpu.dot_dimension_numbers<[1], [0], [0], [1], [0, 0, 1, 1], [], []>} : vector<8x128xbf16>, vector<128x512xbf16>, vector<8x512xf32> -> vector<8x512xf32>
    %13 = arith.addf %10, %12 : vector<8x512xf32>
    %14 = vector.extract_strided_slice %13 {offsets = [0, 0], sizes = [8, 128], strides = [1, 1]} : vector<8x512xf32> to vector<8x128xf32>
    %cst_11 = arith.constant 5.000000e-01 : f32
    %15 = vector.broadcast %cst_11 : f32 to vector<8x128xf32>
    %16 = arith.mulf %15, %14 : vector<8x128xf32>
    %17 = math.tanh %16 : vector<8x128xf32>
    %cst_12 = arith.constant 5.000000e-01 : f32
    %18 = vector.broadcast %cst_12 : f32 to vector<8x128xf32>
    %19 = arith.mulf %18, %17 : vector<8x128xf32>
    %cst_13 = arith.constant 5.000000e-01 : f32
    %20 = vector.broadcast %cst_13 : f32 to vector<8x128xf32>
    %21 = arith.addf %19, %20 : vector<8x128xf32>
    %22 = vector.extract_strided_slice %13 {offsets = [0, 128], sizes = [8, 128], strides = [1, 1]} : vector<8x512xf32> to vector<8x128xf32>
    %cst_14 = arith.constant 5.000000e-01 : f32
    %23 = vector.broadcast %cst_14 : f32 to vector<8x128xf32>
    %24 = arith.mulf %23, %22 : vector<8x128xf32>
    %25 = math.tanh %24 : vector<8x128xf32>
    %cst_15 = arith.constant 5.000000e-01 : f32
    %26 = vector.broadcast %cst_15 : f32 to vector<8x128xf32>
    %27 = arith.mulf %26, %25 : vector<8x128xf32>
    %cst_16 = arith.constant 5.000000e-01 : f32
    %28 = vector.broadcast %cst_16 : f32 to vector<8x128xf32>
    %29 = arith.addf %27, %28 : vector<8x128xf32>
    %30 = vector.extract_strided_slice %13 {offsets = [0, 256], sizes = [8, 128], strides = [1, 1]} : vector<8x512xf32> to vector<8x128xf32>
    %31 = math.tanh %30 : vector<8x128xf32>
    %32 = vector.extract_strided_slice %13 {offsets = [0, 384], sizes = [8, 128], strides = [1, 1]} : vector<8x512xf32> to vector<8x128xf32>
    %cst_17 = arith.constant 5.000000e-01 : f32
    %33 = vector.broadcast %cst_17 : f32 to vector<8x128xf32>
    %34 = arith.mulf %33, %32 : vector<8x128xf32>
    %35 = math.tanh %34 : vector<8x128xf32>
    %cst_18 = arith.constant 5.000000e-01 : f32
    %36 = vector.broadcast %cst_18 : f32 to vector<8x128xf32>
    %37 = arith.mulf %36, %35 : vector<8x128xf32>
    %cst_19 = arith.constant 5.000000e-01 : f32
    %38 = vector.broadcast %cst_19 : f32 to vector<8x128xf32>
    %39 = arith.addf %37, %38 : vector<8x128xf32>
    %40 = arith.mulf %29, %4 : vector<8x128xf32>
    %41 = arith.mulf %21, %31 : vector<8x128xf32>
    %42 = arith.addf %40, %41 : vector<8x128xf32>
    %43 = math.tanh %42 : vector<8x128xf32>
    %44 = arith.mulf %39, %43 : vector<8x128xf32>
    %c0_i32_20 = arith.constant 0 : i32
    %45 = arith.addi %7, %c0_i32_20 : i32
    %46 = vector.broadcast %45 : i32 to vector<8x1xi32>
    %47 = arith.cmpi sgt, %6, %46 : vector<8x1xi32>
    %48 = vector.shape_cast %47 : vector<8x1xi1> to vector<8x1xi1>
    %49 = vector.broadcast %48 : vector<8x1xi1> to vector<8x128xi1>
    %50 = arith.select %49, %44, %3 : vector<8x128xi1>, vector<8x128xf32>
    %51 = vector.shape_cast %47 : vector<8x1xi1> to vector<8x1xi1>
    %52 = vector.broadcast %51 : vector<8x1xi1> to vector<8x128xi1>
    %53 = arith.select %52, %42, %4 : vector<8x128xi1>, vector<8x128xf32>
    %cst_21 = arith.constant 0.000000e+00 : f32
    %54 = vector.shape_cast %47 : vector<8x1xi1> to vector<8x1xi1>
    %55 = vector.broadcast %54 : vector<8x1xi1> to vector<8x128xi1>
    %56 = vector.broadcast %cst_21 : f32 to vector<8x128xf32>
    %57 = arith.select %55, %44, %56 : vector<8x128xi1>, vector<8x128xf32>
    %c0_22 = arith.constant 0 : index
    %c0_23 = arith.constant 0 : index
    %c0_24 = arith.constant 0 : index
    %58 = vector.load %arg6[%c0_22, %c0_23, %c0_24] : memref<8x8x128xf32, #tpu.memory_space<vmem>>, vector<1x8x128xf32>
    %59 = vector.shape_cast %58 : vector<1x8x128xf32> to vector<8x128xf32>
    %60 = vector.shape_cast %57 : vector<8x128xf32> to vector<1x8x128xf32>
    tpu.vector_store %arg6[%c0_22, %c0_23, %c0_24], %60 {strides = array<i32>} : memref<8x8x128xf32, #tpu.memory_space<vmem>>, vector<1x8x128xf32>,
    %c1 = arith.constant 1 : index
    %c0_25 = arith.constant 0 : index
    %c0_26 = arith.constant 0 : index
    %61 = vector.load %arg2[%c1, %c0_25, %c0_26] : memref<8x8x512xbf16, #tpu.memory_space<vmem>>, vector<1x8x512xbf16>
    %62 = vector.shape_cast %61 : vector<1x8x512xbf16> to vector<8x512xbf16>
    %63 = arith.extf %62 : vector<8x512xbf16> to vector<8x512xf32>
    %64 = arith.truncf %50 : vector<8x128xf32> to vector<8x128xbf16>
    %cst_27 = arith.constant dense<0.000000e+00> : vector<8x512xf32>
    %65 = tpu.matmul %64, %5, %cst_27 {dimension_numbers = #tpu.dot_dimension_numbers<[1], [0], [0], [1], [0, 0, 1, 1], [], []>} : vector<8x128xbf16>, vector<128x512xbf16>, vector<8x512xf32> -> vector<8x512xf32>
    %66 = arith.addf %63, %65 : vector<8x512xf32>
    %67 = vector.extract_strided_slice %66 {offsets = [0, 0], sizes = [8, 128], strides = [1, 1]} : vector<8x512xf32> to vector<8x128xf32>
    %cst_28 = arith.constant 5.000000e-01 : f32
    %68 = vector.broadcast %cst_28 : f32 to vector<8x128xf32>
    %69 = arith.mulf %68, %67 : vector<8x128xf32>
    %70 = math.tanh %69 : vector<8x128xf32>
    %cst_29 = arith.constant 5.000000e-01 : f32
    %71 = vector.broadcast %cst_29 : f32 to vector<8x128xf32>
    %72 = arith.mulf %71, %70 : vector<8x128xf32>
    %cst_30 = arith.constant 5.000000e-01 : f32
    %73 = vector.broadcast %cst_30 : f32 to vector<8x128xf32>
    %74 = arith.addf %72, %73 : vector<8x128xf32>
    %75 = vector.extract_strided_slice %66 {offsets = [0, 128], sizes = [8, 128], strides = [1, 1]} : vector<8x512xf32> to vector<8x128xf32>
    %cst_31 = arith.constant 5.000000e-01 : f32
    %76 = vector.broadcast %cst_31 : f32 to vector<8x128xf32>
    %77 = arith.mulf %76, %75 : vector<8x128xf32>
    %78 = math.tanh %77 : vector<8x128xf32>
    %cst_32 = arith.constant 5.000000e-01 : f32
    %79 = vector.broadcast %cst_32 : f32 to vector<8x128xf32>
    %80 = arith.mulf %79, %78 : vector<8x128xf32>
    %cst_33 = arith.constant 5.000000e-01 : f32
    %81 = vector.broadcast %cst_33 : f32 to vector<8x128xf32>
    %82 = arith.addf %80, %81 : vector<8x128xf32>
    %83 = vector.extract_strided_slice %66 {offsets = [0, 256], sizes = [8, 128], strides = [1, 1]} : vector<8x512xf32> to vector<8x128xf32>
    %84 = math.tanh %83 : vector<8x128xf32>
    %85 = vector.extract_strided_slice %66 {offsets = [0, 384], sizes = [8, 128], strides = [1, 1]} : vector<8x512xf32> to vector<8x128xf32>
    %cst_34 = arith.constant 5.000000e-01 : f32
    %86 = vector.broadcast %cst_34 : f32 to vector<8x128xf32>
    %87 = arith.mulf %86, %85 : vector<8x128xf32>
    %88 = math.tanh %87 : vector<8x128xf32>
    %cst_35 = arith.constant 5.000000e-01 : f32
    %89 = vector.broadcast %cst_35 : f32 to vector<8x128xf32>
    %90 = arith.mulf %89, %88 : vector<8x128xf32>
    %cst_36 = arith.constant 5.000000e-01 : f32
    %91 = vector.broadcast %cst_36 : f32 to vector<8x128xf32>
    %92 = arith.addf %90, %91 : vector<8x128xf32>
    %93 = arith.mulf %82, %53 : vector<8x128xf32>
    %94 = arith.mulf %74, %84 : vector<8x128xf32>
    %95 = arith.addf %93, %94 : vector<8x128xf32>
    %96 = math.tanh %95 : vector<8x128xf32>
    %97 = arith.mulf %92, %96 : vector<8x128xf32>
    %c1_i32 = arith.constant 1 : i32
    %98 = arith.addi %7, %c1_i32 : i32
    %99 = vector.broadcast %98 : i32 to vector<8x1xi32>
    %100 = arith.cmpi sgt, %6, %99 : vector<8x1xi32>
    %101 = vector.shape_cast %100 : vector<8x1xi1> to vector<8x1xi1>
    %102 = vector.broadcast %101 : vector<8x1xi1> to vector<8x128xi1>
    %103 = arith.select %102, %97, %50 : vector<8x128xi1>, vector<8x128xf32>
    %104 = vector.shape_cast %100 : vector<8x1xi1> to vector<8x1xi1>
    %105 = vector.broadcast %104 : vector<8x1xi1> to vector<8x128xi1>
    %106 = arith.select %105, %95, %53 : vector<8x128xi1>, vector<8x128xf32>
    %cst_37 = arith.constant 0.000000e+00 : f32
    %107 = vector.shape_cast %100 : vector<8x1xi1> to vector<8x1xi1>
    %108 = vector.broadcast %107 : vector<8x1xi1> to vector<8x128xi1>
    %109 = vector.broadcast %cst_37 : f32 to vector<8x128xf32>
    %110 = arith.select %108, %97, %109 : vector<8x128xi1>, vector<8x128xf32>
    %c1_38 = arith.constant 1 : index
    %c0_39 = arith.constant 0 : index
    %c0_40 = arith.constant 0 : index
    %111 = vector.load %arg6[%c1_38, %c0_39, %c0_40] : memref<8x8x128xf32, #tpu.memory_space<vmem>>, vector<1x8x128xf32>
    %112 = vector.shape_cast %111 : vector<1x8x128xf32> to vector<8x128xf32>
    %113 = vector.shape_cast %110 : vector<8x128xf32> to vector<1x8x128xf32>
    tpu.vector_store %arg6[%c1_38, %c0_39, %c0_40], %113 {strides = array<i32>} : memref<8x8x128xf32, #tpu.memory_space<vmem>>, vector<1x8x128xf32>,
    %c2 = arith.constant 2 : index
    %c0_41 = arith.constant 0 : index
    %c0_42 = arith.constant 0 : index
    %114 = vector.load %arg2[%c2, %c0_41, %c0_42] : memref<8x8x512xbf16, #tpu.memory_space<vmem>>, vector<1x8x512xbf16>
    %115 = vector.shape_cast %114 : vector<1x8x512xbf16> to vector<8x512xbf16>
    %116 = arith.extf %115 : vector<8x512xbf16> to vector<8x512xf32>
    %117 = arith.truncf %103 : vector<8x128xf32> to vector<8x128xbf16>
    %cst_43 = arith.constant dense<0.000000e+00> : vector<8x512xf32>
    %118 = tpu.matmul %117, %5, %cst_43 {dimension_numbers = #tpu.dot_dimension_numbers<[1], [0], [0], [1], [0, 0, 1, 1], [], []>} : vector<8x128xbf16>, vector<128x512xbf16>, vector<8x512xf32> -> vector<8x512xf32>
    %119 = arith.addf %116, %118 : vector<8x512xf32>
    %120 = vector.extract_strided_slice %119 {offsets = [0, 0], sizes = [8, 128], strides = [1, 1]} : vector<8x512xf32> to vector<8x128xf32>
    %cst_44 = arith.constant 5.000000e-01 : f32
    %121 = vector.broadcast %cst_44 : f32 to vector<8x128xf32>
    %122 = arith.mulf %121, %120 : vector<8x128xf32>
    %123 = math.tanh %122 : vector<8x128xf32>
    %cst_45 = arith.constant 5.000000e-01 : f32
    %124 = vector.broadcast %cst_45 : f32 to vector<8x128xf32>
    %125 = arith.mulf %124, %123 : vector<8x128xf32>
    %cst_46 = arith.constant 5.000000e-01 : f32
    %126 = vector.broadcast %cst_46 : f32 to vector<8x128xf32>
    %127 = arith.addf %125, %126 : vector<8x128xf32>
    %128 = vector.extract_strided_slice %119 {offsets = [0, 128], sizes = [8, 128], strides = [1, 1]} : vector<8x512xf32> to vector<8x128xf32>
    %cst_47 = arith.constant 5.000000e-01 : f32
    %129 = vector.broadcast %cst_47 : f32 to vector<8x128xf32>
    %130 = arith.mulf %129, %128 : vector<8x128xf32>
    %131 = math.tanh %130 : vector<8x128xf32>
    %cst_48 = arith.constant 5.000000e-01 : f32
    %132 = vector.broadcast %cst_48 : f32 to vector<8x128xf32>
    %133 = arith.mulf %132, %131 : vector<8x128xf32>
    %cst_49 = arith.constant 5.000000e-01 : f32
    %134 = vector.broadcast %cst_49 : f32 to vector<8x128xf32>
    %135 = arith.addf %133, %134 : vector<8x128xf32>
    %136 = vector.extract_strided_slice %119 {offsets = [0, 256], sizes = [8, 128], strides = [1, 1]} : vector<8x512xf32> to vector<8x128xf32>
    %137 = math.tanh %136 : vector<8x128xf32>
    %138 = vector.extract_strided_slice %119 {offsets = [0, 384], sizes = [8, 128], strides = [1, 1]} : vector<8x512xf32> to vector<8x128xf32>
    %cst_50 = arith.constant 5.000000e-01 : f32
    %139 = vector.broadcast %cst_50 : f32 to vector<8x128xf32>
    %140 = arith.mulf %139, %138 : vector<8x128xf32>
    %141 = math.tanh %140 : vector<8x128xf32>
    %cst_51 = arith.constant 5.000000e-01 : f32
    %142 = vector.broadcast %cst_51 : f32 to vector<8x128xf32>
    %143 = arith.mulf %142, %141 : vector<8x128xf32>
    %cst_52 = arith.constant 5.000000e-01 : f32
    %144 = vector.broadcast %cst_52 : f32 to vector<8x128xf32>
    %145 = arith.addf %143, %144 : vector<8x128xf32>
    %146 = arith.mulf %135, %106 : vector<8x128xf32>
    %147 = arith.mulf %127, %137 : vector<8x128xf32>
    %148 = arith.addf %146, %147 : vector<8x128xf32>
    %149 = math.tanh %148 : vector<8x128xf32>
    %150 = arith.mulf %145, %149 : vector<8x128xf32>
    %c2_i32 = arith.constant 2 : i32
    %151 = arith.addi %7, %c2_i32 : i32
    %152 = vector.broadcast %151 : i32 to vector<8x1xi32>
    %153 = arith.cmpi sgt, %6, %152 : vector<8x1xi32>
    %154 = vector.shape_cast %153 : vector<8x1xi1> to vector<8x1xi1>
    %155 = vector.broadcast %154 : vector<8x1xi1> to vector<8x128xi1>
    %156 = arith.select %155, %150, %103 : vector<8x128xi1>, vector<8x128xf32>
    %157 = vector.shape_cast %153 : vector<8x1xi1> to vector<8x1xi1>
    %158 = vector.broadcast %157 : vector<8x1xi1> to vector<8x128xi1>
    %159 = arith.select %158, %148, %106 : vector<8x128xi1>, vector<8x128xf32>
    %cst_53 = arith.constant 0.000000e+00 : f32
    %160 = vector.shape_cast %153 : vector<8x1xi1> to vector<8x1xi1>
    %161 = vector.broadcast %160 : vector<8x1xi1> to vector<8x128xi1>
    %162 = vector.broadcast %cst_53 : f32 to vector<8x128xf32>
    %163 = arith.select %161, %150, %162 : vector<8x128xi1>, vector<8x128xf32>
    %c2_54 = arith.constant 2 : index
    %c0_55 = arith.constant 0 : index
    %c0_56 = arith.constant 0 : index
    %164 = vector.load %arg6[%c2_54, %c0_55, %c0_56] : memref<8x8x128xf32, #tpu.memory_space<vmem>>, vector<1x8x128xf32>
    %165 = vector.shape_cast %164 : vector<1x8x128xf32> to vector<8x128xf32>
    %166 = vector.shape_cast %163 : vector<8x128xf32> to vector<1x8x128xf32>
    tpu.vector_store %arg6[%c2_54, %c0_55, %c0_56], %166 {strides = array<i32>} : memref<8x8x128xf32, #tpu.memory_space<vmem>>, vector<1x8x128xf32>,
    %c3 = arith.constant 3 : index
    %c0_57 = arith.constant 0 : index
    %c0_58 = arith.constant 0 : index
    %167 = vector.load %arg2[%c3, %c0_57, %c0_58] : memref<8x8x512xbf16, #tpu.memory_space<vmem>>, vector<1x8x512xbf16>
    %168 = vector.shape_cast %167 : vector<1x8x512xbf16> to vector<8x512xbf16>
    %169 = arith.extf %168 : vector<8x512xbf16> to vector<8x512xf32>
    %170 = arith.truncf %156 : vector<8x128xf32> to vector<8x128xbf16>
    %cst_59 = arith.constant dense<0.000000e+00> : vector<8x512xf32>
    %171 = tpu.matmul %170, %5, %cst_59 {dimension_numbers = #tpu.dot_dimension_numbers<[1], [0], [0], [1], [0, 0, 1, 1], [], []>} : vector<8x128xbf16>, vector<128x512xbf16>, vector<8x512xf32> -> vector<8x512xf32>
    %172 = arith.addf %169, %171 : vector<8x512xf32>
    %173 = vector.extract_strided_slice %172 {offsets = [0, 0], sizes = [8, 128], strides = [1, 1]} : vector<8x512xf32> to vector<8x128xf32>
    %cst_60 = arith.constant 5.000000e-01 : f32
    %174 = vector.broadcast %cst_60 : f32 to vector<8x128xf32>
    %175 = arith.mulf %174, %173 : vector<8x128xf32>
    %176 = math.tanh %175 : vector<8x128xf32>
    %cst_61 = arith.constant 5.000000e-01 : f32
    %177 = vector.broadcast %cst_61 : f32 to vector<8x128xf32>
    %178 = arith.mulf %177, %176 : vector<8x128xf32>
    %cst_62 = arith.constant 5.000000e-01 : f32
    %179 = vector.broadcast %cst_62 : f32 to vector<8x128xf32>
    %180 = arith.addf %178, %179 : vector<8x128xf32>
    %181 = vector.extract_strided_slice %172 {offsets = [0, 128], sizes = [8, 128], strides = [1, 1]} : vector<8x512xf32> to vector<8x128xf32>
    %cst_63 = arith.constant 5.000000e-01 : f32
    %182 = vector.broadcast %cst_63 : f32 to vector<8x128xf32>
    %183 = arith.mulf %182, %181 : vector<8x128xf32>
    %184 = math.tanh %183 : vector<8x128xf32>
    %cst_64 = arith.constant 5.000000e-01 : f32
    %185 = vector.broadcast %cst_64 : f32 to vector<8x128xf32>
    %186 = arith.mulf %185, %184 : vector<8x128xf32>
    %cst_65 = arith.constant 5.000000e-01 : f32
    %187 = vector.broadcast %cst_65 : f32 to vector<8x128xf32>
    %188 = arith.addf %186, %187 : vector<8x128xf32>
    %189 = vector.extract_strided_slice %172 {offsets = [0, 256], sizes = [8, 128], strides = [1, 1]} : vector<8x512xf32> to vector<8x128xf32>
    %190 = math.tanh %189 : vector<8x128xf32>
    %191 = vector.extract_strided_slice %172 {offsets = [0, 384], sizes = [8, 128], strides = [1, 1]} : vector<8x512xf32> to vector<8x128xf32>
    %cst_66 = arith.constant 5.000000e-01 : f32
    %192 = vector.broadcast %cst_66 : f32 to vector<8x128xf32>
    %193 = arith.mulf %192, %191 : vector<8x128xf32>
    %194 = math.tanh %193 : vector<8x128xf32>
    %cst_67 = arith.constant 5.000000e-01 : f32
    %195 = vector.broadcast %cst_67 : f32 to vector<8x128xf32>
    %196 = arith.mulf %195, %194 : vector<8x128xf32>
    %cst_68 = arith.constant 5.000000e-01 : f32
    %197 = vector.broadcast %cst_68 : f32 to vector<8x128xf32>
    %198 = arith.addf %196, %197 : vector<8x128xf32>
    %199 = arith.mulf %188, %159 : vector<8x128xf32>
    %200 = arith.mulf %180, %190 : vector<8x128xf32>
    %201 = arith.addf %199, %200 : vector<8x128xf32>
    %202 = math.tanh %201 : vector<8x128xf32>
    %203 = arith.mulf %198, %202 : vector<8x128xf32>
    %c3_i32 = arith.constant 3 : i32
    %204 = arith.addi %7, %c3_i32 : i32
    %205 = vector.broadcast %204 : i32 to vector<8x1xi32>
    %206 = arith.cmpi sgt, %6, %205 : vector<8x1xi32>
    %207 = vector.shape_cast %206 : vector<8x1xi1> to vector<8x1xi1>
    %208 = vector.broadcast %207 : vector<8x1xi1> to vector<8x128xi1>
    %209 = arith.select %208, %203, %156 : vector<8x128xi1>, vector<8x128xf32>
    %210 = vector.shape_cast %206 : vector<8x1xi1> to vector<8x1xi1>
    %211 = vector.broadcast %210 : vector<8x1xi1> to vector<8x128xi1>
    %212 = arith.select %211, %201, %159 : vector<8x128xi1>, vector<8x128xf32>
    %cst_69 = arith.constant 0.000000e+00 : f32
    %213 = vector.shape_cast %206 : vector<8x1xi1> to vector<8x1xi1>
    %214 = vector.broadcast %213 : vector<8x1xi1> to vector<8x128xi1>
    %215 = vector.broadcast %cst_69 : f32 to vector<8x128xf32>
    %216 = arith.select %214, %203, %215 : vector<8x128xi1>, vector<8x128xf32>
    %c3_70 = arith.constant 3 : index
    %c0_71 = arith.constant 0 : index
    %c0_72 = arith.constant 0 : index
    %217 = vector.load %arg6[%c3_70, %c0_71, %c0_72] : memref<8x8x128xf32, #tpu.memory_space<vmem>>, vector<1x8x128xf32>
    %218 = vector.shape_cast %217 : vector<1x8x128xf32> to vector<8x128xf32>
    %219 = vector.shape_cast %216 : vector<8x128xf32> to vector<1x8x128xf32>
    tpu.vector_store %arg6[%c3_70, %c0_71, %c0_72], %219 {strides = array<i32>} : memref<8x8x128xf32, #tpu.memory_space<vmem>>, vector<1x8x128xf32>,
    %c4 = arith.constant 4 : index
    %c0_73 = arith.constant 0 : index
    %c0_74 = arith.constant 0 : index
    %220 = vector.load %arg2[%c4, %c0_73, %c0_74] : memref<8x8x512xbf16, #tpu.memory_space<vmem>>, vector<1x8x512xbf16>
    %221 = vector.shape_cast %220 : vector<1x8x512xbf16> to vector<8x512xbf16>
    %222 = arith.extf %221 : vector<8x512xbf16> to vector<8x512xf32>
    %223 = arith.truncf %209 : vector<8x128xf32> to vector<8x128xbf16>
    %cst_75 = arith.constant dense<0.000000e+00> : vector<8x512xf32>
    %224 = tpu.matmul %223, %5, %cst_75 {dimension_numbers = #tpu.dot_dimension_numbers<[1], [0], [0], [1], [0, 0, 1, 1], [], []>} : vector<8x128xbf16>, vector<128x512xbf16>, vector<8x512xf32> -> vector<8x512xf32>
    %225 = arith.addf %222, %224 : vector<8x512xf32>
    %226 = vector.extract_strided_slice %225 {offsets = [0, 0], sizes = [8, 128], strides = [1, 1]} : vector<8x512xf32> to vector<8x128xf32>
    %cst_76 = arith.constant 5.000000e-01 : f32
    %227 = vector.broadcast %cst_76 : f32 to vector<8x128xf32>
    %228 = arith.mulf %227, %226 : vector<8x128xf32>
    %229 = math.tanh %228 : vector<8x128xf32>
    %cst_77 = arith.constant 5.000000e-01 : f32
    %230 = vector.broadcast %cst_77 : f32 to vector<8x128xf32>
    %231 = arith.mulf %230, %229 : vector<8x128xf32>
    %cst_78 = arith.constant 5.000000e-01 : f32
    %232 = vector.broadcast %cst_78 : f32 to vector<8x128xf32>
    %233 = arith.addf %231, %232 : vector<8x128xf32>
    %234 = vector.extract_strided_slice %225 {offsets = [0, 128], sizes = [8, 128], strides = [1, 1]} : vector<8x512xf32> to vector<8x128xf32>
    %cst_79 = arith.constant 5.000000e-01 : f32
    %235 = vector.broadcast %cst_79 : f32 to vector<8x128xf32>
    %236 = arith.mulf %235, %234 : vector<8x128xf32>
    %237 = math.tanh %236 : vector<8x128xf32>
    %cst_80 = arith.constant 5.000000e-01 : f32
    %238 = vector.broadcast %cst_80 : f32 to vector<8x128xf32>
    %239 = arith.mulf %238, %237 : vector<8x128xf32>
    %cst_81 = arith.constant 5.000000e-01 : f32
    %240 = vector.broadcast %cst_81 : f32 to vector<8x128xf32>
    %241 = arith.addf %239, %240 : vector<8x128xf32>
    %242 = vector.extract_strided_slice %225 {offsets = [0, 256], sizes = [8, 128], strides = [1, 1]} : vector<8x512xf32> to vector<8x128xf32>
    %243 = math.tanh %242 : vector<8x128xf32>
    %244 = vector.extract_strided_slice %225 {offsets = [0, 384], sizes = [8, 128], strides = [1, 1]} : vector<8x512xf32> to vector<8x128xf32>
    %cst_82 = arith.constant 5.000000e-01 : f32
    %245 = vector.broadcast %cst_82 : f32 to vector<8x128xf32>
    %246 = arith.mulf %245, %244 : vector<8x128xf32>
    %247 = math.tanh %246 : vector<8x128xf32>
    %cst_83 = arith.constant 5.000000e-01 : f32
    %248 = vector.broadcast %cst_83 : f32 to vector<8x128xf32>
    %249 = arith.mulf %248, %247 : vector<8x128xf32>
    %cst_84 = arith.constant 5.000000e-01 : f32
    %250 = vector.broadcast %cst_84 : f32 to vector<8x128xf32>
    %251 = arith.addf %249, %250 : vector<8x128xf32>
    %252 = arith.mulf %241, %212 : vector<8x128xf32>
    %253 = arith.mulf %233, %243 : vector<8x128xf32>
    %254 = arith.addf %252, %253 : vector<8x128xf32>
    %255 = math.tanh %254 : vector<8x128xf32>
    %256 = arith.mulf %251, %255 : vector<8x128xf32>
    %c4_i32 = arith.constant 4 : i32
    %257 = arith.addi %7, %c4_i32 : i32
    %258 = vector.broadcast %257 : i32 to vector<8x1xi32>
    %259 = arith.cmpi sgt, %6, %258 : vector<8x1xi32>
    %260 = vector.shape_cast %259 : vector<8x1xi1> to vector<8x1xi1>
    %261 = vector.broadcast %260 : vector<8x1xi1> to vector<8x128xi1>
    %262 = arith.select %261, %256, %209 : vector<8x128xi1>, vector<8x128xf32>
    %263 = vector.shape_cast %259 : vector<8x1xi1> to vector<8x1xi1>
    %264 = vector.broadcast %263 : vector<8x1xi1> to vector<8x128xi1>
    %265 = arith.select %264, %254, %212 : vector<8x128xi1>, vector<8x128xf32>
    %cst_85 = arith.constant 0.000000e+00 : f32
    %266 = vector.shape_cast %259 : vector<8x1xi1> to vector<8x1xi1>
    %267 = vector.broadcast %266 : vector<8x1xi1> to vector<8x128xi1>
    %268 = vector.broadcast %cst_85 : f32 to vector<8x128xf32>
    %269 = arith.select %267, %256, %268 : vector<8x128xi1>, vector<8x128xf32>
    %c4_86 = arith.constant 4 : index
    %c0_87 = arith.constant 0 : index
    %c0_88 = arith.constant 0 : index
    %270 = vector.load %arg6[%c4_86, %c0_87, %c0_88] : memref<8x8x128xf32, #tpu.memory_space<vmem>>, vector<1x8x128xf32>
    %271 = vector.shape_cast %270 : vector<1x8x128xf32> to vector<8x128xf32>
    %272 = vector.shape_cast %269 : vector<8x128xf32> to vector<1x8x128xf32>
    tpu.vector_store %arg6[%c4_86, %c0_87, %c0_88], %272 {strides = array<i32>} : memref<8x8x128xf32, #tpu.memory_space<vmem>>, vector<1x8x128xf32>,
    %c5 = arith.constant 5 : index
    %c0_89 = arith.constant 0 : index
    %c0_90 = arith.constant 0 : index
    %273 = vector.load %arg2[%c5, %c0_89, %c0_90] : memref<8x8x512xbf16, #tpu.memory_space<vmem>>, vector<1x8x512xbf16>
    %274 = vector.shape_cast %273 : vector<1x8x512xbf16> to vector<8x512xbf16>
    %275 = arith.extf %274 : vector<8x512xbf16> to vector<8x512xf32>
    %276 = arith.truncf %262 : vector<8x128xf32> to vector<8x128xbf16>
    %cst_91 = arith.constant dense<0.000000e+00> : vector<8x512xf32>
    %277 = tpu.matmul %276, %5, %cst_91 {dimension_numbers = #tpu.dot_dimension_numbers<[1], [0], [0], [1], [0, 0, 1, 1], [], []>} : vector<8x128xbf16>, vector<128x512xbf16>, vector<8x512xf32> -> vector<8x512xf32>
    %278 = arith.addf %275, %277 : vector<8x512xf32>
    %279 = vector.extract_strided_slice %278 {offsets = [0, 0], sizes = [8, 128], strides = [1, 1]} : vector<8x512xf32> to vector<8x128xf32>
    %cst_92 = arith.constant 5.000000e-01 : f32
    %280 = vector.broadcast %cst_92 : f32 to vector<8x128xf32>
    %281 = arith.mulf %280, %279 : vector<8x128xf32>
    %282 = math.tanh %281 : vector<8x128xf32>
    %cst_93 = arith.constant 5.000000e-01 : f32
    %283 = vector.broadcast %cst_93 : f32 to vector<8x128xf32>
    %284 = arith.mulf %283, %282 : vector<8x128xf32>
    %cst_94 = arith.constant 5.000000e-01 : f32
    %285 = vector.broadcast %cst_94 : f32 to vector<8x128xf32>
    %286 = arith.addf %284, %285 : vector<8x128xf32>
    %287 = vector.extract_strided_slice %278 {offsets = [0, 128], sizes = [8, 128], strides = [1, 1]} : vector<8x512xf32> to vector<8x128xf32>
    %cst_95 = arith.constant 5.000000e-01 : f32
    %288 = vector.broadcast %cst_95 : f32 to vector<8x128xf32>
    %289 = arith.mulf %288, %287 : vector<8x128xf32>
    %290 = math.tanh %289 : vector<8x128xf32>
    %cst_96 = arith.constant 5.000000e-01 : f32
    %291 = vector.broadcast %cst_96 : f32 to vector<8x128xf32>
    %292 = arith.mulf %291, %290 : vector<8x128xf32>
    %cst_97 = arith.constant 5.000000e-01 : f32
    %293 = vector.broadcast %cst_97 : f32 to vector<8x128xf32>
    %294 = arith.addf %292, %293 : vector<8x128xf32>
    %295 = vector.extract_strided_slice %278 {offsets = [0, 256], sizes = [8, 128], strides = [1, 1]} : vector<8x512xf32> to vector<8x128xf32>
    %296 = math.tanh %295 : vector<8x128xf32>
    %297 = vector.extract_strided_slice %278 {offsets = [0, 384], sizes = [8, 128], strides = [1, 1]} : vector<8x512xf32> to vector<8x128xf32>
    %cst_98 = arith.constant 5.000000e-01 : f32
    %298 = vector.broadcast %cst_98 : f32 to vector<8x128xf32>
    %299 = arith.mulf %298, %297 : vector<8x128xf32>
    %300 = math.tanh %299 : vector<8x128xf32>
    %cst_99 = arith.constant 5.000000e-01 : f32
    %301 = vector.broadcast %cst_99 : f32 to vector<8x128xf32>
    %302 = arith.mulf %301, %300 : vector<8x128xf32>
    %cst_100 = arith.constant 5.000000e-01 : f32
    %303 = vector.broadcast %cst_100 : f32 to vector<8x128xf32>
    %304 = arith.addf %302, %303 : vector<8x128xf32>
    %305 = arith.mulf %294, %265 : vector<8x128xf32>
    %306 = arith.mulf %286, %296 : vector<8x128xf32>
    %307 = arith.addf %305, %306 : vector<8x128xf32>
    %308 = math.tanh %307 : vector<8x128xf32>
    %309 = arith.mulf %304, %308 : vector<8x128xf32>
    %c5_i32 = arith.constant 5 : i32
    %310 = arith.addi %7, %c5_i32 : i32
    %311 = vector.broadcast %310 : i32 to vector<8x1xi32>
    %312 = arith.cmpi sgt, %6, %311 : vector<8x1xi32>
    %313 = vector.shape_cast %312 : vector<8x1xi1> to vector<8x1xi1>
    %314 = vector.broadcast %313 : vector<8x1xi1> to vector<8x128xi1>
    %315 = arith.select %314, %309, %262 : vector<8x128xi1>, vector<8x128xf32>
    %316 = vector.shape_cast %312 : vector<8x1xi1> to vector<8x1xi1>
    %317 = vector.broadcast %316 : vector<8x1xi1> to vector<8x128xi1>
    %318 = arith.select %317, %307, %265 : vector<8x128xi1>, vector<8x128xf32>
    %cst_101 = arith.constant 0.000000e+00 : f32
    %319 = vector.shape_cast %312 : vector<8x1xi1> to vector<8x1xi1>
    %320 = vector.broadcast %319 : vector<8x1xi1> to vector<8x128xi1>
    %321 = vector.broadcast %cst_101 : f32 to vector<8x128xf32>
    %322 = arith.select %320, %309, %321 : vector<8x128xi1>, vector<8x128xf32>
    %c5_102 = arith.constant 5 : index
    %c0_103 = arith.constant 0 : index
    %c0_104 = arith.constant 0 : index
    %323 = vector.load %arg6[%c5_102, %c0_103, %c0_104] : memref<8x8x128xf32, #tpu.memory_space<vmem>>, vector<1x8x128xf32>
    %324 = vector.shape_cast %323 : vector<1x8x128xf32> to vector<8x128xf32>
    %325 = vector.shape_cast %322 : vector<8x128xf32> to vector<1x8x128xf32>
    tpu.vector_store %arg6[%c5_102, %c0_103, %c0_104], %325 {strides = array<i32>} : memref<8x8x128xf32, #tpu.memory_space<vmem>>, vector<1x8x128xf32>,
    %c6 = arith.constant 6 : index
    %c0_105 = arith.constant 0 : index
    %c0_106 = arith.constant 0 : index
    %326 = vector.load %arg2[%c6, %c0_105, %c0_106] : memref<8x8x512xbf16, #tpu.memory_space<vmem>>, vector<1x8x512xbf16>
    %327 = vector.shape_cast %326 : vector<1x8x512xbf16> to vector<8x512xbf16>
    %328 = arith.extf %327 : vector<8x512xbf16> to vector<8x512xf32>
    %329 = arith.truncf %315 : vector<8x128xf32> to vector<8x128xbf16>
    %cst_107 = arith.constant dense<0.000000e+00> : vector<8x512xf32>
    %330 = tpu.matmul %329, %5, %cst_107 {dimension_numbers = #tpu.dot_dimension_numbers<[1], [0], [0], [1], [0, 0, 1, 1], [], []>} : vector<8x128xbf16>, vector<128x512xbf16>, vector<8x512xf32> -> vector<8x512xf32>
    %331 = arith.addf %328, %330 : vector<8x512xf32>
    %332 = vector.extract_strided_slice %331 {offsets = [0, 0], sizes = [8, 128], strides = [1, 1]} : vector<8x512xf32> to vector<8x128xf32>
    %cst_108 = arith.constant 5.000000e-01 : f32
    %333 = vector.broadcast %cst_108 : f32 to vector<8x128xf32>
    %334 = arith.mulf %333, %332 : vector<8x128xf32>
    %335 = math.tanh %334 : vector<8x128xf32>
    %cst_109 = arith.constant 5.000000e-01 : f32
    %336 = vector.broadcast %cst_109 : f32 to vector<8x128xf32>
    %337 = arith.mulf %336, %335 : vector<8x128xf32>
    %cst_110 = arith.constant 5.000000e-01 : f32
    %338 = vector.broadcast %cst_110 : f32 to vector<8x128xf32>
    %339 = arith.addf %337, %338 : vector<8x128xf32>
    %340 = vector.extract_strided_slice %331 {offsets = [0, 128], sizes = [8, 128], strides = [1, 1]} : vector<8x512xf32> to vector<8x128xf32>
    %cst_111 = arith.constant 5.000000e-01 : f32
    %341 = vector.broadcast %cst_111 : f32 to vector<8x128xf32>
    %342 = arith.mulf %341, %340 : vector<8x128xf32>
    %343 = math.tanh %342 : vector<8x128xf32>
    %cst_112 = arith.constant 5.000000e-01 : f32
    %344 = vector.broadcast %cst_112 : f32 to vector<8x128xf32>
    %345 = arith.mulf %344, %343 : vector<8x128xf32>
    %cst_113 = arith.constant 5.000000e-01 : f32
    %346 = vector.broadcast %cst_113 : f32 to vector<8x128xf32>
    %347 = arith.addf %345, %346 : vector<8x128xf32>
    %348 = vector.extract_strided_slice %331 {offsets = [0, 256], sizes = [8, 128], strides = [1, 1]} : vector<8x512xf32> to vector<8x128xf32>
    %349 = math.tanh %348 : vector<8x128xf32>
    %350 = vector.extract_strided_slice %331 {offsets = [0, 384], sizes = [8, 128], strides = [1, 1]} : vector<8x512xf32> to vector<8x128xf32>
    %cst_114 = arith.constant 5.000000e-01 : f32
    %351 = vector.broadcast %cst_114 : f32 to vector<8x128xf32>
    %352 = arith.mulf %351, %350 : vector<8x128xf32>
    %353 = math.tanh %352 : vector<8x128xf32>
    %cst_115 = arith.constant 5.000000e-01 : f32
    %354 = vector.broadcast %cst_115 : f32 to vector<8x128xf32>
    %355 = arith.mulf %354, %353 : vector<8x128xf32>
    %cst_116 = arith.constant 5.000000e-01 : f32
    %356 = vector.broadcast %cst_116 : f32 to vector<8x128xf32>
    %357 = arith.addf %355, %356 : vector<8x128xf32>
    %358 = arith.mulf %347, %318 : vector<8x128xf32>
    %359 = arith.mulf %339, %349 : vector<8x128xf32>
    %360 = arith.addf %358, %359 : vector<8x128xf32>
    %361 = math.tanh %360 : vector<8x128xf32>
    %362 = arith.mulf %357, %361 : vector<8x128xf32>
    %c6_i32 = arith.constant 6 : i32
    %363 = arith.addi %7, %c6_i32 : i32
    %364 = vector.broadcast %363 : i32 to vector<8x1xi32>
    %365 = arith.cmpi sgt, %6, %364 : vector<8x1xi32>
    %366 = vector.shape_cast %365 : vector<8x1xi1> to vector<8x1xi1>
    %367 = vector.broadcast %366 : vector<8x1xi1> to vector<8x128xi1>
    %368 = arith.select %367, %362, %315 : vector<8x128xi1>, vector<8x128xf32>
    %369 = vector.shape_cast %365 : vector<8x1xi1> to vector<8x1xi1>
    %370 = vector.broadcast %369 : vector<8x1xi1> to vector<8x128xi1>
    %371 = arith.select %370, %360, %318 : vector<8x128xi1>, vector<8x128xf32>
    %cst_117 = arith.constant 0.000000e+00 : f32
    %372 = vector.shape_cast %365 : vector<8x1xi1> to vector<8x1xi1>
    %373 = vector.broadcast %372 : vector<8x1xi1> to vector<8x128xi1>
    %374 = vector.broadcast %cst_117 : f32 to vector<8x128xf32>
    %375 = arith.select %373, %362, %374 : vector<8x128xi1>, vector<8x128xf32>
    %c6_118 = arith.constant 6 : index
    %c0_119 = arith.constant 0 : index
    %c0_120 = arith.constant 0 : index
    %376 = vector.load %arg6[%c6_118, %c0_119, %c0_120] : memref<8x8x128xf32, #tpu.memory_space<vmem>>, vector<1x8x128xf32>
    %377 = vector.shape_cast %376 : vector<1x8x128xf32> to vector<8x128xf32>
    %378 = vector.shape_cast %375 : vector<8x128xf32> to vector<1x8x128xf32>
    tpu.vector_store %arg6[%c6_118, %c0_119, %c0_120], %378 {strides = array<i32>} : memref<8x8x128xf32, #tpu.memory_space<vmem>>, vector<1x8x128xf32>,
    %c7 = arith.constant 7 : index
    %c0_121 = arith.constant 0 : index
    %c0_122 = arith.constant 0 : index
    %379 = vector.load %arg2[%c7, %c0_121, %c0_122] : memref<8x8x512xbf16, #tpu.memory_space<vmem>>, vector<1x8x512xbf16>
    %380 = vector.shape_cast %379 : vector<1x8x512xbf16> to vector<8x512xbf16>
    %381 = arith.extf %380 : vector<8x512xbf16> to vector<8x512xf32>
    %382 = arith.truncf %368 : vector<8x128xf32> to vector<8x128xbf16>
    %cst_123 = arith.constant dense<0.000000e+00> : vector<8x512xf32>
    %383 = tpu.matmul %382, %5, %cst_123 {dimension_numbers = #tpu.dot_dimension_numbers<[1], [0], [0], [1], [0, 0, 1, 1], [], []>} : vector<8x128xbf16>, vector<128x512xbf16>, vector<8x512xf32> -> vector<8x512xf32>
    %384 = arith.addf %381, %383 : vector<8x512xf32>
    %385 = vector.extract_strided_slice %384 {offsets = [0, 0], sizes = [8, 128], strides = [1, 1]} : vector<8x512xf32> to vector<8x128xf32>
    %cst_124 = arith.constant 5.000000e-01 : f32
    %386 = vector.broadcast %cst_124 : f32 to vector<8x128xf32>
    %387 = arith.mulf %386, %385 : vector<8x128xf32>
    %388 = math.tanh %387 : vector<8x128xf32>
    %cst_125 = arith.constant 5.000000e-01 : f32
    %389 = vector.broadcast %cst_125 : f32 to vector<8x128xf32>
    %390 = arith.mulf %389, %388 : vector<8x128xf32>
    %cst_126 = arith.constant 5.000000e-01 : f32
    %391 = vector.broadcast %cst_126 : f32 to vector<8x128xf32>
    %392 = arith.addf %390, %391 : vector<8x128xf32>
    %393 = vector.extract_strided_slice %384 {offsets = [0, 128], sizes = [8, 128], strides = [1, 1]} : vector<8x512xf32> to vector<8x128xf32>
    %cst_127 = arith.constant 5.000000e-01 : f32
    %394 = vector.broadcast %cst_127 : f32 to vector<8x128xf32>
    %395 = arith.mulf %394, %393 : vector<8x128xf32>
    %396 = math.tanh %395 : vector<8x128xf32>
    %cst_128 = arith.constant 5.000000e-01 : f32
    %397 = vector.broadcast %cst_128 : f32 to vector<8x128xf32>
    %398 = arith.mulf %397, %396 : vector<8x128xf32>
    %cst_129 = arith.constant 5.000000e-01 : f32
    %399 = vector.broadcast %cst_129 : f32 to vector<8x128xf32>
    %400 = arith.addf %398, %399 : vector<8x128xf32>
    %401 = vector.extract_strided_slice %384 {offsets = [0, 256], sizes = [8, 128], strides = [1, 1]} : vector<8x512xf32> to vector<8x128xf32>
    %402 = math.tanh %401 : vector<8x128xf32>
    %403 = vector.extract_strided_slice %384 {offsets = [0, 384], sizes = [8, 128], strides = [1, 1]} : vector<8x512xf32> to vector<8x128xf32>
    %cst_130 = arith.constant 5.000000e-01 : f32
    %404 = vector.broadcast %cst_130 : f32 to vector<8x128xf32>
    %405 = arith.mulf %404, %403 : vector<8x128xf32>
    %406 = math.tanh %405 : vector<8x128xf32>
    %cst_131 = arith.constant 5.000000e-01 : f32
    %407 = vector.broadcast %cst_131 : f32 to vector<8x128xf32>
    %408 = arith.mulf %407, %406 : vector<8x128xf32>
    %cst_132 = arith.constant 5.000000e-01 : f32
    %409 = vector.broadcast %cst_132 : f32 to vector<8x128xf32>
    %410 = arith.addf %408, %409 : vector<8x128xf32>
    %411 = arith.mulf %400, %371 : vector<8x128xf32>
    %412 = arith.mulf %392, %402 : vector<8x128xf32>
    %413 = arith.addf %411, %412 : vector<8x128xf32>
    %414 = math.tanh %413 : vector<8x128xf32>
    %415 = arith.mulf %410, %414 : vector<8x128xf32>
    %c7_i32 = arith.constant 7 : i32
    %416 = arith.addi %7, %c7_i32 : i32
    %417 = vector.broadcast %416 : i32 to vector<8x1xi32>
    %418 = arith.cmpi sgt, %6, %417 : vector<8x1xi32>
    %419 = vector.shape_cast %418 : vector<8x1xi1> to vector<8x1xi1>
    %420 = vector.broadcast %419 : vector<8x1xi1> to vector<8x128xi1>
    %421 = arith.select %420, %415, %368 : vector<8x128xi1>, vector<8x128xf32>
    %422 = vector.shape_cast %418 : vector<8x1xi1> to vector<8x1xi1>
    %423 = vector.broadcast %422 : vector<8x1xi1> to vector<8x128xi1>
    %424 = arith.select %423, %413, %371 : vector<8x128xi1>, vector<8x128xf32>
    %cst_133 = arith.constant 0.000000e+00 : f32
    %425 = vector.shape_cast %418 : vector<8x1xi1> to vector<8x1xi1>
    %426 = vector.broadcast %425 : vector<8x1xi1> to vector<8x128xi1>
    %427 = vector.broadcast %cst_133 : f32 to vector<8x128xf32>
    %428 = arith.select %426, %415, %427 : vector<8x128xi1>, vector<8x128xf32>
    %c7_134 = arith.constant 7 : index
    %c0_135 = arith.constant 0 : index
    %c0_136 = arith.constant 0 : index
    %429 = vector.load %arg6[%c7_134, %c0_135, %c0_136] : memref<8x8x128xf32, #tpu.memory_space<vmem>>, vector<1x8x128xf32>
    %430 = vector.shape_cast %429 : vector<1x8x128xf32> to vector<8x128xf32>
    %431 = vector.shape_cast %428 : vector<8x128xf32> to vector<1x8x128xf32>
    tpu.vector_store %arg6[%c7_134, %c0_135, %c0_136], %431 {strides = array<i32>} : memref<8x8x128xf32, #tpu.memory_space<vmem>>, vector<1x8x128xf32>,
    %c0_137 = arith.constant 0 : index
    %c0_138 = arith.constant 0 : index
    %432 = vector.load %arg7[%c0_137, %c0_138] : memref<8x128xf32, #tpu.memory_space<vmem>>, vector<8x128xf32>
    tpu.vector_store %arg7[%c0_137, %c0_138], %421 {strides = array<i32>} : memref<8x128xf32, #tpu.memory_space<vmem>>, vector<8x128xf32>,
    %c0_139 = arith.constant 0 : index
    %c0_140 = arith.constant 0 : index
    %433 = vector.load %arg8[%c0_139, %c0_140] : memref<8x128xf32, #tpu.memory_space<vmem>>, vector<8x128xf32>
    tpu.vector_store %arg8[%c0_139, %c0_140], %424 {strides = array<i32>} : memref<8x128xf32, #tpu.memory_space<vmem>>, vector<8x128xf32>,
    return
  }
  func.func @transform_0(%arg0: i32) -> (i32, i32) {
    %c0_i32 = arith.constant 0 : i32
    %c0_i32_0 = arith.constant 0 : i32
    %c0_i32_1 = arith.constant 0 : i32
    return %c0_i32, %c0_i32_0 : i32, i32
  }
  func.func @transform_1(%arg0: i32) -> (i32, i32, i32) {
    %c0_i32 = arith.constant 0 : i32
    %c0_i32_0 = arith.constant 0 : i32
    %c0_i32_1 = arith.constant 0 : i32
    return %arg0, %c0_i32, %c0_i32_0 : i32, i32, i32
  }
  func.func @transform_2(%arg0: i32) -> (i32, i32) {
    %c0_i32 = arith.constant 0 : i32
    %c0_i32_0 = arith.constant 0 : i32
    %c0_i32_1 = arith.constant 0 : i32
    return %c0_i32, %c0_i32_0 : i32, i32
  }
  func.func @transform_3(%arg0: i32) -> (i32, i32) {
    %c0_i32 = arith.constant 0 : i32
    %c0_i32_0 = arith.constant 0 : i32
    %c0_i32_1 = arith.constant 0 : i32
    return %c0_i32, %c0_i32_0 : i32, i32
  }
  func.func @transform_4(%arg0: i32) -> (i32, i32) {
    %c0_i32 = arith.constant 0 : i32
    %c0_i32_0 = arith.constant 0 : i32
    %c0_i32_1 = arith.constant 0 : i32
    return %c0_i32, %c0_i32_0 : i32, i32
  }
  func.func @transform_5(%arg0: i32) -> (i32, i32, i32) {
    %c0_i32 = arith.constant 0 : i32
    %c0_i32_0 = arith.constant 0 : i32
    %c0_i32_1 = arith.constant 0 : i32
    return %arg0, %c0_i32, %c0_i32_0 : i32, i32, i32
  }
  func.func @transform_6(%arg0: i32) -> (i32, i32) {
    %c0_i32 = arith.constant 0 : i32
    %c0_i32_0 = arith.constant 0 : i32
    %c0_i32_1 = arith.constant 0 : i32
    return %c0_i32, %c0_i32_0 : i32, i32
  }
  func.func @transform_7(%arg0: i32) -> (i32, i32) {
    %c0_i32 = arith.constant 0 : i32
    %c0_i32_0 = arith.constant 0 : i32
    %c0_i32_1 = arith.constant 0 : i32
    return %c0_i32, %c0_i32_0 : i32, i32
  }
}

module attributes {stable_mosaic.version = 11 : i64} {
  func.func @_lstm_block_kernel(%arg0: i32, %arg1: memref<8x1xi32, #tpu.memory_space<vmem>>, %arg2: memref<8x8x512xbf16, #tpu.memory_space<vmem>>, %arg3: memref<128x512xbf16, #tpu.memory_space<vmem>>, %arg4: memref<8x128xf32, #tpu.memory_space<vmem>>, %arg5: memref<8x128xf32, #tpu.memory_space<vmem>>, %arg6: memref<8x8x128xf32, #tpu.memory_space<vmem>>, %arg7: memref<8x128xf32, #tpu.memory_space<vmem>>, %arg8: memref<8x128xf32, #tpu.memory_space<vmem>>) attributes {dimension_semantics = [#tpu.dimension_semantics<arbitrary>], iteration_bounds = array<i64: 1>, scalar_prefetch = 0 : i64, scratch_operands = 0 : i64, tpu.core_type = #tpu.core_type<tc>, window_params = [{pipeline_mode = #tpu.pipeline_mode<synchronous>, transform_indices = @transform_0, window_bounds = array<i64: 8, 1>}, {transform_indices = @transform_1, window_bounds = array<i64: 8, 8, 512>}, {pipeline_mode = #tpu.pipeline_mode<synchronous>, transform_indices = @transform_2, window_bounds = array<i64: 128, 512>}, {pipeline_mode = #tpu.pipeline_mode<synchronous>, transform_indices = @transform_3, window_bounds = array<i64: 8, 128>}, {pipeline_mode = #tpu.pipeline_mode<synchronous>, transform_indices = @transform_4, window_bounds = array<i64: 8, 128>}, {transform_indices = @transform_5, window_bounds = array<i64: 8, 8, 128>}, {pipeline_mode = #tpu.pipeline_mode<synchronous>, transform_indices = @transform_6, window_bounds = array<i64: 8, 128>}, {pipeline_mode = #tpu.pipeline_mode<synchronous>, transform_indices = @transform_7, window_bounds = array<i64: 8, 128>}]} {
    %c0_i32 = arith.constant 0 : i32
    %0 = arith.cmpi eq, %arg0, %c0_i32 : i32
    %1 = arith.extui %0 : i1 to i32
    %c0_i32_0 = arith.constant 0 : i32
    %2 = arith.cmpi ne, %1, %c0_i32_0 : i32
    scf.if %2 {
      %c0_143 = arith.constant 0 : index
      %c0_144 = arith.constant 0 : index
      %437 = vector.load %arg4[%c0_143, %c0_144] : memref<8x128xf32, #tpu.memory_space<vmem>>, vector<8x128xf32>
      %c0_145 = arith.constant 0 : index
      %c0_146 = arith.constant 0 : index
      %438 = vector.load %arg7[%c0_145, %c0_146] : memref<8x128xf32, #tpu.memory_space<vmem>>, vector<8x128xf32>
      tpu.vector_store %arg7[%c0_145, %c0_146], %437 {strides = array<i32>} : memref<8x128xf32, #tpu.memory_space<vmem>>, vector<8x128xf32>,
      %c0_147 = arith.constant 0 : index
      %c0_148 = arith.constant 0 : index
      %439 = vector.load %arg5[%c0_147, %c0_148] : memref<8x128xf32, #tpu.memory_space<vmem>>, vector<8x128xf32>
      %c0_149 = arith.constant 0 : index
      %c0_150 = arith.constant 0 : index
      %440 = vector.load %arg8[%c0_149, %c0_150] : memref<8x128xf32, #tpu.memory_space<vmem>>, vector<8x128xf32>
      tpu.vector_store %arg8[%c0_149, %c0_150], %439 {strides = array<i32>} : memref<8x128xf32, #tpu.memory_space<vmem>>, vector<8x128xf32>,
    } else {
    }
    %c0 = arith.constant 0 : index
    %c0_1 = arith.constant 0 : index
    %3 = vector.load %arg7[%c0, %c0_1] : memref<8x128xf32, #tpu.memory_space<vmem>>, vector<8x128xf32>
    %c0_2 = arith.constant 0 : index
    %c0_3 = arith.constant 0 : index
    %4 = vector.load %arg8[%c0_2, %c0_3] : memref<8x128xf32, #tpu.memory_space<vmem>>, vector<8x128xf32>
    %c0_4 = arith.constant 0 : index
    %c0_5 = arith.constant 0 : index
    %5 = vector.load %arg3[%c0_4, %c0_5] : memref<128x512xbf16, #tpu.memory_space<vmem>>, vector<128x512xbf16>
    %c0_6 = arith.constant 0 : index
    %c0_7 = arith.constant 0 : index
    %6 = vector.load %arg1[%c0_6, %c0_7] : memref<8x1xi32, #tpu.memory_space<vmem>>, vector<8x1xi32>
    %c8_i32 = arith.constant 8 : i32
    %7 = arith.muli %arg0, %c8_i32 : i32
    %c0_8 = arith.constant 0 : index
    %c0_9 = arith.constant 0 : index
    %c0_10 = arith.constant 0 : index
    %8 = vector.load %arg2[%c0_8, %c0_9, %c0_10] : memref<8x8x512xbf16, #tpu.memory_space<vmem>>, vector<1x8x512xbf16>
    %9 = vector.shape_cast %8 : vector<1x8x512xbf16> to vector<8x512xbf16>
    %10 = arith.extf %9 : vector<8x512xbf16> to vector<8x512xf32>
    %11 = arith.truncf %3 : vector<8x128xf32> to vector<8x128xbf16>
    %cst = arith.constant dense<0.000000e+00> : vector<8x512xf32>
    %12 = tpu.matmul %11, %5, %cst {dimension_numbers = #tpu.dot_dimension_numbers<[1], [0], [0], [1], [0, 0, 1, 1], [], []>} : vector<8x128xbf16>, vector<128x512xbf16>, vector<8x512xf32> -> vector<8x512xf32>
    %13 = arith.addf %10, %12 : vector<8x512xf32>
    %14 = vector.extract_strided_slice %13 {offsets = [0, 0], sizes = [8, 128], strides = [1, 1]} : vector<8x512xf32> to vector<8x128xf32>
    %cst_11 = arith.constant 5.000000e-01 : f32
    %15 = vector.broadcast %cst_11 : f32 to vector<8x128xf32>
    %16 = arith.mulf %15, %14 : vector<8x128xf32>
    %17 = math.tanh %16 : vector<8x128xf32>
    %cst_12 = arith.constant 5.000000e-01 : f32
    %18 = vector.broadcast %cst_12 : f32 to vector<8x128xf32>
    %19 = arith.mulf %18, %17 : vector<8x128xf32>
    %cst_13 = arith.constant 5.000000e-01 : f32
    %20 = vector.broadcast %cst_13 : f32 to vector<8x128xf32>
    %21 = arith.addf %19, %20 : vector<8x128xf32>
    %22 = vector.extract_strided_slice %13 {offsets = [0, 128], sizes = [8, 128], strides = [1, 1]} : vector<8x512xf32> to vector<8x128xf32>
    %cst_14 = arith.constant 5.000000e-01 : f32
    %23 = vector.broadcast %cst_14 : f32 to vector<8x128xf32>
    %24 = arith.mulf %23, %22 : vector<8x128xf32>
    %25 = math.tanh %24 : vector<8x128xf32>
    %cst_15 = arith.constant 5.000000e-01 : f32
    %26 = vector.broadcast %cst_15 : f32 to vector<8x128xf32>
    %27 = arith.mulf %26, %25 : vector<8x128xf32>
    %cst_16 = arith.constant 5.000000e-01 : f32
    %28 = vector.broadcast %cst_16 : f32 to vector<8x128xf32>
    %29 = arith.addf %27, %28 : vector<8x128xf32>
    %30 = vector.extract_strided_slice %13 {offsets = [0, 256], sizes = [8, 128], strides = [1, 1]} : vector<8x512xf32> to vector<8x128xf32>
    %31 = math.tanh %30 : vector<8x128xf32>
    %32 = vector.extract_strided_slice %13 {offsets = [0, 384], sizes = [8, 128], strides = [1, 1]} : vector<8x512xf32> to vector<8x128xf32>
    %cst_17 = arith.constant 5.000000e-01 : f32
    %33 = vector.broadcast %cst_17 : f32 to vector<8x128xf32>
    %34 = arith.mulf %33, %32 : vector<8x128xf32>
    %35 = math.tanh %34 : vector<8x128xf32>
    %cst_18 = arith.constant 5.000000e-01 : f32
    %36 = vector.broadcast %cst_18 : f32 to vector<8x128xf32>
    %37 = arith.mulf %36, %35 : vector<8x128xf32>
    %cst_19 = arith.constant 5.000000e-01 : f32
    %38 = vector.broadcast %cst_19 : f32 to vector<8x128xf32>
    %39 = arith.addf %37, %38 : vector<8x128xf32>
    %40 = arith.mulf %29, %4 : vector<8x128xf32>
    %41 = arith.mulf %21, %31 : vector<8x128xf32>
    %42 = arith.addf %40, %41 : vector<8x128xf32>
    %43 = math.tanh %42 : vector<8x128xf32>
    %44 = arith.mulf %39, %43 : vector<8x128xf32>
    %c0_i32_20 = arith.constant 0 : i32
    %45 = arith.addi %7, %c0_i32_20 : i32
    %46 = vector.broadcast %45 : i32 to vector<8x1xi32>
    %47 = arith.cmpi sgt, %6, %46 : vector<8x1xi32>
    %48 = vector.shape_cast %47 : vector<8x1xi1> to vector<8x1xi1>
    %49 = vector.broadcast %48 : vector<8x1xi1> to vector<8x128xi1>
    %50 = arith.select %49, %44, %3 : vector<8x128xi1>, vector<8x128xf32>
    %51 = vector.shape_cast %47 : vector<8x1xi1> to vector<8x1xi1>
    %52 = vector.broadcast %51 : vector<8x1xi1> to vector<8x128xi1>
    %53 = arith.select %52, %42, %4 : vector<8x128xi1>, vector<8x128xf32>
    %cst_21 = arith.constant 0.000000e+00 : f32
    %54 = vector.shape_cast %47 : vector<8x1xi1> to vector<8x1xi1>
    %55 = vector.broadcast %54 : vector<8x1xi1> to vector<8x128xi1>
    %56 = vector.broadcast %cst_21 : f32 to vector<8x128xf32>
    %57 = arith.select %55, %44, %56 : vector<8x128xi1>, vector<8x128xf32>
    %c0_22 = arith.constant 0 : index
    %c0_23 = arith.constant 0 : index
    %c0_24 = arith.constant 0 : index
    %58 = vector.load %arg6[%c0_22, %c0_23, %c0_24] : memref<8x8x128xf32, #tpu.memory_space<vmem>>, vector<1x8x128xf32>
    %59 = vector.shape_cast %58 : vector<1x8x128xf32> to vector<8x128xf32>
    %60 = vector.shape_cast %57 : vector<8x128xf32> to vector<1x8x128xf32>
    tpu.vector_store %arg6[%c0_22, %c0_23, %c0_24], %60 {strides = array<i32>} : memref<8x8x128xf32, #tpu.memory_space<vmem>>, vector<1x8x128xf32>,
    %c1 = arith.constant 1 : index
    %c0_25 = arith.constant 0 : index
    %c0_26 = arith.constant 0 : index
    %61 = vector.load %arg2[%c1, %c0_25, %c0_26] : memref<8x8x512xbf16, #tpu.memory_space<vmem>>, vector<1x8x512xbf16>
    %62 = vector.shape_cast %61 : vector<1x8x512xbf16> to vector<8x512xbf16>
    %63 = arith.extf %62 : vector<8x512xbf16> to vector<8x512xf32>
    %64 = arith.truncf %50 : vector<8x128xf32> to vector<8x128xbf16>
    %cst_27 = arith.constant dense<0.000000e+00> : vector<8x512xf32>
    %65 = tpu.matmul %64, %5, %cst_27 {dimension_numbers = #tpu.dot_dimension_numbers<[1], [0], [0], [1], [0, 0, 1, 1], [], []>} : vector<8x128xbf16>, vector<128x512xbf16>, vector<8x512xf32> -> vector<8x512xf32>
    %66 = arith.addf %63, %65 : vector<8x512xf32>
    %67 = vector.extract_strided_slice %66 {offsets = [0, 0], sizes = [8, 128], strides = [1, 1]} : vector<8x512xf32> to vector<8x128xf32>
    %cst_28 = arith.constant 5.000000e-01 : f32
    %68 = vector.broadcast %cst_28 : f32 to vector<8x128xf32>
    %69 = arith.mulf %68, %67 : vector<8x128xf32>
    %70 = math.tanh %69 : vector<8x128xf32>
    %cst_29 = arith.constant 5.000000e-01 : f32
    %71 = vector.broadcast %cst_29 : f32 to vector<8x128xf32>
    %72 = arith.mulf %71, %70 : vector<8x128xf32>
    %cst_30 = arith.constant 5.000000e-01 : f32
    %73 = vector.broadcast %cst_30 : f32 to vector<8x128xf32>
    %74 = arith.addf %72, %73 : vector<8x128xf32>
    %75 = vector.extract_strided_slice %66 {offsets = [0, 128], sizes = [8, 128], strides = [1, 1]} : vector<8x512xf32> to vector<8x128xf32>
    %cst_31 = arith.constant 5.000000e-01 : f32
    %76 = vector.broadcast %cst_31 : f32 to vector<8x128xf32>
    %77 = arith.mulf %76, %75 : vector<8x128xf32>
    %78 = math.tanh %77 : vector<8x128xf32>
    %cst_32 = arith.constant 5.000000e-01 : f32
    %79 = vector.broadcast %cst_32 : f32 to vector<8x128xf32>
    %80 = arith.mulf %79, %78 : vector<8x128xf32>
    %cst_33 = arith.constant 5.000000e-01 : f32
    %81 = vector.broadcast %cst_33 : f32 to vector<8x128xf32>
    %82 = arith.addf %80, %81 : vector<8x128xf32>
    %83 = vector.extract_strided_slice %66 {offsets = [0, 256], sizes = [8, 128], strides = [1, 1]} : vector<8x512xf32> to vector<8x128xf32>
    %84 = math.tanh %83 : vector<8x128xf32>
    %85 = vector.extract_strided_slice %66 {offsets = [0, 384], sizes = [8, 128], strides = [1, 1]} : vector<8x512xf32> to vector<8x128xf32>
    %cst_34 = arith.constant 5.000000e-01 : f32
    %86 = vector.broadcast %cst_34 : f32 to vector<8x128xf32>
    %87 = arith.mulf %86, %85 : vector<8x128xf32>
    %88 = math.tanh %87 : vector<8x128xf32>
    %cst_35 = arith.constant 5.000000e-01 : f32
    %89 = vector.broadcast %cst_35 : f32 to vector<8x128xf32>
    %90 = arith.mulf %89, %88 : vector<8x128xf32>
    %cst_36 = arith.constant 5.000000e-01 : f32
    %91 = vector.broadcast %cst_36 : f32 to vector<8x128xf32>
    %92 = arith.addf %90, %91 : vector<8x128xf32>
    %93 = arith.mulf %82, %53 : vector<8x128xf32>
    %94 = arith.mulf %74, %84 : vector<8x128xf32>
    %95 = arith.addf %93, %94 : vector<8x128xf32>
    %96 = math.tanh %95 : vector<8x128xf32>
    %97 = arith.mulf %92, %96 : vector<8x128xf32>
    %c1_i32 = arith.constant 1 : i32
    %98 = arith.addi %7, %c1_i32 : i32
    %99 = vector.broadcast %98 : i32 to vector<8x1xi32>
    %100 = arith.cmpi sgt, %6, %99 : vector<8x1xi32>
    %101 = vector.shape_cast %100 : vector<8x1xi1> to vector<8x1xi1>
    %102 = vector.broadcast %101 : vector<8x1xi1> to vector<8x128xi1>
    %103 = arith.select %102, %97, %50 : vector<8x128xi1>, vector<8x128xf32>
    %104 = vector.shape_cast %100 : vector<8x1xi1> to vector<8x1xi1>
    %105 = vector.broadcast %104 : vector<8x1xi1> to vector<8x128xi1>
    %106 = arith.select %105, %95, %53 : vector<8x128xi1>, vector<8x128xf32>
    %cst_37 = arith.constant 0.000000e+00 : f32
    %107 = vector.shape_cast %100 : vector<8x1xi1> to vector<8x1xi1>
    %108 = vector.broadcast %107 : vector<8x1xi1> to vector<8x128xi1>
    %109 = vector.broadcast %cst_37 : f32 to vector<8x128xf32>
    %110 = arith.select %108, %97, %109 : vector<8x128xi1>, vector<8x128xf32>
    %c1_38 = arith.constant 1 : index
    %c0_39 = arith.constant 0 : index
    %c0_40 = arith.constant 0 : index
    %111 = vector.load %arg6[%c1_38, %c0_39, %c0_40] : memref<8x8x128xf32, #tpu.memory_space<vmem>>, vector<1x8x128xf32>
    %112 = vector.shape_cast %111 : vector<1x8x128xf32> to vector<8x128xf32>
    %113 = vector.shape_cast %110 : vector<8x128xf32> to vector<1x8x128xf32>
    tpu.vector_store %arg6[%c1_38, %c0_39, %c0_40], %113 {strides = array<i32>} : memref<8x8x128xf32, #tpu.memory_space<vmem>>, vector<1x8x128xf32>,
    %c2 = arith.constant 2 : index
    %c0_41 = arith.constant 0 : index
    %c0_42 = arith.constant 0 : index
    %114 = vector.load %arg2[%c2, %c0_41, %c0_42] : memref<8x8x512xbf16, #tpu.memory_space<vmem>>, vector<1x8x512xbf16>
    %115 = vector.shape_cast %114 : vector<1x8x512xbf16> to vector<8x512xbf16>
    %116 = arith.extf %115 : vector<8x512xbf16> to vector<8x512xf32>
    %117 = arith.truncf %103 : vector<8x128xf32> to vector<8x128xbf16>
    %cst_43 = arith.constant dense<0.000000e+00> : vector<8x512xf32>
    %118 = tpu.matmul %117, %5, %cst_43 {dimension_numbers = #tpu.dot_dimension_numbers<[1], [0], [0], [1], [0, 0, 1, 1], [], []>} : vector<8x128xbf16>, vector<128x512xbf16>, vector<8x512xf32> -> vector<8x512xf32>
    %119 = arith.addf %116, %118 : vector<8x512xf32>
    %120 = vector.extract_strided_slice %119 {offsets = [0, 0], sizes = [8, 128], strides = [1, 1]} : vector<8x512xf32> to vector<8x128xf32>
    %cst_44 = arith.constant 5.000000e-01 : f32
    %121 = vector.broadcast %cst_44 : f32 to vector<8x128xf32>
    %122 = arith.mulf %121, %120 : vector<8x128xf32>
    %123 = math.tanh %122 : vector<8x128xf32>
    %cst_45 = arith.constant 5.000000e-01 : f32
    %124 = vector.broadcast %cst_45 : f32 to vector<8x128xf32>
    %125 = arith.mulf %124, %123 : vector<8x128xf32>
    %cst_46 = arith.constant 5.000000e-01 : f32
    %126 = vector.broadcast %cst_46 : f32 to vector<8x128xf32>
    %127 = arith.addf %125, %126 : vector<8x128xf32>
    %128 = vector.extract_strided_slice %119 {offsets = [0, 128], sizes = [8, 128], strides = [1, 1]} : vector<8x512xf32> to vector<8x128xf32>
    %cst_47 = arith.constant 5.000000e-01 : f32
    %129 = vector.broadcast %cst_47 : f32 to vector<8x128xf32>
    %130 = arith.mulf %129, %128 : vector<8x128xf32>
    %131 = math.tanh %130 : vector<8x128xf32>
    %cst_48 = arith.constant 5.000000e-01 : f32
    %132 = vector.broadcast %cst_48 : f32 to vector<8x128xf32>
    %133 = arith.mulf %132, %131 : vector<8x128xf32>
    %cst_49 = arith.constant 5.000000e-01 : f32
    %134 = vector.broadcast %cst_49 : f32 to vector<8x128xf32>
    %135 = arith.addf %133, %134 : vector<8x128xf32>
    %136 = vector.extract_strided_slice %119 {offsets = [0, 256], sizes = [8, 128], strides = [1, 1]} : vector<8x512xf32> to vector<8x128xf32>
    %137 = math.tanh %136 : vector<8x128xf32>
    %138 = vector.extract_strided_slice %119 {offsets = [0, 384], sizes = [8, 128], strides = [1, 1]} : vector<8x512xf32> to vector<8x128xf32>
    %cst_50 = arith.constant 5.000000e-01 : f32
    %139 = vector.broadcast %cst_50 : f32 to vector<8x128xf32>
    %140 = arith.mulf %139, %138 : vector<8x128xf32>
    %141 = math.tanh %140 : vector<8x128xf32>
    %cst_51 = arith.constant 5.000000e-01 : f32
    %142 = vector.broadcast %cst_51 : f32 to vector<8x128xf32>
    %143 = arith.mulf %142, %141 : vector<8x128xf32>
    %cst_52 = arith.constant 5.000000e-01 : f32
    %144 = vector.broadcast %cst_52 : f32 to vector<8x128xf32>
    %145 = arith.addf %143, %144 : vector<8x128xf32>
    %146 = arith.mulf %135, %106 : vector<8x128xf32>
    %147 = arith.mulf %127, %137 : vector<8x128xf32>
    %148 = arith.addf %146, %147 : vector<8x128xf32>
    %149 = math.tanh %148 : vector<8x128xf32>
    %150 = arith.mulf %145, %149 : vector<8x128xf32>
    %c2_i32 = arith.constant 2 : i32
    %151 = arith.addi %7, %c2_i32 : i32
    %152 = vector.broadcast %151 : i32 to vector<8x1xi32>
    %153 = arith.cmpi sgt, %6, %152 : vector<8x1xi32>
    %154 = vector.shape_cast %153 : vector<8x1xi1> to vector<8x1xi1>
    %155 = vector.broadcast %154 : vector<8x1xi1> to vector<8x128xi1>
    %156 = arith.select %155, %150, %103 : vector<8x128xi1>, vector<8x128xf32>
    %157 = vector.shape_cast %153 : vector<8x1xi1> to vector<8x1xi1>
    %158 = vector.broadcast %157 : vector<8x1xi1> to vector<8x128xi1>
    %159 = arith.select %158, %148, %106 : vector<8x128xi1>, vector<8x128xf32>
    %cst_53 = arith.constant 0.000000e+00 : f32
    %160 = vector.shape_cast %153 : vector<8x1xi1> to vector<8x1xi1>
    %161 = vector.broadcast %160 : vector<8x1xi1> to vector<8x128xi1>
    %162 = vector.broadcast %cst_53 : f32 to vector<8x128xf32>
    %163 = arith.select %161, %150, %162 : vector<8x128xi1>, vector<8x128xf32>
    %c2_54 = arith.constant 2 : index
    %c0_55 = arith.constant 0 : index
    %c0_56 = arith.constant 0 : index
    %164 = vector.load %arg6[%c2_54, %c0_55, %c0_56] : memref<8x8x128xf32, #tpu.memory_space<vmem>>, vector<1x8x128xf32>
    %165 = vector.shape_cast %164 : vector<1x8x128xf32> to vector<8x128xf32>
    %166 = vector.shape_cast %163 : vector<8x128xf32> to vector<1x8x128xf32>
    tpu.vector_store %arg6[%c2_54, %c0_55, %c0_56], %166 {strides = array<i32>} : memref<8x8x128xf32, #tpu.memory_space<vmem>>, vector<1x8x128xf32>,
    %c3 = arith.constant 3 : index
    %c0_57 = arith.constant 0 : index
    %c0_58 = arith.constant 0 : index
    %167 = vector.load %arg2[%c3, %c0_57, %c0_58] : memref<8x8x512xbf16, #tpu.memory_space<vmem>>, vector<1x8x512xbf16>
    %168 = vector.shape_cast %167 : vector<1x8x512xbf16> to vector<8x512xbf16>
    %169 = arith.extf %168 : vector<8x512xbf16> to vector<8x512xf32>
    %170 = arith.truncf %156 : vector<8x128xf32> to vector<8x128xbf16>
    %cst_59 = arith.constant dense<0.000000e+00> : vector<8x512xf32>
    %171 = tpu.matmul %170, %5, %cst_59 {dimension_numbers = #tpu.dot_dimension_numbers<[1], [0], [0], [1], [0, 0, 1, 1], [], []>} : vector<8x128xbf16>, vector<128x512xbf16>, vector<8x512xf32> -> vector<8x512xf32>
    %172 = arith.addf %169, %171 : vector<8x512xf32>
    %173 = vector.extract_strided_slice %172 {offsets = [0, 0], sizes = [8, 128], strides = [1, 1]} : vector<8x512xf32> to vector<8x128xf32>
    %cst_60 = arith.constant 5.000000e-01 : f32
    %174 = vector.broadcast %cst_60 : f32 to vector<8x128xf32>
    %175 = arith.mulf %174, %173 : vector<8x128xf32>
    %176 = math.tanh %175 : vector<8x128xf32>
    %cst_61 = arith.constant 5.000000e-01 : f32
    %177 = vector.broadcast %cst_61 : f32 to vector<8x128xf32>
    %178 = arith.mulf %177, %176 : vector<8x128xf32>
    %cst_62 = arith.constant 5.000000e-01 : f32
    %179 = vector.broadcast %cst_62 : f32 to vector<8x128xf32>
    %180 = arith.addf %178, %179 : vector<8x128xf32>
    %181 = vector.extract_strided_slice %172 {offsets = [0, 128], sizes = [8, 128], strides = [1, 1]} : vector<8x512xf32> to vector<8x128xf32>
    %cst_63 = arith.constant 5.000000e-01 : f32
    %182 = vector.broadcast %cst_63 : f32 to vector<8x128xf32>
    %183 = arith.mulf %182, %181 : vector<8x128xf32>
    %184 = math.tanh %183 : vector<8x128xf32>
    %cst_64 = arith.constant 5.000000e-01 : f32
    %185 = vector.broadcast %cst_64 : f32 to vector<8x128xf32>
    %186 = arith.mulf %185, %184 : vector<8x128xf32>
    %cst_65 = arith.constant 5.000000e-01 : f32
    %187 = vector.broadcast %cst_65 : f32 to vector<8x128xf32>
    %188 = arith.addf %186, %187 : vector<8x128xf32>
    %189 = vector.extract_strided_slice %172 {offsets = [0, 256], sizes = [8, 128], strides = [1, 1]} : vector<8x512xf32> to vector<8x128xf32>
    %190 = math.tanh %189 : vector<8x128xf32>
    %191 = vector.extract_strided_slice %172 {offsets = [0, 384], sizes = [8, 128], strides = [1, 1]} : vector<8x512xf32> to vector<8x128xf32>
    %cst_66 = arith.constant 5.000000e-01 : f32
    %192 = vector.broadcast %cst_66 : f32 to vector<8x128xf32>
    %193 = arith.mulf %192, %191 : vector<8x128xf32>
    %194 = math.tanh %193 : vector<8x128xf32>
    %cst_67 = arith.constant 5.000000e-01 : f32
    %195 = vector.broadcast %cst_67 : f32 to vector<8x128xf32>
    %196 = arith.mulf %195, %194 : vector<8x128xf32>
    %cst_68 = arith.constant 5.000000e-01 : f32
    %197 = vector.broadcast %cst_68 : f32 to vector<8x128xf32>
    %198 = arith.addf %196, %197 : vector<8x128xf32>
    %199 = arith.mulf %188, %159 : vector<8x128xf32>
    %200 = arith.mulf %180, %190 : vector<8x128xf32>
    %201 = arith.addf %199, %200 : vector<8x128xf32>
    %202 = math.tanh %201 : vector<8x128xf32>
    %203 = arith.mulf %198, %202 : vector<8x128xf32>
    %c3_i32 = arith.constant 3 : i32
    %204 = arith.addi %7, %c3_i32 : i32
    %205 = vector.broadcast %204 : i32 to vector<8x1xi32>
    %206 = arith.cmpi sgt, %6, %205 : vector<8x1xi32>
    %207 = vector.shape_cast %206 : vector<8x1xi1> to vector<8x1xi1>
    %208 = vector.broadcast %207 : vector<8x1xi1> to vector<8x128xi1>
    %209 = arith.select %208, %203, %156 : vector<8x128xi1>, vector<8x128xf32>
    %210 = vector.shape_cast %206 : vector<8x1xi1> to vector<8x1xi1>
    %211 = vector.broadcast %210 : vector<8x1xi1> to vector<8x128xi1>
    %212 = arith.select %211, %201, %159 : vector<8x128xi1>, vector<8x128xf32>
    %cst_69 = arith.constant 0.000000e+00 : f32
    %213 = vector.shape_cast %206 : vector<8x1xi1> to vector<8x1xi1>
    %214 = vector.broadcast %213 : vector<8x1xi1> to vector<8x128xi1>
    %215 = vector.broadcast %cst_69 : f32 to vector<8x128xf32>
    %216 = arith.select %214, %203, %215 : vector<8x128xi1>, vector<8x128xf32>
    %c3_70 = arith.constant 3 : index
    %c0_71 = arith.constant 0 : index
    %c0_72 = arith.constant 0 : index
    %217 = vector.load %arg6[%c3_70, %c0_71, %c0_72] : memref<8x8x128xf32, #tpu.memory_space<vmem>>, vector<1x8x128xf32>
    %218 = vector.shape_cast %217 : vector<1x8x128xf32> to vector<8x128xf32>
    %219 = vector.shape_cast %216 : vector<8x128xf32> to vector<1x8x128xf32>
    tpu.vector_store %arg6[%c3_70, %c0_71, %c0_72], %219 {strides = array<i32>} : memref<8x8x128xf32, #tpu.memory_space<vmem>>, vector<1x8x128xf32>,
    %c4 = arith.constant 4 : index
    %c0_73 = arith.constant 0 : index
    %c0_74 = arith.constant 0 : index
    %220 = vector.load %arg2[%c4, %c0_73, %c0_74] : memref<8x8x512xbf16, #tpu.memory_space<vmem>>, vector<1x8x512xbf16>
    %221 = vector.shape_cast %220 : vector<1x8x512xbf16> to vector<8x512xbf16>
    %222 = arith.extf %221 : vector<8x512xbf16> to vector<8x512xf32>
    %223 = arith.truncf %209 : vector<8x128xf32> to vector<8x128xbf16>
    %cst_75 = arith.constant dense<0.000000e+00> : vector<8x512xf32>
    %224 = tpu.matmul %223, %5, %cst_75 {dimension_numbers = #tpu.dot_dimension_numbers<[1], [0], [0], [1], [0, 0, 1, 1], [], []>} : vector<8x128xbf16>, vector<128x512xbf16>, vector<8x512xf32> -> vector<8x512xf32>
    %225 = arith.addf %222, %224 : vector<8x512xf32>
    %226 = vector.extract_strided_slice %225 {offsets = [0, 0], sizes = [8, 128], strides = [1, 1]} : vector<8x512xf32> to vector<8x128xf32>
    %cst_76 = arith.constant 5.000000e-01 : f32
    %227 = vector.broadcast %cst_76 : f32 to vector<8x128xf32>
    %228 = arith.mulf %227, %226 : vector<8x128xf32>
    %229 = math.tanh %228 : vector<8x128xf32>
    %cst_77 = arith.constant 5.000000e-01 : f32
    %230 = vector.broadcast %cst_77 : f32 to vector<8x128xf32>
    %231 = arith.mulf %230, %229 : vector<8x128xf32>
    %cst_78 = arith.constant 5.000000e-01 : f32
    %232 = vector.broadcast %cst_78 : f32 to vector<8x128xf32>
    %233 = arith.addf %231, %232 : vector<8x128xf32>
    %234 = vector.extract_strided_slice %225 {offsets = [0, 128], sizes = [8, 128], strides = [1, 1]} : vector<8x512xf32> to vector<8x128xf32>
    %cst_79 = arith.constant 5.000000e-01 : f32
    %235 = vector.broadcast %cst_79 : f32 to vector<8x128xf32>
    %236 = arith.mulf %235, %234 : vector<8x128xf32>
    %237 = math.tanh %236 : vector<8x128xf32>
    %cst_80 = arith.constant 5.000000e-01 : f32
    %238 = vector.broadcast %cst_80 : f32 to vector<8x128xf32>
    %239 = arith.mulf %238, %237 : vector<8x128xf32>
    %cst_81 = arith.constant 5.000000e-01 : f32
    %240 = vector.broadcast %cst_81 : f32 to vector<8x128xf32>
    %241 = arith.addf %239, %240 : vector<8x128xf32>
    %242 = vector.extract_strided_slice %225 {offsets = [0, 256], sizes = [8, 128], strides = [1, 1]} : vector<8x512xf32> to vector<8x128xf32>
    %243 = math.tanh %242 : vector<8x128xf32>
    %244 = vector.extract_strided_slice %225 {offsets = [0, 384], sizes = [8, 128], strides = [1, 1]} : vector<8x512xf32> to vector<8x128xf32>
    %cst_82 = arith.constant 5.000000e-01 : f32
    %245 = vector.broadcast %cst_82 : f32 to vector<8x128xf32>
    %246 = arith.mulf %245, %244 : vector<8x128xf32>
    %247 = math.tanh %246 : vector<8x128xf32>
    %cst_83 = arith.constant 5.000000e-01 : f32
    %248 = vector.broadcast %cst_83 : f32 to vector<8x128xf32>
    %249 = arith.mulf %248, %247 : vector<8x128xf32>
    %cst_84 = arith.constant 5.000000e-01 : f32
    %250 = vector.broadcast %cst_84 : f32 to vector<8x128xf32>
    %251 = arith.addf %249, %250 : vector<8x128xf32>
    %252 = arith.mulf %241, %212 : vector<8x128xf32>
    %253 = arith.mulf %233, %243 : vector<8x128xf32>
    %254 = arith.addf %252, %253 : vector<8x128xf32>
    %255 = math.tanh %254 : vector<8x128xf32>
    %256 = arith.mulf %251, %255 : vector<8x128xf32>
    %c4_i32 = arith.constant 4 : i32
    %257 = arith.addi %7, %c4_i32 : i32
    %258 = vector.broadcast %257 : i32 to vector<8x1xi32>
    %259 = arith.cmpi sgt, %6, %258 : vector<8x1xi32>
    %260 = vector.shape_cast %259 : vector<8x1xi1> to vector<8x1xi1>
    %261 = vector.broadcast %260 : vector<8x1xi1> to vector<8x128xi1>
    %262 = arith.select %261, %256, %209 : vector<8x128xi1>, vector<8x128xf32>
    %263 = vector.shape_cast %259 : vector<8x1xi1> to vector<8x1xi1>
    %264 = vector.broadcast %263 : vector<8x1xi1> to vector<8x128xi1>
    %265 = arith.select %264, %254, %212 : vector<8x128xi1>, vector<8x128xf32>
    %cst_85 = arith.constant 0.000000e+00 : f32
    %266 = vector.shape_cast %259 : vector<8x1xi1> to vector<8x1xi1>
    %267 = vector.broadcast %266 : vector<8x1xi1> to vector<8x128xi1>
    %268 = vector.broadcast %cst_85 : f32 to vector<8x128xf32>
    %269 = arith.select %267, %256, %268 : vector<8x128xi1>, vector<8x128xf32>
    %c4_86 = arith.constant 4 : index
    %c0_87 = arith.constant 0 : index
    %c0_88 = arith.constant 0 : index
    %270 = vector.load %arg6[%c4_86, %c0_87, %c0_88] : memref<8x8x128xf32, #tpu.memory_space<vmem>>, vector<1x8x128xf32>
    %271 = vector.shape_cast %270 : vector<1x8x128xf32> to vector<8x128xf32>
    %272 = vector.shape_cast %269 : vector<8x128xf32> to vector<1x8x128xf32>
    tpu.vector_store %arg6[%c4_86, %c0_87, %c0_88], %272 {strides = array<i32>} : memref<8x8x128xf32, #tpu.memory_space<vmem>>, vector<1x8x128xf32>,
    %c5 = arith.constant 5 : index
    %c0_89 = arith.constant 0 : index
    %c0_90 = arith.constant 0 : index
    %273 = vector.load %arg2[%c5, %c0_89, %c0_90] : memref<8x8x512xbf16, #tpu.memory_space<vmem>>, vector<1x8x512xbf16>
    %274 = vector.shape_cast %273 : vector<1x8x512xbf16> to vector<8x512xbf16>
    %275 = arith.extf %274 : vector<8x512xbf16> to vector<8x512xf32>
    %276 = arith.truncf %262 : vector<8x128xf32> to vector<8x128xbf16>
    %cst_91 = arith.constant dense<0.000000e+00> : vector<8x512xf32>
    %277 = tpu.matmul %276, %5, %cst_91 {dimension_numbers = #tpu.dot_dimension_numbers<[1], [0], [0], [1], [0, 0, 1, 1], [], []>} : vector<8x128xbf16>, vector<128x512xbf16>, vector<8x512xf32> -> vector<8x512xf32>
    %278 = arith.addf %275, %277 : vector<8x512xf32>
    %279 = vector.extract_strided_slice %278 {offsets = [0, 0], sizes = [8, 128], strides = [1, 1]} : vector<8x512xf32> to vector<8x128xf32>
    %cst_92 = arith.constant 5.000000e-01 : f32
    %280 = vector.broadcast %cst_92 : f32 to vector<8x128xf32>
    %281 = arith.mulf %280, %279 : vector<8x128xf32>
    %282 = math.tanh %281 : vector<8x128xf32>
    %cst_93 = arith.constant 5.000000e-01 : f32
    %283 = vector.broadcast %cst_93 : f32 to vector<8x128xf32>
    %284 = arith.mulf %283, %282 : vector<8x128xf32>
    %cst_94 = arith.constant 5.000000e-01 : f32
    %285 = vector.broadcast %cst_94 : f32 to vector<8x128xf32>
    %286 = arith.addf %284, %285 : vector<8x128xf32>
    %287 = vector.extract_strided_slice %278 {offsets = [0, 128], sizes = [8, 128], strides = [1, 1]} : vector<8x512xf32> to vector<8x128xf32>
    %cst_95 = arith.constant 5.000000e-01 : f32
    %288 = vector.broadcast %cst_95 : f32 to vector<8x128xf32>
    %289 = arith.mulf %288, %287 : vector<8x128xf32>
    %290 = math.tanh %289 : vector<8x128xf32>
    %cst_96 = arith.constant 5.000000e-01 : f32
    %291 = vector.broadcast %cst_96 : f32 to vector<8x128xf32>
    %292 = arith.mulf %291, %290 : vector<8x128xf32>
    %cst_97 = arith.constant 5.000000e-01 : f32
    %293 = vector.broadcast %cst_97 : f32 to vector<8x128xf32>
    %294 = arith.addf %292, %293 : vector<8x128xf32>
    %295 = vector.extract_strided_slice %278 {offsets = [0, 256], sizes = [8, 128], strides = [1, 1]} : vector<8x512xf32> to vector<8x128xf32>
    %296 = math.tanh %295 : vector<8x128xf32>
    %297 = vector.extract_strided_slice %278 {offsets = [0, 384], sizes = [8, 128], strides = [1, 1]} : vector<8x512xf32> to vector<8x128xf32>
    %cst_98 = arith.constant 5.000000e-01 : f32
    %298 = vector.broadcast %cst_98 : f32 to vector<8x128xf32>
    %299 = arith.mulf %298, %297 : vector<8x128xf32>
    %300 = math.tanh %299 : vector<8x128xf32>
    %cst_99 = arith.constant 5.000000e-01 : f32
    %301 = vector.broadcast %cst_99 : f32 to vector<8x128xf32>
    %302 = arith.mulf %301, %300 : vector<8x128xf32>
    %cst_100 = arith.constant 5.000000e-01 : f32
    %303 = vector.broadcast %cst_100 : f32 to vector<8x128xf32>
    %304 = arith.addf %302, %303 : vector<8x128xf32>
    %305 = arith.mulf %294, %265 : vector<8x128xf32>
    %306 = arith.mulf %286, %296 : vector<8x128xf32>
    %307 = arith.addf %305, %306 : vector<8x128xf32>
    %308 = math.tanh %307 : vector<8x128xf32>
    %309 = arith.mulf %304, %308 : vector<8x128xf32>
    %c5_i32 = arith.constant 5 : i32
    %310 = arith.addi %7, %c5_i32 : i32
    %311 = vector.broadcast %310 : i32 to vector<8x1xi32>
    %312 = arith.cmpi sgt, %6, %311 : vector<8x1xi32>
    %313 = vector.shape_cast %312 : vector<8x1xi1> to vector<8x1xi1>
    %314 = vector.broadcast %313 : vector<8x1xi1> to vector<8x128xi1>
    %315 = arith.select %314, %309, %262 : vector<8x128xi1>, vector<8x128xf32>
    %316 = vector.shape_cast %312 : vector<8x1xi1> to vector<8x1xi1>
    %317 = vector.broadcast %316 : vector<8x1xi1> to vector<8x128xi1>
    %318 = arith.select %317, %307, %265 : vector<8x128xi1>, vector<8x128xf32>
    %cst_101 = arith.constant 0.000000e+00 : f32
    %319 = vector.shape_cast %312 : vector<8x1xi1> to vector<8x1xi1>
    %320 = vector.broadcast %319 : vector<8x1xi1> to vector<8x128xi1>
    %321 = vector.broadcast %cst_101 : f32 to vector<8x128xf32>
    %322 = arith.select %320, %309, %321 : vector<8x128xi1>, vector<8x128xf32>
    %c5_102 = arith.constant 5 : index
    %c0_103 = arith.constant 0 : index
    %c0_104 = arith.constant 0 : index
    %323 = vector.load %arg6[%c5_102, %c0_103, %c0_104] : memref<8x8x128xf32, #tpu.memory_space<vmem>>, vector<1x8x128xf32>
    %324 = vector.shape_cast %323 : vector<1x8x128xf32> to vector<8x128xf32>
    %325 = vector.shape_cast %322 : vector<8x128xf32> to vector<1x8x128xf32>
    tpu.vector_store %arg6[%c5_102, %c0_103, %c0_104], %325 {strides = array<i32>} : memref<8x8x128xf32, #tpu.memory_space<vmem>>, vector<1x8x128xf32>,
    %c6 = arith.constant 6 : index
    %c0_105 = arith.constant 0 : index
    %c0_106 = arith.constant 0 : index
    %326 = vector.load %arg2[%c6, %c0_105, %c0_106] : memref<8x8x512xbf16, #tpu.memory_space<vmem>>, vector<1x8x512xbf16>
    %327 = vector.shape_cast %326 : vector<1x8x512xbf16> to vector<8x512xbf16>
    %328 = arith.extf %327 : vector<8x512xbf16> to vector<8x512xf32>
    %329 = arith.truncf %315 : vector<8x128xf32> to vector<8x128xbf16>
    %cst_107 = arith.constant dense<0.000000e+00> : vector<8x512xf32>
    %330 = tpu.matmul %329, %5, %cst_107 {dimension_numbers = #tpu.dot_dimension_numbers<[1], [0], [0], [1], [0, 0, 1, 1], [], []>} : vector<8x128xbf16>, vector<128x512xbf16>, vector<8x512xf32> -> vector<8x512xf32>
    %331 = arith.addf %328, %330 : vector<8x512xf32>
    %332 = vector.extract_strided_slice %331 {offsets = [0, 0], sizes = [8, 128], strides = [1, 1]} : vector<8x512xf32> to vector<8x128xf32>
    %cst_108 = arith.constant 5.000000e-01 : f32
    %333 = vector.broadcast %cst_108 : f32 to vector<8x128xf32>
    %334 = arith.mulf %333, %332 : vector<8x128xf32>
    %335 = math.tanh %334 : vector<8x128xf32>
    %cst_109 = arith.constant 5.000000e-01 : f32
    %336 = vector.broadcast %cst_109 : f32 to vector<8x128xf32>
    %337 = arith.mulf %336, %335 : vector<8x128xf32>
    %cst_110 = arith.constant 5.000000e-01 : f32
    %338 = vector.broadcast %cst_110 : f32 to vector<8x128xf32>
    %339 = arith.addf %337, %338 : vector<8x128xf32>
    %340 = vector.extract_strided_slice %331 {offsets = [0, 128], sizes = [8, 128], strides = [1, 1]} : vector<8x512xf32> to vector<8x128xf32>
    %cst_111 = arith.constant 5.000000e-01 : f32
    %341 = vector.broadcast %cst_111 : f32 to vector<8x128xf32>
    %342 = arith.mulf %341, %340 : vector<8x128xf32>
    %343 = math.tanh %342 : vector<8x128xf32>
    %cst_112 = arith.constant 5.000000e-01 : f32
    %344 = vector.broadcast %cst_112 : f32 to vector<8x128xf32>
    %345 = arith.mulf %344, %343 : vector<8x128xf32>
    %cst_113 = arith.constant 5.000000e-01 : f32
    %346 = vector.broadcast %cst_113 : f32 to vector<8x128xf32>
    %347 = arith.addf %345, %346 : vector<8x128xf32>
    %348 = vector.extract_strided_slice %331 {offsets = [0, 256], sizes = [8, 128], strides = [1, 1]} : vector<8x512xf32> to vector<8x128xf32>
    %349 = math.tanh %348 : vector<8x128xf32>
    %350 = vector.extract_strided_slice %331 {offsets = [0, 384], sizes = [8, 128], strides = [1, 1]} : vector<8x512xf32> to vector<8x128xf32>
    %cst_114 = arith.constant 5.000000e-01 : f32
    %351 = vector.broadcast %cst_114 : f32 to vector<8x128xf32>
    %352 = arith.mulf %351, %350 : vector<8x128xf32>
    %353 = math.tanh %352 : vector<8x128xf32>
    %cst_115 = arith.constant 5.000000e-01 : f32
    %354 = vector.broadcast %cst_115 : f32 to vector<8x128xf32>
    %355 = arith.mulf %354, %353 : vector<8x128xf32>
    %cst_116 = arith.constant 5.000000e-01 : f32
    %356 = vector.broadcast %cst_116 : f32 to vector<8x128xf32>
    %357 = arith.addf %355, %356 : vector<8x128xf32>
    %358 = arith.mulf %347, %318 : vector<8x128xf32>
    %359 = arith.mulf %339, %349 : vector<8x128xf32>
    %360 = arith.addf %358, %359 : vector<8x128xf32>
    %361 = math.tanh %360 : vector<8x128xf32>
    %362 = arith.mulf %357, %361 : vector<8x128xf32>
    %c6_i32 = arith.constant 6 : i32
    %363 = arith.addi %7, %c6_i32 : i32
    %364 = vector.broadcast %363 : i32 to vector<8x1xi32>
    %365 = arith.cmpi sgt, %6, %364 : vector<8x1xi32>
    %366 = vector.shape_cast %365 : vector<8x1xi1> to vector<8x1xi1>
    %367 = vector.broadcast %366 : vector<8x1xi1> to vector<8x128xi1>
    %368 = arith.select %367, %362, %315 : vector<8x128xi1>, vector<8x128xf32>
    %369 = vector.shape_cast %365 : vector<8x1xi1> to vector<8x1xi1>
    %370 = vector.broadcast %369 : vector<8x1xi1> to vector<8x128xi1>
    %371 = arith.select %370, %360, %318 : vector<8x128xi1>, vector<8x128xf32>
    %cst_117 = arith.constant 0.000000e+00 : f32
    %372 = vector.shape_cast %365 : vector<8x1xi1> to vector<8x1xi1>
    %373 = vector.broadcast %372 : vector<8x1xi1> to vector<8x128xi1>
    %374 = vector.broadcast %cst_117 : f32 to vector<8x128xf32>
    %375 = arith.select %373, %362, %374 : vector<8x128xi1>, vector<8x128xf32>
    %c6_118 = arith.constant 6 : index
    %c0_119 = arith.constant 0 : index
    %c0_120 = arith.constant 0 : index
    %376 = vector.load %arg6[%c6_118, %c0_119, %c0_120] : memref<8x8x128xf32, #tpu.memory_space<vmem>>, vector<1x8x128xf32>
    %377 = vector.shape_cast %376 : vector<1x8x128xf32> to vector<8x128xf32>
    %378 = vector.shape_cast %375 : vector<8x128xf32> to vector<1x8x128xf32>
    tpu.vector_store %arg6[%c6_118, %c0_119, %c0_120], %378 {strides = array<i32>} : memref<8x8x128xf32, #tpu.memory_space<vmem>>, vector<1x8x128xf32>,
    %c7 = arith.constant 7 : index
    %c0_121 = arith.constant 0 : index
    %c0_122 = arith.constant 0 : index
    %379 = vector.load %arg2[%c7, %c0_121, %c0_122] : memref<8x8x512xbf16, #tpu.memory_space<vmem>>, vector<1x8x512xbf16>
    %380 = vector.shape_cast %379 : vector<1x8x512xbf16> to vector<8x512xbf16>
    %381 = arith.extf %380 : vector<8x512xbf16> to vector<8x512xf32>
    %382 = arith.truncf %368 : vector<8x128xf32> to vector<8x128xbf16>
    %cst_123 = arith.constant dense<0.000000e+00> : vector<8x512xf32>
    %383 = tpu.matmul %382, %5, %cst_123 {dimension_numbers = #tpu.dot_dimension_numbers<[1], [0], [0], [1], [0, 0, 1, 1], [], []>} : vector<8x128xbf16>, vector<128x512xbf16>, vector<8x512xf32> -> vector<8x512xf32>
    %384 = arith.addf %381, %383 : vector<8x512xf32>
    %385 = vector.extract_strided_slice %384 {offsets = [0, 0], sizes = [8, 128], strides = [1, 1]} : vector<8x512xf32> to vector<8x128xf32>
    %cst_124 = arith.constant 5.000000e-01 : f32
    %386 = vector.broadcast %cst_124 : f32 to vector<8x128xf32>
    %387 = arith.mulf %386, %385 : vector<8x128xf32>
    %388 = math.tanh %387 : vector<8x128xf32>
    %cst_125 = arith.constant 5.000000e-01 : f32
    %389 = vector.broadcast %cst_125 : f32 to vector<8x128xf32>
    %390 = arith.mulf %389, %388 : vector<8x128xf32>
    %cst_126 = arith.constant 5.000000e-01 : f32
    %391 = vector.broadcast %cst_126 : f32 to vector<8x128xf32>
    %392 = arith.addf %390, %391 : vector<8x128xf32>
    %393 = vector.extract_strided_slice %384 {offsets = [0, 128], sizes = [8, 128], strides = [1, 1]} : vector<8x512xf32> to vector<8x128xf32>
    %cst_127 = arith.constant 5.000000e-01 : f32
    %394 = vector.broadcast %cst_127 : f32 to vector<8x128xf32>
    %395 = arith.mulf %394, %393 : vector<8x128xf32>
    %396 = math.tanh %395 : vector<8x128xf32>
    %cst_128 = arith.constant 5.000000e-01 : f32
    %397 = vector.broadcast %cst_128 : f32 to vector<8x128xf32>
    %398 = arith.mulf %397, %396 : vector<8x128xf32>
    %cst_129 = arith.constant 5.000000e-01 : f32
    %399 = vector.broadcast %cst_129 : f32 to vector<8x128xf32>
    %400 = arith.addf %398, %399 : vector<8x128xf32>
    %401 = vector.extract_strided_slice %384 {offsets = [0, 256], sizes = [8, 128], strides = [1, 1]} : vector<8x512xf32> to vector<8x128xf32>
    %402 = math.tanh %401 : vector<8x128xf32>
    %403 = vector.extract_strided_slice %384 {offsets = [0, 384], sizes = [8, 128], strides = [1, 1]} : vector<8x512xf32> to vector<8x128xf32>
    %cst_130 = arith.constant 5.000000e-01 : f32
    %404 = vector.broadcast %cst_130 : f32 to vector<8x128xf32>
    %405 = arith.mulf %404, %403 : vector<8x128xf32>
    %406 = math.tanh %405 : vector<8x128xf32>
    %cst_131 = arith.constant 5.000000e-01 : f32
    %407 = vector.broadcast %cst_131 : f32 to vector<8x128xf32>
    %408 = arith.mulf %407, %406 : vector<8x128xf32>
    %cst_132 = arith.constant 5.000000e-01 : f32
    %409 = vector.broadcast %cst_132 : f32 to vector<8x128xf32>
    %410 = arith.addf %408, %409 : vector<8x128xf32>
    %411 = arith.mulf %400, %371 : vector<8x128xf32>
    %412 = arith.mulf %392, %402 : vector<8x128xf32>
    %413 = arith.addf %411, %412 : vector<8x128xf32>
    %414 = math.tanh %413 : vector<8x128xf32>
    %415 = arith.mulf %410, %414 : vector<8x128xf32>
    %c7_i32 = arith.constant 7 : i32
    %416 = arith.addi %7, %c7_i32 : i32
    %417 = vector.broadcast %416 : i32 to vector<8x1xi32>
    %418 = arith.cmpi sgt, %6, %417 : vector<8x1xi32>
    %419 = vector.shape_cast %418 : vector<8x1xi1> to vector<8x1xi1>
    %420 = vector.broadcast %419 : vector<8x1xi1> to vector<8x128xi1>
    %421 = arith.select %420, %415, %368 : vector<8x128xi1>, vector<8x128xf32>
    %422 = vector.shape_cast %418 : vector<8x1xi1> to vector<8x1xi1>
    %423 = vector.broadcast %422 : vector<8x1xi1> to vector<8x128xi1>
    %424 = arith.select %423, %413, %371 : vector<8x128xi1>, vector<8x128xf32>
    %cst_133 = arith.constant 0.000000e+00 : f32
    %425 = vector.shape_cast %418 : vector<8x1xi1> to vector<8x1xi1>
    %426 = vector.broadcast %425 : vector<8x1xi1> to vector<8x128xi1>
    %427 = vector.broadcast %cst_133 : f32 to vector<8x128xf32>
    %428 = arith.select %426, %415, %427 : vector<8x128xi1>, vector<8x128xf32>
    %c7_134 = arith.constant 7 : index
    %c0_135 = arith.constant 0 : index
    %c0_136 = arith.constant 0 : index
    %429 = vector.load %arg6[%c7_134, %c0_135, %c0_136] : memref<8x8x128xf32, #tpu.memory_space<vmem>>, vector<1x8x128xf32>
    %430 = vector.shape_cast %429 : vector<1x8x128xf32> to vector<8x128xf32>
    %431 = vector.shape_cast %428 : vector<8x128xf32> to vector<1x8x128xf32>
    tpu.vector_store %arg6[%c7_134, %c0_135, %c0_136], %431 {strides = array<i32>} : memref<8x8x128xf32, #tpu.memory_space<vmem>>, vector<1x8x128xf32>,
    %c0_137 = arith.constant 0 : index
    %c0_138 = arith.constant 0 : index
    %432 = vector.load %arg7[%c0_137, %c0_138] : memref<8x128xf32, #tpu.memory_space<vmem>>, vector<8x128xf32>
    tpu.vector_store %arg7[%c0_137, %c0_138], %421 {strides = array<i32>} : memref<8x128xf32, #tpu.memory_space<vmem>>, vector<8x128xf32>,
    %c0_139 = arith.constant 0 : index
    %c0_140 = arith.constant 0 : index
    %433 = vector.load %arg8[%c0_139, %c0_140] : memref<8x128xf32, #tpu.memory_space<vmem>>, vector<8x128xf32>
    tpu.vector_store %arg8[%c0_139, %c0_140], %424 {strides = array<i32>} : memref<8x128xf32, #tpu.memory_space<vmem>>, vector<8x128xf32>,
    %c0_i32_141 = arith.constant 0 : i32
    %434 = arith.cmpi eq, %arg0, %c0_i32_141 : i32
    %435 = arith.extui %434 : i1 to i32
    %c0_i32_142 = arith.constant 0 : i32
    %436 = arith.cmpi ne, %435, %c0_i32_142 : i32
    scf.if %436 {
      %c0_143 = arith.constant 0 : index
      %c0_144 = arith.constant 0 : index
      %437 = vector.load %arg7[%c0_143, %c0_144] : memref<8x128xf32, #tpu.memory_space<vmem>>, vector<8x128xf32>
      %c0_145 = arith.constant 0 : index
      %c0_146 = arith.constant 0 : index
      %438 = vector.load %arg8[%c0_145, %c0_146] : memref<8x128xf32, #tpu.memory_space<vmem>>, vector<8x128xf32>
      %439 = arith.mulf %437, %437 : vector<8x128xf32>
      %cst_147 = arith.constant dense<0.000000e+00> : vector<8xf32>
      %440 = vector.multi_reduction <add>, %439, %cst_147 [1] : vector<8x128xf32> to vector<8xf32>
      %441 = vector.shape_cast %440 : vector<8xf32> to vector<8x1xf32>
      %442 = arith.mulf %438, %438 : vector<8x128xf32>
      %cst_148 = arith.constant dense<0.000000e+00> : vector<8xf32>
      %443 = vector.multi_reduction <add>, %442, %cst_148 [1] : vector<8x128xf32> to vector<8xf32>
      %444 = vector.shape_cast %443 : vector<8xf32> to vector<8x1xf32>
      %cst_149 = arith.constant 0.000000e+00 : f32
      %445 = vector.broadcast %cst_149 : f32 to vector<8x1xf32>
      %446 = arith.cmpf ogt, %441, %445 : vector<8x1xf32>
      %cst_150 = arith.constant 1.000000e+00 : f32
      %447 = vector.broadcast %cst_150 : f32 to vector<8x1xf32>
      %448 = arith.select %446, %441, %447 : vector<8x1xi1>, vector<8x1xf32>
      %449 = math.rsqrt %448 : vector<8x1xf32>
      %450 = vector.broadcast %449 : vector<8x1xf32> to vector<8x128xf32>
      %451 = arith.mulf %437, %450 : vector<8x128xf32>
      %c0_151 = arith.constant 0 : index
      %c0_152 = arith.constant 0 : index
      %452 = vector.load %arg7[%c0_151, %c0_152] : memref<8x128xf32, #tpu.memory_space<vmem>>, vector<8x128xf32>
      tpu.vector_store %arg7[%c0_151, %c0_152], %451 {strides = array<i32>} : memref<8x128xf32, #tpu.memory_space<vmem>>, vector<8x128xf32>,
      %cst_153 = arith.constant 0.000000e+00 : f32
      %453 = vector.broadcast %cst_153 : f32 to vector<8x1xf32>
      %454 = arith.cmpf ogt, %444, %453 : vector<8x1xf32>
      %cst_154 = arith.constant 1.000000e+00 : f32
      %455 = vector.broadcast %cst_154 : f32 to vector<8x1xf32>
      %456 = arith.select %454, %444, %455 : vector<8x1xi1>, vector<8x1xf32>
      %457 = math.rsqrt %456 : vector<8x1xf32>
      %458 = vector.broadcast %457 : vector<8x1xf32> to vector<8x128xf32>
      %459 = arith.mulf %438, %458 : vector<8x128xf32>
      %c0_155 = arith.constant 0 : index
      %c0_156 = arith.constant 0 : index
      %460 = vector.load %arg8[%c0_155, %c0_156] : memref<8x128xf32, #tpu.memory_space<vmem>>, vector<8x128xf32>
      tpu.vector_store %arg8[%c0_155, %c0_156], %459 {strides = array<i32>} : memref<8x128xf32, #tpu.memory_space<vmem>>, vector<8x128xf32>,
    } else {
    }
    return
  }
  func.func @transform_0(%arg0: i32) -> (i32, i32) {
    %c0_i32 = arith.constant 0 : i32
    %c0_i32_0 = arith.constant 0 : i32
    %c0_i32_1 = arith.constant 0 : i32
    return %c0_i32, %c0_i32_0 : i32, i32
  }
  func.func @transform_1(%arg0: i32) -> (i32, i32, i32) {
    %c0_i32 = arith.constant 0 : i32
    %c0_i32_0 = arith.constant 0 : i32
    %c0_i32_1 = arith.constant 0 : i32
    return %arg0, %c0_i32, %c0_i32_0 : i32, i32, i32
  }
  func.func @transform_2(%arg0: i32) -> (i32, i32) {
    %c0_i32 = arith.constant 0 : i32
    %c0_i32_0 = arith.constant 0 : i32
    %c0_i32_1 = arith.constant 0 : i32
    return %c0_i32, %c0_i32_0 : i32, i32
  }
  func.func @transform_3(%arg0: i32) -> (i32, i32) {
    %c0_i32 = arith.constant 0 : i32
    %c0_i32_0 = arith.constant 0 : i32
    %c0_i32_1 = arith.constant 0 : i32
    return %c0_i32, %c0_i32_0 : i32, i32
  }
  func.func @transform_4(%arg0: i32) -> (i32, i32) {
    %c0_i32 = arith.constant 0 : i32
    %c0_i32_0 = arith.constant 0 : i32
    %c0_i32_1 = arith.constant 0 : i32
    return %c0_i32, %c0_i32_0 : i32, i32
  }
  func.func @transform_5(%arg0: i32) -> (i32, i32, i32) {
    %c0_i32 = arith.constant 0 : i32
    %c0_i32_0 = arith.constant 0 : i32
    %c0_i32_1 = arith.constant 0 : i32
    return %arg0, %c0_i32, %c0_i32_0 : i32, i32, i32
  }
  func.func @transform_6(%arg0: i32) -> (i32, i32) {
    %c0_i32 = arith.constant 0 : i32
    %c0_i32_0 = arith.constant 0 : i32
    %c0_i32_1 = arith.constant 0 : i32
    return %c0_i32, %c0_i32_0 : i32, i32
  }
  func.func @transform_7(%arg0: i32) -> (i32, i32) {
    %c0_i32 = arith.constant 0 : i32
    %c0_i32_0 = arith.constant 0 : i32
    %c0_i32_1 = arith.constant 0 : i32
    return %c0_i32, %c0_i32_0 : i32, i32
  }
}

module attributes {stable_mosaic.version = 11 : i64} {
  func.func @_matmul_bias_kernel(%arg0: i32, %arg1: i32, %arg2: memref<16x128xbf16, #tpu.memory_space<vmem>>, %arg3: memref<128x512xbf16, #tpu.memory_space<vmem>>, %arg4: memref<1x512xf32, #tpu.memory_space<vmem>>, %arg5: memref<16x512xf32, #tpu.memory_space<vmem>>) attributes {dimension_semantics = [#tpu.dimension_semantics<parallel>, #tpu.dimension_semantics<parallel>], iteration_bounds = array<i64: 1, 1>, scalar_prefetch = 0 : i64, scratch_operands = 0 : i64, tpu.core_type = #tpu.core_type<tc>, window_params = [{transform_indices = @transform_0, window_bounds = array<i64: 16, 128>}, {transform_indices = @transform_1, window_bounds = array<i64: 128, 512>}, {transform_indices = @transform_2, window_bounds = array<i64: 1, 512>}, {transform_indices = @transform_3, window_bounds = array<i64: 16, 512>}]} {
    %c0 = arith.constant 0 : index
    %c0_0 = arith.constant 0 : index
    %0 = vector.load %arg2[%c0, %c0_0] : memref<16x128xbf16, #tpu.memory_space<vmem>>, vector<16x128xbf16>
    %c0_1 = arith.constant 0 : index
    %c0_2 = arith.constant 0 : index
    %1 = vector.load %arg3[%c0_1, %c0_2] : memref<128x512xbf16, #tpu.memory_space<vmem>>, vector<128x512xbf16>
    %cst = arith.constant dense<0.000000e+00> : vector<16x512xf32>
    %2 = tpu.matmul %0, %1, %cst {dimension_numbers = #tpu.dot_dimension_numbers<[1], [0], [0], [1], [0, 0, 1, 1], [], []>} : vector<16x128xbf16>, vector<128x512xbf16>, vector<16x512xf32> -> vector<16x512xf32>
    %c0_3 = arith.constant 0 : index
    %c0_4 = arith.constant 0 : index
    %3 = vector.load %arg4[%c0_3, %c0_4] : memref<1x512xf32, #tpu.memory_space<vmem>>, vector<1x512xf32>
    %4 = vector.broadcast %3 : vector<1x512xf32> to vector<16x512xf32>
    %5 = arith.addf %2, %4 : vector<16x512xf32>
    %c0_5 = arith.constant 0 : index
    %c0_6 = arith.constant 0 : index
    %6 = vector.load %arg5[%c0_5, %c0_6] : memref<16x512xf32, #tpu.memory_space<vmem>>, vector<16x512xf32>
    tpu.vector_store %arg5[%c0_5, %c0_6], %5 {strides = array<i32>} : memref<16x512xf32, #tpu.memory_space<vmem>>, vector<16x512xf32>,
    return
  }
  func.func @transform_0(%arg0: i32, %arg1: i32) -> (i32, i32) {
    %c0_i32 = arith.constant 0 : i32
    %c0_i32_0 = arith.constant 0 : i32
    return %arg0, %c0_i32 : i32, i32
  }
  func.func @transform_1(%arg0: i32, %arg1: i32) -> (i32, i32) {
    %c0_i32 = arith.constant 0 : i32
    %c0_i32_0 = arith.constant 0 : i32
    return %c0_i32, %arg1 : i32, i32
  }
  func.func @transform_2(%arg0: i32, %arg1: i32) -> (i32, i32) {
    %c0_i32 = arith.constant 0 : i32
    %c0_i32_0 = arith.constant 0 : i32
    return %c0_i32, %arg1 : i32, i32
  }
  func.func @transform_3(%arg0: i32, %arg1: i32) -> (i32, i32) {
    %c0_i32 = arith.constant 0 : i32
    return %arg0, %arg1 : i32, i32
  }
}

module attributes {stable_mosaic.version = 11 : i64} {
  func.func @_lstm_block_kernel(%arg0: i32, %arg1: memref<8x1xi32, #tpu.memory_space<vmem>>, %arg2: memref<8x8x512xbf16, #tpu.memory_space<vmem>>, %arg3: memref<8x512xf32, #tpu.memory_space<vmem>>, %arg4: memref<128x512xbf16, #tpu.memory_space<vmem>>, %arg5: memref<8x128xf32, #tpu.memory_space<vmem>>, %arg6: memref<8x128xf32, #tpu.memory_space<vmem>>, %arg7: memref<8x8x128xf32, #tpu.memory_space<vmem>>, %arg8: memref<8x128xf32, #tpu.memory_space<vmem>>, %arg9: memref<8x128xf32, #tpu.memory_space<vmem>>) attributes {dimension_semantics = [#tpu.dimension_semantics<arbitrary>], iteration_bounds = array<i64: 1>, scalar_prefetch = 0 : i64, scratch_operands = 0 : i64, tpu.core_type = #tpu.core_type<tc>, window_params = [{pipeline_mode = #tpu.pipeline_mode<synchronous>, transform_indices = @transform_0, window_bounds = array<i64: 8, 1>}, {transform_indices = @transform_1, window_bounds = array<i64: 8, 8, 512>}, {pipeline_mode = #tpu.pipeline_mode<synchronous>, transform_indices = @transform_2, window_bounds = array<i64: 8, 512>}, {pipeline_mode = #tpu.pipeline_mode<synchronous>, transform_indices = @transform_3, window_bounds = array<i64: 128, 512>}, {pipeline_mode = #tpu.pipeline_mode<synchronous>, transform_indices = @transform_4, window_bounds = array<i64: 8, 128>}, {pipeline_mode = #tpu.pipeline_mode<synchronous>, transform_indices = @transform_5, window_bounds = array<i64: 8, 128>}, {transform_indices = @transform_6, window_bounds = array<i64: 8, 8, 128>}, {pipeline_mode = #tpu.pipeline_mode<synchronous>, transform_indices = @transform_7, window_bounds = array<i64: 8, 128>}, {pipeline_mode = #tpu.pipeline_mode<synchronous>, transform_indices = @transform_8, window_bounds = array<i64: 8, 128>}]} {
    %c0_i32 = arith.constant 0 : i32
    %0 = arith.cmpi eq, %arg0, %c0_i32 : i32
    %1 = arith.extui %0 : i1 to i32
    %c0_i32_0 = arith.constant 0 : i32
    %2 = arith.cmpi ne, %1, %c0_i32_0 : i32
    scf.if %2 {
      %c0_143 = arith.constant 0 : index
      %c0_144 = arith.constant 0 : index
      %443 = vector.load %arg5[%c0_143, %c0_144] : memref<8x128xf32, #tpu.memory_space<vmem>>, vector<8x128xf32>
      %c0_145 = arith.constant 0 : index
      %c0_146 = arith.constant 0 : index
      %444 = vector.load %arg8[%c0_145, %c0_146] : memref<8x128xf32, #tpu.memory_space<vmem>>, vector<8x128xf32>
      tpu.vector_store %arg8[%c0_145, %c0_146], %443 {strides = array<i32>} : memref<8x128xf32, #tpu.memory_space<vmem>>, vector<8x128xf32>,
      %c0_147 = arith.constant 0 : index
      %c0_148 = arith.constant 0 : index
      %445 = vector.load %arg6[%c0_147, %c0_148] : memref<8x128xf32, #tpu.memory_space<vmem>>, vector<8x128xf32>
      %c0_149 = arith.constant 0 : index
      %c0_150 = arith.constant 0 : index
      %446 = vector.load %arg9[%c0_149, %c0_150] : memref<8x128xf32, #tpu.memory_space<vmem>>, vector<8x128xf32>
      tpu.vector_store %arg9[%c0_149, %c0_150], %445 {strides = array<i32>} : memref<8x128xf32, #tpu.memory_space<vmem>>, vector<8x128xf32>,
    } else {
    }
    %c0 = arith.constant 0 : index
    %c0_1 = arith.constant 0 : index
    %3 = vector.load %arg8[%c0, %c0_1] : memref<8x128xf32, #tpu.memory_space<vmem>>, vector<8x128xf32>
    %c0_2 = arith.constant 0 : index
    %c0_3 = arith.constant 0 : index
    %4 = vector.load %arg9[%c0_2, %c0_3] : memref<8x128xf32, #tpu.memory_space<vmem>>, vector<8x128xf32>
    %c0_4 = arith.constant 0 : index
    %c0_5 = arith.constant 0 : index
    %5 = vector.load %arg4[%c0_4, %c0_5] : memref<128x512xbf16, #tpu.memory_space<vmem>>, vector<128x512xbf16>
    %c0_6 = arith.constant 0 : index
    %c0_7 = arith.constant 0 : index
    %6 = vector.load %arg1[%c0_6, %c0_7] : memref<8x1xi32, #tpu.memory_space<vmem>>, vector<8x1xi32>
    %c0_8 = arith.constant 0 : index
    %c0_9 = arith.constant 0 : index
    %7 = vector.load %arg3[%c0_8, %c0_9] : memref<8x512xf32, #tpu.memory_space<vmem>>, vector<8x512xf32>
    %c8_i32 = arith.constant 8 : i32
    %8 = arith.muli %arg0, %c8_i32 : i32
    %c0_10 = arith.constant 0 : index
    %c0_11 = arith.constant 0 : index
    %c0_12 = arith.constant 0 : index
    %9 = vector.load %arg2[%c0_10, %c0_11, %c0_12] : memref<8x8x512xbf16, #tpu.memory_space<vmem>>, vector<1x8x512xbf16>
    %10 = vector.shape_cast %9 : vector<1x8x512xbf16> to vector<8x512xbf16>
    %11 = arith.extf %10 : vector<8x512xbf16> to vector<8x512xf32>
    %12 = arith.addf %11, %7 : vector<8x512xf32>
    %13 = arith.truncf %3 : vector<8x128xf32> to vector<8x128xbf16>
    %cst = arith.constant dense<0.000000e+00> : vector<8x512xf32>
    %14 = tpu.matmul %13, %5, %cst {dimension_numbers = #tpu.dot_dimension_numbers<[1], [0], [0], [1], [0, 0, 1, 1], [], []>} : vector<8x128xbf16>, vector<128x512xbf16>, vector<8x512xf32> -> vector<8x512xf32>
    %15 = arith.addf %12, %14 : vector<8x512xf32>
    %16 = vector.extract_strided_slice %15 {offsets = [0, 0], sizes = [8, 128], strides = [1, 1]} : vector<8x512xf32> to vector<8x128xf32>
    %cst_13 = arith.constant 5.000000e-01 : f32
    %17 = vector.broadcast %cst_13 : f32 to vector<8x128xf32>
    %18 = arith.mulf %17, %16 : vector<8x128xf32>
    %19 = math.tanh %18 : vector<8x128xf32>
    %cst_14 = arith.constant 5.000000e-01 : f32
    %20 = vector.broadcast %cst_14 : f32 to vector<8x128xf32>
    %21 = arith.mulf %20, %19 : vector<8x128xf32>
    %cst_15 = arith.constant 5.000000e-01 : f32
    %22 = vector.broadcast %cst_15 : f32 to vector<8x128xf32>
    %23 = arith.addf %21, %22 : vector<8x128xf32>
    %24 = vector.extract_strided_slice %15 {offsets = [0, 128], sizes = [8, 128], strides = [1, 1]} : vector<8x512xf32> to vector<8x128xf32>
    %cst_16 = arith.constant 5.000000e-01 : f32
    %25 = vector.broadcast %cst_16 : f32 to vector<8x128xf32>
    %26 = arith.mulf %25, %24 : vector<8x128xf32>
    %27 = math.tanh %26 : vector<8x128xf32>
    %cst_17 = arith.constant 5.000000e-01 : f32
    %28 = vector.broadcast %cst_17 : f32 to vector<8x128xf32>
    %29 = arith.mulf %28, %27 : vector<8x128xf32>
    %cst_18 = arith.constant 5.000000e-01 : f32
    %30 = vector.broadcast %cst_18 : f32 to vector<8x128xf32>
    %31 = arith.addf %29, %30 : vector<8x128xf32>
    %32 = vector.extract_strided_slice %15 {offsets = [0, 256], sizes = [8, 128], strides = [1, 1]} : vector<8x512xf32> to vector<8x128xf32>
    %33 = math.tanh %32 : vector<8x128xf32>
    %34 = vector.extract_strided_slice %15 {offsets = [0, 384], sizes = [8, 128], strides = [1, 1]} : vector<8x512xf32> to vector<8x128xf32>
    %cst_19 = arith.constant 5.000000e-01 : f32
    %35 = vector.broadcast %cst_19 : f32 to vector<8x128xf32>
    %36 = arith.mulf %35, %34 : vector<8x128xf32>
    %37 = math.tanh %36 : vector<8x128xf32>
    %cst_20 = arith.constant 5.000000e-01 : f32
    %38 = vector.broadcast %cst_20 : f32 to vector<8x128xf32>
    %39 = arith.mulf %38, %37 : vector<8x128xf32>
    %cst_21 = arith.constant 5.000000e-01 : f32
    %40 = vector.broadcast %cst_21 : f32 to vector<8x128xf32>
    %41 = arith.addf %39, %40 : vector<8x128xf32>
    %42 = arith.mulf %31, %4 : vector<8x128xf32>
    %43 = arith.mulf %23, %33 : vector<8x128xf32>
    %44 = arith.addf %42, %43 : vector<8x128xf32>
    %45 = math.tanh %44 : vector<8x128xf32>
    %46 = arith.mulf %41, %45 : vector<8x128xf32>
    %c0_i32_22 = arith.constant 0 : i32
    %47 = arith.addi %8, %c0_i32_22 : i32
    %48 = vector.broadcast %47 : i32 to vector<8x1xi32>
    %49 = arith.cmpi sgt, %6, %48 : vector<8x1xi32>
    %50 = vector.shape_cast %49 : vector<8x1xi1> to vector<8x1xi1>
    %51 = vector.broadcast %50 : vector<8x1xi1> to vector<8x128xi1>
    %52 = arith.select %51, %46, %3 : vector<8x128xi1>, vector<8x128xf32>
    %53 = vector.shape_cast %49 : vector<8x1xi1> to vector<8x1xi1>
    %54 = vector.broadcast %53 : vector<8x1xi1> to vector<8x128xi1>
    %55 = arith.select %54, %44, %4 : vector<8x128xi1>, vector<8x128xf32>
    %cst_23 = arith.constant 0.000000e+00 : f32
    %56 = vector.shape_cast %49 : vector<8x1xi1> to vector<8x1xi1>
    %57 = vector.broadcast %56 : vector<8x1xi1> to vector<8x128xi1>
    %58 = vector.broadcast %cst_23 : f32 to vector<8x128xf32>
    %59 = arith.select %57, %46, %58 : vector<8x128xi1>, vector<8x128xf32>
    %c0_24 = arith.constant 0 : index
    %c0_25 = arith.constant 0 : index
    %c0_26 = arith.constant 0 : index
    %60 = vector.load %arg7[%c0_24, %c0_25, %c0_26] : memref<8x8x128xf32, #tpu.memory_space<vmem>>, vector<1x8x128xf32>
    %61 = vector.shape_cast %60 : vector<1x8x128xf32> to vector<8x128xf32>
    %62 = vector.shape_cast %59 : vector<8x128xf32> to vector<1x8x128xf32>
    tpu.vector_store %arg7[%c0_24, %c0_25, %c0_26], %62 {strides = array<i32>} : memref<8x8x128xf32, #tpu.memory_space<vmem>>, vector<1x8x128xf32>,
    %c1 = arith.constant 1 : index
    %c0_27 = arith.constant 0 : index
    %c0_28 = arith.constant 0 : index
    %63 = vector.load %arg2[%c1, %c0_27, %c0_28] : memref<8x8x512xbf16, #tpu.memory_space<vmem>>, vector<1x8x512xbf16>
    %64 = vector.shape_cast %63 : vector<1x8x512xbf16> to vector<8x512xbf16>
    %65 = arith.extf %64 : vector<8x512xbf16> to vector<8x512xf32>
    %66 = arith.addf %65, %7 : vector<8x512xf32>
    %67 = arith.truncf %52 : vector<8x128xf32> to vector<8x128xbf16>
    %cst_29 = arith.constant dense<0.000000e+00> : vector<8x512xf32>
    %68 = tpu.matmul %67, %5, %cst_29 {dimension_numbers = #tpu.dot_dimension_numbers<[1], [0], [0], [1], [0, 0, 1, 1], [], []>} : vector<8x128xbf16>, vector<128x512xbf16>, vector<8x512xf32> -> vector<8x512xf32>
    %69 = arith.addf %66, %68 : vector<8x512xf32>
    %70 = vector.extract_strided_slice %69 {offsets = [0, 0], sizes = [8, 128], strides = [1, 1]} : vector<8x512xf32> to vector<8x128xf32>
    %cst_30 = arith.constant 5.000000e-01 : f32
    %71 = vector.broadcast %cst_30 : f32 to vector<8x128xf32>
    %72 = arith.mulf %71, %70 : vector<8x128xf32>
    %73 = math.tanh %72 : vector<8x128xf32>
    %cst_31 = arith.constant 5.000000e-01 : f32
    %74 = vector.broadcast %cst_31 : f32 to vector<8x128xf32>
    %75 = arith.mulf %74, %73 : vector<8x128xf32>
    %cst_32 = arith.constant 5.000000e-01 : f32
    %76 = vector.broadcast %cst_32 : f32 to vector<8x128xf32>
    %77 = arith.addf %75, %76 : vector<8x128xf32>
    %78 = vector.extract_strided_slice %69 {offsets = [0, 128], sizes = [8, 128], strides = [1, 1]} : vector<8x512xf32> to vector<8x128xf32>
    %cst_33 = arith.constant 5.000000e-01 : f32
    %79 = vector.broadcast %cst_33 : f32 to vector<8x128xf32>
    %80 = arith.mulf %79, %78 : vector<8x128xf32>
    %81 = math.tanh %80 : vector<8x128xf32>
    %cst_34 = arith.constant 5.000000e-01 : f32
    %82 = vector.broadcast %cst_34 : f32 to vector<8x128xf32>
    %83 = arith.mulf %82, %81 : vector<8x128xf32>
    %cst_35 = arith.constant 5.000000e-01 : f32
    %84 = vector.broadcast %cst_35 : f32 to vector<8x128xf32>
    %85 = arith.addf %83, %84 : vector<8x128xf32>
    %86 = vector.extract_strided_slice %69 {offsets = [0, 256], sizes = [8, 128], strides = [1, 1]} : vector<8x512xf32> to vector<8x128xf32>
    %87 = math.tanh %86 : vector<8x128xf32>
    %88 = vector.extract_strided_slice %69 {offsets = [0, 384], sizes = [8, 128], strides = [1, 1]} : vector<8x512xf32> to vector<8x128xf32>
    %cst_36 = arith.constant 5.000000e-01 : f32
    %89 = vector.broadcast %cst_36 : f32 to vector<8x128xf32>
    %90 = arith.mulf %89, %88 : vector<8x128xf32>
    %91 = math.tanh %90 : vector<8x128xf32>
    %cst_37 = arith.constant 5.000000e-01 : f32
    %92 = vector.broadcast %cst_37 : f32 to vector<8x128xf32>
    %93 = arith.mulf %92, %91 : vector<8x128xf32>
    %cst_38 = arith.constant 5.000000e-01 : f32
    %94 = vector.broadcast %cst_38 : f32 to vector<8x128xf32>
    %95 = arith.addf %93, %94 : vector<8x128xf32>
    %96 = arith.mulf %85, %55 : vector<8x128xf32>
    %97 = arith.mulf %77, %87 : vector<8x128xf32>
    %98 = arith.addf %96, %97 : vector<8x128xf32>
    %99 = math.tanh %98 : vector<8x128xf32>
    %100 = arith.mulf %95, %99 : vector<8x128xf32>
    %c1_i32 = arith.constant 1 : i32
    %101 = arith.addi %8, %c1_i32 : i32
    %102 = vector.broadcast %101 : i32 to vector<8x1xi32>
    %103 = arith.cmpi sgt, %6, %102 : vector<8x1xi32>
    %104 = vector.shape_cast %103 : vector<8x1xi1> to vector<8x1xi1>
    %105 = vector.broadcast %104 : vector<8x1xi1> to vector<8x128xi1>
    %106 = arith.select %105, %100, %52 : vector<8x128xi1>, vector<8x128xf32>
    %107 = vector.shape_cast %103 : vector<8x1xi1> to vector<8x1xi1>
    %108 = vector.broadcast %107 : vector<8x1xi1> to vector<8x128xi1>
    %109 = arith.select %108, %98, %55 : vector<8x128xi1>, vector<8x128xf32>
    %cst_39 = arith.constant 0.000000e+00 : f32
    %110 = vector.shape_cast %103 : vector<8x1xi1> to vector<8x1xi1>
    %111 = vector.broadcast %110 : vector<8x1xi1> to vector<8x128xi1>
    %112 = vector.broadcast %cst_39 : f32 to vector<8x128xf32>
    %113 = arith.select %111, %100, %112 : vector<8x128xi1>, vector<8x128xf32>
    %c1_40 = arith.constant 1 : index
    %c0_41 = arith.constant 0 : index
    %c0_42 = arith.constant 0 : index
    %114 = vector.load %arg7[%c1_40, %c0_41, %c0_42] : memref<8x8x128xf32, #tpu.memory_space<vmem>>, vector<1x8x128xf32>
    %115 = vector.shape_cast %114 : vector<1x8x128xf32> to vector<8x128xf32>
    %116 = vector.shape_cast %113 : vector<8x128xf32> to vector<1x8x128xf32>
    tpu.vector_store %arg7[%c1_40, %c0_41, %c0_42], %116 {strides = array<i32>} : memref<8x8x128xf32, #tpu.memory_space<vmem>>, vector<1x8x128xf32>,
    %c2 = arith.constant 2 : index
    %c0_43 = arith.constant 0 : index
    %c0_44 = arith.constant 0 : index
    %117 = vector.load %arg2[%c2, %c0_43, %c0_44] : memref<8x8x512xbf16, #tpu.memory_space<vmem>>, vector<1x8x512xbf16>
    %118 = vector.shape_cast %117 : vector<1x8x512xbf16> to vector<8x512xbf16>
    %119 = arith.extf %118 : vector<8x512xbf16> to vector<8x512xf32>
    %120 = arith.addf %119, %7 : vector<8x512xf32>
    %121 = arith.truncf %106 : vector<8x128xf32> to vector<8x128xbf16>
    %cst_45 = arith.constant dense<0.000000e+00> : vector<8x512xf32>
    %122 = tpu.matmul %121, %5, %cst_45 {dimension_numbers = #tpu.dot_dimension_numbers<[1], [0], [0], [1], [0, 0, 1, 1], [], []>} : vector<8x128xbf16>, vector<128x512xbf16>, vector<8x512xf32> -> vector<8x512xf32>
    %123 = arith.addf %120, %122 : vector<8x512xf32>
    %124 = vector.extract_strided_slice %123 {offsets = [0, 0], sizes = [8, 128], strides = [1, 1]} : vector<8x512xf32> to vector<8x128xf32>
    %cst_46 = arith.constant 5.000000e-01 : f32
    %125 = vector.broadcast %cst_46 : f32 to vector<8x128xf32>
    %126 = arith.mulf %125, %124 : vector<8x128xf32>
    %127 = math.tanh %126 : vector<8x128xf32>
    %cst_47 = arith.constant 5.000000e-01 : f32
    %128 = vector.broadcast %cst_47 : f32 to vector<8x128xf32>
    %129 = arith.mulf %128, %127 : vector<8x128xf32>
    %cst_48 = arith.constant 5.000000e-01 : f32
    %130 = vector.broadcast %cst_48 : f32 to vector<8x128xf32>
    %131 = arith.addf %129, %130 : vector<8x128xf32>
    %132 = vector.extract_strided_slice %123 {offsets = [0, 128], sizes = [8, 128], strides = [1, 1]} : vector<8x512xf32> to vector<8x128xf32>
    %cst_49 = arith.constant 5.000000e-01 : f32
    %133 = vector.broadcast %cst_49 : f32 to vector<8x128xf32>
    %134 = arith.mulf %133, %132 : vector<8x128xf32>
    %135 = math.tanh %134 : vector<8x128xf32>
    %cst_50 = arith.constant 5.000000e-01 : f32
    %136 = vector.broadcast %cst_50 : f32 to vector<8x128xf32>
    %137 = arith.mulf %136, %135 : vector<8x128xf32>
    %cst_51 = arith.constant 5.000000e-01 : f32
    %138 = vector.broadcast %cst_51 : f32 to vector<8x128xf32>
    %139 = arith.addf %137, %138 : vector<8x128xf32>
    %140 = vector.extract_strided_slice %123 {offsets = [0, 256], sizes = [8, 128], strides = [1, 1]} : vector<8x512xf32> to vector<8x128xf32>
    %141 = math.tanh %140 : vector<8x128xf32>
    %142 = vector.extract_strided_slice %123 {offsets = [0, 384], sizes = [8, 128], strides = [1, 1]} : vector<8x512xf32> to vector<8x128xf32>
    %cst_52 = arith.constant 5.000000e-01 : f32
    %143 = vector.broadcast %cst_52 : f32 to vector<8x128xf32>
    %144 = arith.mulf %143, %142 : vector<8x128xf32>
    %145 = math.tanh %144 : vector<8x128xf32>
    %cst_53 = arith.constant 5.000000e-01 : f32
    %146 = vector.broadcast %cst_53 : f32 to vector<8x128xf32>
    %147 = arith.mulf %146, %145 : vector<8x128xf32>
    %cst_54 = arith.constant 5.000000e-01 : f32
    %148 = vector.broadcast %cst_54 : f32 to vector<8x128xf32>
    %149 = arith.addf %147, %148 : vector<8x128xf32>
    %150 = arith.mulf %139, %109 : vector<8x128xf32>
    %151 = arith.mulf %131, %141 : vector<8x128xf32>
    %152 = arith.addf %150, %151 : vector<8x128xf32>
    %153 = math.tanh %152 : vector<8x128xf32>
    %154 = arith.mulf %149, %153 : vector<8x128xf32>
    %c2_i32 = arith.constant 2 : i32
    %155 = arith.addi %8, %c2_i32 : i32
    %156 = vector.broadcast %155 : i32 to vector<8x1xi32>
    %157 = arith.cmpi sgt, %6, %156 : vector<8x1xi32>
    %158 = vector.shape_cast %157 : vector<8x1xi1> to vector<8x1xi1>
    %159 = vector.broadcast %158 : vector<8x1xi1> to vector<8x128xi1>
    %160 = arith.select %159, %154, %106 : vector<8x128xi1>, vector<8x128xf32>
    %161 = vector.shape_cast %157 : vector<8x1xi1> to vector<8x1xi1>
    %162 = vector.broadcast %161 : vector<8x1xi1> to vector<8x128xi1>
    %163 = arith.select %162, %152, %109 : vector<8x128xi1>, vector<8x128xf32>
    %cst_55 = arith.constant 0.000000e+00 : f32
    %164 = vector.shape_cast %157 : vector<8x1xi1> to vector<8x1xi1>
    %165 = vector.broadcast %164 : vector<8x1xi1> to vector<8x128xi1>
    %166 = vector.broadcast %cst_55 : f32 to vector<8x128xf32>
    %167 = arith.select %165, %154, %166 : vector<8x128xi1>, vector<8x128xf32>
    %c2_56 = arith.constant 2 : index
    %c0_57 = arith.constant 0 : index
    %c0_58 = arith.constant 0 : index
    %168 = vector.load %arg7[%c2_56, %c0_57, %c0_58] : memref<8x8x128xf32, #tpu.memory_space<vmem>>, vector<1x8x128xf32>
    %169 = vector.shape_cast %168 : vector<1x8x128xf32> to vector<8x128xf32>
    %170 = vector.shape_cast %167 : vector<8x128xf32> to vector<1x8x128xf32>
    tpu.vector_store %arg7[%c2_56, %c0_57, %c0_58], %170 {strides = array<i32>} : memref<8x8x128xf32, #tpu.memory_space<vmem>>, vector<1x8x128xf32>,
    %c3 = arith.constant 3 : index
    %c0_59 = arith.constant 0 : index
    %c0_60 = arith.constant 0 : index
    %171 = vector.load %arg2[%c3, %c0_59, %c0_60] : memref<8x8x512xbf16, #tpu.memory_space<vmem>>, vector<1x8x512xbf16>
    %172 = vector.shape_cast %171 : vector<1x8x512xbf16> to vector<8x512xbf16>
    %173 = arith.extf %172 : vector<8x512xbf16> to vector<8x512xf32>
    %174 = arith.addf %173, %7 : vector<8x512xf32>
    %175 = arith.truncf %160 : vector<8x128xf32> to vector<8x128xbf16>
    %cst_61 = arith.constant dense<0.000000e+00> : vector<8x512xf32>
    %176 = tpu.matmul %175, %5, %cst_61 {dimension_numbers = #tpu.dot_dimension_numbers<[1], [0], [0], [1], [0, 0, 1, 1], [], []>} : vector<8x128xbf16>, vector<128x512xbf16>, vector<8x512xf32> -> vector<8x512xf32>
    %177 = arith.addf %174, %176 : vector<8x512xf32>
    %178 = vector.extract_strided_slice %177 {offsets = [0, 0], sizes = [8, 128], strides = [1, 1]} : vector<8x512xf32> to vector<8x128xf32>
    %cst_62 = arith.constant 5.000000e-01 : f32
    %179 = vector.broadcast %cst_62 : f32 to vector<8x128xf32>
    %180 = arith.mulf %179, %178 : vector<8x128xf32>
    %181 = math.tanh %180 : vector<8x128xf32>
    %cst_63 = arith.constant 5.000000e-01 : f32
    %182 = vector.broadcast %cst_63 : f32 to vector<8x128xf32>
    %183 = arith.mulf %182, %181 : vector<8x128xf32>
    %cst_64 = arith.constant 5.000000e-01 : f32
    %184 = vector.broadcast %cst_64 : f32 to vector<8x128xf32>
    %185 = arith.addf %183, %184 : vector<8x128xf32>
    %186 = vector.extract_strided_slice %177 {offsets = [0, 128], sizes = [8, 128], strides = [1, 1]} : vector<8x512xf32> to vector<8x128xf32>
    %cst_65 = arith.constant 5.000000e-01 : f32
    %187 = vector.broadcast %cst_65 : f32 to vector<8x128xf32>
    %188 = arith.mulf %187, %186 : vector<8x128xf32>
    %189 = math.tanh %188 : vector<8x128xf32>
    %cst_66 = arith.constant 5.000000e-01 : f32
    %190 = vector.broadcast %cst_66 : f32 to vector<8x128xf32>
    %191 = arith.mulf %190, %189 : vector<8x128xf32>
    %cst_67 = arith.constant 5.000000e-01 : f32
    %192 = vector.broadcast %cst_67 : f32 to vector<8x128xf32>
    %193 = arith.addf %191, %192 : vector<8x128xf32>
    %194 = vector.extract_strided_slice %177 {offsets = [0, 256], sizes = [8, 128], strides = [1, 1]} : vector<8x512xf32> to vector<8x128xf32>
    %195 = math.tanh %194 : vector<8x128xf32>
    %196 = vector.extract_strided_slice %177 {offsets = [0, 384], sizes = [8, 128], strides = [1, 1]} : vector<8x512xf32> to vector<8x128xf32>
    %cst_68 = arith.constant 5.000000e-01 : f32
    %197 = vector.broadcast %cst_68 : f32 to vector<8x128xf32>
    %198 = arith.mulf %197, %196 : vector<8x128xf32>
    %199 = math.tanh %198 : vector<8x128xf32>
    %cst_69 = arith.constant 5.000000e-01 : f32
    %200 = vector.broadcast %cst_69 : f32 to vector<8x128xf32>
    %201 = arith.mulf %200, %199 : vector<8x128xf32>
    %cst_70 = arith.constant 5.000000e-01 : f32
    %202 = vector.broadcast %cst_70 : f32 to vector<8x128xf32>
    %203 = arith.addf %201, %202 : vector<8x128xf32>
    %204 = arith.mulf %193, %163 : vector<8x128xf32>
    %205 = arith.mulf %185, %195 : vector<8x128xf32>
    %206 = arith.addf %204, %205 : vector<8x128xf32>
    %207 = math.tanh %206 : vector<8x128xf32>
    %208 = arith.mulf %203, %207 : vector<8x128xf32>
    %c3_i32 = arith.constant 3 : i32
    %209 = arith.addi %8, %c3_i32 : i32
    %210 = vector.broadcast %209 : i32 to vector<8x1xi32>
    %211 = arith.cmpi sgt, %6, %210 : vector<8x1xi32>
    %212 = vector.shape_cast %211 : vector<8x1xi1> to vector<8x1xi1>
    %213 = vector.broadcast %212 : vector<8x1xi1> to vector<8x128xi1>
    %214 = arith.select %213, %208, %160 : vector<8x128xi1>, vector<8x128xf32>
    %215 = vector.shape_cast %211 : vector<8x1xi1> to vector<8x1xi1>
    %216 = vector.broadcast %215 : vector<8x1xi1> to vector<8x128xi1>
    %217 = arith.select %216, %206, %163 : vector<8x128xi1>, vector<8x128xf32>
    %cst_71 = arith.constant 0.000000e+00 : f32
    %218 = vector.shape_cast %211 : vector<8x1xi1> to vector<8x1xi1>
    %219 = vector.broadcast %218 : vector<8x1xi1> to vector<8x128xi1>
    %220 = vector.broadcast %cst_71 : f32 to vector<8x128xf32>
    %221 = arith.select %219, %208, %220 : vector<8x128xi1>, vector<8x128xf32>
    %c3_72 = arith.constant 3 : index
    %c0_73 = arith.constant 0 : index
    %c0_74 = arith.constant 0 : index
    %222 = vector.load %arg7[%c3_72, %c0_73, %c0_74] : memref<8x8x128xf32, #tpu.memory_space<vmem>>, vector<1x8x128xf32>
    %223 = vector.shape_cast %222 : vector<1x8x128xf32> to vector<8x128xf32>
    %224 = vector.shape_cast %221 : vector<8x128xf32> to vector<1x8x128xf32>
    tpu.vector_store %arg7[%c3_72, %c0_73, %c0_74], %224 {strides = array<i32>} : memref<8x8x128xf32, #tpu.memory_space<vmem>>, vector<1x8x128xf32>,
    %c4 = arith.constant 4 : index
    %c0_75 = arith.constant 0 : index
    %c0_76 = arith.constant 0 : index
    %225 = vector.load %arg2[%c4, %c0_75, %c0_76] : memref<8x8x512xbf16, #tpu.memory_space<vmem>>, vector<1x8x512xbf16>
    %226 = vector.shape_cast %225 : vector<1x8x512xbf16> to vector<8x512xbf16>
    %227 = arith.extf %226 : vector<8x512xbf16> to vector<8x512xf32>
    %228 = arith.addf %227, %7 : vector<8x512xf32>
    %229 = arith.truncf %214 : vector<8x128xf32> to vector<8x128xbf16>
    %cst_77 = arith.constant dense<0.000000e+00> : vector<8x512xf32>
    %230 = tpu.matmul %229, %5, %cst_77 {dimension_numbers = #tpu.dot_dimension_numbers<[1], [0], [0], [1], [0, 0, 1, 1], [], []>} : vector<8x128xbf16>, vector<128x512xbf16>, vector<8x512xf32> -> vector<8x512xf32>
    %231 = arith.addf %228, %230 : vector<8x512xf32>
    %232 = vector.extract_strided_slice %231 {offsets = [0, 0], sizes = [8, 128], strides = [1, 1]} : vector<8x512xf32> to vector<8x128xf32>
    %cst_78 = arith.constant 5.000000e-01 : f32
    %233 = vector.broadcast %cst_78 : f32 to vector<8x128xf32>
    %234 = arith.mulf %233, %232 : vector<8x128xf32>
    %235 = math.tanh %234 : vector<8x128xf32>
    %cst_79 = arith.constant 5.000000e-01 : f32
    %236 = vector.broadcast %cst_79 : f32 to vector<8x128xf32>
    %237 = arith.mulf %236, %235 : vector<8x128xf32>
    %cst_80 = arith.constant 5.000000e-01 : f32
    %238 = vector.broadcast %cst_80 : f32 to vector<8x128xf32>
    %239 = arith.addf %237, %238 : vector<8x128xf32>
    %240 = vector.extract_strided_slice %231 {offsets = [0, 128], sizes = [8, 128], strides = [1, 1]} : vector<8x512xf32> to vector<8x128xf32>
    %cst_81 = arith.constant 5.000000e-01 : f32
    %241 = vector.broadcast %cst_81 : f32 to vector<8x128xf32>
    %242 = arith.mulf %241, %240 : vector<8x128xf32>
    %243 = math.tanh %242 : vector<8x128xf32>
    %cst_82 = arith.constant 5.000000e-01 : f32
    %244 = vector.broadcast %cst_82 : f32 to vector<8x128xf32>
    %245 = arith.mulf %244, %243 : vector<8x128xf32>
    %cst_83 = arith.constant 5.000000e-01 : f32
    %246 = vector.broadcast %cst_83 : f32 to vector<8x128xf32>
    %247 = arith.addf %245, %246 : vector<8x128xf32>
    %248 = vector.extract_strided_slice %231 {offsets = [0, 256], sizes = [8, 128], strides = [1, 1]} : vector<8x512xf32> to vector<8x128xf32>
    %249 = math.tanh %248 : vector<8x128xf32>
    %250 = vector.extract_strided_slice %231 {offsets = [0, 384], sizes = [8, 128], strides = [1, 1]} : vector<8x512xf32> to vector<8x128xf32>
    %cst_84 = arith.constant 5.000000e-01 : f32
    %251 = vector.broadcast %cst_84 : f32 to vector<8x128xf32>
    %252 = arith.mulf %251, %250 : vector<8x128xf32>
    %253 = math.tanh %252 : vector<8x128xf32>
    %cst_85 = arith.constant 5.000000e-01 : f32
    %254 = vector.broadcast %cst_85 : f32 to vector<8x128xf32>
    %255 = arith.mulf %254, %253 : vector<8x128xf32>
    %cst_86 = arith.constant 5.000000e-01 : f32
    %256 = vector.broadcast %cst_86 : f32 to vector<8x128xf32>
    %257 = arith.addf %255, %256 : vector<8x128xf32>
    %258 = arith.mulf %247, %217 : vector<8x128xf32>
    %259 = arith.mulf %239, %249 : vector<8x128xf32>
    %260 = arith.addf %258, %259 : vector<8x128xf32>
    %261 = math.tanh %260 : vector<8x128xf32>
    %262 = arith.mulf %257, %261 : vector<8x128xf32>
    %c4_i32 = arith.constant 4 : i32
    %263 = arith.addi %8, %c4_i32 : i32
    %264 = vector.broadcast %263 : i32 to vector<8x1xi32>
    %265 = arith.cmpi sgt, %6, %264 : vector<8x1xi32>
    %266 = vector.shape_cast %265 : vector<8x1xi1> to vector<8x1xi1>
    %267 = vector.broadcast %266 : vector<8x1xi1> to vector<8x128xi1>
    %268 = arith.select %267, %262, %214 : vector<8x128xi1>, vector<8x128xf32>
    %269 = vector.shape_cast %265 : vector<8x1xi1> to vector<8x1xi1>
    %270 = vector.broadcast %269 : vector<8x1xi1> to vector<8x128xi1>
    %271 = arith.select %270, %260, %217 : vector<8x128xi1>, vector<8x128xf32>
    %cst_87 = arith.constant 0.000000e+00 : f32
    %272 = vector.shape_cast %265 : vector<8x1xi1> to vector<8x1xi1>
    %273 = vector.broadcast %272 : vector<8x1xi1> to vector<8x128xi1>
    %274 = vector.broadcast %cst_87 : f32 to vector<8x128xf32>
    %275 = arith.select %273, %262, %274 : vector<8x128xi1>, vector<8x128xf32>
    %c4_88 = arith.constant 4 : index
    %c0_89 = arith.constant 0 : index
    %c0_90 = arith.constant 0 : index
    %276 = vector.load %arg7[%c4_88, %c0_89, %c0_90] : memref<8x8x128xf32, #tpu.memory_space<vmem>>, vector<1x8x128xf32>
    %277 = vector.shape_cast %276 : vector<1x8x128xf32> to vector<8x128xf32>
    %278 = vector.shape_cast %275 : vector<8x128xf32> to vector<1x8x128xf32>
    tpu.vector_store %arg7[%c4_88, %c0_89, %c0_90], %278 {strides = array<i32>} : memref<8x8x128xf32, #tpu.memory_space<vmem>>, vector<1x8x128xf32>,
    %c5 = arith.constant 5 : index
    %c0_91 = arith.constant 0 : index
    %c0_92 = arith.constant 0 : index
    %279 = vector.load %arg2[%c5, %c0_91, %c0_92] : memref<8x8x512xbf16, #tpu.memory_space<vmem>>, vector<1x8x512xbf16>
    %280 = vector.shape_cast %279 : vector<1x8x512xbf16> to vector<8x512xbf16>
    %281 = arith.extf %280 : vector<8x512xbf16> to vector<8x512xf32>
    %282 = arith.addf %281, %7 : vector<8x512xf32>
    %283 = arith.truncf %268 : vector<8x128xf32> to vector<8x128xbf16>
    %cst_93 = arith.constant dense<0.000000e+00> : vector<8x512xf32>
    %284 = tpu.matmul %283, %5, %cst_93 {dimension_numbers = #tpu.dot_dimension_numbers<[1], [0], [0], [1], [0, 0, 1, 1], [], []>} : vector<8x128xbf16>, vector<128x512xbf16>, vector<8x512xf32> -> vector<8x512xf32>
    %285 = arith.addf %282, %284 : vector<8x512xf32>
    %286 = vector.extract_strided_slice %285 {offsets = [0, 0], sizes = [8, 128], strides = [1, 1]} : vector<8x512xf32> to vector<8x128xf32>
    %cst_94 = arith.constant 5.000000e-01 : f32
    %287 = vector.broadcast %cst_94 : f32 to vector<8x128xf32>
    %288 = arith.mulf %287, %286 : vector<8x128xf32>
    %289 = math.tanh %288 : vector<8x128xf32>
    %cst_95 = arith.constant 5.000000e-01 : f32
    %290 = vector.broadcast %cst_95 : f32 to vector<8x128xf32>
    %291 = arith.mulf %290, %289 : vector<8x128xf32>
    %cst_96 = arith.constant 5.000000e-01 : f32
    %292 = vector.broadcast %cst_96 : f32 to vector<8x128xf32>
    %293 = arith.addf %291, %292 : vector<8x128xf32>
    %294 = vector.extract_strided_slice %285 {offsets = [0, 128], sizes = [8, 128], strides = [1, 1]} : vector<8x512xf32> to vector<8x128xf32>
    %cst_97 = arith.constant 5.000000e-01 : f32
    %295 = vector.broadcast %cst_97 : f32 to vector<8x128xf32>
    %296 = arith.mulf %295, %294 : vector<8x128xf32>
    %297 = math.tanh %296 : vector<8x128xf32>
    %cst_98 = arith.constant 5.000000e-01 : f32
    %298 = vector.broadcast %cst_98 : f32 to vector<8x128xf32>
    %299 = arith.mulf %298, %297 : vector<8x128xf32>
    %cst_99 = arith.constant 5.000000e-01 : f32
    %300 = vector.broadcast %cst_99 : f32 to vector<8x128xf32>
    %301 = arith.addf %299, %300 : vector<8x128xf32>
    %302 = vector.extract_strided_slice %285 {offsets = [0, 256], sizes = [8, 128], strides = [1, 1]} : vector<8x512xf32> to vector<8x128xf32>
    %303 = math.tanh %302 : vector<8x128xf32>
    %304 = vector.extract_strided_slice %285 {offsets = [0, 384], sizes = [8, 128], strides = [1, 1]} : vector<8x512xf32> to vector<8x128xf32>
    %cst_100 = arith.constant 5.000000e-01 : f32
    %305 = vector.broadcast %cst_100 : f32 to vector<8x128xf32>
    %306 = arith.mulf %305, %304 : vector<8x128xf32>
    %307 = math.tanh %306 : vector<8x128xf32>
    %cst_101 = arith.constant 5.000000e-01 : f32
    %308 = vector.broadcast %cst_101 : f32 to vector<8x128xf32>
    %309 = arith.mulf %308, %307 : vector<8x128xf32>
    %cst_102 = arith.constant 5.000000e-01 : f32
    %310 = vector.broadcast %cst_102 : f32 to vector<8x128xf32>
    %311 = arith.addf %309, %310 : vector<8x128xf32>
    %312 = arith.mulf %301, %271 : vector<8x128xf32>
    %313 = arith.mulf %293, %303 : vector<8x128xf32>
    %314 = arith.addf %312, %313 : vector<8x128xf32>
    %315 = math.tanh %314 : vector<8x128xf32>
    %316 = arith.mulf %311, %315 : vector<8x128xf32>
    %c5_i32 = arith.constant 5 : i32
    %317 = arith.addi %8, %c5_i32 : i32
    %318 = vector.broadcast %317 : i32 to vector<8x1xi32>
    %319 = arith.cmpi sgt, %6, %318 : vector<8x1xi32>
    %320 = vector.shape_cast %319 : vector<8x1xi1> to vector<8x1xi1>
    %321 = vector.broadcast %320 : vector<8x1xi1> to vector<8x128xi1>
    %322 = arith.select %321, %316, %268 : vector<8x128xi1>, vector<8x128xf32>
    %323 = vector.shape_cast %319 : vector<8x1xi1> to vector<8x1xi1>
    %324 = vector.broadcast %323 : vector<8x1xi1> to vector<8x128xi1>
    %325 = arith.select %324, %314, %271 : vector<8x128xi1>, vector<8x128xf32>
    %cst_103 = arith.constant 0.000000e+00 : f32
    %326 = vector.shape_cast %319 : vector<8x1xi1> to vector<8x1xi1>
    %327 = vector.broadcast %326 : vector<8x1xi1> to vector<8x128xi1>
    %328 = vector.broadcast %cst_103 : f32 to vector<8x128xf32>
    %329 = arith.select %327, %316, %328 : vector<8x128xi1>, vector<8x128xf32>
    %c5_104 = arith.constant 5 : index
    %c0_105 = arith.constant 0 : index
    %c0_106 = arith.constant 0 : index
    %330 = vector.load %arg7[%c5_104, %c0_105, %c0_106] : memref<8x8x128xf32, #tpu.memory_space<vmem>>, vector<1x8x128xf32>
    %331 = vector.shape_cast %330 : vector<1x8x128xf32> to vector<8x128xf32>
    %332 = vector.shape_cast %329 : vector<8x128xf32> to vector<1x8x128xf32>
    tpu.vector_store %arg7[%c5_104, %c0_105, %c0_106], %332 {strides = array<i32>} : memref<8x8x128xf32, #tpu.memory_space<vmem>>, vector<1x8x128xf32>,
    %c6 = arith.constant 6 : index
    %c0_107 = arith.constant 0 : index
    %c0_108 = arith.constant 0 : index
    %333 = vector.load %arg2[%c6, %c0_107, %c0_108] : memref<8x8x512xbf16, #tpu.memory_space<vmem>>, vector<1x8x512xbf16>
    %334 = vector.shape_cast %333 : vector<1x8x512xbf16> to vector<8x512xbf16>
    %335 = arith.extf %334 : vector<8x512xbf16> to vector<8x512xf32>
    %336 = arith.addf %335, %7 : vector<8x512xf32>
    %337 = arith.truncf %322 : vector<8x128xf32> to vector<8x128xbf16>
    %cst_109 = arith.constant dense<0.000000e+00> : vector<8x512xf32>
    %338 = tpu.matmul %337, %5, %cst_109 {dimension_numbers = #tpu.dot_dimension_numbers<[1], [0], [0], [1], [0, 0, 1, 1], [], []>} : vector<8x128xbf16>, vector<128x512xbf16>, vector<8x512xf32> -> vector<8x512xf32>
    %339 = arith.addf %336, %338 : vector<8x512xf32>
    %340 = vector.extract_strided_slice %339 {offsets = [0, 0], sizes = [8, 128], strides = [1, 1]} : vector<8x512xf32> to vector<8x128xf32>
    %cst_110 = arith.constant 5.000000e-01 : f32
    %341 = vector.broadcast %cst_110 : f32 to vector<8x128xf32>
    %342 = arith.mulf %341, %340 : vector<8x128xf32>
    %343 = math.tanh %342 : vector<8x128xf32>
    %cst_111 = arith.constant 5.000000e-01 : f32
    %344 = vector.broadcast %cst_111 : f32 to vector<8x128xf32>
    %345 = arith.mulf %344, %343 : vector<8x128xf32>
    %cst_112 = arith.constant 5.000000e-01 : f32
    %346 = vector.broadcast %cst_112 : f32 to vector<8x128xf32>
    %347 = arith.addf %345, %346 : vector<8x128xf32>
    %348 = vector.extract_strided_slice %339 {offsets = [0, 128], sizes = [8, 128], strides = [1, 1]} : vector<8x512xf32> to vector<8x128xf32>
    %cst_113 = arith.constant 5.000000e-01 : f32
    %349 = vector.broadcast %cst_113 : f32 to vector<8x128xf32>
    %350 = arith.mulf %349, %348 : vector<8x128xf32>
    %351 = math.tanh %350 : vector<8x128xf32>
    %cst_114 = arith.constant 5.000000e-01 : f32
    %352 = vector.broadcast %cst_114 : f32 to vector<8x128xf32>
    %353 = arith.mulf %352, %351 : vector<8x128xf32>
    %cst_115 = arith.constant 5.000000e-01 : f32
    %354 = vector.broadcast %cst_115 : f32 to vector<8x128xf32>
    %355 = arith.addf %353, %354 : vector<8x128xf32>
    %356 = vector.extract_strided_slice %339 {offsets = [0, 256], sizes = [8, 128], strides = [1, 1]} : vector<8x512xf32> to vector<8x128xf32>
    %357 = math.tanh %356 : vector<8x128xf32>
    %358 = vector.extract_strided_slice %339 {offsets = [0, 384], sizes = [8, 128], strides = [1, 1]} : vector<8x512xf32> to vector<8x128xf32>
    %cst_116 = arith.constant 5.000000e-01 : f32
    %359 = vector.broadcast %cst_116 : f32 to vector<8x128xf32>
    %360 = arith.mulf %359, %358 : vector<8x128xf32>
    %361 = math.tanh %360 : vector<8x128xf32>
    %cst_117 = arith.constant 5.000000e-01 : f32
    %362 = vector.broadcast %cst_117 : f32 to vector<8x128xf32>
    %363 = arith.mulf %362, %361 : vector<8x128xf32>
    %cst_118 = arith.constant 5.000000e-01 : f32
    %364 = vector.broadcast %cst_118 : f32 to vector<8x128xf32>
    %365 = arith.addf %363, %364 : vector<8x128xf32>
    %366 = arith.mulf %355, %325 : vector<8x128xf32>
    %367 = arith.mulf %347, %357 : vector<8x128xf32>
    %368 = arith.addf %366, %367 : vector<8x128xf32>
    %369 = math.tanh %368 : vector<8x128xf32>
    %370 = arith.mulf %365, %369 : vector<8x128xf32>
    %c6_i32 = arith.constant 6 : i32
    %371 = arith.addi %8, %c6_i32 : i32
    %372 = vector.broadcast %371 : i32 to vector<8x1xi32>
    %373 = arith.cmpi sgt, %6, %372 : vector<8x1xi32>
    %374 = vector.shape_cast %373 : vector<8x1xi1> to vector<8x1xi1>
    %375 = vector.broadcast %374 : vector<8x1xi1> to vector<8x128xi1>
    %376 = arith.select %375, %370, %322 : vector<8x128xi1>, vector<8x128xf32>
    %377 = vector.shape_cast %373 : vector<8x1xi1> to vector<8x1xi1>
    %378 = vector.broadcast %377 : vector<8x1xi1> to vector<8x128xi1>
    %379 = arith.select %378, %368, %325 : vector<8x128xi1>, vector<8x128xf32>
    %cst_119 = arith.constant 0.000000e+00 : f32
    %380 = vector.shape_cast %373 : vector<8x1xi1> to vector<8x1xi1>
    %381 = vector.broadcast %380 : vector<8x1xi1> to vector<8x128xi1>
    %382 = vector.broadcast %cst_119 : f32 to vector<8x128xf32>
    %383 = arith.select %381, %370, %382 : vector<8x128xi1>, vector<8x128xf32>
    %c6_120 = arith.constant 6 : index
    %c0_121 = arith.constant 0 : index
    %c0_122 = arith.constant 0 : index
    %384 = vector.load %arg7[%c6_120, %c0_121, %c0_122] : memref<8x8x128xf32, #tpu.memory_space<vmem>>, vector<1x8x128xf32>
    %385 = vector.shape_cast %384 : vector<1x8x128xf32> to vector<8x128xf32>
    %386 = vector.shape_cast %383 : vector<8x128xf32> to vector<1x8x128xf32>
    tpu.vector_store %arg7[%c6_120, %c0_121, %c0_122], %386 {strides = array<i32>} : memref<8x8x128xf32, #tpu.memory_space<vmem>>, vector<1x8x128xf32>,
    %c7 = arith.constant 7 : index
    %c0_123 = arith.constant 0 : index
    %c0_124 = arith.constant 0 : index
    %387 = vector.load %arg2[%c7, %c0_123, %c0_124] : memref<8x8x512xbf16, #tpu.memory_space<vmem>>, vector<1x8x512xbf16>
    %388 = vector.shape_cast %387 : vector<1x8x512xbf16> to vector<8x512xbf16>
    %389 = arith.extf %388 : vector<8x512xbf16> to vector<8x512xf32>
    %390 = arith.addf %389, %7 : vector<8x512xf32>
    %391 = arith.truncf %376 : vector<8x128xf32> to vector<8x128xbf16>
    %cst_125 = arith.constant dense<0.000000e+00> : vector<8x512xf32>
    %392 = tpu.matmul %391, %5, %cst_125 {dimension_numbers = #tpu.dot_dimension_numbers<[1], [0], [0], [1], [0, 0, 1, 1], [], []>} : vector<8x128xbf16>, vector<128x512xbf16>, vector<8x512xf32> -> vector<8x512xf32>
    %393 = arith.addf %390, %392 : vector<8x512xf32>
    %394 = vector.extract_strided_slice %393 {offsets = [0, 0], sizes = [8, 128], strides = [1, 1]} : vector<8x512xf32> to vector<8x128xf32>
    %cst_126 = arith.constant 5.000000e-01 : f32
    %395 = vector.broadcast %cst_126 : f32 to vector<8x128xf32>
    %396 = arith.mulf %395, %394 : vector<8x128xf32>
    %397 = math.tanh %396 : vector<8x128xf32>
    %cst_127 = arith.constant 5.000000e-01 : f32
    %398 = vector.broadcast %cst_127 : f32 to vector<8x128xf32>
    %399 = arith.mulf %398, %397 : vector<8x128xf32>
    %cst_128 = arith.constant 5.000000e-01 : f32
    %400 = vector.broadcast %cst_128 : f32 to vector<8x128xf32>
    %401 = arith.addf %399, %400 : vector<8x128xf32>
    %402 = vector.extract_strided_slice %393 {offsets = [0, 128], sizes = [8, 128], strides = [1, 1]} : vector<8x512xf32> to vector<8x128xf32>
    %cst_129 = arith.constant 5.000000e-01 : f32
    %403 = vector.broadcast %cst_129 : f32 to vector<8x128xf32>
    %404 = arith.mulf %403, %402 : vector<8x128xf32>
    %405 = math.tanh %404 : vector<8x128xf32>
    %cst_130 = arith.constant 5.000000e-01 : f32
    %406 = vector.broadcast %cst_130 : f32 to vector<8x128xf32>
    %407 = arith.mulf %406, %405 : vector<8x128xf32>
    %cst_131 = arith.constant 5.000000e-01 : f32
    %408 = vector.broadcast %cst_131 : f32 to vector<8x128xf32>
    %409 = arith.addf %407, %408 : vector<8x128xf32>
    %410 = vector.extract_strided_slice %393 {offsets = [0, 256], sizes = [8, 128], strides = [1, 1]} : vector<8x512xf32> to vector<8x128xf32>
    %411 = math.tanh %410 : vector<8x128xf32>
    %412 = vector.extract_strided_slice %393 {offsets = [0, 384], sizes = [8, 128], strides = [1, 1]} : vector<8x512xf32> to vector<8x128xf32>
    %cst_132 = arith.constant 5.000000e-01 : f32
    %413 = vector.broadcast %cst_132 : f32 to vector<8x128xf32>
    %414 = arith.mulf %413, %412 : vector<8x128xf32>
    %415 = math.tanh %414 : vector<8x128xf32>
    %cst_133 = arith.constant 5.000000e-01 : f32
    %416 = vector.broadcast %cst_133 : f32 to vector<8x128xf32>
    %417 = arith.mulf %416, %415 : vector<8x128xf32>
    %cst_134 = arith.constant 5.000000e-01 : f32
    %418 = vector.broadcast %cst_134 : f32 to vector<8x128xf32>
    %419 = arith.addf %417, %418 : vector<8x128xf32>
    %420 = arith.mulf %409, %379 : vector<8x128xf32>
    %421 = arith.mulf %401, %411 : vector<8x128xf32>
    %422 = arith.addf %420, %421 : vector<8x128xf32>
    %423 = math.tanh %422 : vector<8x128xf32>
    %424 = arith.mulf %419, %423 : vector<8x128xf32>
    %c7_i32 = arith.constant 7 : i32
    %425 = arith.addi %8, %c7_i32 : i32
    %426 = vector.broadcast %425 : i32 to vector<8x1xi32>
    %427 = arith.cmpi sgt, %6, %426 : vector<8x1xi32>
    %428 = vector.shape_cast %427 : vector<8x1xi1> to vector<8x1xi1>
    %429 = vector.broadcast %428 : vector<8x1xi1> to vector<8x128xi1>
    %430 = arith.select %429, %424, %376 : vector<8x128xi1>, vector<8x128xf32>
    %431 = vector.shape_cast %427 : vector<8x1xi1> to vector<8x1xi1>
    %432 = vector.broadcast %431 : vector<8x1xi1> to vector<8x128xi1>
    %433 = arith.select %432, %422, %379 : vector<8x128xi1>, vector<8x128xf32>
    %cst_135 = arith.constant 0.000000e+00 : f32
    %434 = vector.shape_cast %427 : vector<8x1xi1> to vector<8x1xi1>
    %435 = vector.broadcast %434 : vector<8x1xi1> to vector<8x128xi1>
    %436 = vector.broadcast %cst_135 : f32 to vector<8x128xf32>
    %437 = arith.select %435, %424, %436 : vector<8x128xi1>, vector<8x128xf32>
    %c7_136 = arith.constant 7 : index
    %c0_137 = arith.constant 0 : index
    %c0_138 = arith.constant 0 : index
    %438 = vector.load %arg7[%c7_136, %c0_137, %c0_138] : memref<8x8x128xf32, #tpu.memory_space<vmem>>, vector<1x8x128xf32>
    %439 = vector.shape_cast %438 : vector<1x8x128xf32> to vector<8x128xf32>
    %440 = vector.shape_cast %437 : vector<8x128xf32> to vector<1x8x128xf32>
    tpu.vector_store %arg7[%c7_136, %c0_137, %c0_138], %440 {strides = array<i32>} : memref<8x8x128xf32, #tpu.memory_space<vmem>>, vector<1x8x128xf32>,
    %c0_139 = arith.constant 0 : index
    %c0_140 = arith.constant 0 : index
    %441 = vector.load %arg8[%c0_139, %c0_140] : memref<8x128xf32, #tpu.memory_space<vmem>>, vector<8x128xf32>
    tpu.vector_store %arg8[%c0_139, %c0_140], %430 {strides = array<i32>} : memref<8x128xf32, #tpu.memory_space<vmem>>, vector<8x128xf32>,
    %c0_141 = arith.constant 0 : index
    %c0_142 = arith.constant 0 : index
    %442 = vector.load %arg9[%c0_141, %c0_142] : memref<8x128xf32, #tpu.memory_space<vmem>>, vector<8x128xf32>
    tpu.vector_store %arg9[%c0_141, %c0_142], %433 {strides = array<i32>} : memref<8x128xf32, #tpu.memory_space<vmem>>, vector<8x128xf32>,
    return
  }
  func.func @transform_0(%arg0: i32) -> (i32, i32) {
    %c0_i32 = arith.constant 0 : i32
    %c0_i32_0 = arith.constant 0 : i32
    %c0_i32_1 = arith.constant 0 : i32
    return %c0_i32, %c0_i32_0 : i32, i32
  }
  func.func @transform_1(%arg0: i32) -> (i32, i32, i32) {
    %c0_i32 = arith.constant 0 : i32
    %c0_i32_0 = arith.constant 0 : i32
    %c0_i32_1 = arith.constant 0 : i32
    return %arg0, %c0_i32, %c0_i32_0 : i32, i32, i32
  }
  func.func @transform_2(%arg0: i32) -> (i32, i32) {
    %c0_i32 = arith.constant 0 : i32
    %c0_i32_0 = arith.constant 0 : i32
    %c0_i32_1 = arith.constant 0 : i32
    return %c0_i32, %c0_i32_0 : i32, i32
  }
  func.func @transform_3(%arg0: i32) -> (i32, i32) {
    %c0_i32 = arith.constant 0 : i32
    %c0_i32_0 = arith.constant 0 : i32
    %c0_i32_1 = arith.constant 0 : i32
    return %c0_i32, %c0_i32_0 : i32, i32
  }
  func.func @transform_4(%arg0: i32) -> (i32, i32) {
    %c0_i32 = arith.constant 0 : i32
    %c0_i32_0 = arith.constant 0 : i32
    %c0_i32_1 = arith.constant 0 : i32
    return %c0_i32, %c0_i32_0 : i32, i32
  }
  func.func @transform_5(%arg0: i32) -> (i32, i32) {
    %c0_i32 = arith.constant 0 : i32
    %c0_i32_0 = arith.constant 0 : i32
    %c0_i32_1 = arith.constant 0 : i32
    return %c0_i32, %c0_i32_0 : i32, i32
  }
  func.func @transform_6(%arg0: i32) -> (i32, i32, i32) {
    %c0_i32 = arith.constant 0 : i32
    %c0_i32_0 = arith.constant 0 : i32
    %c0_i32_1 = arith.constant 0 : i32
    return %arg0, %c0_i32, %c0_i32_0 : i32, i32, i32
  }
  func.func @transform_7(%arg0: i32) -> (i32, i32) {
    %c0_i32 = arith.constant 0 : i32
    %c0_i32_0 = arith.constant 0 : i32
    %c0_i32_1 = arith.constant 0 : i32
    return %c0_i32, %c0_i32_0 : i32, i32
  }
  func.func @transform_8(%arg0: i32) -> (i32, i32) {
    %c0_i32 = arith.constant 0 : i32
    %c0_i32_0 = arith.constant 0 : i32
    %c0_i32_1 = arith.constant 0 : i32
    return %c0_i32, %c0_i32_0 : i32, i32
  }
}

module attributes {stable_mosaic.version = 11 : i64} {
  func.func @_matmul_bias_kernel(%arg0: i32, %arg1: i32, %arg2: memref<16x128xbf16, #tpu.memory_space<vmem>>, %arg3: memref<128x128xbf16, #tpu.memory_space<vmem>>, %arg4: memref<1x128xf32, #tpu.memory_space<vmem>>, %arg5: memref<16x128xf32, #tpu.memory_space<vmem>>) attributes {dimension_semantics = [#tpu.dimension_semantics<parallel>, #tpu.dimension_semantics<parallel>], iteration_bounds = array<i64: 1, 1>, scalar_prefetch = 0 : i64, scratch_operands = 0 : i64, tpu.core_type = #tpu.core_type<tc>, window_params = [{transform_indices = @transform_0, window_bounds = array<i64: 16, 128>}, {transform_indices = @transform_1, window_bounds = array<i64: 128, 128>}, {transform_indices = @transform_2, window_bounds = array<i64: 1, 128>}, {transform_indices = @transform_3, window_bounds = array<i64: 16, 128>}]} {
    %c0 = arith.constant 0 : index
    %c0_0 = arith.constant 0 : index
    %0 = vector.load %arg2[%c0, %c0_0] : memref<16x128xbf16, #tpu.memory_space<vmem>>, vector<16x128xbf16>
    %c0_1 = arith.constant 0 : index
    %c0_2 = arith.constant 0 : index
    %1 = vector.load %arg3[%c0_1, %c0_2] : memref<128x128xbf16, #tpu.memory_space<vmem>>, vector<128x128xbf16>
    %cst = arith.constant dense<0.000000e+00> : vector<16x128xf32>
    %2 = tpu.matmul %0, %1, %cst {dimension_numbers = #tpu.dot_dimension_numbers<[1], [0], [0], [1], [0, 0, 1, 1], [], []>} : vector<16x128xbf16>, vector<128x128xbf16>, vector<16x128xf32> -> vector<16x128xf32>
    %c0_3 = arith.constant 0 : index
    %c0_4 = arith.constant 0 : index
    %3 = vector.load %arg4[%c0_3, %c0_4] : memref<1x128xf32, #tpu.memory_space<vmem>>, vector<1x128xf32>
    %4 = vector.broadcast %3 : vector<1x128xf32> to vector<16x128xf32>
    %5 = arith.addf %2, %4 : vector<16x128xf32>
    %c0_5 = arith.constant 0 : index
    %c0_6 = arith.constant 0 : index
    %6 = vector.load %arg5[%c0_5, %c0_6] : memref<16x128xf32, #tpu.memory_space<vmem>>, vector<16x128xf32>
    tpu.vector_store %arg5[%c0_5, %c0_6], %5 {strides = array<i32>} : memref<16x128xf32, #tpu.memory_space<vmem>>, vector<16x128xf32>,
    return
  }
  func.func @transform_0(%arg0: i32, %arg1: i32) -> (i32, i32) {
    %c0_i32 = arith.constant 0 : i32
    %c0_i32_0 = arith.constant 0 : i32
    return %arg0, %c0_i32 : i32, i32
  }
  func.func @transform_1(%arg0: i32, %arg1: i32) -> (i32, i32) {
    %c0_i32 = arith.constant 0 : i32
    %c0_i32_0 = arith.constant 0 : i32
    return %c0_i32, %arg1 : i32, i32
  }
  func.func @transform_2(%arg0: i32, %arg1: i32) -> (i32, i32) {
    %c0_i32 = arith.constant 0 : i32
    %c0_i32_0 = arith.constant 0 : i32
    return %c0_i32, %arg1 : i32, i32
  }
  func.func @transform_3(%arg0: i32, %arg1: i32) -> (i32, i32) {
    %c0_i32 = arith.constant 0 : i32
    return %arg0, %arg1 : i32, i32
  }
}

</mosaic_0001>

<llo_original>
// kernel: seq2seq_forward.8
$region0: #{seq2seq_forward.8}
  #allocation0 [shape = 'u32[]', space=smem, size = 0x4, offset = 0x4, fixed_abs, tag = 'smem constant byte address 0x4 - core index']
  #allocation1 [shape = 'u32[144,128]{1,0:T(1,128)}', space=vmem, size = 0x12000, scoped, tag = 'internal scratch']
  %s0 = inlined_call_operand.vmem [shape: bf16[64,16], index: 0, kind: input, shape index: {}]
  %s1 = inlined_call_operand.vmem [shape: bf16[16,512], index: 1, kind: input, shape index: {}]
  %s2 = inlined_call_operand.vmem [shape: f32[1,512], index: 2, kind: input, shape index: {}]
  %s3 = inlined_call_operand.vmem [shape: bf16[64,512], index: 3, kind: output, shape index: {}]
  %s4 = sld [smem:[#allocation0]]
  $region22: #{seq2seq_forward.8} parent=0
    _
  %s6 = ssub.s32 1, %s4
  %s7 = scalar_select 0, %s6, %s4
  // Predicated region
  $region2: #{seq2seq_forward.8} parent=0 // pred_check
    _
  $region3: #{seq2seq_forward.8} parent=0 // pred_check_branch
    %9 = sbr.rel (0) target = $region5
  $region4: #{seq2seq_forward.8} parent=0 // pred_region
    _
  $region5: #{seq2seq_forward.8} parent=0 // pred_fallthru
    _
  // Predicated region
  $region6: #{seq2seq_forward.8} parent=0 // pred_check
    _
  $region7: #{seq2seq_forward.8} parent=0 // pred_check_branch
    %11 = sbr.rel (0) target = $region9
  $region8: #{seq2seq_forward.8} parent=0 // pred_region
    _
  $region9: #{seq2seq_forward.8} parent=0 // pred_fallthru
    _
  // Predicated region
  $region10: #{seq2seq_forward.8} parent=0 // pred_check
    _
  $region11: #{seq2seq_forward.8} parent=0 // pred_check_branch
    %13 = sbr.rel (0) target = $region13
  $region12: #{seq2seq_forward.8} parent=0 // pred_region
    _
  $region13: #{seq2seq_forward.8} parent=0 // pred_fallthru
    _
  %v15 = vld [vmem:[%s0] sm:$0xf]
  %v16 = vld [vmem:[%s0 + $0x4] sm:$0xf]
  %v17 = vld [vmem:[%s0 + $0x8] sm:$0xf]
  %v18 = vld [vmem:[%s0 + $0xc] sm:$0xf]
  %v19 = vld [vmem:[%s0 + $0x10] sm:$0xf]
  %v20 = vld [vmem:[%s0 + $0x14] sm:$0xf]
  %v21 = vld [vmem:[%s0 + $0x18] sm:$0xf]
  %v22 = vld [vmem:[%s0 + $0x1c] sm:$0xf]
  %v23 = vld [vmem:[%s1] sm:$0xff]
  %v24 = vld [vmem:[%s1 + $0x8] sm:$0xff]
  %v25 = vld [vmem:[%s1 + $0x10] sm:$0xff]
  %v26 = vld [vmem:[%s1 + $0x18] sm:$0xff]
  %v27 = vld [vmem:[%s2] sm:$0xf]
  %v29 = vlaneseq
  %v30 = vshrl.u32 %v29, 7
  %v31 = vsub.s32 0, %v30
  %v32 = vrot.slane %v27, %v31
  %v33 = vlaneseq
  %v34 = vshrl.u32 %v33, 7
  %v35 = vsub.s32 1, %v34
  %v36 = vrot.slane %v27, %v35
  %v37 = vlaneseq
  %v38 = vshrl.u32 %v37, 7
  %v39 = vsub.s32 2, %v38
  %v40 = vrot.slane %v27, %v39
  %v41 = vlaneseq
  %v42 = vshrl.u32 %v41, 7
  %v43 = vsub.s32 3, %v42
  %v44 = vrot.slane %v27, %v43
  %v57 = vunpack.c.l.b16 %v15
  %v58 = vunpack.c.l.b16 %v16
  %v59 = vunpack.c.l.b16 %v17
  %v60 = vunpack.c.l.b16 %v18
  %v61 = vunpack.c.l.b16 %v19
  %v62 = vunpack.c.l.b16 %v20
  %v63 = vunpack.c.l.b16 %v21
  %v64 = vunpack.c.l.b16 %v22
  %v65 = vpack.c.b16 %v58, %v57
  %v66 = vpack.c.b16 %v60, %v59
  %v67 = vpack.c.b16 %v62, %v61
  %v68 = vpack.c.b16 %v64, %v63
  %v73 = vunpack.c.l.b16 %v23
  %v74 = vunpack.c.h.b16 %v23
  %v75 = vunpack.c.l.b16 %v24
  %v76 = vunpack.c.h.b16 %v24
  %v77 = vunpack.c.l.b16 %v25
  %v78 = vunpack.c.h.b16 %v25
  %v79 = vunpack.c.l.b16 %v26
  %v80 = vunpack.c.h.b16 %v26
  %v81 = vpack.c.b16 %v77, %v73
  %v82 = vpack.c.b16 %v78, %v74
  %v83 = vpack.c.b16 %v79, %v75
  %v84 = vpack.c.b16 %v80, %v76
  %vm89 = vcmask 130048
  %v91 = vsel %vm89, %v65, 0
  %v94 = vsel %vm89, %v66, 0
  %v97 = vsel %vm89, %v67, 0
  %v100 = vsel %vm89, %v68, 0
  %102 = vmatprep.subr.bf16.mxu0 %v82
  %103 = vmatpush1.bf16.msra.mxu0 %v81
  %104 = vmatprep.subr.bf16.mxu0 0
  %105 = vmatpush1.bf16.msra.mxu0 0
  %106 = vmatprep.subr.bf16.mxu0 0
  %107 = vmatpush1.bf16.msra.mxu0 0
  %108 = vmatprep.subr.bf16.mxu0 0
  %109 = vmatpush1.bf16.msra.mxu0 0
  %110 = vmatprep.subr.bf16.mxu0 0
  %111 = vmatpush1.bf16.msra.mxu0 0
  %112 = vmatprep.subr.bf16.mxu0 0
  %113 = vmatpush1.bf16.msra.mxu0 0
  %114 = vmatprep.subr.bf16.mxu0 0
  %115 = vmatpush1.bf16.msra.mxu0 0
  %116 = vmatprep.subr.bf16.mxu0 0
  %117 = vmatpush1.bf16.msra.mxu0 0
  %118 = vmatprep.subr.bf16.mxu0 0
  %119 = vmatpush1.bf16.msra.mxu0 0
  %120 = vmatprep.subr.bf16.mxu0 0
  %121 = vmatpush1.bf16.msra.mxu0 0
  %122 = vmatprep.subr.bf16.mxu0 0
  %123 = vmatpush1.bf16.msra.mxu0 0
  %124 = vmatprep.subr.bf16.mxu0 0
  %125 = vmatpush1.bf16.msra.mxu0 0
  %126 = vmatprep.subr.bf16.mxu0 0
  %127 = vmatpush1.bf16.msra.mxu0 0
  %128 = vmatprep.subr.bf16.mxu0 0
  %129 = vmatpush1.bf16.msra.mxu0 0
  %130 = vmatprep.subr.bf16.mxu0 0
  %131 = vmatpush1.bf16.msra.mxu0 0
  %132 = vmatprep.subr.bf16.mxu0 0
  %133 = vmatpush1.bf16.msra.mxu0 0
  %134 = vmatprep.mubr.bf16.mxu0 0
  %135 = vmatmul.mubr.bf16.gmra.mrb[0].mxu0 %v91
  %v136 = vpop.f32.mrb[0].mxu0
  %v137 = vadd.f32 %v32, %v136
  %v138 = vpop.f32.mrb[0].mxu0
  %v139 = vadd.f32 %v36, %v138
  %v140 = vpop.f32.mrb[0].mxu0
  %v141 = vadd.f32 %v32, %v140
  %v142 = vpop.f32.mrb[0].mxu0
  %v143 = vadd.f32 %v36, %v142
  %144 = vmatprep.mubr.bf16.mxu0 0
  %145 = vmatmul.mubr.bf16.gmra.mrb[0].mxu0 %v94
  %v146 = vpop.f32.mrb[0].mxu0
  %v147 = vadd.f32 %v32, %v146
  %v148 = vpop.f32.mrb[0].mxu0
  %v149 = vadd.f32 %v36, %v148
  %v150 = vpop.f32.mrb[0].mxu0
  %v151 = vadd.f32 %v32, %v150
  %v152 = vpop.f32.mrb[0].mxu0
  %v153 = vadd.f32 %v36, %v152
  %154 = vmatprep.mubr.bf16.mxu0 0
  %155 = vmatmul.mubr.bf16.gmra.mrb[0].mxu0 %v97
  %v156 = vpop.f32.mrb[0].mxu0
  %v157 = vadd.f32 %v32, %v156
  %v158 = vpop.f32.mrb[0].mxu0
  %v159 = vadd.f32 %v36, %v158
  %v160 = vpop.f32.mrb[0].mxu0
  %v161 = vadd.f32 %v32, %v160
  %v162 = vpop.f32.mrb[0].mxu0
  %v163 = vadd.f32 %v36, %v162
  %164 = vmatprep.mubr.bf16.mxu0 0
  %165 = vmatmul.mubr.bf16.gmra.mrb[0].mxu0 %v100
  %v166 = vpop.f32.mrb[0].mxu0
  %v167 = vadd.f32 %v32, %v166
  %v168 = vpop.f32.mrb[0].mxu0
  %v169 = vadd.f32 %v36, %v168
  %v170 = vpop.f32.mrb[0].mxu0
  %v171 = vadd.f32 %v32, %v170
  %v172 = vpop.f32.mrb[0].mxu0
  %v173 = vadd.f32 %v36, %v172
  %174 = vdwg.mxu0
  %175 = vmatprep.subr.bf16.mxu0 %v84
  %176 = vmatpush1.bf16.msra.mxu0 %v83
  %177 = vmatprep.subr.bf16.mxu0 0
  %178 = vmatpush1.bf16.msra.mxu0 0
  %179 = vmatprep.subr.bf16.mxu0 0
  %180 = vmatpush1.bf16.msra.mxu0 0
  %181 = vmatprep.subr.bf16.mxu0 0
  %182 = vmatpush1.bf16.msra.mxu0 0
  %183 = vmatprep.subr.bf16.mxu0 0
  %184 = vmatpush1.bf16.msra.mxu0 0
  %185 = vmatprep.subr.bf16.mxu0 0
  %186 = vmatpush1.bf16.msra.mxu0 0
  %187 = vmatprep.subr.bf16.mxu0 0
  %188 = vmatpush1.bf16.msra.mxu0 0
  %189 = vmatprep.subr.bf16.mxu0 0
  %190 = vmatpush1.bf16.msra.mxu0 0
  %191 = vmatprep.subr.bf16.mxu0 0
  %192 = vmatpush1.bf16.msra.mxu0 0
  %193 = vmatprep.subr.bf16.mxu0 0
  %194 = vmatpush1.bf16.msra.mxu0 0
  %195 = vmatprep.subr.bf16.mxu0 0
  %196 = vmatpush1.bf16.msra.mxu0 0
  %197 = vmatprep.subr.bf16.mxu0 0
  %198 = vmatpush1.bf16.msra.mxu0 0
  %199 = vmatprep.subr.bf16.mxu0 0
  %200 = vmatpush1.bf16.msra.mxu0 0
  %201 = vmatprep.subr.bf16.mxu0 0
  %202 = vmatpush1.bf16.msra.mxu0 0
  %203 = vmatprep.subr.bf16.mxu0 0
  %204 = vmatpush1.bf16.msra.mxu0 0
  %205 = vmatprep.subr.bf16.mxu0 0
  %206 = vmatpush1.bf16.msra.mxu0 0
  %207 = vmatprep.mubr.bf16.mxu0 0
  %208 = vmatmul.mubr.bf16.gmra.mrb[0].mxu0 %v91
  %v209 = vpop.f32.mrb[0].mxu0
  %v210 = vadd.f32 %v40, %v209
  %v211 = vpop.f32.mrb[0].mxu0
  %v212 = vadd.f32 %v44, %v211
  %v213 = vpop.f32.mrb[0].mxu0
  %v214 = vadd.f32 %v40, %v213
  %v215 = vpop.f32.mrb[0].mxu0
  %v216 = vadd.f32 %v44, %v215
  %217 = vmatprep.mubr.bf16.mxu0 0
  %218 = vmatmul.mubr.bf16.gmra.mrb[0].mxu0 %v94
  %v219 = vpop.f32.mrb[0].mxu0
  %v220 = vadd.f32 %v40, %v219
  %v221 = vpop.f32.mrb[0].mxu0
  %v222 = vadd.f32 %v44, %v221
  %v223 = vpop.f32.mrb[0].mxu0
  %v224 = vadd.f32 %v40, %v223
  %v225 = vpop.f32.mrb[0].mxu0
  %v226 = vadd.f32 %v44, %v225
  %227 = vmatprep.mubr.bf16.mxu0 0
  %228 = vmatmul.mubr.bf16.gmra.mrb[0].mxu0 %v97
  %v229 = vpop.f32.mrb[0].mxu0
  %v230 = vadd.f32 %v40, %v229
  %v231 = vpop.f32.mrb[0].mxu0
  %v232 = vadd.f32 %v44, %v231
  %v233 = vpop.f32.mrb[0].mxu0
  %v234 = vadd.f32 %v40, %v233
  %v235 = vpop.f32.mrb[0].mxu0
  %v236 = vadd.f32 %v44, %v235
  %237 = vmatprep.mubr.bf16.mxu0 0
  %238 = vmatmul.mubr.bf16.gmra.mrb[0].mxu0 %v100
  %v239 = vpop.f32.mrb[0].mxu0
  %v240 = vadd.f32 %v40, %v239
  %v241 = vpop.f32.mrb[0].mxu0
  %v242 = vadd.f32 %v44, %v241
  %v243 = vpop.f32.mrb[0].mxu0
  %v244 = vadd.f32 %v40, %v243
  %v245 = vpop.f32.mrb[0].mxu0
  %v246 = vadd.f32 %v44, %v245
  %247 = vdwg.mxu0
  %v248 = vpack.c.bf16 %v141, %v137
  %v249 = vpack.c.bf16 %v143, %v139
  %v250 = vpack.c.bf16 %v214, %v210
  %v251 = vpack.c.bf16 %v216, %v212
  %v252 = vpack.c.bf16 %v151, %v147
  %v253 = vpack.c.bf16 %v153, %v149
  %v254 = vpack.c.bf16 %v224, %v220
  %v255 = vpack.c.bf16 %v226, %v222
  %v256 = vpack.c.bf16 %v161, %v157
  %v257 = vpack.c.bf16 %v163, %v159
  %v258 = vpack.c.bf16 %v234, %v230
  %v259 = vpack.c.bf16 %v236, %v232
  %v260 = vpack.c.bf16 %v171, %v167
  %v261 = vpack.c.bf16 %v173, %v169
  %v262 = vpack.c.bf16 %v244, %v240
  %v263 = vpack.c.bf16 %v246, %v242
  %v280 = vunpack.c.l.b16 %v248
  %v281 = vunpack.c.l.b16 %v249
  %v282 = vunpack.c.l.b16 %v250
  %v283 = vunpack.c.l.b16 %v251
  %v284 = vunpack.c.h.b16 %v248
  %v285 = vunpack.c.h.b16 %v249
  %v286 = vunpack.c.h.b16 %v250
  %v287 = vunpack.c.h.b16 %v251
  %v288 = vunpack.c.l.b16 %v252
  %v289 = vunpack.c.l.b16 %v253
  %v290 = vunpack.c.l.b16 %v254
  %v291 = vunpack.c.l.b16 %v255
  %v292 = vunpack.c.h.b16 %v252
  %v293 = vunpack.c.h.b16 %v253
  %v294 = vunpack.c.h.b16 %v254
  %v295 = vunpack.c.h.b16 %v255
  %v296 = vunpack.c.l.b16 %v256
  %v297 = vunpack.c.l.b16 %v257
  %v298 = vunpack.c.l.b16 %v258
  %v299 = vunpack.c.l.b16 %v259
  %v300 = vunpack.c.h.b16 %v256
  %v301 = vunpack.c.h.b16 %v257
  %v302 = vunpack.c.h.b16 %v258
  %v303 = vunpack.c.h.b16 %v259
  %v304 = vunpack.c.l.b16 %v260
  %v305 = vunpack.c.l.b16 %v261
  %v306 = vunpack.c.l.b16 %v262
  %v307 = vunpack.c.l.b16 %v263
  %v308 = vunpack.c.h.b16 %v260
  %v309 = vunpack.c.h.b16 %v261
  %v310 = vunpack.c.h.b16 %v262
  %v311 = vunpack.c.h.b16 %v263
  %v312 = vpack.c.b16 %v281, %v280
  %v313 = vpack.c.b16 %v283, %v282
  %v314 = vpack.c.b16 %v285, %v284
  %v315 = vpack.c.b16 %v287, %v286
  %v316 = vpack.c.b16 %v289, %v288
  %v317 = vpack.c.b16 %v291, %v290
  %v318 = vpack.c.b16 %v293, %v292
  %v319 = vpack.c.b16 %v295, %v294
  %v320 = vpack.c.b16 %v297, %v296
  %v321 = vpack.c.b16 %v299, %v298
  %v322 = vpack.c.b16 %v301, %v300
  %v323 = vpack.c.b16 %v303, %v302
  %v324 = vpack.c.b16 %v305, %v304
  %v325 = vpack.c.b16 %v307, %v306
  %v326 = vpack.c.b16 %v309, %v308
  %v327 = vpack.c.b16 %v311, %v310
  %344 = vst [vmem:[%s3] sm:$0xff] %v312
  %345 = vst [vmem:[%s3 + $0x8] sm:$0xff] %v313
  %346 = vst [vmem:[%s3 + $0x10] sm:$0xff] %v314
  %347 = vst [vmem:[%s3 + $0x18] sm:$0xff] %v315
  %348 = vst [vmem:[%s3 + $0x20] sm:$0xff] %v316
  %349 = vst [vmem:[%s3 + $0x28] sm:$0xff] %v317
  %350 = vst [vmem:[%s3 + $0x30] sm:$0xff] %v318
  %351 = vst [vmem:[%s3 + $0x38] sm:$0xff] %v319
  %352 = vst [vmem:[%s3 + $0x40] sm:$0xff] %v320
  %353 = vst [vmem:[%s3 + $0x48] sm:$0xff] %v321
  %354 = vst [vmem:[%s3 + $0x50] sm:$0xff] %v322
  %355 = vst [vmem:[%s3 + $0x58] sm:$0xff] %v323
  %356 = vst [vmem:[%s3 + $0x60] sm:$0xff] %v324
  %357 = vst [vmem:[%s3 + $0x68] sm:$0xff] %v325
  %358 = vst [vmem:[%s3 + $0x70] sm:$0xff] %v326
  %359 = vst [vmem:[%s3 + $0x78] sm:$0xff] %v327
  // Predicated region
  $region14: #{seq2seq_forward.8} parent=0 // pred_check
    _
  $region15: #{seq2seq_forward.8} parent=0 // pred_check_branch
    %361 = sbr.rel (0) target = $region17
  $region16: #{seq2seq_forward.8} parent=0 // pred_region
    _
  $region17: #{seq2seq_forward.8} parent=0 // pred_fallthru
    _
  // Predicated region
  $region18: #{seq2seq_forward.8} parent=0 // pred_check
    _
  $region19: #{seq2seq_forward.8} parent=0 // pred_check_branch
    %363 = sbr.rel (0) target = $region21
  $region20: #{seq2seq_forward.8} parent=0 // pred_region
    _
  $region21: #{seq2seq_forward.8} parent=0 // pred_fallthru
    _

// kernel: seq2seq_forward.10
$region0: #{seq2seq_forward.10}
  #allocation0 [shape = 'u32[]', space=smem, size = 0x4, offset = 0x4, fixed_abs, tag = 'smem constant byte address 0x4 - core index']
  #allocation1 [shape = 'u32[144,128]{1,0:T(1,128)}', space=vmem, size = 0x12000, scoped, tag = 'internal scratch']
  %s0 = inlined_call_operand.vmem [shape: bf16[64,128], index: 0, kind: input, shape index: {}]
  %s1 = inlined_call_operand.vmem [shape: bf16[128,512], index: 1, kind: input, shape index: {}]
  %s2 = inlined_call_operand.vmem [shape: f32[1,512], index: 2, kind: input, shape index: {}]
  %s3 = inlined_call_operand.vmem [shape: bf16[64,512], index: 3, kind: output, shape index: {}]
  %s4 = sld [smem:[#allocation0]]
  $region22: #{seq2seq_forward.10} parent=0
    _
  %s6 = ssub.s32 1, %s4
  %s7 = scalar_select 0, %s6, %s4
  // Predicated region
  $region2: #{seq2seq_forward.10} parent=0 // pred_check
    _
  $region3: #{seq2seq_forward.10} parent=0 // pred_check_branch
    %9 = sbr.rel (0) target = $region5
  $region4: #{seq2seq_forward.10} parent=0 // pred_region
    _
  $region5: #{seq2seq_forward.10} parent=0 // pred_fallthru
    _
  // Predicated region
  $region6: #{seq2seq_forward.10} parent=0 // pred_check
    _
  $region7: #{seq2seq_forward.10} parent=0 // pred_check_branch
    %11 = sbr.rel (0) target = $region9
  $region8: #{seq2seq_forward.10} parent=0 // pred_region
    _
  $region9: #{seq2seq_forward.10} parent=0 // pred_fallthru
    _
  // Predicated region
  $region10: #{seq2seq_forward.10} parent=0 // pred_check
    _
  $region11: #{seq2seq_forward.10} parent=0 // pred_check_branch
    %13 = sbr.rel (0) target = $region13
  $region12: #{seq2seq_forward.10} parent=0 // pred_region
    _
  $region13: #{seq2seq_forward.10} parent=0 // pred_fallthru
    _
  %v15 = vld [vmem:[%s0] sm:$0xf]
  %v16 = vld [vmem:[%s0 + $0x4] sm:$0xf]
  %v17 = vld [vmem:[%s0 + $0x8] sm:$0xf]
  %v18 = vld [vmem:[%s0 + $0xc] sm:$0xf]
  %v19 = vld [vmem:[%s0 + $0x10] sm:$0xf]
  %v20 = vld [vmem:[%s0 + $0x14] sm:$0xf]
  %v21 = vld [vmem:[%s0 + $0x18] sm:$0xf]
  %v22 = vld [vmem:[%s0 + $0x1c] sm:$0xf]
  %v23 = vld [vmem:[%s1] sm:$0xff]
  %v24 = vld [vmem:[%s1 + $0x8] sm:$0xff]
  %v25 = vld [vmem:[%s1 + $0x10] sm:$0xff]
  %v26 = vld [vmem:[%s1 + $0x18] sm:$0xff]
  %v27 = vld [vmem:[%s1 + $0x20] sm:$0xff]
  %v28 = vld [vmem:[%s1 + $0x28] sm:$0xff]
  %v29 = vld [vmem:[%s1 + $0x30] sm:$0xff]
  %v30 = vld [vmem:[%s1 + $0x38] sm:$0xff]
  %v31 = vld [vmem:[%s1 + $0x40] sm:$0xff]
  %v32 = vld [vmem:[%s1 + $0x48] sm:$0xff]
  %v33 = vld [vmem:[%s1 + $0x50] sm:$0xff]
  %v34 = vld [vmem:[%s1 + $0x58] sm:$0xff]
  %v35 = vld [vmem:[%s1 + $0x60] sm:$0xff]
  %v36 = vld [vmem:[%s1 + $0x68] sm:$0xff]
  %v37 = vld [vmem:[%s1 + $0x70] sm:$0xff]
  %v38 = vld [vmem:[%s1 + $0x78] sm:$0xff]
  %v39 = vld [vmem:[%s1 + $0x80] sm:$0xff]
  %v40 = vld [vmem:[%s1 + $0x88] sm:$0xff]
  %v41 = vld [vmem:[%s1 + $0x90] sm:$0xff]
  %v42 = vld [vmem:[%s1 + $0x98] sm:$0xff]
  %v43 = vld [vmem:[%s1 + $0xa0] sm:$0xff]
  %v44 = vld [vmem:[%s1 + $0xa8] sm:$0xff]
  %v45 = vld [vmem:[%s1 + $0xb0] sm:$0xff]
  %v46 = vld [vmem:[%s1 + $0xb8] sm:$0xff]
  %v47 = vld [vmem:[%s1 + $0xc0] sm:$0xff]
  %v48 = vld [vmem:[%s1 + $0xc8] sm:$0xff]
  %v49 = vld [vmem:[%s1 + $0xd0] sm:$0xff]
  %v50 = vld [vmem:[%s1 + $0xd8] sm:$0xff]
  %v51 = vld [vmem:[%s1 + $0xe0] sm:$0xff]
  %v52 = vld [vmem:[%s1 + $0xe8] sm:$0xff]
  %v53 = vld [vmem:[%s1 + $0xf0] sm:$0xff]
  %v54 = vld [vmem:[%s1 + $0xf8] sm:$0xff]
  %v55 = vld [vmem:[%s2] sm:$0xf]
  %v57 = vlaneseq
  %v58 = vshrl.u32 %v57, 7
  %v59 = vsub.s32 0, %v58
  %v60 = vrot.slane %v55, %v59
  %v61 = vlaneseq
  %v62 = vshrl.u32 %v61, 7
  %v63 = vsub.s32 1, %v62
  %v64 = vrot.slane %v55, %v63
  %v65 = vlaneseq
  %v66 = vshrl.u32 %v65, 7
  %v67 = vsub.s32 2, %v66
  %v68 = vrot.slane %v55, %v67
  %v69 = vlaneseq
  %v70 = vshrl.u32 %v69, 7
  %v71 = vsub.s32 3, %v70
  %v72 = vrot.slane %v55, %v71
  %v85 = vunpack.c.l.b16 %v15
  %v86 = vunpack.c.l.b16 %v16
  %v87 = vunpack.c.l.b16 %v17
  %v88 = vunpack.c.l.b16 %v18
  %v89 = vunpack.c.l.b16 %v19
  %v90 = vunpack.c.l.b16 %v20
  %v91 = vunpack.c.l.b16 %v21
  %v92 = vunpack.c.l.b16 %v22
  %v93 = vpack.c.b16 %v86, %v85
  %v94 = vpack.c.b16 %v88, %v87
  %v95 = vpack.c.b16 %v90, %v89
  %v96 = vpack.c.b16 %v92, %v91
  %v133 = vunpack.c.l.b16 %v23
  %v134 = vunpack.c.h.b16 %v23
  %v135 = vunpack.c.l.b16 %v24
  %v136 = vunpack.c.h.b16 %v24
  %v137 = vunpack.c.l.b16 %v25
  %v138 = vunpack.c.h.b16 %v25
  %v139 = vunpack.c.l.b16 %v26
  %v140 = vunpack.c.h.b16 %v26
  %v141 = vunpack.c.l.b16 %v27
  %v142 = vunpack.c.h.b16 %v27
  %v143 = vunpack.c.l.b16 %v28
  %v144 = vunpack.c.h.b16 %v28
  %v145 = vunpack.c.l.b16 %v29
  %v146 = vunpack.c.h.b16 %v29
  %v147 = vunpack.c.l.b16 %v30
  %v148 = vunpack.c.h.b16 %v30
  %v149 = vunpack.c.l.b16 %v31
  %v150 = vunpack.c.h.b16 %v31
  %v151 = vunpack.c.l.b16 %v32
  %v152 = vunpack.c.h.b16 %v32
  %v153 = vunpack.c.l.b16 %v33
  %v154 = vunpack.c.h.b16 %v33
  %v155 = vunpack.c.l.b16 %v34
  %v156 = vunpack.c.h.b16 %v34
  %v157 = vunpack.c.l.b16 %v35
  %v158 = vunpack.c.h.b16 %v35
  %v159 = vunpack.c.l.b16 %v36
  %v160 = vunpack.c.h.b16 %v36
  %v161 = vunpack.c.l.b16 %v37
  %v162 = vunpack.c.h.b16 %v37
  %v163 = vunpack.c.l.b16 %v38
  %v164 = vunpack.c.h.b16 %v38
  %v165 = vunpack.c.l.b16 %v39
  %v166 = vunpack.c.h.b16 %v39
  %v167 = vunpack.c.l.b16 %v40
  %v168 = vunpack.c.h.b16 %v40
  %v169 = vunpack.c.l.b16 %v41
  %v170 = vunpack.c.h.b16 %v41
  %v171 = vunpack.c.l.b16 %v42
  %v172 = vunpack.c.h.b16 %v42
  %v173 = vunpack.c.l.b16 %v43
  %v174 = vunpack.c.h.b16 %v43
  %v175 = vunpack.c.l.b16 %v44
  %v176 = vunpack.c.h.b16 %v44
  %v177 = vunpack.c.l.b16 %v45
  %v178 = vunpack.c.h.b16 %v45
  %v179 = vunpack.c.l.b16 %v46
  %v180 = vunpack.c.h.b16 %v46
  %v181 = vunpack.c.l.b16 %v47
  %v182 = vunpack.c.h.b16 %v47
  %v183 = vunpack.c.l.b16 %v48
  %v184 = vunpack.c.h.b16 %v48
  %v185 = vunpack.c.l.b16 %v49
  %v186 = vunpack.c.h.b16 %v49
  %v187 = vunpack.c.l.b16 %v50
  %v188 = vunpack.c.h.b16 %v50
  %v189 = vunpack.c.l.b16 %v51
  %v190 = vunpack.c.h.b16 %v51
  %v191 = vunpack.c.l.b16 %v52
  %v192 = vunpack.c.h.b16 %v52
  %v193 = vunpack.c.l.b16 %v53
  %v194 = vunpack.c.h.b16 %v53
  %v195 = vunpack.c.l.b16 %v54
  %v196 = vunpack.c.h.b16 %v54
  %v197 = vpack.c.b16 %v137, %v133
  %v198 = vpack.c.b16 %v138, %v134
  %v199 = vpack.c.b16 %v139, %v135
  %v200 = vpack.c.b16 %v140, %v136
  %v201 = vpack.c.b16 %v145, %v141
  %v202 = vpack.c.b16 %v146, %v142
  %v203 = vpack.c.b16 %v147, %v143
  %v204 = vpack.c.b16 %v148, %v144
  %v205 = vpack.c.b16 %v153, %v149
  %v206 = vpack.c.b16 %v154, %v150
  %v207 = vpack.c.b16 %v155, %v151
  %v208 = vpack.c.b16 %v156, %v152
  %v209 = vpack.c.b16 %v161, %v157
  %v210 = vpack.c.b16 %v162, %v158
  %v211 = vpack.c.b16 %v163, %v159
  %v212 = vpack.c.b16 %v164, %v160
  %v213 = vpack.c.b16 %v169, %v165
  %v214 = vpack.c.b16 %v170, %v166
  %v215 = vpack.c.b16 %v171, %v167
  %v216 = vpack.c.b16 %v172, %v168
  %v217 = vpack.c.b16 %v177, %v173
  %v218 = vpack.c.b16 %v178, %v174
  %v219 = vpack.c.b16 %v179, %v175
  %v220 = vpack.c.b16 %v180, %v176
  %v221 = vpack.c.b16 %v185, %v181
  %v222 = vpack.c.b16 %v186, %v182
  %v223 = vpack.c.b16 %v187, %v183
  %v224 = vpack.c.b16 %v188, %v184
  %v225 = vpack.c.b16 %v193, %v189
  %v226 = vpack.c.b16 %v194, %v190
  %v227 = vpack.c.b16 %v195, %v191
  %v228 = vpack.c.b16 %v196, %v192
  %261 = vmatprep.subr.bf16.mxu0 %v198
  %262 = vmatpush1.bf16.msra.mxu0 %v197
  %263 = vmatprep.subr.bf16.mxu0 %v202
  %264 = vmatpush1.bf16.msra.mxu0 %v201
  %265 = vmatprep.subr.bf16.mxu0 %v206
  %266 = vmatpush1.bf16.msra.mxu0 %v205
  %267 = vmatprep.subr.bf16.mxu0 %v210
  %268 = vmatpush1.bf16.msra.mxu0 %v209
  %269 = vmatprep.subr.bf16.mxu0 %v214
  %270 = vmatpush1.bf16.msra.mxu0 %v213
  %271 = vmatprep.subr.bf16.mxu0 %v218
  %272 = vmatpush1.bf16.msra.mxu0 %v217
  %273 = vmatprep.subr.bf16.mxu0 %v222
  %274 = vmatpush1.bf16.msra.mxu0 %v221
  %275 = vmatprep.subr.bf16.mxu0 %v226
  %276 = vmatpush1.bf16.msra.mxu0 %v225
  %277 = vmatprep.subr.bf16.mxu0 0
  %278 = vmatpush1.bf16.msra.mxu0 0
  %279 = vmatprep.subr.bf16.mxu0 0
  %280 = vmatpush1.bf16.msra.mxu0 0
  %281 = vmatprep.subr.bf16.mxu0 0
  %282 = vmatpush1.bf16.msra.mxu0 0
  %283 = vmatprep.subr.bf16.mxu0 0
  %284 = vmatpush1.bf16.msra.mxu0 0
  %285 = vmatprep.subr.bf16.mxu0 0
  %286 = vmatpush1.bf16.msra.mxu0 0
  %287 = vmatprep.subr.bf16.mxu0 0
  %288 = vmatpush1.bf16.msra.mxu0 0
  %289 = vmatprep.subr.bf16.mxu0 0
  %290 = vmatpush1.bf16.msra.mxu0 0
  %291 = vmatprep.subr.bf16.mxu0 0
  %292 = vmatpush1.bf16.msra.mxu0 0
  %293 = vmatprep.mubr.bf16.mxu0 0
  %294 = vmatmul.mubr.bf16.gmra.mrb[0].mxu0 %v93
  %v295 = vpop.f32.mrb[0].mxu0
  %v296 = vadd.f32 %v60, %v295
  %v297 = vpop.f32.mrb[0].mxu0
  %v298 = vadd.f32 %v64, %v297
  %v299 = vpop.f32.mrb[0].mxu0
  %v300 = vadd.f32 %v60, %v299
  %v301 = vpop.f32.mrb[0].mxu0
  %v302 = vadd.f32 %v64, %v301
  %303 = vmatprep.mubr.bf16.mxu0 0
  %304 = vmatmul.mubr.bf16.gmra.mrb[0].mxu0 %v94
  %v305 = vpop.f32.mrb[0].mxu0
  %v306 = vadd.f32 %v60, %v305
  %v307 = vpop.f32.mrb[0].mxu0
  %v308 = vadd.f32 %v64, %v307
  %v309 = vpop.f32.mrb[0].mxu0
  %v310 = vadd.f32 %v60, %v309
  %v311 = vpop.f32.mrb[0].mxu0
  %v312 = vadd.f32 %v64, %v311
  %313 = vmatprep.mubr.bf16.mxu0 0
  %314 = vmatmul.mubr.bf16.gmra.mrb[0].mxu0 %v95
  %v315 = vpop.f32.mrb[0].mxu0
  %v316 = vadd.f32 %v60, %v315
  %v317 = vpop.f32.mrb[0].mxu0
  %v318 = vadd.f32 %v64, %v317
  %v319 = vpop.f32.mrb[0].mxu0
  %v320 = vadd.f32 %v60, %v319
  %v321 = vpop.f32.mrb[0].mxu0
  %v322 = vadd.f32 %v64, %v321
  %323 = vmatprep.mubr.bf16.mxu0 0
  %324 = vmatmul.mubr.bf16.gmra.mrb[0].mxu0 %v96
  %v325 = vpop.f32.mrb[0].mxu0
  %v326 = vadd.f32 %v60, %v325
  %v327 = vpop.f32.mrb[0].mxu0
  %v328 = vadd.f32 %v64, %v327
  %v329 = vpop.f32.mrb[0].mxu0
  %v330 = vadd.f32 %v60, %v329
  %v331 = vpop.f32.mrb[0].mxu0
  %v332 = vadd.f32 %v64, %v331
  %333 = vdwg.mxu0
  %334 = vmatprep.subr.bf16.mxu0 %v200
  %335 = vmatpush1.bf16.msra.mxu0 %v199
  %336 = vmatprep.subr.bf16.mxu0 %v204
  %337 = vmatpush1.bf16.msra.mxu0 %v203
  %338 = vmatprep.subr.bf16.mxu0 %v208
  %339 = vmatpush1.bf16.msra.mxu0 %v207
  %340 = vmatprep.subr.bf16.mxu0 %v212
  %341 = vmatpush1.bf16.msra.mxu0 %v211
  %342 = vmatprep.subr.bf16.mxu0 %v216
  %343 = vmatpush1.bf16.msra.mxu0 %v215
  %344 = vmatprep.subr.bf16.mxu0 %v220
  %345 = vmatpush1.bf16.msra.mxu0 %v219
  %346 = vmatprep.subr.bf16.mxu0 %v224
  %347 = vmatpush1.bf16.msra.mxu0 %v223
  %348 = vmatprep.subr.bf16.mxu0 %v228
  %349 = vmatpush1.bf16.msra.mxu0 %v227
  %350 = vmatprep.subr.bf16.mxu0 0
  %351 = vmatpush1.bf16.msra.mxu0 0
  %352 = vmatprep.subr.bf16.mxu0 0
  %353 = vmatpush1.bf16.msra.mxu0 0
  %354 = vmatprep.subr.bf16.mxu0 0
  %355 = vmatpush1.bf16.msra.mxu0 0
  %356 = vmatprep.subr.bf16.mxu0 0
  %357 = vmatpush1.bf16.msra.mxu0 0
  %358 = vmatprep.subr.bf16.mxu0 0
  %359 = vmatpush1.bf16.msra.mxu0 0
  %360 = vmatprep.subr.bf16.mxu0 0
  %361 = vmatpush1.bf16.msra.mxu0 0
  %362 = vmatprep.subr.bf16.mxu0 0
  %363 = vmatpush1.bf16.msra.mxu0 0
  %364 = vmatprep.subr.bf16.mxu0 0
  %365 = vmatpush1.bf16.msra.mxu0 0
  %366 = vmatprep.mubr.bf16.mxu0 0
  %367 = vmatmul.mubr.bf16.gmra.mrb[0].mxu0 %v93
  %v368 = vpop.f32.mrb[0].mxu0
  %v369 = vadd.f32 %v68, %v368
  %v370 = vpop.f32.mrb[0].mxu0
  %v371 = vadd.f32 %v72, %v370
  %v372 = vpop.f32.mrb[0].mxu0
  %v373 = vadd.f32 %v68, %v372
  %v374 = vpop.f32.mrb[0].mxu0
  %v375 = vadd.f32 %v72, %v374
  %376 = vmatprep.mubr.bf16.mxu0 0
  %377 = vmatmul.mubr.bf16.gmra.mrb[0].mxu0 %v94
  %v378 = vpop.f32.mrb[0].mxu0
  %v379 = vadd.f32 %v68, %v378
  %v380 = vpop.f32.mrb[0].mxu0
  %v381 = vadd.f32 %v72, %v380
  %v382 = vpop.f32.mrb[0].mxu0
  %v383 = vadd.f32 %v68, %v382
  %v384 = vpop.f32.mrb[0].mxu0
  %v385 = vadd.f32 %v72, %v384
  %386 = vmatprep.mubr.bf16.mxu0 0
  %387 = vmatmul.mubr.bf16.gmra.mrb[0].mxu0 %v95
  %v388 = vpop.f32.mrb[0].mxu0
  %v389 = vadd.f32 %v68, %v388
  %v390 = vpop.f32.mrb[0].mxu0
  %v391 = vadd.f32 %v72, %v390
  %v392 = vpop.f32.mrb[0].mxu0
  %v393 = vadd.f32 %v68, %v392
  %v394 = vpop.f32.mrb[0].mxu0
  %v395 = vadd.f32 %v72, %v394
  %396 = vmatprep.mubr.bf16.mxu0 0
  %397 = vmatmul.mubr.bf16.gmra.mrb[0].mxu0 %v96
  %v398 = vpop.f32.mrb[0].mxu0
  %v399 = vadd.f32 %v68, %v398
  %v400 = vpop.f32.mrb[0].mxu0
  %v401 = vadd.f32 %v72, %v400
  %v402 = vpop.f32.mrb[0].mxu0
  %v403 = vadd.f32 %v68, %v402
  %v404 = vpop.f32.mrb[0].mxu0
  %v405 = vadd.f32 %v72, %v404
  %406 = vdwg.mxu0
  %v407 = vpack.c.bf16 %v300, %v296
  %v408 = vpack.c.bf16 %v302, %v298
  %v409 = vpack.c.bf16 %v373, %v369
  %v410 = vpack.c.bf16 %v375, %v371
  %v411 = vpack.c.bf16 %v310, %v306
  %v412 = vpack.c.bf16 %v312, %v308
  %v413 = vpack.c.bf16 %v383, %v379
  %v414 = vpack.c.bf16 %v385, %v381
  %v415 = vpack.c.bf16 %v320, %v316
  %v416 = vpack.c.bf16 %v322, %v318
  %v417 = vpack.c.bf16 %v393, %v389
  %v418 = vpack.c.bf16 %v395, %v391
  %v419 = vpack.c.bf16 %v330, %v326
  %v420 = vpack.c.bf16 %v332, %v328
  %v421 = vpack.c.bf16 %v403, %v399
  %v422 = vpack.c.bf16 %v405, %v401
  %v439 = vunpack.c.l.b16 %v407
  %v440 = vunpack.c.l.b16 %v408
  %v441 = vunpack.c.l.b16 %v409
  %v442 = vunpack.c.l.b16 %v410
  %v443 = vunpack.c.h.b16 %v407
  %v444 = vunpack.c.h.b16 %v408
  %v445 = vunpack.c.h.b16 %v409
  %v446 = vunpack.c.h.b16 %v410
  %v447 = vunpack.c.l.b16 %v411
  %v448 = vunpack.c.l.b16 %v412
  %v449 = vunpack.c.l.b16 %v413
  %v450 = vunpack.c.l.b16 %v414
  %v451 = vunpack.c.h.b16 %v411
  %v452 = vunpack.c.h.b16 %v412
  %v453 = vunpack.c.h.b16 %v413
  %v454 = vunpack.c.h.b16 %v414
  %v455 = vunpack.c.l.b16 %v415
  %v456 = vunpack.c.l.b16 %v416
  %v457 = vunpack.c.l.b16 %v417
  %v458 = vunpack.c.l.b16 %v418
  %v459 = vunpack.c.h.b16 %v415
  %v460 = vunpack.c.h.b16 %v416
  %v461 = vunpack.c.h.b16 %v417
  %v462 = vunpack.c.h.b16 %v418
  %v463 = vunpack.c.l.b16 %v419
  %v464 = vunpack.c.l.b16 %v420
  %v465 = vunpack.c.l.b16 %v421
  %v466 = vunpack.c.l.b16 %v422
  %v467 = vunpack.c.h.b16 %v419
  %v468 = vunpack.c.h.b16 %v420
  %v469 = vunpack.c.h.b16 %v421
  %v470 = vunpack.c.h.b16 %v422
  %v471 = vpack.c.b16 %v440, %v439
  %v472 = vpack.c.b16 %v442, %v441
  %v473 = vpack.c.b16 %v444, %v443
  %v474 = vpack.c.b16 %v446, %v445
  %v475 = vpack.c.b16 %v448, %v447
  %v476 = vpack.c.b16 %v450, %v449
  %v477 = vpack.c.b16 %v452, %v451
  %v478 = vpack.c.b16 %v454, %v453
  %v479 = vpack.c.b16 %v456, %v455
  %v480 = vpack.c.b16 %v458, %v457
  %v481 = vpack.c.b16 %v460, %v459
  %v482 = vpack.c.b16 %v462, %v461
  %v483 = vpack.c.b16 %v464, %v463
  %v484 = vpack.c.b16 %v466, %v465
  %v485 = vpack.c.b16 %v468, %v467
  %v486 = vpack.c.b16 %v470, %v469
  %503 = vst [vmem:[%s3] sm:$0xff] %v471
  %504 = vst [vmem:[%s3 + $0x8] sm:$0xff] %v472
  %505 = vst [vmem:[%s3 + $0x10] sm:$0xff] %v473
  %506 = vst [vmem:[%s3 + $0x18] sm:$0xff] %v474
  %507 = vst [vmem:[%s3 + $0x20] sm:$0xff] %v475
  %508 = vst [vmem:[%s3 + $0x28] sm:$0xff] %v476
  %509 = vst [vmem:[%s3 + $0x30] sm:$0xff] %v477
  %510 = vst [vmem:[%s3 + $0x38] sm:$0xff] %v478
  %511 = vst [vmem:[%s3 + $0x40] sm:$0xff] %v479
  %512 = vst [vmem:[%s3 + $0x48] sm:$0xff] %v480
  %513 = vst [vmem:[%s3 + $0x50] sm:$0xff] %v481
  %514 = vst [vmem:[%s3 + $0x58] sm:$0xff] %v482
  %515 = vst [vmem:[%s3 + $0x60] sm:$0xff] %v483
  %516 = vst [vmem:[%s3 + $0x68] sm:$0xff] %v484
  %517 = vst [vmem:[%s3 + $0x70] sm:$0xff] %v485
  %518 = vst [vmem:[%s3 + $0x78] sm:$0xff] %v486
  // Predicated region
  $region14: #{seq2seq_forward.10} parent=0 // pred_check
    _
  $region15: #{seq2seq_forward.10} parent=0 // pred_check_branch
    %520 = sbr.rel (0) target = $region17
  $region16: #{seq2seq_forward.10} parent=0 // pred_region
    _
  $region17: #{seq2seq_forward.10} parent=0 // pred_fallthru
    _
  // Predicated region
  $region18: #{seq2seq_forward.10} parent=0 // pred_check
    _
  $region19: #{seq2seq_forward.10} parent=0 // pred_check_branch
    %522 = sbr.rel (0) target = $region21
  $region20: #{seq2seq_forward.10} parent=0 // pred_region
    _
  $region21: #{seq2seq_forward.10} parent=0 // pred_fallthru
    _

// kernel: seq2seq_forward.9
$region0: #{seq2seq_forward.9}
  #allocation0 [shape = 'u32[]', space=smem, size = 0x4, offset = 0x4, fixed_abs, tag = 'smem constant byte address 0x4 - core index']
  #allocation1 [shape = 'u32[144,128]{1,0:T(1,128)}', space=vmem, size = 0x12000, scoped, tag = 'internal scratch']
  %s0 = inlined_call_operand.vmem [shape: s32[8,1], index: 0, kind: input, shape index: {}]
  %s1 = inlined_call_operand.vmem [shape: bf16[8,8,512], index: 1, kind: input, shape index: {}]
  %s2 = inlined_call_operand.vmem [shape: bf16[128,512], index: 2, kind: input, shape index: {}]
  %s3 = inlined_call_operand.vmem [shape: f32[8,128], index: 3, kind: input, shape index: {}, may-alias: {3,4}]
  %s4 = inlined_call_operand.vmem [shape: f32[8,128], index: 4, kind: input, shape index: {}, may-alias: {3,4}]
  %s5 = inlined_call_operand.vmem [shape: f32[8,8,128], index: 5, kind: output, shape index: {0}]
  %s6 = inlined_call_operand.hbm [shape: f32[8,128], index: 6, kind: output, shape index: {1}]
  %s7 = inlined_call_operand.hbm [shape: f32[8,128], index: 7, kind: output, shape index: {2}]
  %8 = xla_tuple %s5, %s6, %s7
  %s9 = sld [smem:[#allocation0]]
  $region50: #{seq2seq_forward.9} parent=0
    _
  %s11 = ssub.s32 1, %s9
  %s12 = scalar_select 0, %s11, %s9
  $region1: #{seq2seq_forward.9} parent=0
    #allocation2 [shape = 'u8[4096]{0}', space=vmem, size = 0x1000, scoped, tag = 'output window, operand 1, single buffered']
    #allocation3 [shape = 's32[1]{0}', space=sflag, size = 0x4, scoped, tag = 'scoped memory for seq2seq_forward.9']
    #allocation4 [shape = 'u8[4096]{0}', space=vmem, size = 0x1000, scoped, tag = 'output window, operand 2, single buffered']
    #allocation5 [shape = 's32[1]{0}', space=sflag, size = 0x4, scoped, tag = 'scoped memory for seq2seq_forward.9']
    %13 = vsyncpa [#allocation3], 0
    %14 = vsyncpa [#allocation5], 0
    // Predicated region
    $region2: #{seq2seq_forward.9} parent=1 // pred_check
      _
    $region3: #{seq2seq_forward.9} parent=1 // pred_check_branch
      %16 = sbr.rel (0) target = $region5
    $region4: #{seq2seq_forward.9} parent=1 // pred_region
      _
    $region5: #{seq2seq_forward.9} parent=1 // pred_fallthru
      _
    // Predicated region
    $region6: #{seq2seq_forward.9} parent=1 // pred_check
      _
    $region7: #{seq2seq_forward.9} parent=1 // pred_check_branch
      %18 = sbr.rel (0) target = $region9
    $region8: #{seq2seq_forward.9} parent=1 // pred_region
      _
    $region9: #{seq2seq_forward.9} parent=1 // pred_fallthru
      _
    // Predicated region
    $region10: #{seq2seq_forward.9} parent=1 // pred_check
      _
    $region11: #{seq2seq_forward.9} parent=1 // pred_check_branch
      %20 = sbr.rel (0) target = $region13
    $region12: #{seq2seq_forward.9} parent=1 // pred_region
      _
    $region13: #{seq2seq_forward.9} parent=1 // pred_fallthru
      _
    // Predicated region
    $region14: #{seq2seq_forward.9} parent=1 // pred_check
      _
    $region15: #{seq2seq_forward.9} parent=1 // pred_check_branch
      %22 = sbr.rel (0) target = $region17
    $region16: #{seq2seq_forward.9} parent=1 // pred_region
      _
    $region17: #{seq2seq_forward.9} parent=1 // pred_fallthru
      _
    // Predicated region
    $region18: #{seq2seq_forward.9} parent=1 // pred_check
      _
    $region19: #{seq2seq_forward.9} parent=1 // pred_check_branch
      %24 = sbr.rel (0) target = $region21
    $region20: #{seq2seq_forward.9} parent=1 // pred_region
      _
    $region21: #{seq2seq_forward.9} parent=1 // pred_fallthru
      _
    %p26 = scmp.eq.s32.totalorder 0, 0
    // Predicated region
    $region22: #{seq2seq_forward.9} parent=1 // pred_check
      %p27 = pneg %p26
    $region23: #{seq2seq_forward.9} parent=1 // pred_check_branch
      %29 = sbr.rel (%p27) target = $region25
    $region24: #{seq2seq_forward.9} parent=1 // pred_region
      %v30 = vld [vmem:[%s3] sm:$0xff]
      %31 = vst [vmem:[#allocation2] sm:$0xff] %v30
      %v32 = vld [vmem:[%s4] sm:$0xff]
      %33 = vst [vmem:[#allocation4] sm:$0xff] %v32
    $region25: #{seq2seq_forward.9} parent=1 // pred_fallthru
      _
    %v34 = vld [vmem:[#allocation2] sm:$0xff]
    %v35 = vld [vmem:[#allocation4] sm:$0xff]
    %v36 = vld [vmem:[%s2] sm:$0xff]
    %v37 = vld [vmem:[%s2 + $0x8] sm:$0xff]
    %v38 = vld [vmem:[%s2 + $0x10] sm:$0xff]
    %v39 = vld [vmem:[%s2 + $0x18] sm:$0xff]
    %v40 = vld [vmem:[%s2 + $0x20] sm:$0xff]
    %v41 = vld [vmem:[%s2 + $0x28] sm:$0xff]
    %v42 = vld [vmem:[%s2 + $0x30] sm:$0xff]
    %v43 = vld [vmem:[%s2 + $0x38] sm:$0xff]
    %v44 = vld [vmem:[%s2 + $0x40] sm:$0xff]
    %v45 = vld [vmem:[%s2 + $0x48] sm:$0xff]
    %v46 = vld [vmem:[%s2 + $0x50] sm:$0xff]
    %v47 = vld [vmem:[%s2 + $0x58] sm:$0xff]
    %v48 = vld [vmem:[%s2 + $0x60] sm:$0xff]
    %v49 = vld [vmem:[%s2 + $0x68] sm:$0xff]
    %v50 = vld [vmem:[%s2 + $0x70] sm:$0xff]
    %v51 = vld [vmem:[%s2 + $0x78] sm:$0xff]
    %v52 = vld [vmem:[%s2 + $0x80] sm:$0xff]
    %v53 = vld [vmem:[%s2 + $0x88] sm:$0xff]
    %v54 = vld [vmem:[%s2 + $0x90] sm:$0xff]
    %v55 = vld [vmem:[%s2 + $0x98] sm:$0xff]
    %v56 = vld [vmem:[%s2 + $0xa0] sm:$0xff]
    %v57 = vld [vmem:[%s2 + $0xa8] sm:$0xff]
    %v58 = vld [vmem:[%s2 + $0xb0] sm:$0xff]
    %v59 = vld [vmem:[%s2 + $0xb8] sm:$0xff]
    %v60 = vld [vmem:[%s2 + $0xc0] sm:$0xff]
    %v61 = vld [vmem:[%s2 + $0xc8] sm:$0xff]
    %v62 = vld [vmem:[%s2 + $0xd0] sm:$0xff]
    %v63 = vld [vmem:[%s2 + $0xd8] sm:$0xff]
    %v64 = vld [vmem:[%s2 + $0xe0] sm:$0xff]
    %v65 = vld [vmem:[%s2 + $0xe8] sm:$0xff]
    %v66 = vld [vmem:[%s2 + $0xf0] sm:$0xff]
    %v67 = vld [vmem:[%s2 + $0xf8] sm:$0xff]
    %v68 = vld [vmem:[%s0] sm:$0xff]
    %s69 = smul.u32 0, 8
    %v70 = vld [vmem:[%s1] sm:$0xff]
    %v71 = vld [vmem:[%s1 + $0x8] sm:$0xff]
    %v72 = vunpack.c.l.bf16 %v70
    %v73 = vunpack.c.h.bf16 %v70
    %v74 = vunpack.c.l.bf16 %v71
    %v75 = vunpack.c.h.bf16 %v71
    %v76 = vpack.c.bf16 %v34, %v34
    %v109 = vunpack.c.l.b16 %v36
    %v110 = vunpack.c.h.b16 %v36
    %v111 = vunpack.c.l.b16 %v37
    %v112 = vunpack.c.h.b16 %v37
    %v113 = vunpack.c.l.b16 %v38
    %v114 = vunpack.c.h.b16 %v38
    %v115 = vunpack.c.l.b16 %v39
    %v116 = vunpack.c.h.b16 %v39
    %v117 = vunpack.c.l.b16 %v40
    %v118 = vunpack.c.h.b16 %v40
    %v119 = vunpack.c.l.b16 %v41
    %v120 = vunpack.c.h.b16 %v41
    %v121 = vunpack.c.l.b16 %v42
    %v122 = vunpack.c.h.b16 %v42
    %v123 = vunpack.c.l.b16 %v43
    %v124 = vunpack.c.h.b16 %v43
    %v125 = vunpack.c.l.b16 %v44
    %v126 = vunpack.c.h.b16 %v44
    %v127 = vunpack.c.l.b16 %v45
    %v128 = vunpack.c.h.b16 %v45
    %v129 = vunpack.c.l.b16 %v46
    %v130 = vunpack.c.h.b16 %v46
    %v131 = vunpack.c.l.b16 %v47
    %v132 = vunpack.c.h.b16 %v47
    %v133 = vunpack.c.l.b16 %v48
    %v134 = vunpack.c.h.b16 %v48
    %v135 = vunpack.c.l.b16 %v49
    %v136 = vunpack.c.h.b16 %v49
    %v137 = vunpack.c.l.b16 %v50
    %v138 = vunpack.c.h.b16 %v50
    %v139 = vunpack.c.l.b16 %v51
    %v140 = vunpack.c.h.b16 %v51
    %v141 = vunpack.c.l.b16 %v52
    %v142 = vunpack.c.h.b16 %v52
    %v143 = vunpack.c.l.b16 %v53
    %v144 = vunpack.c.h.b16 %v53
    %v145 = vunpack.c.l.b16 %v54
    %v146 = vunpack.c.h.b16 %v54
    %v147 = vunpack.c.l.b16 %v55
    %v148 = vunpack.c.h.b16 %v55
    %v149 = vunpack.c.l.b16 %v56
    %v150 = vunpack.c.h.b16 %v56
    %v151 = vunpack.c.l.b16 %v57
    %v152 = vunpack.c.h.b16 %v57
    %v153 = vunpack.c.l.b16 %v58
    %v154 = vunpack.c.h.b16 %v58
    %v155 = vunpack.c.l.b16 %v59
    %v156 = vunpack.c.h.b16 %v59
    %v157 = vunpack.c.l.b16 %v60
    %v158 = vunpack.c.h.b16 %v60
    %v159 = vunpack.c.l.b16 %v61
    %v160 = vunpack.c.h.b16 %v61
    %v161 = vunpack.c.l.b16 %v62
    %v162 = vunpack.c.h.b16 %v62
    %v163 = vunpack.c.l.b16 %v63
    %v164 = vunpack.c.h.b16 %v63
    %v165 = vunpack.c.l.b16 %v64
    %v166 = vunpack.c.h.b16 %v64
    %v167 = vunpack.c.l.b16 %v65
    %v168 = vunpack.c.h.b16 %v65
    %v169 = vunpack.c.l.b16 %v66
    %v170 = vunpack.c.h.b16 %v66
    %v171 = vunpack.c.l.b16 %v67
    %v172 = vunpack.c.h.b16 %v67
    %v173 = vpack.c.b16 %v113, %v109
    %v174 = vpack.c.b16 %v114, %v110
    %v175 = vpack.c.b16 %v115, %v111
    %v176 = vpack.c.b16 %v116, %v112
    %v177 = vpack.c.b16 %v121, %v117
    %v178 = vpack.c.b16 %v122, %v118
    %v179 = vpack.c.b16 %v123, %v119
    %v180 = vpack.c.b16 %v124, %v120
    %v181 = vpack.c.b16 %v129, %v125
    %v182 = vpack.c.b16 %v130, %v126
    %v183 = vpack.c.b16 %v131, %v127
    %v184 = vpack.c.b16 %v132, %v128
    %v185 = vpack.c.b16 %v137, %v133
    %v186 = vpack.c.b16 %v138, %v134
    %v187 = vpack.c.b16 %v139, %v135
    %v188 = vpack.c.b16 %v140, %v136
    %v189 = vpack.c.b16 %v145, %v141
    %v190 = vpack.c.b16 %v146, %v142
    %v191 = vpack.c.b16 %v147, %v143
    %v192 = vpack.c.b16 %v148, %v144
    %v193 = vpack.c.b16 %v153, %v149
    %v194 = vpack.c.b16 %v154, %v150
    %v195 = vpack.c.b16 %v155, %v151
    %v196 = vpack.c.b16 %v156, %v152
    %v197 = vpack.c.b16 %v161, %v157
    %v198 = vpack.c.b16 %v162, %v158
    %v199 = vpack.c.b16 %v163, %v159
    %v200 = vpack.c.b16 %v164, %v160
    %v201 = vpack.c.b16 %v169, %v165
    %v202 = vpack.c.b16 %v170, %v166
    %v203 = vpack.c.b16 %v171, %v167
    %v204 = vpack.c.b16 %v172, %v168
    %237 = vmatprep.subr.bf16.mxu0 %v174
    %238 = vmatpush1.bf16.msra.mxu0 %v173
    %239 = vmatprep.subr.bf16.mxu0 %v178
    %240 = vmatpush1.bf16.msra.mxu0 %v177
    %241 = vmatprep.subr.bf16.mxu0 %v182
    %242 = vmatpush1.bf16.msra.mxu0 %v181
    %243 = vmatprep.subr.bf16.mxu0 %v186
    %244 = vmatpush1.bf16.msra.mxu0 %v185
    %245 = vmatprep.subr.bf16.mxu0 %v190
    %246 = vmatpush1.bf16.msra.mxu0 %v189
    %247 = vmatprep.subr.bf16.mxu0 %v194
    %248 = vmatpush1.bf16.msra.mxu0 %v193
    %249 = vmatprep.subr.bf16.mxu0 %v198
    %250 = vmatpush1.bf16.msra.mxu0 %v197
    %251 = vmatprep.subr.bf16.mxu0 %v202
    %252 = vmatpush1.bf16.msra.mxu0 %v201
    %253 = vmatprep.subr.bf16.mxu0 0
    %254 = vmatpush1.bf16.msra.mxu0 0
    %255 = vmatprep.subr.bf16.mxu0 0
    %256 = vmatpush1.bf16.msra.mxu0 0
    %257 = vmatprep.subr.bf16.mxu0 0
    %258 = vmatpush1.bf16.msra.mxu0 0
    %259 = vmatprep.subr.bf16.mxu0 0
    %260 = vmatpush1.bf16.msra.mxu0 0
    %261 = vmatprep.subr.bf16.mxu0 0
    %262 = vmatpush1.bf16.msra.mxu0 0
    %263 = vmatprep.subr.bf16.mxu0 0
    %264 = vmatpush1.bf16.msra.mxu0 0
    %265 = vmatprep.subr.bf16.mxu0 0
    %266 = vmatpush1.bf16.msra.mxu0 0
    %267 = vmatprep.subr.bf16.mxu0 0
    %268 = vmatpush1.bf16.msra.mxu0 0
    %269 = vmatprep.mubr.bf16.mxu0 0
    %270 = vmatmul.mubr.bf16.gmra.mrb[0].mxu0 %v76
    %v271 = vpop.f32.mrb[0].mxu0
    %v272 = vadd.f32 0.0, %v271
    %v273 = vpop.f32.mrb[0].mxu0
    %v274 = vadd.f32 0.0, %v273
    %v275 = vpop.f32.mrb[0].mxu0
    %v276 = vpop.f32.mrb[0].mxu0
    %277 = vdwg.mxu0
    %278 = vmatprep.subr.bf16.mxu0 %v176
    %279 = vmatpush1.bf16.msra.mxu0 %v175
    %280 = vmatprep.subr.bf16.mxu0 %v180
    %281 = vmatpush1.bf16.msra.mxu0 %v179
    %282 = vmatprep.subr.bf16.mxu0 %v184
    %283 = vmatpush1.bf16.msra.mxu0 %v183
    %284 = vmatprep.subr.bf16.mxu0 %v188
    %285 = vmatpush1.bf16.msra.mxu0 %v187
    %286 = vmatprep.subr.bf16.mxu0 %v192
    %287 = vmatpush1.bf16.msra.mxu0 %v191
    %288 = vmatprep.subr.bf16.mxu0 %v196
    %289 = vmatpush1.bf16.msra.mxu0 %v195
    %290 = vmatprep.subr.bf16.mxu0 %v200
    %291 = vmatpush1.bf16.msra.mxu0 %v199
    %292 = vmatprep.subr.bf16.mxu0 %v204
    %293 = vmatpush1.bf16.msra.mxu0 %v203
    %294 = vmatprep.subr.bf16.mxu0 0
    %295 = vmatpush1.bf16.msra.mxu0 0
    %296 = vmatprep.subr.bf16.mxu0 0
    %297 = vmatpush1.bf16.msra.mxu0 0
    %298 = vmatprep.subr.bf16.mxu0 0
    %299 = vmatpush1.bf16.msra.mxu0 0
    %300 = vmatprep.subr.bf16.mxu0 0
    %301 = vmatpush1.bf16.msra.mxu0 0
    %302 = vmatprep.subr.bf16.mxu0 0
    %303 = vmatpush1.bf16.msra.mxu0 0
    %304 = vmatprep.subr.bf16.mxu0 0
    %305 = vmatpush1.bf16.msra.mxu0 0
    %306 = vmatprep.subr.bf16.mxu0 0
    %307 = vmatpush1.bf16.msra.mxu0 0
    %308 = vmatprep.subr.bf16.mxu0 0
    %309 = vmatpush1.bf16.msra.mxu0 0
    %310 = vmatprep.mubr.bf16.mxu0 0
    %311 = vmatmul.mubr.bf16.gmra.mrb[0].mxu0 %v76
    %v312 = vpop.f32.mrb[0].mxu0
    %v313 = vadd.f32 0.0, %v312
    %v314 = vpop.f32.mrb[0].mxu0
    %v315 = vadd.f32 0.0, %v314
    %v316 = vpop.f32.mrb[0].mxu0
    %v317 = vpop.f32.mrb[0].mxu0
    %318 = vdwg.mxu0
    %v319 = vadd.f32 %v72, %v272
    %v320 = vadd.f32 %v73, %v274
    %v321 = vadd.f32 %v74, %v313
    %v322 = vadd.f32 %v75, %v315
    %v323 = vmul.f32 %v319, 0.5
    %v324 = vtanh.pop %v323
    %v325 = vmul.f32 %v324, 0.5
    %v326 = vadd.f32 %v325, 0.5
    %v327 = vmul.f32 %v320, 0.5
    %v328 = vtanh.pop %v327
    %v329 = vmul.f32 %v328, 0.5
    %v330 = vadd.f32 %v329, 0.5
    %v331 = vtanh.pop %v321
    %v332 = vmul.f32 %v322, 0.5
    %v333 = vtanh.pop %v332
    %v334 = vmul.f32 %v333, 0.5
    %v335 = vadd.f32 %v334, 0.5
    %v336 = vmul.f32 %v330, %v35
    %v337 = vmul.f32 %v326, %v331
    %v338 = vadd.f32 %v336, %v337
    %v339 = vtanh.pop %v338
    %v340 = vmul.f32 %v335, %v339
    %v341 = vstv %s69
    %vm342 = vcmp.gt.s32.totalorder %v68, %v341
    %v343 = vsel %vm342, 1, 0
    %344 = vset.pattern.permute.xlu0 0
    %345 = vperm.xlu0 %344, %v343
    %v346 = vpop.permute.xlu0 %345
    %vm347 = vcmp.eq.s32.totalorder %v346, 1
    %v348 = vsel %vm347, %v340, %v34
    %v349 = vsel %vm347, %v338, %v35
    %v350 = vsel %vm347, %v340, 0.0
    %351 = vst [vmem:[%s5] sm:$0xff] %v350
    %s352 = scalar_lea.vmem %s1, 16
    %v353 = vld [vmem:[%s352] sm:$0xff]
    %v354 = vld [vmem:[%s352 + $0x8] sm:$0xff]
    %v355 = vunpack.c.l.bf16 %v353
    %v356 = vunpack.c.h.bf16 %v353
    %v357 = vunpack.c.l.bf16 %v354
    %v358 = vunpack.c.h.bf16 %v354
    %v359 = vpack.c.bf16 %v348, %v348
    %360 = vmatprep.subr.bf16.mxu0 %v174
    %361 = vmatpush1.bf16.msra.mxu0 %v173
    %362 = vmatprep.subr.bf16.mxu0 %v178
    %363 = vmatpush1.bf16.msra.mxu0 %v177
    %364 = vmatprep.subr.bf16.mxu0 %v182
    %365 = vmatpush1.bf16.msra.mxu0 %v181
    %366 = vmatprep.subr.bf16.mxu0 %v186
    %367 = vmatpush1.bf16.msra.mxu0 %v185
    %368 = vmatprep.subr.bf16.mxu0 %v190
    %369 = vmatpush1.bf16.msra.mxu0 %v189
    %370 = vmatprep.subr.bf16.mxu0 %v194
    %371 = vmatpush1.bf16.msra.mxu0 %v193
    %372 = vmatprep.subr.bf16.mxu0 %v198
    %373 = vmatpush1.bf16.msra.mxu0 %v197
    %374 = vmatprep.subr.bf16.mxu0 %v202
    %375 = vmatpush1.bf16.msra.mxu0 %v201
    %376 = vmatprep.subr.bf16.mxu0 0
    %377 = vmatpush1.bf16.msra.mxu0 0
    %378 = vmatprep.subr.bf16.mxu0 0
    %379 = vmatpush1.bf16.msra.mxu0 0
    %380 = vmatprep.subr.bf16.mxu0 0
    %381 = vmatpush1.bf16.msra.mxu0 0
    %382 = vmatprep.subr.bf16.mxu0 0
    %383 = vmatpush1.bf16.msra.mxu0 0
    %384 = vmatprep.subr.bf16.mxu0 0
    %385 = vmatpush1.bf16.msra.mxu0 0
    %386 = vmatprep.subr.bf16.mxu0 0
    %387 = vmatpush1.bf16.msra.mxu0 0
    %388 = vmatprep.subr.bf16.mxu0 0
    %389 = vmatpush1.bf16.msra.mxu0 0
    %390 = vmatprep.subr.bf16.mxu0 0
    %391 = vmatpush1.bf16.msra.mxu0 0
    %392 = vmatprep.mubr.bf16.mxu0 0
    %393 = vmatmul.mubr.bf16.gmra.mrb[0].mxu0 %v359
    %v394 = vpop.f32.mrb[0].mxu0
    %v395 = vadd.f32 0.0, %v394
    %v396 = vpop.f32.mrb[0].mxu0
    %v397 = vadd.f32 0.0, %v396
    %v398 = vpop.f32.mrb[0].mxu0
    %v399 = vpop.f32.mrb[0].mxu0
    %400 = vdwg.mxu0
    %401 = vmatprep.subr.bf16.mxu0 %v176
    %402 = vmatpush1.bf16.msra.mxu0 %v175
    %403 = vmatprep.subr.bf16.mxu0 %v180
    %404 = vmatpush1.bf16.msra.mxu0 %v179
    %405 = vmatprep.subr.bf16.mxu0 %v184
    %406 = vmatpush1.bf16.msra.mxu0 %v183
    %407 = vmatprep.subr.bf16.mxu0 %v188
    %408 = vmatpush1.bf16.msra.mxu0 %v187
    %409 = vmatprep.subr.bf16.mxu0 %v192
    %410 = vmatpush1.bf16.msra.mxu0 %v191
    %411 = vmatprep.subr.bf16.mxu0 %v196
    %412 = vmatpush1.bf16.msra.mxu0 %v195
    %413 = vmatprep.subr.bf16.mxu0 %v200
    %414 = vmatpush1.bf16.msra.mxu0 %v199
    %415 = vmatprep.subr.bf16.mxu0 %v204
    %416 = vmatpush1.bf16.msra.mxu0 %v203
    %417 = vmatprep.subr.bf16.mxu0 0
    %418 = vmatpush1.bf16.msra.mxu0 0
    %419 = vmatprep.subr.bf16.mxu0 0
    %420 = vmatpush1.bf16.msra.mxu0 0
    %421 = vmatprep.subr.bf16.mxu0 0
    %422 = vmatpush1.bf16.msra.mxu0 0
    %423 = vmatprep.subr.bf16.mxu0 0
    %424 = vmatpush1.bf16.msra.mxu0 0
    %425 = vmatprep.subr.bf16.mxu0 0
    %426 = vmatpush1.bf16.msra.mxu0 0
    %427 = vmatprep.subr.bf16.mxu0 0
    %428 = vmatpush1.bf16.msra.mxu0 0
    %429 = vmatprep.subr.bf16.mxu0 0
    %430 = vmatpush1.bf16.msra.mxu0 0
    %431 = vmatprep.subr.bf16.mxu0 0
    %432 = vmatpush1.bf16.msra.mxu0 0
    %433 = vmatprep.mubr.bf16.mxu0 0
    %434 = vmatmul.mubr.bf16.gmra.mrb[0].mxu0 %v359
    %v435 = vpop.f32.mrb[0].mxu0
    %v436 = vadd.f32 0.0, %v435
    %v437 = vpop.f32.mrb[0].mxu0
    %v438 = vadd.f32 0.0, %v437
    %v439 = vpop.f32.mrb[0].mxu0
    %v440 = vpop.f32.mrb[0].mxu0
    %441 = vdwg.mxu0
    %v442 = vadd.f32 %v355, %v395
    %v443 = vadd.f32 %v356, %v397
    %v444 = vadd.f32 %v357, %v436
    %v445 = vadd.f32 %v358, %v438
    %v446 = vmul.f32 %v442, 0.5
    %v447 = vtanh.pop %v446
    %v448 = vmul.f32 %v447, 0.5
    %v449 = vadd.f32 %v448, 0.5
    %v450 = vmul.f32 %v443, 0.5
    %v451 = vtanh.pop %v450
    %v452 = vmul.f32 %v451, 0.5
    %v453 = vadd.f32 %v452, 0.5
    %v454 = vtanh.pop %v444
    %v455 = vmul.f32 %v445, 0.5
    %v456 = vtanh.pop %v455
    %v457 = vmul.f32 %v456, 0.5
    %v458 = vadd.f32 %v457, 0.5
    %v459 = vmul.f32 %v453, %v349
    %v460 = vmul.f32 %v449, %v454
    %v461 = vadd.f32 %v459, %v460
    %v462 = vtanh.pop %v461
    %v463 = vmul.f32 %v458, %v462
    %s464 = sadd.s32 %s69, 1
    %v465 = vstv %s464
    %vm466 = vcmp.gt.s32.totalorder %v68, %v465
    %v467 = vsel %vm466, 1, 0
    %468 = vset.pattern.permute.xlu0 0
    %469 = vperm.xlu0 %468, %v467
    %v470 = vpop.permute.xlu0 %469
    %vm471 = vcmp.eq.s32.totalorder %v470, 1
    %v472 = vsel %vm471, %v463, %v348
    %v473 = vsel %vm471, %v461, %v349
    %v474 = vsel %vm471, %v463, 0.0
    %s475 = scalar_lea.vmem %s5, 8
    %476 = vst [vmem:[%s475] sm:$0xff] %v474
    %s477 = scalar_lea.vmem %s1, 32
    %v478 = vld [vmem:[%s477] sm:$0xff]
    %v479 = vld [vmem:[%s477 + $0x8] sm:$0xff]
    %v480 = vunpack.c.l.bf16 %v478
    %v481 = vunpack.c.h.bf16 %v478
    %v482 = vunpack.c.l.bf16 %v479
    %v483 = vunpack.c.h.bf16 %v479
    %v484 = vpack.c.bf16 %v472, %v472
    %485 = vmatprep.subr.bf16.mxu0 %v174
    %486 = vmatpush1.bf16.msra.mxu0 %v173
    %487 = vmatprep.subr.bf16.mxu0 %v178
    %488 = vmatpush1.bf16.msra.mxu0 %v177
    %489 = vmatprep.subr.bf16.mxu0 %v182
    %490 = vmatpush1.bf16.msra.mxu0 %v181
    %491 = vmatprep.subr.bf16.mxu0 %v186
    %492 = vmatpush1.bf16.msra.mxu0 %v185
    %493 = vmatprep.subr.bf16.mxu0 %v190
    %494 = vmatpush1.bf16.msra.mxu0 %v189
    %495 = vmatprep.subr.bf16.mxu0 %v194
    %496 = vmatpush1.bf16.msra.mxu0 %v193
    %497 = vmatprep.subr.bf16.mxu0 %v198
    %498 = vmatpush1.bf16.msra.mxu0 %v197
    %499 = vmatprep.subr.bf16.mxu0 %v202
    %500 = vmatpush1.bf16.msra.mxu0 %v201
    %501 = vmatprep.subr.bf16.mxu0 0
    %502 = vmatpush1.bf16.msra.mxu0 0
    %503 = vmatprep.subr.bf16.mxu0 0
    %504 = vmatpush1.bf16.msra.mxu0 0
    %505 = vmatprep.subr.bf16.mxu0 0
    %506 = vmatpush1.bf16.msra.mxu0 0
    %507 = vmatprep.subr.bf16.mxu0 0
    %508 = vmatpush1.bf16.msra.mxu0 0
    %509 = vmatprep.subr.bf16.mxu0 0
    %510 = vmatpush1.bf16.msra.mxu0 0
    %511 = vmatprep.subr.bf16.mxu0 0
    %512 = vmatpush1.bf16.msra.mxu0 0
    %513 = vmatprep.subr.bf16.mxu0 0
    %514 = vmatpush1.bf16.msra.mxu0 0
    %515 = vmatprep.subr.bf16.mxu0 0
    %516 = vmatpush1.bf16.msra.mxu0 0
    %517 = vmatprep.mubr.bf16.mxu0 0
    %518 = vmatmul.mubr.bf16.gmra.mrb[0].mxu0 %v484
    %v519 = vpop.f32.mrb[0].mxu0
    %v520 = vadd.f32 0.0, %v519
    %v521 = vpop.f32.mrb[0].mxu0
    %v522 = vadd.f32 0.0, %v521
    %v523 = vpop.f32.mrb[0].mxu0
    %v524 = vpop.f32.mrb[0].mxu0
    %525 = vdwg.mxu0
    %526 = vmatprep.subr.bf16.mxu0 %v176
    %527 = vmatpush1.bf16.msra.mxu0 %v175
    %528 = vmatprep.subr.bf16.mxu0 %v180
    %529 = vmatpush1.bf16.msra.mxu0 %v179
    %530 = vmatprep.subr.bf16.mxu0 %v184
    %531 = vmatpush1.bf16.msra.mxu0 %v183
    %532 = vmatprep.subr.bf16.mxu0 %v188
    %533 = vmatpush1.bf16.msra.mxu0 %v187
    %534 = vmatprep.subr.bf16.mxu0 %v192
    %535 = vmatpush1.bf16.msra.mxu0 %v191
    %536 = vmatprep.subr.bf16.mxu0 %v196
    %537 = vmatpush1.bf16.msra.mxu0 %v195
    %538 = vmatprep.subr.bf16.mxu0 %v200
    %539 = vmatpush1.bf16.msra.mxu0 %v199
    %540 = vmatprep.subr.bf16.mxu0 %v204
    %541 = vmatpush1.bf16.msra.mxu0 %v203
    %542 = vmatprep.subr.bf16.mxu0 0
    %543 = vmatpush1.bf16.msra.mxu0 0
    %544 = vmatprep.subr.bf16.mxu0 0
    %545 = vmatpush1.bf16.msra.mxu0 0
    %546 = vmatprep.subr.bf16.mxu0 0
    %547 = vmatpush1.bf16.msra.mxu0 0
    %548 = vmatprep.subr.bf16.mxu0 0
    %549 = vmatpush1.bf16.msra.mxu0 0
    %550 = vmatprep.subr.bf16.mxu0 0
    %551 = vmatpush1.bf16.msra.mxu0 0
    %552 = vmatprep.subr.bf16.mxu0 0
    %553 = vmatpush1.bf16.msra.mxu0 0
    %554 = vmatprep.subr.bf16.mxu0 0
    %555 = vmatpush1.bf16.msra.mxu0 0
    %556 = vmatprep.subr.bf16.mxu0 0
    %557 = vmatpush1.bf16.msra.mxu0 0
    %558 = vmatprep.mubr.bf16.mxu0 0
    %559 = vmatmul.mubr.bf16.gmra.mrb[0].mxu0 %v484
    %v560 = vpop.f32.mrb[0].mxu0
    %v561 = vadd.f32 0.0, %v560
    %v562 = vpop.f32.mrb[0].mxu0
    %v563 = vadd.f32 0.0, %v562
    %v564 = vpop.f32.mrb[0].mxu0
    %v565 = vpop.f32.mrb[0].mxu0
    %566 = vdwg.mxu0
    %v567 = vadd.f32 %v480, %v520
    %v568 = vadd.f32 %v481, %v522
    %v569 = vadd.f32 %v482, %v561
    %v570 = vadd.f32 %v483, %v563
    %v571 = vmul.f32 %v567, 0.5
    %v572 = vtanh.pop %v571
    %v573 = vmul.f32 %v572, 0.5
    %v574 = vadd.f32 %v573, 0.5
    %v575 = vmul.f32 %v568, 0.5
    %v576 = vtanh.pop %v575
    %v577 = vmul.f32 %v576, 0.5
    %v578 = vadd.f32 %v577, 0.5
    %v579 = vtanh.pop %v569
    %v580 = vmul.f32 %v570, 0.5
    %v581 = vtanh.pop %v580
    %v582 = vmul.f32 %v581, 0.5
    %v583 = vadd.f32 %v582, 0.5
    %v584 = vmul.f32 %v578, %v473
    %v585 = vmul.f32 %v574, %v579
    %v586 = vadd.f32 %v584, %v585
    %v587 = vtanh.pop %v586
    %v588 = vmul.f32 %v583, %v587
    %s589 = sadd.s32 %s69, 2
    %v590 = vstv %s589
    %vm591 = vcmp.gt.s32.totalorder %v68, %v590
    %v592 = vsel %vm591, 1, 0
    %593 = vset.pattern.permute.xlu0 0
    %594 = vperm.xlu0 %593, %v592
    %v595 = vpop.permute.xlu0 %594
    %vm596 = vcmp.eq.s32.totalorder %v595, 1
    %v597 = vsel %vm596, %v588, %v472
    %v598 = vsel %vm596, %v586, %v473
    %v599 = vsel %vm596, %v588, 0.0
    %s600 = scalar_lea.vmem %s5, 16
    %601 = vst [vmem:[%s600] sm:$0xff] %v599
    %s602 = scalar_lea.vmem %s1, 48
    %v603 = vld [vmem:[%s602] sm:$0xff]
    %v604 = vld [vmem:[%s602 + $0x8] sm:$0xff]
    %v605 = vunpack.c.l.bf16 %v603
    %v606 = vunpack.c.h.bf16 %v603
    %v607 = vunpack.c.l.bf16 %v604
    %v608 = vunpack.c.h.bf16 %v604
    %v609 = vpack.c.bf16 %v597, %v597
    %610 = vmatprep.subr.bf16.mxu0 %v174
    %611 = vmatpush1.bf16.msra.mxu0 %v173
    %612 = vmatprep.subr.bf16.mxu0 %v178
    %613 = vmatpush1.bf16.msra.mxu0 %v177
    %614 = vmatprep.subr.bf16.mxu0 %v182
    %615 = vmatpush1.bf16.msra.mxu0 %v181
    %616 = vmatprep.subr.bf16.mxu0 %v186
    %617 = vmatpush1.bf16.msra.mxu0 %v185
    %618 = vmatprep.subr.bf16.mxu0 %v190
    %619 = vmatpush1.bf16.msra.mxu0 %v189
    %620 = vmatprep.subr.bf16.mxu0 %v194
    %621 = vmatpush1.bf16.msra.mxu0 %v193
    %622 = vmatprep.subr.bf16.mxu0 %v198
    %623 = vmatpush1.bf16.msra.mxu0 %v197
    %624 = vmatprep.subr.bf16.mxu0 %v202
    %625 = vmatpush1.bf16.msra.mxu0 %v201
    %626 = vmatprep.subr.bf16.mxu0 0
    %627 = vmatpush1.bf16.msra.mxu0 0
    %628 = vmatprep.subr.bf16.mxu0 0
    %629 = vmatpush1.bf16.msra.mxu0 0
    %630 = vmatprep.subr.bf16.mxu0 0
    %631 = vmatpush1.bf16.msra.mxu0 0
    %632 = vmatprep.subr.bf16.mxu0 0
    %633 = vmatpush1.bf16.msra.mxu0 0
    %634 = vmatprep.subr.bf16.mxu0 0
    %635 = vmatpush1.bf16.msra.mxu0 0
    %636 = vmatprep.subr.bf16.mxu0 0
    %637 = vmatpush1.bf16.msra.mxu0 0
    %638 = vmatprep.subr.bf16.mxu0 0
    %639 = vmatpush1.bf16.msra.mxu0 0
    %640 = vmatprep.subr.bf16.mxu0 0
    %641 = vmatpush1.bf16.msra.mxu0 0
    %642 = vmatprep.mubr.bf16.mxu0 0
    %643 = vmatmul.mubr.bf16.gmra.mrb[0].mxu0 %v609
    %v644 = vpop.f32.mrb[0].mxu0
    %v645 = vadd.f32 0.0, %v644
    %v646 = vpop.f32.mrb[0].mxu0
    %v647 = vadd.f32 0.0, %v646
    %v648 = vpop.f32.mrb[0].mxu0
    %v649 = vpop.f32.mrb[0].mxu0
    %650 = vdwg.mxu0
    %651 = vmatprep.subr.bf16.mxu0 %v176
    %652 = vmatpush1.bf16.msra.mxu0 %v175
    %653 = vmatprep.subr.bf16.mxu0 %v180
    %654 = vmatpush1.bf16.msra.mxu0 %v179
    %655 = vmatprep.subr.bf16.mxu0 %v184
    %656 = vmatpush1.bf16.msra.mxu0 %v183
    %657 = vmatprep.subr.bf16.mxu0 %v188
    %658 = vmatpush1.bf16.msra.mxu0 %v187
    %659 = vmatprep.subr.bf16.mxu0 %v192
    %660 = vmatpush1.bf16.msra.mxu0 %v191
    %661 = vmatprep.subr.bf16.mxu0 %v196
    %662 = vmatpush1.bf16.msra.mxu0 %v195
    %663 = vmatprep.subr.bf16.mxu0 %v200
    %664 = vmatpush1.bf16.msra.mxu0 %v199
    %665 = vmatprep.subr.bf16.mxu0 %v204
    %666 = vmatpush1.bf16.msra.mxu0 %v203
    %667 = vmatprep.subr.bf16.mxu0 0
    %668 = vmatpush1.bf16.msra.mxu0 0
    %669 = vmatprep.subr.bf16.mxu0 0
    %670 = vmatpush1.bf16.msra.mxu0 0
    %671 = vmatprep.subr.bf16.mxu0 0
    %672 = vmatpush1.bf16.msra.mxu0 0
    %673 = vmatprep.subr.bf16.mxu0 0
    %674 = vmatpush1.bf16.msra.mxu0 0
    %675 = vmatprep.subr.bf16.mxu0 0
    %676 = vmatpush1.bf16.msra.mxu0 0
    %677 = vmatprep.subr.bf16.mxu0 0
    %678 = vmatpush1.bf16.msra.mxu0 0
    %679 = vmatprep.subr.bf16.mxu0 0
    %680 = vmatpush1.bf16.msra.mxu0 0
    %681 = vmatprep.subr.bf16.mxu0 0
    %682 = vmatpush1.bf16.msra.mxu0 0
    %683 = vmatprep.mubr.bf16.mxu0 0
    %684 = vmatmul.mubr.bf16.gmra.mrb[0].mxu0 %v609
    %v685 = vpop.f32.mrb[0].mxu0
    %v686 = vadd.f32 0.0, %v685
    %v687 = vpop.f32.mrb[0].mxu0
    %v688 = vadd.f32 0.0, %v687
    %v689 = vpop.f32.mrb[0].mxu0
    %v690 = vpop.f32.mrb[0].mxu0
    %691 = vdwg.mxu0
    %v692 = vadd.f32 %v605, %v645
    %v693 = vadd.f32 %v606, %v647
    %v694 = vadd.f32 %v607, %v686
    %v695 = vadd.f32 %v608, %v688
    %v696 = vmul.f32 %v692, 0.5
    %v697 = vtanh.pop %v696
    %v698 = vmul.f32 %v697, 0.5
    %v699 = vadd.f32 %v698, 0.5
    %v700 = vmul.f32 %v693, 0.5
    %v701 = vtanh.pop %v700
    %v702 = vmul.f32 %v701, 0.5
    %v703 = vadd.f32 %v702, 0.5
    %v704 = vtanh.pop %v694
    %v705 = vmul.f32 %v695, 0.5
    %v706 = vtanh.pop %v705
    %v707 = vmul.f32 %v706, 0.5
    %v708 = vadd.f32 %v707, 0.5
    %v709 = vmul.f32 %v703, %v598
    %v710 = vmul.f32 %v699, %v704
    %v711 = vadd.f32 %v709, %v710
    %v712 = vtanh.pop %v711
    %v713 = vmul.f32 %v708, %v712
    %s714 = sadd.s32 %s69, 3
    %v715 = vstv %s714
    %vm716 = vcmp.gt.s32.totalorder %v68, %v715
    %v717 = vsel %vm716, 1, 0
    %718 = vset.pattern.permute.xlu0 0
    %719 = vperm.xlu0 %718, %v717
    %v720 = vpop.permute.xlu0 %719
    %vm721 = vcmp.eq.s32.totalorder %v720, 1
    %v722 = vsel %vm721, %v713, %v597
    %v723 = vsel %vm721, %v711, %v598
    %v724 = vsel %vm721, %v713, 0.0
    %s725 = scalar_lea.vmem %s5, 24
    %726 = vst [vmem:[%s725] sm:$0xff] %v724
    %s727 = scalar_lea.vmem %s1, 64
    %v728 = vld [vmem:[%s727] sm:$0xff]
    %v729 = vld [vmem:[%s727 + $0x8] sm:$0xff]
    %v730 = vunpack.c.l.bf16 %v728
    %v731 = vunpack.c.h.bf16 %v728
    %v732 = vunpack.c.l.bf16 %v729
    %v733 = vunpack.c.h.bf16 %v729
    %v734 = vpack.c.bf16 %v722, %v722
    %735 = vmatprep.subr.bf16.mxu0 %v174
    %736 = vmatpush1.bf16.msra.mxu0 %v173
    %737 = vmatprep.subr.bf16.mxu0 %v178
    %738 = vmatpush1.bf16.msra.mxu0 %v177
    %739 = vmatprep.subr.bf16.mxu0 %v182
    %740 = vmatpush1.bf16.msra.mxu0 %v181
    %741 = vmatprep.subr.bf16.mxu0 %v186
    %742 = vmatpush1.bf16.msra.mxu0 %v185
    %743 = vmatprep.subr.bf16.mxu0 %v190
    %744 = vmatpush1.bf16.msra.mxu0 %v189
    %745 = vmatprep.subr.bf16.mxu0 %v194
    %746 = vmatpush1.bf16.msra.mxu0 %v193
    %747 = vmatprep.subr.bf16.mxu0 %v198
    %748 = vmatpush1.bf16.msra.mxu0 %v197
    %749 = vmatprep.subr.bf16.mxu0 %v202
    %750 = vmatpush1.bf16.msra.mxu0 %v201
    %751 = vmatprep.subr.bf16.mxu0 0
    %752 = vmatpush1.bf16.msra.mxu0 0
    %753 = vmatprep.subr.bf16.mxu0 0
    %754 = vmatpush1.bf16.msra.mxu0 0
    %755 = vmatprep.subr.bf16.mxu0 0
    %756 = vmatpush1.bf16.msra.mxu0 0
    %757 = vmatprep.subr.bf16.mxu0 0
    %758 = vmatpush1.bf16.msra.mxu0 0
    %759 = vmatprep.subr.bf16.mxu0 0
    %760 = vmatpush1.bf16.msra.mxu0 0
    %761 = vmatprep.subr.bf16.mxu0 0
    %762 = vmatpush1.bf16.msra.mxu0 0
    %763 = vmatprep.subr.bf16.mxu0 0
    %764 = vmatpush1.bf16.msra.mxu0 0
    %765 = vmatprep.subr.bf16.mxu0 0
    %766 = vmatpush1.bf16.msra.mxu0 0
    %767 = vmatprep.mubr.bf16.mxu0 0
    %768 = vmatmul.mubr.bf16.gmra.mrb[0].mxu0 %v734
    %v769 = vpop.f32.mrb[0].mxu0
    %v770 = vadd.f32 0.0, %v769
    %v771 = vpop.f32.mrb[0].mxu0
    %v772 = vadd.f32 0.0, %v771
    %v773 = vpop.f32.mrb[0].mxu0
    %v774 = vpop.f32.mrb[0].mxu0
    %775 = vdwg.mxu0
    %776 = vmatprep.subr.bf16.mxu0 %v176
    %777 = vmatpush1.bf16.msra.mxu0 %v175
    %778 = vmatprep.subr.bf16.mxu0 %v180
    %779 = vmatpush1.bf16.msra.mxu0 %v179
    %780 = vmatprep.subr.bf16.mxu0 %v184
    %781 = vmatpush1.bf16.msra.mxu0 %v183
    %782 = vmatprep.subr.bf16.mxu0 %v188
    %783 = vmatpush1.bf16.msra.mxu0 %v187
    %784 = vmatprep.subr.bf16.mxu0 %v192
    %785 = vmatpush1.bf16.msra.mxu0 %v191
    %786 = vmatprep.subr.bf16.mxu0 %v196
    %787 = vmatpush1.bf16.msra.mxu0 %v195
    %788 = vmatprep.subr.bf16.mxu0 %v200
    %789 = vmatpush1.bf16.msra.mxu0 %v199
    %790 = vmatprep.subr.bf16.mxu0 %v204
    %791 = vmatpush1.bf16.msra.mxu0 %v203
    %792 = vmatprep.subr.bf16.mxu0 0
    %793 = vmatpush1.bf16.msra.mxu0 0
    %794 = vmatprep.subr.bf16.mxu0 0
    %795 = vmatpush1.bf16.msra.mxu0 0
    %796 = vmatprep.subr.bf16.mxu0 0
    %797 = vmatpush1.bf16.msra.mxu0 0
    %798 = vmatprep.subr.bf16.mxu0 0
    %799 = vmatpush1.bf16.msra.mxu0 0
    %800 = vmatprep.subr.bf16.mxu0 0
    %801 = vmatpush1.bf16.msra.mxu0 0
    %802 = vmatprep.subr.bf16.mxu0 0
    %803 = vmatpush1.bf16.msra.mxu0 0
    %804 = vmatprep.subr.bf16.mxu0 0
    %805 = vmatpush1.bf16.msra.mxu0 0
    %806 = vmatprep.subr.bf16.mxu0 0
    %807 = vmatpush1.bf16.msra.mxu0 0
    %808 = vmatprep.mubr.bf16.mxu0 0
    %809 = vmatmul.mubr.bf16.gmra.mrb[0].mxu0 %v734
    %v810 = vpop.f32.mrb[0].mxu0
    %v811 = vadd.f32 0.0, %v810
    %v812 = vpop.f32.mrb[0].mxu0
    %v813 = vadd.f32 0.0, %v812
    %v814 = vpop.f32.mrb[0].mxu0
    %v815 = vpop.f32.mrb[0].mxu0
    %816 = vdwg.mxu0
    %v817 = vadd.f32 %v730, %v770
    %v818 = vadd.f32 %v731, %v772
    %v819 = vadd.f32 %v732, %v811
    %v820 = vadd.f32 %v733, %v813
    %v821 = vmul.f32 %v817, 0.5
    %v822 = vtanh.pop %v821
    %v823 = vmul.f32 %v822, 0.5
    %v824 = vadd.f32 %v823, 0.5
    %v825 = vmul.f32 %v818, 0.5
    %v826 = vtanh.pop %v825
    %v827 = vmul.f32 %v826, 0.5
    %v828 = vadd.f32 %v827, 0.5
    %v829 = vtanh.pop %v819
    %v830 = vmul.f32 %v820, 0.5
    %v831 = vtanh.pop %v830
    %v832 = vmul.f32 %v831, 0.5
    %v833 = vadd.f32 %v832, 0.5
    %v834 = vmul.f32 %v828, %v723
    %v835 = vmul.f32 %v824, %v829
    %v836 = vadd.f32 %v834, %v835
    %v837 = vtanh.pop %v836
    %v838 = vmul.f32 %v833, %v837
    %s839 = sadd.s32 %s69, 4
    %v840 = vstv %s839
    %vm841 = vcmp.gt.s32.totalorder %v68, %v840
    %v842 = vsel %vm841, 1, 0
    %843 = vset.pattern.permute.xlu0 0
    %844 = vperm.xlu0 %843, %v842
    %v845 = vpop.permute.xlu0 %844
    %vm846 = vcmp.eq.s32.totalorder %v845, 1
    %v847 = vsel %vm846, %v838, %v722
    %v848 = vsel %vm846, %v836, %v723
    %v849 = vsel %vm846, %v838, 0.0
    %s850 = scalar_lea.vmem %s5, 32
    %851 = vst [vmem:[%s850] sm:$0xff] %v849
    %s852 = scalar_lea.vmem %s1, 80
    %v853 = vld [vmem:[%s852] sm:$0xff]
    %v854 = vld [vmem:[%s852 + $0x8] sm:$0xff]
    %v855 = vunpack.c.l.bf16 %v853
    %v856 = vunpack.c.h.bf16 %v853
    %v857 = vunpack.c.l.bf16 %v854
    %v858 = vunpack.c.h.bf16 %v854
    %v859 = vpack.c.bf16 %v847, %v847
    %860 = vmatprep.subr.bf16.mxu0 %v174
    %861 = vmatpush1.bf16.msra.mxu0 %v173
    %862 = vmatprep.subr.bf16.mxu0 %v178
    %863 = vmatpush1.bf16.msra.mxu0 %v177
    %864 = vmatprep.subr.bf16.mxu0 %v182
    %865 = vmatpush1.bf16.msra.mxu0 %v181
    %866 = vmatprep.subr.bf16.mxu0 %v186
    %867 = vmatpush1.bf16.msra.mxu0 %v185
    %868 = vmatprep.subr.bf16.mxu0 %v190
    %869 = vmatpush1.bf16.msra.mxu0 %v189
    %870 = vmatprep.subr.bf16.mxu0 %v194
    %871 = vmatpush1.bf16.msra.mxu0 %v193
    %872 = vmatprep.subr.bf16.mxu0 %v198
    %873 = vmatpush1.bf16.msra.mxu0 %v197
    %874 = vmatprep.subr.bf16.mxu0 %v202
    %875 = vmatpush1.bf16.msra.mxu0 %v201
    %876 = vmatprep.subr.bf16.mxu0 0
    %877 = vmatpush1.bf16.msra.mxu0 0
    %878 = vmatprep.subr.bf16.mxu0 0
    %879 = vmatpush1.bf16.msra.mxu0 0
    %880 = vmatprep.subr.bf16.mxu0 0
    %881 = vmatpush1.bf16.msra.mxu0 0
    %882 = vmatprep.subr.bf16.mxu0 0
    %883 = vmatpush1.bf16.msra.mxu0 0
    %884 = vmatprep.subr.bf16.mxu0 0
    %885 = vmatpush1.bf16.msra.mxu0 0
    %886 = vmatprep.subr.bf16.mxu0 0
    %887 = vmatpush1.bf16.msra.mxu0 0
    %888 = vmatprep.subr.bf16.mxu0 0
    %889 = vmatpush1.bf16.msra.mxu0 0
    %890 = vmatprep.subr.bf16.mxu0 0
    %891 = vmatpush1.bf16.msra.mxu0 0
    %892 = vmatprep.mubr.bf16.mxu0 0
    %893 = vmatmul.mubr.bf16.gmra.mrb[0].mxu0 %v859
    %v894 = vpop.f32.mrb[0].mxu0
    %v895 = vadd.f32 0.0, %v894
    %v896 = vpop.f32.mrb[0].mxu0
    %v897 = vadd.f32 0.0, %v896
    %v898 = vpop.f32.mrb[0].mxu0
    %v899 = vpop.f32.mrb[0].mxu0
    %900 = vdwg.mxu0
    %901 = vmatprep.subr.bf16.mxu0 %v176
    %902 = vmatpush1.bf16.msra.mxu0 %v175
    %903 = vmatprep.subr.bf16.mxu0 %v180
    %904 = vmatpush1.bf16.msra.mxu0 %v179
    %905 = vmatprep.subr.bf16.mxu0 %v184
    %906 = vmatpush1.bf16.msra.mxu0 %v183
    %907 = vmatprep.subr.bf16.mxu0 %v188
    %908 = vmatpush1.bf16.msra.mxu0 %v187
    %909 = vmatprep.subr.bf16.mxu0 %v192
    %910 = vmatpush1.bf16.msra.mxu0 %v191
    %911 = vmatprep.subr.bf16.mxu0 %v196
    %912 = vmatpush1.bf16.msra.mxu0 %v195
    %913 = vmatprep.subr.bf16.mxu0 %v200
    %914 = vmatpush1.bf16.msra.mxu0 %v199
    %915 = vmatprep.subr.bf16.mxu0 %v204
    %916 = vmatpush1.bf16.msra.mxu0 %v203
    %917 = vmatprep.subr.bf16.mxu0 0
    %918 = vmatpush1.bf16.msra.mxu0 0
    %919 = vmatprep.subr.bf16.mxu0 0
    %920 = vmatpush1.bf16.msra.mxu0 0
    %921 = vmatprep.subr.bf16.mxu0 0
    %922 = vmatpush1.bf16.msra.mxu0 0
    %923 = vmatprep.subr.bf16.mxu0 0
    %924 = vmatpush1.bf16.msra.mxu0 0
    %925 = vmatprep.subr.bf16.mxu0 0
    %926 = vmatpush1.bf16.msra.mxu0 0
    %927 = vmatprep.subr.bf16.mxu0 0
    %928 = vmatpush1.bf16.msra.mxu0 0
    %929 = vmatprep.subr.bf16.mxu0 0
    %930 = vmatpush1.bf16.msra.mxu0 0
    %931 = vmatprep.subr.bf16.mxu0 0
    %932 = vmatpush1.bf16.msra.mxu0 0
    %933 = vmatprep.mubr.bf16.mxu0 0
    %934 = vmatmul.mubr.bf16.gmra.mrb[0].mxu0 %v859
    %v935 = vpop.f32.mrb[0].mxu0
    %v936 = vadd.f32 0.0, %v935
    %v937 = vpop.f32.mrb[0].mxu0
    %v938 = vadd.f32 0.0, %v937
    %v939 = vpop.f32.mrb[0].mxu0
    %v940 = vpop.f32.mrb[0].mxu0
    %941 = vdwg.mxu0
    %v942 = vadd.f32 %v855, %v895
    %v943 = vadd.f32 %v856, %v897
    %v944 = vadd.f32 %v857, %v936
    %v945 = vadd.f32 %v858, %v938
    %v946 = vmul.f32 %v942, 0.5
    %v947 = vtanh.pop %v946
    %v948 = vmul.f32 %v947, 0.5
    %v949 = vadd.f32 %v948, 0.5
    %v950 = vmul.f32 %v943, 0.5
    %v951 = vtanh.pop %v950
    %v952 = vmul.f32 %v951, 0.5
    %v953 = vadd.f32 %v952, 0.5
    %v954 = vtanh.pop %v944
    %v955 = vmul.f32 %v945, 0.5
    %v956 = vtanh.pop %v955
    %v957 = vmul.f32 %v956, 0.5
    %v958 = vadd.f32 %v957, 0.5
    %v959 = vmul.f32 %v953, %v848
    %v960 = vmul.f32 %v949, %v954
    %v961 = vadd.f32 %v959, %v960
    %v962 = vtanh.pop %v961
    %v963 = vmul.f32 %v958, %v962
    %s964 = sadd.s32 %s69, 5
    %v965 = vstv %s964
    %vm966 = vcmp.gt.s32.totalorder %v68, %v965
    %v967 = vsel %vm966, 1, 0
    %968 = vset.pattern.permute.xlu0 0
    %969 = vperm.xlu0 %968, %v967
    %v970 = vpop.permute.xlu0 %969
    %vm971 = vcmp.eq.s32.totalorder %v970, 1
    %v972 = vsel %vm971, %v963, %v847
    %v973 = vsel %vm971, %v961, %v848
    %v974 = vsel %vm971, %v963, 0.0
    %s975 = scalar_lea.vmem %s5, 40
    %976 = vst [vmem:[%s975] sm:$0xff] %v974
    %s977 = scalar_lea.vmem %s1, 96
    %v978 = vld [vmem:[%s977] sm:$0xff]
    %v979 = vld [vmem:[%s977 + $0x8] sm:$0xff]
    %v980 = vunpack.c.l.bf16 %v978
    %v981 = vunpack.c.h.bf16 %v978
    %v982 = vunpack.c.l.bf16 %v979
    %v983 = vunpack.c.h.bf16 %v979
    %v984 = vpack.c.bf16 %v972, %v972
    %985 = vmatprep.subr.bf16.mxu0 %v174
    %986 = vmatpush1.bf16.msra.mxu0 %v173
    %987 = vmatprep.subr.bf16.mxu0 %v178
    %988 = vmatpush1.bf16.msra.mxu0 %v177
    %989 = vmatprep.subr.bf16.mxu0 %v182
    %990 = vmatpush1.bf16.msra.mxu0 %v181
    %991 = vmatprep.subr.bf16.mxu0 %v186
    %992 = vmatpush1.bf16.msra.mxu0 %v185
    %993 = vmatprep.subr.bf16.mxu0 %v190
    %994 = vmatpush1.bf16.msra.mxu0 %v189
    %995 = vmatprep.subr.bf16.mxu0 %v194
    %996 = vmatpush1.bf16.msra.mxu0 %v193
    %997 = vmatprep.subr.bf16.mxu0 %v198
    %998 = vmatpush1.bf16.msra.mxu0 %v197
    %999 = vmatprep.subr.bf16.mxu0 %v202
    %1000 = vmatpush1.bf16.msra.mxu0 %v201
    %1001 = vmatprep.subr.bf16.mxu0 0
    %1002 = vmatpush1.bf16.msra.mxu0 0
    %1003 = vmatprep.subr.bf16.mxu0 0
    %1004 = vmatpush1.bf16.msra.mxu0 0
    %1005 = vmatprep.subr.bf16.mxu0 0
    %1006 = vmatpush1.bf16.msra.mxu0 0
    %1007 = vmatprep.subr.bf16.mxu0 0
    %1008 = vmatpush1.bf16.msra.mxu0 0
    %1009 = vmatprep.subr.bf16.mxu0 0
    %1010 = vmatpush1.bf16.msra.mxu0 0
    %1011 = vmatprep.subr.bf16.mxu0 0
    %1012 = vmatpush1.bf16.msra.mxu0 0
    %1013 = vmatprep.subr.bf16.mxu0 0
    %1014 = vmatpush1.bf16.msra.mxu0 0
    %1015 = vmatprep.subr.bf16.mxu0 0
    %1016 = vmatpush1.bf16.msra.mxu0 0
    %1017 = vmatprep.mubr.bf16.mxu0 0
    %1018 = vmatmul.mubr.bf16.gmra.mrb[0].mxu0 %v984
    %v1019 = vpop.f32.mrb[0].mxu0
    %v1020 = vadd.f32 0.0, %v1019
    %v1021 = vpop.f32.mrb[0].mxu0
    %v1022 = vadd.f32 0.0, %v1021
    %v1023 = vpop.f32.mrb[0].mxu0
    %v1024 = vpop.f32.mrb[0].mxu0
    %1025 = vdwg.mxu0
    %1026 = vmatprep.subr.bf16.mxu0 %v176
    %1027 = vmatpush1.bf16.msra.mxu0 %v175
    %1028 = vmatprep.subr.bf16.mxu0 %v180
    %1029 = vmatpush1.bf16.msra.mxu0 %v179
    %1030 = vmatprep.subr.bf16.mxu0 %v184
    %1031 = vmatpush1.bf16.msra.mxu0 %v183
    %1032 = vmatprep.subr.bf16.mxu0 %v188
    %1033 = vmatpush1.bf16.msra.mxu0 %v187
    %1034 = vmatprep.subr.bf16.mxu0 %v192
    %1035 = vmatpush1.bf16.msra.mxu0 %v191
    %1036 = vmatprep.subr.bf16.mxu0 %v196
    %1037 = vmatpush1.bf16.msra.mxu0 %v195
    %1038 = vmatprep.subr.bf16.mxu0 %v200
    %1039 = vmatpush1.bf16.msra.mxu0 %v199
    %1040 = vmatprep.subr.bf16.mxu0 %v204
    %1041 = vmatpush1.bf16.msra.mxu0 %v203
    %1042 = vmatprep.subr.bf16.mxu0 0
    %1043 = vmatpush1.bf16.msra.mxu0 0
    %1044 = vmatprep.subr.bf16.mxu0 0
    %1045 = vmatpush1.bf16.msra.mxu0 0
    %1046 = vmatprep.subr.bf16.mxu0 0
    %1047 = vmatpush1.bf16.msra.mxu0 0
    %1048 = vmatprep.subr.bf16.mxu0 0
    %1049 = vmatpush1.bf16.msra.mxu0 0
    %1050 = vmatprep.subr.bf16.mxu0 0
    %1051 = vmatpush1.bf16.msra.mxu0 0
    %1052 = vmatprep.subr.bf16.mxu0 0
    %1053 = vmatpush1.bf16.msra.mxu0 0
    %1054 = vmatprep.subr.bf16.mxu0 0
    %1055 = vmatpush1.bf16.msra.mxu0 0
    %1056 = vmatprep.subr.bf16.mxu0 0
    %1057 = vmatpush1.bf16.msra.mxu0 0
    %1058 = vmatprep.mubr.bf16.mxu0 0
    %1059 = vmatmul.mubr.bf16.gmra.mrb[0].mxu0 %v984
    %v1060 = vpop.f32.mrb[0].mxu0
    %v1061 = vadd.f32 0.0, %v1060
    %v1062 = vpop.f32.mrb[0].mxu0
    %v1063 = vadd.f32 0.0, %v1062
    %v1064 = vpop.f32.mrb[0].mxu0
    %v1065 = vpop.f32.mrb[0].mxu0
    %1066 = vdwg.mxu0
    %v1067 = vadd.f32 %v980, %v1020
    %v1068 = vadd.f32 %v981, %v1022
    %v1069 = vadd.f32 %v982, %v1061
    %v1070 = vadd.f32 %v983, %v1063
    %v1071 = vmul.f32 %v1067, 0.5
    %v1072 = vtanh.pop %v1071
    %v1073 = vmul.f32 %v1072, 0.5
    %v1074 = vadd.f32 %v1073, 0.5
    %v1075 = vmul.f32 %v1068, 0.5
    %v1076 = vtanh.pop %v1075
    %v1077 = vmul.f32 %v1076, 0.5
    %v1078 = vadd.f32 %v1077, 0.5
    %v1079 = vtanh.pop %v1069
    %v1080 = vmul.f32 %v1070, 0.5
    %v1081 = vtanh.pop %v1080
    %v1082 = vmul.f32 %v1081, 0.5
    %v1083 = vadd.f32 %v1082, 0.5
    %v1084 = vmul.f32 %v1078, %v973
    %v1085 = vmul.f32 %v1074, %v1079
    %v1086 = vadd.f32 %v1084, %v1085
    %v1087 = vtanh.pop %v1086
    %v1088 = vmul.f32 %v1083, %v1087
    %s1089 = sadd.s32 %s69, 6
    %v1090 = vstv %s1089
    %vm1091 = vcmp.gt.s32.totalorder %v68, %v1090
    %v1092 = vsel %vm1091, 1, 0
    %1093 = vset.pattern.permute.xlu0 0
    %1094 = vperm.xlu0 %1093, %v1092
    %v1095 = vpop.permute.xlu0 %1094
    %vm1096 = vcmp.eq.s32.totalorder %v1095, 1
    %v1097 = vsel %vm1096, %v1088, %v972
    %v1098 = vsel %vm1096, %v1086, %v973
    %v1099 = vsel %vm1096, %v1088, 0.0
    %s1100 = scalar_lea.vmem %s5, 48
    %1101 = vst [vmem:[%s1100] sm:$0xff] %v1099
    %s1102 = scalar_lea.vmem %s1, 112
    %v1103 = vld [vmem:[%s1102] sm:$0xff]
    %v1104 = vld [vmem:[%s1102 + $0x8] sm:$0xff]
    %v1105 = vunpack.c.l.bf16 %v1103
    %v1106 = vunpack.c.h.bf16 %v1103
    %v1107 = vunpack.c.l.bf16 %v1104
    %v1108 = vunpack.c.h.bf16 %v1104
    %v1109 = vpack.c.bf16 %v1097, %v1097
    %1110 = vmatprep.subr.bf16.mxu0 %v174
    %1111 = vmatpush1.bf16.msra.mxu0 %v173
    %1112 = vmatprep.subr.bf16.mxu0 %v178
    %1113 = vmatpush1.bf16.msra.mxu0 %v177
    %1114 = vmatprep.subr.bf16.mxu0 %v182
    %1115 = vmatpush1.bf16.msra.mxu0 %v181
    %1116 = vmatprep.subr.bf16.mxu0 %v186
    %1117 = vmatpush1.bf16.msra.mxu0 %v185
    %1118 = vmatprep.subr.bf16.mxu0 %v190
    %1119 = vmatpush1.bf16.msra.mxu0 %v189
    %1120 = vmatprep.subr.bf16.mxu0 %v194
    %1121 = vmatpush1.bf16.msra.mxu0 %v193
    %1122 = vmatprep.subr.bf16.mxu0 %v198
    %1123 = vmatpush1.bf16.msra.mxu0 %v197
    %1124 = vmatprep.subr.bf16.mxu0 %v202
    %1125 = vmatpush1.bf16.msra.mxu0 %v201
    %1126 = vmatprep.subr.bf16.mxu0 0
    %1127 = vmatpush1.bf16.msra.mxu0 0
    %1128 = vmatprep.subr.bf16.mxu0 0
    %1129 = vmatpush1.bf16.msra.mxu0 0
    %1130 = vmatprep.subr.bf16.mxu0 0
    %1131 = vmatpush1.bf16.msra.mxu0 0
    %1132 = vmatprep.subr.bf16.mxu0 0
    %1133 = vmatpush1.bf16.msra.mxu0 0
    %1134 = vmatprep.subr.bf16.mxu0 0
    %1135 = vmatpush1.bf16.msra.mxu0 0
    %1136 = vmatprep.subr.bf16.mxu0 0
    %1137 = vmatpush1.bf16.msra.mxu0 0
    %1138 = vmatprep.subr.bf16.mxu0 0
    %1139 = vmatpush1.bf16.msra.mxu0 0
    %1140 = vmatprep.subr.bf16.mxu0 0
    %1141 = vmatpush1.bf16.msra.mxu0 0
    %1142 = vmatprep.mubr.bf16.mxu0 0
    %1143 = vmatmul.mubr.bf16.gmra.mrb[0].mxu0 %v1109
    %v1144 = vpop.f32.mrb[0].mxu0
    %v1145 = vadd.f32 0.0, %v1144
    %v1146 = vpop.f32.mrb[0].mxu0
    %v1147 = vadd.f32 0.0, %v1146
    %v1148 = vpop.f32.mrb[0].mxu0
    %v1149 = vpop.f32.mrb[0].mxu0
    %1150 = vdwg.mxu0
    %1151 = vmatprep.subr.bf16.mxu0 %v176
    %1152 = vmatpush1.bf16.msra.mxu0 %v175
    %1153 = vmatprep.subr.bf16.mxu0 %v180
    %1154 = vmatpush1.bf16.msra.mxu0 %v179
    %1155 = vmatprep.subr.bf16.mxu0 %v184
    %1156 = vmatpush1.bf16.msra.mxu0 %v183
    %1157 = vmatprep.subr.bf16.mxu0 %v188
    %1158 = vmatpush1.bf16.msra.mxu0 %v187
    %1159 = vmatprep.subr.bf16.mxu0 %v192
    %1160 = vmatpush1.bf16.msra.mxu0 %v191
    %1161 = vmatprep.subr.bf16.mxu0 %v196
    %1162 = vmatpush1.bf16.msra.mxu0 %v195
    %1163 = vmatprep.subr.bf16.mxu0 %v200
    %1164 = vmatpush1.bf16.msra.mxu0 %v199
    %1165 = vmatprep.subr.bf16.mxu0 %v204
    %1166 = vmatpush1.bf16.msra.mxu0 %v203
    %1167 = vmatprep.subr.bf16.mxu0 0
    %1168 = vmatpush1.bf16.msra.mxu0 0
    %1169 = vmatprep.subr.bf16.mxu0 0
    %1170 = vmatpush1.bf16.msra.mxu0 0
    %1171 = vmatprep.subr.bf16.mxu0 0
    %1172 = vmatpush1.bf16.msra.mxu0 0
    %1173 = vmatprep.subr.bf16.mxu0 0
    %1174 = vmatpush1.bf16.msra.mxu0 0
    %1175 = vmatprep.subr.bf16.mxu0 0
    %1176 = vmatpush1.bf16.msra.mxu0 0
    %1177 = vmatprep.subr.bf16.mxu0 0
    %1178 = vmatpush1.bf16.msra.mxu0 0
    %1179 = vmatprep.subr.bf16.mxu0 0
    %1180 = vmatpush1.bf16.msra.mxu0 0
    %1181 = vmatprep.subr.bf16.mxu0 0
    %1182 = vmatpush1.bf16.msra.mxu0 0
    %1183 = vmatprep.mubr.bf16.mxu0 0
    %1184 = vmatmul.mubr.bf16.gmra.mrb[0].mxu0 %v1109
    %v1185 = vpop.f32.mrb[0].mxu0
    %v1186 = vadd.f32 0.0, %v1185
    %v1187 = vpop.f32.mrb[0].mxu0
    %v1188 = vadd.f32 0.0, %v1187
    %v1189 = vpop.f32.mrb[0].mxu0
    %v1190 = vpop.f32.mrb[0].mxu0
    %1191 = vdwg.mxu0
    %v1192 = vadd.f32 %v1105, %v1145
    %v1193 = vadd.f32 %v1106, %v1147
    %v1194 = vadd.f32 %v1107, %v1186
    %v1195 = vadd.f32 %v1108, %v1188
    %v1196 = vmul.f32 %v1192, 0.5
    %v1197 = vtanh.pop %v1196
    %v1198 = vmul.f32 %v1197, 0.5
    %v1199 = vadd.f32 %v1198, 0.5
    %v1200 = vmul.f32 %v1193, 0.5
    %v1201 = vtanh.pop %v1200
    %v1202 = vmul.f32 %v1201, 0.5
    %v1203 = vadd.f32 %v1202, 0.5
    %v1204 = vtanh.pop %v1194
    %v1205 = vmul.f32 %v1195, 0.5
    %v1206 = vtanh.pop %v1205
    %v1207 = vmul.f32 %v1206, 0.5
    %v1208 = vadd.f32 %v1207, 0.5
    %v1209 = vmul.f32 %v1203, %v1098
    %v1210 = vmul.f32 %v1199, %v1204
    %v1211 = vadd.f32 %v1209, %v1210
    %v1212 = vtanh.pop %v1211
    %v1213 = vmul.f32 %v1208, %v1212
    %s1214 = sadd.s32 %s69, 7
    %v1215 = vstv %s1214
    %vm1216 = vcmp.gt.s32.totalorder %v68, %v1215
    %v1217 = vsel %vm1216, 1, 0
    %1218 = vset.pattern.permute.xlu0 0
    %1219 = vperm.xlu0 %1218, %v1217
    %v1220 = vpop.permute.xlu0 %1219
    %vm1221 = vcmp.eq.s32.totalorder %v1220, 1
    %v1222 = vsel %vm1221, %v1213, %v1097
    %v1223 = vsel %vm1221, %v1211, %v1098
    %v1224 = vsel %vm1221, %v1213, 0.0
    %s1225 = scalar_lea.vmem %s5, 56
    %1226 = vst [vmem:[%s1225] sm:$0xff] %v1224
    %1227 = vst [vmem:[#allocation2] sm:$0xff] %v1222
    %1228 = vst [vmem:[#allocation4] sm:$0xff] %v1223
    // Predicated region
    $region26: #{seq2seq_forward.9} parent=1 // pred_check
      _
    $region27: #{seq2seq_forward.9} parent=1 // pred_check_branch
      %1230 = sbr.rel (0) target = $region29
    $region28: #{seq2seq_forward.9} parent=1 // pred_region
      _
    $region29: #{seq2seq_forward.9} parent=1 // pred_fallthru
      _
    // Predicated region
    $region30: #{seq2seq_forward.9} parent=1 // pred_check
      _
    $region31: #{seq2seq_forward.9} parent=1 // pred_check_branch
      %1232 = sbr.rel (0) target = $region33
    $region32: #{seq2seq_forward.9} parent=1 // pred_region
      %s1234 = ssub.s32 128, 128
      %1235 = vsyncadd [#allocation3], %s1234
      %s1237 = sshll.u32 [#allocation2], 4
      %s1238 = int_to_ptr.vmem [resolvable:$true] %s1237
      %1240 = dma.vmem_to_hbm [thread:$0]  %s1238, 128, %s6, [#allocation3]
    $region33: #{seq2seq_forward.9} parent=1 // pred_fallthru
      _
    // Predicated region
    $region34: #{seq2seq_forward.9} parent=1 // pred_check
      _
    $region35: #{seq2seq_forward.9} parent=1 // pred_check_branch
      %1242 = sbr.rel (0) target = $region37
    $region36: #{seq2seq_forward.9} parent=1 // pred_region
      %s1244 = ssub.s32 128, 128
      %1245 = vsyncadd [#allocation5], %s1244
      %s1247 = sshll.u32 [#allocation4], 4
      %s1248 = int_to_ptr.vmem [resolvable:$true] %s1247
      %1250 = dma.vmem_to_hbm [thread:$0]  %s1248, 128, %s7, [#allocation5]
    $region37: #{seq2seq_forward.9} parent=1 // pred_fallthru
      _
    // Predicated region
    $region38: #{seq2seq_forward.9} parent=1 // pred_check
      _
    $region39: #{seq2seq_forward.9} parent=1 // pred_check_branch
      %1252 = sbr.rel (0) target = $region41
    $region40: #{seq2seq_forward.9} parent=1 // pred_region
      _
    $region41: #{seq2seq_forward.9} parent=1 // pred_fallthru
      _
    // Predicated region
    $region42: #{seq2seq_forward.9} parent=1 // pred_check
      _
    $region43: #{seq2seq_forward.9} parent=1 // pred_check_branch
      %1254 = sbr.rel (0) target = $region45
    $region44: #{seq2seq_forward.9} parent=1 // pred_region
      %1255 = dma.done [#allocation3], 128
    $region45: #{seq2seq_forward.9} parent=1 // pred_fallthru
      _
    // Predicated region
    $region46: #{seq2seq_forward.9} parent=1 // pred_check
      _
    $region47: #{seq2seq_forward.9} parent=1 // pred_check_branch
      %1257 = sbr.rel (0) target = $region49
    $region48: #{seq2seq_forward.9} parent=1 // pred_region
      %1258 = dma.done [#allocation5], 128
    $region49: #{seq2seq_forward.9} parent=1 // pred_fallthru
      _
    %1259 = vsyncpa [#allocation3], 1
    %1260 = vsyncpa [#allocation5], 1

// kernel: seq2seq_forward.11
$region0: #{seq2seq_forward.11}
  #allocation0 [shape = 'u32[]', space=smem, size = 0x4, offset = 0x4, fixed_abs, tag = 'smem constant byte address 0x4 - core index']
  #allocation1 [shape = 'u32[144,128]{1,0:T(1,128)}', space=vmem, size = 0x12000, scoped, tag = 'internal scratch']
  %s0 = inlined_call_operand.vmem [shape: s32[8,1], index: 0, kind: input, shape index: {}]
  %s1 = inlined_call_operand.vmem [shape: bf16[8,8,512], index: 1, kind: input, shape index: {}]
  %s2 = inlined_call_operand.vmem [shape: bf16[128,512], index: 2, kind: input, shape index: {}]
  %s3 = inlined_call_operand.vmem [shape: f32[8,128], index: 3, kind: input, shape index: {}, may-alias: {3,4}]
  %s4 = inlined_call_operand.vmem [shape: f32[8,128], index: 4, kind: input, shape index: {}, may-alias: {3,4}]
  %s5 = inlined_call_operand.vmem [shape: f32[8,8,128], index: 5, kind: output, shape index: {0}]
  %s6 = inlined_call_operand.vmem [shape: f32[8,128], index: 6, kind: output, shape index: {1}]
  %s7 = inlined_call_operand.vmem [shape: f32[8,128], index: 7, kind: output, shape index: {2}]
  %8 = xla_tuple %s5, %s6, %s7
  %s9 = sld [smem:[#allocation0]]
  $region54: #{seq2seq_forward.11} parent=0
    _
  %s11 = ssub.s32 1, %s9
  %s12 = scalar_select 0, %s11, %s9
  // Predicated region
  $region2: #{seq2seq_forward.11} parent=0 // pred_check
    _
  $region3: #{seq2seq_forward.11} parent=0 // pred_check_branch
    %14 = sbr.rel (0) target = $region5
  $region4: #{seq2seq_forward.11} parent=0 // pred_region
    _
  $region5: #{seq2seq_forward.11} parent=0 // pred_fallthru
    _
  // Predicated region
  $region6: #{seq2seq_forward.11} parent=0 // pred_check
    _
  $region7: #{seq2seq_forward.11} parent=0 // pred_check_branch
    %16 = sbr.rel (0) target = $region9
  $region8: #{seq2seq_forward.11} parent=0 // pred_region
    _
  $region9: #{seq2seq_forward.11} parent=0 // pred_fallthru
    _
  // Predicated region
  $region10: #{seq2seq_forward.11} parent=0 // pred_check
    _
  $region11: #{seq2seq_forward.11} parent=0 // pred_check_branch
    %18 = sbr.rel (0) target = $region13
  $region12: #{seq2seq_forward.11} parent=0 // pred_region
    _
  $region13: #{seq2seq_forward.11} parent=0 // pred_fallthru
    _
  // Predicated region
  $region14: #{seq2seq_forward.11} parent=0 // pred_check
    _
  $region15: #{seq2seq_forward.11} parent=0 // pred_check_branch
    %20 = sbr.rel (0) target = $region17
  $region16: #{seq2seq_forward.11} parent=0 // pred_region
    _
  $region17: #{seq2seq_forward.11} parent=0 // pred_fallthru
    _
  // Predicated region
  $region18: #{seq2seq_forward.11} parent=0 // pred_check
    _
  $region19: #{seq2seq_forward.11} parent=0 // pred_check_branch
    %22 = sbr.rel (0) target = $region21
  $region20: #{seq2seq_forward.11} parent=0 // pred_region
    _
  $region21: #{seq2seq_forward.11} parent=0 // pred_fallthru
    _
  %p24 = scmp.eq.s32.totalorder 0, 0
  // Predicated region
  $region22: #{seq2seq_forward.11} parent=0 // pred_check
    %p25 = pneg %p24
  $region23: #{seq2seq_forward.11} parent=0 // pred_check_branch
    %27 = sbr.rel (%p25) target = $region25
  $region24: #{seq2seq_forward.11} parent=0 // pred_region
    %v28 = vld [vmem:[%s3] sm:$0xff]
    %29 = vst [vmem:[%s6] sm:$0xff] %v28
    %v30 = vld [vmem:[%s4] sm:$0xff]
    %31 = vst [vmem:[%s7] sm:$0xff] %v30
  $region25: #{seq2seq_forward.11} parent=0 // pred_fallthru
    _
  %v32 = vld [vmem:[%s6] sm:$0xff]
  %v33 = vld [vmem:[%s7] sm:$0xff]
  %v34 = vld [vmem:[%s2] sm:$0xff]
  %v35 = vld [vmem:[%s2 + $0x8] sm:$0xff]
  %v36 = vld [vmem:[%s2 + $0x10] sm:$0xff]
  %v37 = vld [vmem:[%s2 + $0x18] sm:$0xff]
  %v38 = vld [vmem:[%s2 + $0x20] sm:$0xff]
  %v39 = vld [vmem:[%s2 + $0x28] sm:$0xff]
  %v40 = vld [vmem:[%s2 + $0x30] sm:$0xff]
  %v41 = vld [vmem:[%s2 + $0x38] sm:$0xff]
  %v42 = vld [vmem:[%s2 + $0x40] sm:$0xff]
  %v43 = vld [vmem:[%s2 + $0x48] sm:$0xff]
  %v44 = vld [vmem:[%s2 + $0x50] sm:$0xff]
  %v45 = vld [vmem:[%s2 + $0x58] sm:$0xff]
  %v46 = vld [vmem:[%s2 + $0x60] sm:$0xff]
  %v47 = vld [vmem:[%s2 + $0x68] sm:$0xff]
  %v48 = vld [vmem:[%s2 + $0x70] sm:$0xff]
  %v49 = vld [vmem:[%s2 + $0x78] sm:$0xff]
  %v50 = vld [vmem:[%s2 + $0x80] sm:$0xff]
  %v51 = vld [vmem:[%s2 + $0x88] sm:$0xff]
  %v52 = vld [vmem:[%s2 + $0x90] sm:$0xff]
  %v53 = vld [vmem:[%s2 + $0x98] sm:$0xff]
  %v54 = vld [vmem:[%s2 + $0xa0] sm:$0xff]
  %v55 = vld [vmem:[%s2 + $0xa8] sm:$0xff]
  %v56 = vld [vmem:[%s2 + $0xb0] sm:$0xff]
  %v57 = vld [vmem:[%s2 + $0xb8] sm:$0xff]
  %v58 = vld [vmem:[%s2 + $0xc0] sm:$0xff]
  %v59 = vld [vmem:[%s2 + $0xc8] sm:$0xff]
  %v60 = vld [vmem:[%s2 + $0xd0] sm:$0xff]
  %v61 = vld [vmem:[%s2 + $0xd8] sm:$0xff]
  %v62 = vld [vmem:[%s2 + $0xe0] sm:$0xff]
  %v63 = vld [vmem:[%s2 + $0xe8] sm:$0xff]
  %v64 = vld [vmem:[%s2 + $0xf0] sm:$0xff]
  %v65 = vld [vmem:[%s2 + $0xf8] sm:$0xff]
  %v66 = vld [vmem:[%s0] sm:$0xff]
  %s67 = smul.u32 0, 8
  %v68 = vld [vmem:[%s1] sm:$0xff]
  %v69 = vld [vmem:[%s1 + $0x8] sm:$0xff]
  %v70 = vunpack.c.l.bf16 %v68
  %v71 = vunpack.c.h.bf16 %v68
  %v72 = vunpack.c.l.bf16 %v69
  %v73 = vunpack.c.h.bf16 %v69
  %v74 = vpack.c.bf16 %v32, %v32
  %v107 = vunpack.c.l.b16 %v34
  %v108 = vunpack.c.h.b16 %v34
  %v109 = vunpack.c.l.b16 %v35
  %v110 = vunpack.c.h.b16 %v35
  %v111 = vunpack.c.l.b16 %v36
  %v112 = vunpack.c.h.b16 %v36
  %v113 = vunpack.c.l.b16 %v37
  %v114 = vunpack.c.h.b16 %v37
  %v115 = vunpack.c.l.b16 %v38
  %v116 = vunpack.c.h.b16 %v38
  %v117 = vunpack.c.l.b16 %v39
  %v118 = vunpack.c.h.b16 %v39
  %v119 = vunpack.c.l.b16 %v40
  %v120 = vunpack.c.h.b16 %v40
  %v121 = vunpack.c.l.b16 %v41
  %v122 = vunpack.c.h.b16 %v41
  %v123 = vunpack.c.l.b16 %v42
  %v124 = vunpack.c.h.b16 %v42
  %v125 = vunpack.c.l.b16 %v43
  %v126 = vunpack.c.h.b16 %v43
  %v127 = vunpack.c.l.b16 %v44
  %v128 = vunpack.c.h.b16 %v44
  %v129 = vunpack.c.l.b16 %v45
  %v130 = vunpack.c.h.b16 %v45
  %v131 = vunpack.c.l.b16 %v46
  %v132 = vunpack.c.h.b16 %v46
  %v133 = vunpack.c.l.b16 %v47
  %v134 = vunpack.c.h.b16 %v47
  %v135 = vunpack.c.l.b16 %v48
  %v136 = vunpack.c.h.b16 %v48
  %v137 = vunpack.c.l.b16 %v49
  %v138 = vunpack.c.h.b16 %v49
  %v139 = vunpack.c.l.b16 %v50
  %v140 = vunpack.c.h.b16 %v50
  %v141 = vunpack.c.l.b16 %v51
  %v142 = vunpack.c.h.b16 %v51
  %v143 = vunpack.c.l.b16 %v52
  %v144 = vunpack.c.h.b16 %v52
  %v145 = vunpack.c.l.b16 %v53
  %v146 = vunpack.c.h.b16 %v53
  %v147 = vunpack.c.l.b16 %v54
  %v148 = vunpack.c.h.b16 %v54
  %v149 = vunpack.c.l.b16 %v55
  %v150 = vunpack.c.h.b16 %v55
  %v151 = vunpack.c.l.b16 %v56
  %v152 = vunpack.c.h.b16 %v56
  %v153 = vunpack.c.l.b16 %v57
  %v154 = vunpack.c.h.b16 %v57
  %v155 = vunpack.c.l.b16 %v58
  %v156 = vunpack.c.h.b16 %v58
  %v157 = vunpack.c.l.b16 %v59
  %v158 = vunpack.c.h.b16 %v59
  %v159 = vunpack.c.l.b16 %v60
  %v160 = vunpack.c.h.b16 %v60
  %v161 = vunpack.c.l.b16 %v61
  %v162 = vunpack.c.h.b16 %v61
  %v163 = vunpack.c.l.b16 %v62
  %v164 = vunpack.c.h.b16 %v62
  %v165 = vunpack.c.l.b16 %v63
  %v166 = vunpack.c.h.b16 %v63
  %v167 = vunpack.c.l.b16 %v64
  %v168 = vunpack.c.h.b16 %v64
  %v169 = vunpack.c.l.b16 %v65
  %v170 = vunpack.c.h.b16 %v65
  %v171 = vpack.c.b16 %v111, %v107
  %v172 = vpack.c.b16 %v112, %v108
  %v173 = vpack.c.b16 %v113, %v109
  %v174 = vpack.c.b16 %v114, %v110
  %v175 = vpack.c.b16 %v119, %v115
  %v176 = vpack.c.b16 %v120, %v116
  %v177 = vpack.c.b16 %v121, %v117
  %v178 = vpack.c.b16 %v122, %v118
  %v179 = vpack.c.b16 %v127, %v123
  %v180 = vpack.c.b16 %v128, %v124
  %v181 = vpack.c.b16 %v129, %v125
  %v182 = vpack.c.b16 %v130, %v126
  %v183 = vpack.c.b16 %v135, %v131
  %v184 = vpack.c.b16 %v136, %v132
  %v185 = vpack.c.b16 %v137, %v133
  %v186 = vpack.c.b16 %v138, %v134
  %v187 = vpack.c.b16 %v143, %v139
  %v188 = vpack.c.b16 %v144, %v140
  %v189 = vpack.c.b16 %v145, %v141
  %v190 = vpack.c.b16 %v146, %v142
  %v191 = vpack.c.b16 %v151, %v147
  %v192 = vpack.c.b16 %v152, %v148
  %v193 = vpack.c.b16 %v153, %v149
  %v194 = vpack.c.b16 %v154, %v150
  %v195 = vpack.c.b16 %v159, %v155
  %v196 = vpack.c.b16 %v160, %v156
  %v197 = vpack.c.b16 %v161, %v157
  %v198 = vpack.c.b16 %v162, %v158
  %v199 = vpack.c.b16 %v167, %v163
  %v200 = vpack.c.b16 %v168, %v164
  %v201 = vpack.c.b16 %v169, %v165
  %v202 = vpack.c.b16 %v170, %v166
  %235 = vmatprep.subr.bf16.mxu0 %v172
  %236 = vmatpush1.bf16.msra.mxu0 %v171
  %237 = vmatprep.subr.bf16.mxu0 %v176
  %238 = vmatpush1.bf16.msra.mxu0 %v175
  %239 = vmatprep.subr.bf16.mxu0 %v180
  %240 = vmatpush1.bf16.msra.mxu0 %v179
  %241 = vmatprep.subr.bf16.mxu0 %v184
  %242 = vmatpush1.bf16.msra.mxu0 %v183
  %243 = vmatprep.subr.bf16.mxu0 %v188
  %244 = vmatpush1.bf16.msra.mxu0 %v187
  %245 = vmatprep.subr.bf16.mxu0 %v192
  %246 = vmatpush1.bf16.msra.mxu0 %v191
  %247 = vmatprep.subr.bf16.mxu0 %v196
  %248 = vmatpush1.bf16.msra.mxu0 %v195
  %249 = vmatprep.subr.bf16.mxu0 %v200
  %250 = vmatpush1.bf16.msra.mxu0 %v199
  %251 = vmatprep.subr.bf16.mxu0 0
  %252 = vmatpush1.bf16.msra.mxu0 0
  %253 = vmatprep.subr.bf16.mxu0 0
  %254 = vmatpush1.bf16.msra.mxu0 0
  %255 = vmatprep.subr.bf16.mxu0 0
  %256 = vmatpush1.bf16.msra.mxu0 0
  %257 = vmatprep.subr.bf16.mxu0 0
  %258 = vmatpush1.bf16.msra.mxu0 0
  %259 = vmatprep.subr.bf16.mxu0 0
  %260 = vmatpush1.bf16.msra.mxu0 0
  %261 = vmatprep.subr.bf16.mxu0 0
  %262 = vmatpush1.bf16.msra.mxu0 0
  %263 = vmatprep.subr.bf16.mxu0 0
  %264 = vmatpush1.bf16.msra.mxu0 0
  %265 = vmatprep.subr.bf16.mxu0 0
  %266 = vmatpush1.bf16.msra.mxu0 0
  %267 = vmatprep.mubr.bf16.mxu0 0
  %268 = vmatmul.mubr.bf16.gmra.mrb[0].mxu0 %v74
  %v269 = vpop.f32.mrb[0].mxu0
  %v270 = vadd.f32 0.0, %v269
  %v271 = vpop.f32.mrb[0].mxu0
  %v272 = vadd.f32 0.0, %v271
  %v273 = vpop.f32.mrb[0].mxu0
  %v274 = vpop.f32.mrb[0].mxu0
  %275 = vdwg.mxu0
  %276 = vmatprep.subr.bf16.mxu0 %v174
  %277 = vmatpush1.bf16.msra.mxu0 %v173
  %278 = vmatprep.subr.bf16.mxu0 %v178
  %279 = vmatpush1.bf16.msra.mxu0 %v177
  %280 = vmatprep.subr.bf16.mxu0 %v182
  %281 = vmatpush1.bf16.msra.mxu0 %v181
  %282 = vmatprep.subr.bf16.mxu0 %v186
  %283 = vmatpush1.bf16.msra.mxu0 %v185
  %284 = vmatprep.subr.bf16.mxu0 %v190
  %285 = vmatpush1.bf16.msra.mxu0 %v189
  %286 = vmatprep.subr.bf16.mxu0 %v194
  %287 = vmatpush1.bf16.msra.mxu0 %v193
  %288 = vmatprep.subr.bf16.mxu0 %v198
  %289 = vmatpush1.bf16.msra.mxu0 %v197
  %290 = vmatprep.subr.bf16.mxu0 %v202
  %291 = vmatpush1.bf16.msra.mxu0 %v201
  %292 = vmatprep.subr.bf16.mxu0 0
  %293 = vmatpush1.bf16.msra.mxu0 0
  %294 = vmatprep.subr.bf16.mxu0 0
  %295 = vmatpush1.bf16.msra.mxu0 0
  %296 = vmatprep.subr.bf16.mxu0 0
  %297 = vmatpush1.bf16.msra.mxu0 0
  %298 = vmatprep.subr.bf16.mxu0 0
  %299 = vmatpush1.bf16.msra.mxu0 0
  %300 = vmatprep.subr.bf16.mxu0 0
  %301 = vmatpush1.bf16.msra.mxu0 0
  %302 = vmatprep.subr.bf16.mxu0 0
  %303 = vmatpush1.bf16.msra.mxu0 0
  %304 = vmatprep.subr.bf16.mxu0 0
  %305 = vmatpush1.bf16.msra.mxu0 0
  %306 = vmatprep.subr.bf16.mxu0 0
  %307 = vmatpush1.bf16.msra.mxu0 0
  %308 = vmatprep.mubr.bf16.mxu0 0
  %309 = vmatmul.mubr.bf16.gmra.mrb[0].mxu0 %v74
  %v310 = vpop.f32.mrb[0].mxu0
  %v311 = vadd.f32 0.0, %v310
  %v312 = vpop.f32.mrb[0].mxu0
  %v313 = vadd.f32 0.0, %v312
  %v314 = vpop.f32.mrb[0].mxu0
  %v315 = vpop.f32.mrb[0].mxu0
  %316 = vdwg.mxu0
  %v317 = vadd.f32 %v70, %v270
  %v318 = vadd.f32 %v71, %v272
  %v319 = vadd.f32 %v72, %v311
  %v320 = vadd.f32 %v73, %v313
  %v321 = vmul.f32 %v317, 0.5
  %v322 = vtanh.pop %v321
  %v323 = vmul.f32 %v322, 0.5
  %v324 = vadd.f32 %v323, 0.5
  %v325 = vmul.f32 %v318, 0.5
  %v326 = vtanh.pop %v325
  %v327 = vmul.f32 %v326, 0.5
  %v328 = vadd.f32 %v327, 0.5
  %v329 = vtanh.pop %v319
  %v330 = vmul.f32 %v320, 0.5
  %v331 = vtanh.pop %v330
  %v332 = vmul.f32 %v331, 0.5
  %v333 = vadd.f32 %v332, 0.5
  %v334 = vmul.f32 %v328, %v33
  %v335 = vmul.f32 %v324, %v329
  %v336 = vadd.f32 %v334, %v335
  %v337 = vtanh.pop %v336
  %v338 = vmul.f32 %v333, %v337
  %v339 = vstv %s67
  %vm340 = vcmp.gt.s32.totalorder %v66, %v339
  %v341 = vsel %vm340, 1, 0
  %342 = vset.pattern.permute.xlu0 0
  %343 = vperm.xlu0 %342, %v341
  %v344 = vpop.permute.xlu0 %343
  %vm345 = vcmp.eq.s32.totalorder %v344, 1
  %v346 = vsel %vm345, %v338, %v32
  %v347 = vsel %vm345, %v336, %v33
  %v348 = vsel %vm345, %v338, 0.0
  %349 = vst [vmem:[%s5] sm:$0xff] %v348
  %s350 = scalar_lea.vmem %s1, 16
  %v351 = vld [vmem:[%s350] sm:$0xff]
  %v352 = vld [vmem:[%s350 + $0x8] sm:$0xff]
  %v353 = vunpack.c.l.bf16 %v351
  %v354 = vunpack.c.h.bf16 %v351
  %v355 = vunpack.c.l.bf16 %v352
  %v356 = vunpack.c.h.bf16 %v352
  %v357 = vpack.c.bf16 %v346, %v346
  %358 = vmatprep.subr.bf16.mxu0 %v172
  %359 = vmatpush1.bf16.msra.mxu0 %v171
  %360 = vmatprep.subr.bf16.mxu0 %v176
  %361 = vmatpush1.bf16.msra.mxu0 %v175
  %362 = vmatprep.subr.bf16.mxu0 %v180
  %363 = vmatpush1.bf16.msra.mxu0 %v179
  %364 = vmatprep.subr.bf16.mxu0 %v184
  %365 = vmatpush1.bf16.msra.mxu0 %v183
  %366 = vmatprep.subr.bf16.mxu0 %v188
  %367 = vmatpush1.bf16.msra.mxu0 %v187
  %368 = vmatprep.subr.bf16.mxu0 %v192
  %369 = vmatpush1.bf16.msra.mxu0 %v191
  %370 = vmatprep.subr.bf16.mxu0 %v196
  %371 = vmatpush1.bf16.msra.mxu0 %v195
  %372 = vmatprep.subr.bf16.mxu0 %v200
  %373 = vmatpush1.bf16.msra.mxu0 %v199
  %374 = vmatprep.subr.bf16.mxu0 0
  %375 = vmatpush1.bf16.msra.mxu0 0
  %376 = vmatprep.subr.bf16.mxu0 0
  %377 = vmatpush1.bf16.msra.mxu0 0
  %378 = vmatprep.subr.bf16.mxu0 0
  %379 = vmatpush1.bf16.msra.mxu0 0
  %380 = vmatprep.subr.bf16.mxu0 0
  %381 = vmatpush1.bf16.msra.mxu0 0
  %382 = vmatprep.subr.bf16.mxu0 0
  %383 = vmatpush1.bf16.msra.mxu0 0
  %384 = vmatprep.subr.bf16.mxu0 0
  %385 = vmatpush1.bf16.msra.mxu0 0
  %386 = vmatprep.subr.bf16.mxu0 0
  %387 = vmatpush1.bf16.msra.mxu0 0
  %388 = vmatprep.subr.bf16.mxu0 0
  %389 = vmatpush1.bf16.msra.mxu0 0
  %390 = vmatprep.mubr.bf16.mxu0 0
  %391 = vmatmul.mubr.bf16.gmra.mrb[0].mxu0 %v357
  %v392 = vpop.f32.mrb[0].mxu0
  %v393 = vadd.f32 0.0, %v392
  %v394 = vpop.f32.mrb[0].mxu0
  %v395 = vadd.f32 0.0, %v394
  %v396 = vpop.f32.mrb[0].mxu0
  %v397 = vpop.f32.mrb[0].mxu0
  %398 = vdwg.mxu0
  %399 = vmatprep.subr.bf16.mxu0 %v174
  %400 = vmatpush1.bf16.msra.mxu0 %v173
  %401 = vmatprep.subr.bf16.mxu0 %v178
  %402 = vmatpush1.bf16.msra.mxu0 %v177
  %403 = vmatprep.subr.bf16.mxu0 %v182
  %404 = vmatpush1.bf16.msra.mxu0 %v181
  %405 = vmatprep.subr.bf16.mxu0 %v186
  %406 = vmatpush1.bf16.msra.mxu0 %v185
  %407 = vmatprep.subr.bf16.mxu0 %v190
  %408 = vmatpush1.bf16.msra.mxu0 %v189
  %409 = vmatprep.subr.bf16.mxu0 %v194
  %410 = vmatpush1.bf16.msra.mxu0 %v193
  %411 = vmatprep.subr.bf16.mxu0 %v198
  %412 = vmatpush1.bf16.msra.mxu0 %v197
  %413 = vmatprep.subr.bf16.mxu0 %v202
  %414 = vmatpush1.bf16.msra.mxu0 %v201
  %415 = vmatprep.subr.bf16.mxu0 0
  %416 = vmatpush1.bf16.msra.mxu0 0
  %417 = vmatprep.subr.bf16.mxu0 0
  %418 = vmatpush1.bf16.msra.mxu0 0
  %419 = vmatprep.subr.bf16.mxu0 0
  %420 = vmatpush1.bf16.msra.mxu0 0
  %421 = vmatprep.subr.bf16.mxu0 0
  %422 = vmatpush1.bf16.msra.mxu0 0
  %423 = vmatprep.subr.bf16.mxu0 0
  %424 = vmatpush1.bf16.msra.mxu0 0
  %425 = vmatprep.subr.bf16.mxu0 0
  %426 = vmatpush1.bf16.msra.mxu0 0
  %427 = vmatprep.subr.bf16.mxu0 0
  %428 = vmatpush1.bf16.msra.mxu0 0
  %429 = vmatprep.subr.bf16.mxu0 0
  %430 = vmatpush1.bf16.msra.mxu0 0
  %431 = vmatprep.mubr.bf16.mxu0 0
  %432 = vmatmul.mubr.bf16.gmra.mrb[0].mxu0 %v357
  %v433 = vpop.f32.mrb[0].mxu0
  %v434 = vadd.f32 0.0, %v433
  %v435 = vpop.f32.mrb[0].mxu0
  %v436 = vadd.f32 0.0, %v435
  %v437 = vpop.f32.mrb[0].mxu0
  %v438 = vpop.f32.mrb[0].mxu0
  %439 = vdwg.mxu0
  %v440 = vadd.f32 %v353, %v393
  %v441 = vadd.f32 %v354, %v395
  %v442 = vadd.f32 %v355, %v434
  %v443 = vadd.f32 %v356, %v436
  %v444 = vmul.f32 %v440, 0.5
  %v445 = vtanh.pop %v444
  %v446 = vmul.f32 %v445, 0.5
  %v447 = vadd.f32 %v446, 0.5
  %v448 = vmul.f32 %v441, 0.5
  %v449 = vtanh.pop %v448
  %v450 = vmul.f32 %v449, 0.5
  %v451 = vadd.f32 %v450, 0.5
  %v452 = vtanh.pop %v442
  %v453 = vmul.f32 %v443, 0.5
  %v454 = vtanh.pop %v453
  %v455 = vmul.f32 %v454, 0.5
  %v456 = vadd.f32 %v455, 0.5
  %v457 = vmul.f32 %v451, %v347
  %v458 = vmul.f32 %v447, %v452
  %v459 = vadd.f32 %v457, %v458
  %v460 = vtanh.pop %v459
  %v461 = vmul.f32 %v456, %v460
  %s462 = sadd.s32 %s67, 1
  %v463 = vstv %s462
  %vm464 = vcmp.gt.s32.totalorder %v66, %v463
  %v465 = vsel %vm464, 1, 0
  %466 = vset.pattern.permute.xlu0 0
  %467 = vperm.xlu0 %466, %v465
  %v468 = vpop.permute.xlu0 %467
  %vm469 = vcmp.eq.s32.totalorder %v468, 1
  %v470 = vsel %vm469, %v461, %v346
  %v471 = vsel %vm469, %v459, %v347
  %v472 = vsel %vm469, %v461, 0.0
  %s473 = scalar_lea.vmem %s5, 8
  %474 = vst [vmem:[%s473] sm:$0xff] %v472
  %s475 = scalar_lea.vmem %s1, 32
  %v476 = vld [vmem:[%s475] sm:$0xff]
  %v477 = vld [vmem:[%s475 + $0x8] sm:$0xff]
  %v478 = vunpack.c.l.bf16 %v476
  %v479 = vunpack.c.h.bf16 %v476
  %v480 = vunpack.c.l.bf16 %v477
  %v481 = vunpack.c.h.bf16 %v477
  %v482 = vpack.c.bf16 %v470, %v470
  %483 = vmatprep.subr.bf16.mxu0 %v172
  %484 = vmatpush1.bf16.msra.mxu0 %v171
  %485 = vmatprep.subr.bf16.mxu0 %v176
  %486 = vmatpush1.bf16.msra.mxu0 %v175
  %487 = vmatprep.subr.bf16.mxu0 %v180
  %488 = vmatpush1.bf16.msra.mxu0 %v179
  %489 = vmatprep.subr.bf16.mxu0 %v184
  %490 = vmatpush1.bf16.msra.mxu0 %v183
  %491 = vmatprep.subr.bf16.mxu0 %v188
  %492 = vmatpush1.bf16.msra.mxu0 %v187
  %493 = vmatprep.subr.bf16.mxu0 %v192
  %494 = vmatpush1.bf16.msra.mxu0 %v191
  %495 = vmatprep.subr.bf16.mxu0 %v196
  %496 = vmatpush1.bf16.msra.mxu0 %v195
  %497 = vmatprep.subr.bf16.mxu0 %v200
  %498 = vmatpush1.bf16.msra.mxu0 %v199
  %499 = vmatprep.subr.bf16.mxu0 0
  %500 = vmatpush1.bf16.msra.mxu0 0
  %501 = vmatprep.subr.bf16.mxu0 0
  %502 = vmatpush1.bf16.msra.mxu0 0
  %503 = vmatprep.subr.bf16.mxu0 0
  %504 = vmatpush1.bf16.msra.mxu0 0
  %505 = vmatprep.subr.bf16.mxu0 0
  %506 = vmatpush1.bf16.msra.mxu0 0
  %507 = vmatprep.subr.bf16.mxu0 0
  %508 = vmatpush1.bf16.msra.mxu0 0
  %509 = vmatprep.subr.bf16.mxu0 0
  %510 = vmatpush1.bf16.msra.mxu0 0
  %511 = vmatprep.subr.bf16.mxu0 0
  %512 = vmatpush1.bf16.msra.mxu0 0
  %513 = vmatprep.subr.bf16.mxu0 0
  %514 = vmatpush1.bf16.msra.mxu0 0
  %515 = vmatprep.mubr.bf16.mxu0 0
  %516 = vmatmul.mubr.bf16.gmra.mrb[0].mxu0 %v482
  %v517 = vpop.f32.mrb[0].mxu0
  %v518 = vadd.f32 0.0, %v517
  %v519 = vpop.f32.mrb[0].mxu0
  %v520 = vadd.f32 0.0, %v519
  %v521 = vpop.f32.mrb[0].mxu0
  %v522 = vpop.f32.mrb[0].mxu0
  %523 = vdwg.mxu0
  %524 = vmatprep.subr.bf16.mxu0 %v174
  %525 = vmatpush1.bf16.msra.mxu0 %v173
  %526 = vmatprep.subr.bf16.mxu0 %v178
  %527 = vmatpush1.bf16.msra.mxu0 %v177
  %528 = vmatprep.subr.bf16.mxu0 %v182
  %529 = vmatpush1.bf16.msra.mxu0 %v181
  %530 = vmatprep.subr.bf16.mxu0 %v186
  %531 = vmatpush1.bf16.msra.mxu0 %v185
  %532 = vmatprep.subr.bf16.mxu0 %v190
  %533 = vmatpush1.bf16.msra.mxu0 %v189
  %534 = vmatprep.subr.bf16.mxu0 %v194
  %535 = vmatpush1.bf16.msra.mxu0 %v193
  %536 = vmatprep.subr.bf16.mxu0 %v198
  %537 = vmatpush1.bf16.msra.mxu0 %v197
  %538 = vmatprep.subr.bf16.mxu0 %v202
  %539 = vmatpush1.bf16.msra.mxu0 %v201
  %540 = vmatprep.subr.bf16.mxu0 0
  %541 = vmatpush1.bf16.msra.mxu0 0
  %542 = vmatprep.subr.bf16.mxu0 0
  %543 = vmatpush1.bf16.msra.mxu0 0
  %544 = vmatprep.subr.bf16.mxu0 0
  %545 = vmatpush1.bf16.msra.mxu0 0
  %546 = vmatprep.subr.bf16.mxu0 0
  %547 = vmatpush1.bf16.msra.mxu0 0
  %548 = vmatprep.subr.bf16.mxu0 0
  %549 = vmatpush1.bf16.msra.mxu0 0
  %550 = vmatprep.subr.bf16.mxu0 0
  %551 = vmatpush1.bf16.msra.mxu0 0
  %552 = vmatprep.subr.bf16.mxu0 0
  %553 = vmatpush1.bf16.msra.mxu0 0
  %554 = vmatprep.subr.bf16.mxu0 0
  %555 = vmatpush1.bf16.msra.mxu0 0
  %556 = vmatprep.mubr.bf16.mxu0 0
  %557 = vmatmul.mubr.bf16.gmra.mrb[0].mxu0 %v482
  %v558 = vpop.f32.mrb[0].mxu0
  %v559 = vadd.f32 0.0, %v558
  %v560 = vpop.f32.mrb[0].mxu0
  %v561 = vadd.f32 0.0, %v560
  %v562 = vpop.f32.mrb[0].mxu0
  %v563 = vpop.f32.mrb[0].mxu0
  %564 = vdwg.mxu0
  %v565 = vadd.f32 %v478, %v518
  %v566 = vadd.f32 %v479, %v520
  %v567 = vadd.f32 %v480, %v559
  %v568 = vadd.f32 %v481, %v561
  %v569 = vmul.f32 %v565, 0.5
  %v570 = vtanh.pop %v569
  %v571 = vmul.f32 %v570, 0.5
  %v572 = vadd.f32 %v571, 0.5
  %v573 = vmul.f32 %v566, 0.5
  %v574 = vtanh.pop %v573
  %v575 = vmul.f32 %v574, 0.5
  %v576 = vadd.f32 %v575, 0.5
  %v577 = vtanh.pop %v567
  %v578 = vmul.f32 %v568, 0.5
  %v579 = vtanh.pop %v578
  %v580 = vmul.f32 %v579, 0.5
  %v581 = vadd.f32 %v580, 0.5
  %v582 = vmul.f32 %v576, %v471
  %v583 = vmul.f32 %v572, %v577
  %v584 = vadd.f32 %v582, %v583
  %v585 = vtanh.pop %v584
  %v586 = vmul.f32 %v581, %v585
  %s587 = sadd.s32 %s67, 2
  %v588 = vstv %s587
  %vm589 = vcmp.gt.s32.totalorder %v66, %v588
  %v590 = vsel %vm589, 1, 0
  %591 = vset.pattern.permute.xlu0 0
  %592 = vperm.xlu0 %591, %v590
  %v593 = vpop.permute.xlu0 %592
  %vm594 = vcmp.eq.s32.totalorder %v593, 1
  %v595 = vsel %vm594, %v586, %v470
  %v596 = vsel %vm594, %v584, %v471
  %v597 = vsel %vm594, %v586, 0.0
  %s598 = scalar_lea.vmem %s5, 16
  %599 = vst [vmem:[%s598] sm:$0xff] %v597
  %s600 = scalar_lea.vmem %s1, 48
  %v601 = vld [vmem:[%s600] sm:$0xff]
  %v602 = vld [vmem:[%s600 + $0x8] sm:$0xff]
  %v603 = vunpack.c.l.bf16 %v601
  %v604 = vunpack.c.h.bf16 %v601
  %v605 = vunpack.c.l.bf16 %v602
  %v606 = vunpack.c.h.bf16 %v602
  %v607 = vpack.c.bf16 %v595, %v595
  %608 = vmatprep.subr.bf16.mxu0 %v172
  %609 = vmatpush1.bf16.msra.mxu0 %v171
  %610 = vmatprep.subr.bf16.mxu0 %v176
  %611 = vmatpush1.bf16.msra.mxu0 %v175
  %612 = vmatprep.subr.bf16.mxu0 %v180
  %613 = vmatpush1.bf16.msra.mxu0 %v179
  %614 = vmatprep.subr.bf16.mxu0 %v184
  %615 = vmatpush1.bf16.msra.mxu0 %v183
  %616 = vmatprep.subr.bf16.mxu0 %v188
  %617 = vmatpush1.bf16.msra.mxu0 %v187
  %618 = vmatprep.subr.bf16.mxu0 %v192
  %619 = vmatpush1.bf16.msra.mxu0 %v191
  %620 = vmatprep.subr.bf16.mxu0 %v196
  %621 = vmatpush1.bf16.msra.mxu0 %v195
  %622 = vmatprep.subr.bf16.mxu0 %v200
  %623 = vmatpush1.bf16.msra.mxu0 %v199
  %624 = vmatprep.subr.bf16.mxu0 0
  %625 = vmatpush1.bf16.msra.mxu0 0
  %626 = vmatprep.subr.bf16.mxu0 0
  %627 = vmatpush1.bf16.msra.mxu0 0
  %628 = vmatprep.subr.bf16.mxu0 0
  %629 = vmatpush1.bf16.msra.mxu0 0
  %630 = vmatprep.subr.bf16.mxu0 0
  %631 = vmatpush1.bf16.msra.mxu0 0
  %632 = vmatprep.subr.bf16.mxu0 0
  %633 = vmatpush1.bf16.msra.mxu0 0
  %634 = vmatprep.subr.bf16.mxu0 0
  %635 = vmatpush1.bf16.msra.mxu0 0
  %636 = vmatprep.subr.bf16.mxu0 0
  %637 = vmatpush1.bf16.msra.mxu0 0
  %638 = vmatprep.subr.bf16.mxu0 0
  %639 = vmatpush1.bf16.msra.mxu0 0
  %640 = vmatprep.mubr.bf16.mxu0 0
  %641 = vmatmul.mubr.bf16.gmra.mrb[0].mxu0 %v607
  %v642 = vpop.f32.mrb[0].mxu0
  %v643 = vadd.f32 0.0, %v642
  %v644 = vpop.f32.mrb[0].mxu0
  %v645 = vadd.f32 0.0, %v644
  %v646 = vpop.f32.mrb[0].mxu0
  %v647 = vpop.f32.mrb[0].mxu0
  %648 = vdwg.mxu0
  %649 = vmatprep.subr.bf16.mxu0 %v174
  %650 = vmatpush1.bf16.msra.mxu0 %v173
  %651 = vmatprep.subr.bf16.mxu0 %v178
  %652 = vmatpush1.bf16.msra.mxu0 %v177
  %653 = vmatprep.subr.bf16.mxu0 %v182
  %654 = vmatpush1.bf16.msra.mxu0 %v181
  %655 = vmatprep.subr.bf16.mxu0 %v186
  %656 = vmatpush1.bf16.msra.mxu0 %v185
  %657 = vmatprep.subr.bf16.mxu0 %v190
  %658 = vmatpush1.bf16.msra.mxu0 %v189
  %659 = vmatprep.subr.bf16.mxu0 %v194
  %660 = vmatpush1.bf16.msra.mxu0 %v193
  %661 = vmatprep.subr.bf16.mxu0 %v198
  %662 = vmatpush1.bf16.msra.mxu0 %v197
  %663 = vmatprep.subr.bf16.mxu0 %v202
  %664 = vmatpush1.bf16.msra.mxu0 %v201
  %665 = vmatprep.subr.bf16.mxu0 0
  %666 = vmatpush1.bf16.msra.mxu0 0
  %667 = vmatprep.subr.bf16.mxu0 0
  %668 = vmatpush1.bf16.msra.mxu0 0
  %669 = vmatprep.subr.bf16.mxu0 0
  %670 = vmatpush1.bf16.msra.mxu0 0
  %671 = vmatprep.subr.bf16.mxu0 0
  %672 = vmatpush1.bf16.msra.mxu0 0
  %673 = vmatprep.subr.bf16.mxu0 0
  %674 = vmatpush1.bf16.msra.mxu0 0
  %675 = vmatprep.subr.bf16.mxu0 0
  %676 = vmatpush1.bf16.msra.mxu0 0
  %677 = vmatprep.subr.bf16.mxu0 0
  %678 = vmatpush1.bf16.msra.mxu0 0
  %679 = vmatprep.subr.bf16.mxu0 0
  %680 = vmatpush1.bf16.msra.mxu0 0
  %681 = vmatprep.mubr.bf16.mxu0 0
  %682 = vmatmul.mubr.bf16.gmra.mrb[0].mxu0 %v607
  %v683 = vpop.f32.mrb[0].mxu0
  %v684 = vadd.f32 0.0, %v683
  %v685 = vpop.f32.mrb[0].mxu0
  %v686 = vadd.f32 0.0, %v685
  %v687 = vpop.f32.mrb[0].mxu0
  %v688 = vpop.f32.mrb[0].mxu0
  %689 = vdwg.mxu0
  %v690 = vadd.f32 %v603, %v643
  %v691 = vadd.f32 %v604, %v645
  %v692 = vadd.f32 %v605, %v684
  %v693 = vadd.f32 %v606, %v686
  %v694 = vmul.f32 %v690, 0.5
  %v695 = vtanh.pop %v694
  %v696 = vmul.f32 %v695, 0.5
  %v697 = vadd.f32 %v696, 0.5
  %v698 = vmul.f32 %v691, 0.5
  %v699 = vtanh.pop %v698
  %v700 = vmul.f32 %v699, 0.5
  %v701 = vadd.f32 %v700, 0.5
  %v702 = vtanh.pop %v692
  %v703 = vmul.f32 %v693, 0.5
  %v704 = vtanh.pop %v703
  %v705 = vmul.f32 %v704, 0.5
  %v706 = vadd.f32 %v705, 0.5
  %v707 = vmul.f32 %v701, %v596
  %v708 = vmul.f32 %v697, %v702
  %v709 = vadd.f32 %v707, %v708
  %v710 = vtanh.pop %v709
  %v711 = vmul.f32 %v706, %v710
  %s712 = sadd.s32 %s67, 3
  %v713 = vstv %s712
  %vm714 = vcmp.gt.s32.totalorder %v66, %v713
  %v715 = vsel %vm714, 1, 0
  %716 = vset.pattern.permute.xlu0 0
  %717 = vperm.xlu0 %716, %v715
  %v718 = vpop.permute.xlu0 %717
  %vm719 = vcmp.eq.s32.totalorder %v718, 1
  %v720 = vsel %vm719, %v711, %v595
  %v721 = vsel %vm719, %v709, %v596
  %v722 = vsel %vm719, %v711, 0.0
  %s723 = scalar_lea.vmem %s5, 24
  %724 = vst [vmem:[%s723] sm:$0xff] %v722
  %s725 = scalar_lea.vmem %s1, 64
  %v726 = vld [vmem:[%s725] sm:$0xff]
  %v727 = vld [vmem:[%s725 + $0x8] sm:$0xff]
  %v728 = vunpack.c.l.bf16 %v726
  %v729 = vunpack.c.h.bf16 %v726
  %v730 = vunpack.c.l.bf16 %v727
  %v731 = vunpack.c.h.bf16 %v727
  %v732 = vpack.c.bf16 %v720, %v720
  %733 = vmatprep.subr.bf16.mxu0 %v172
  %734 = vmatpush1.bf16.msra.mxu0 %v171
  %735 = vmatprep.subr.bf16.mxu0 %v176
  %736 = vmatpush1.bf16.msra.mxu0 %v175
  %737 = vmatprep.subr.bf16.mxu0 %v180
  %738 = vmatpush1.bf16.msra.mxu0 %v179
  %739 = vmatprep.subr.bf16.mxu0 %v184
  %740 = vmatpush1.bf16.msra.mxu0 %v183
  %741 = vmatprep.subr.bf16.mxu0 %v188
  %742 = vmatpush1.bf16.msra.mxu0 %v187
  %743 = vmatprep.subr.bf16.mxu0 %v192
  %744 = vmatpush1.bf16.msra.mxu0 %v191
  %745 = vmatprep.subr.bf16.mxu0 %v196
  %746 = vmatpush1.bf16.msra.mxu0 %v195
  %747 = vmatprep.subr.bf16.mxu0 %v200
  %748 = vmatpush1.bf16.msra.mxu0 %v199
  %749 = vmatprep.subr.bf16.mxu0 0
  %750 = vmatpush1.bf16.msra.mxu0 0
  %751 = vmatprep.subr.bf16.mxu0 0
  %752 = vmatpush1.bf16.msra.mxu0 0
  %753 = vmatprep.subr.bf16.mxu0 0
  %754 = vmatpush1.bf16.msra.mxu0 0
  %755 = vmatprep.subr.bf16.mxu0 0
  %756 = vmatpush1.bf16.msra.mxu0 0
  %757 = vmatprep.subr.bf16.mxu0 0
  %758 = vmatpush1.bf16.msra.mxu0 0
  %759 = vmatprep.subr.bf16.mxu0 0
  %760 = vmatpush1.bf16.msra.mxu0 0
  %761 = vmatprep.subr.bf16.mxu0 0
  %762 = vmatpush1.bf16.msra.mxu0 0
  %763 = vmatprep.subr.bf16.mxu0 0
  %764 = vmatpush1.bf16.msra.mxu0 0
  %765 = vmatprep.mubr.bf16.mxu0 0
  %766 = vmatmul.mubr.bf16.gmra.mrb[0].mxu0 %v732
  %v767 = vpop.f32.mrb[0].mxu0
  %v768 = vadd.f32 0.0, %v767
  %v769 = vpop.f32.mrb[0].mxu0
  %v770 = vadd.f32 0.0, %v769
  %v771 = vpop.f32.mrb[0].mxu0
  %v772 = vpop.f32.mrb[0].mxu0
  %773 = vdwg.mxu0
  %774 = vmatprep.subr.bf16.mxu0 %v174
  %775 = vmatpush1.bf16.msra.mxu0 %v173
  %776 = vmatprep.subr.bf16.mxu0 %v178
  %777 = vmatpush1.bf16.msra.mxu0 %v177
  %778 = vmatprep.subr.bf16.mxu0 %v182
  %779 = vmatpush1.bf16.msra.mxu0 %v181
  %780 = vmatprep.subr.bf16.mxu0 %v186
  %781 = vmatpush1.bf16.msra.mxu0 %v185
  %782 = vmatprep.subr.bf16.mxu0 %v190
  %783 = vmatpush1.bf16.msra.mxu0 %v189
  %784 = vmatprep.subr.bf16.mxu0 %v194
  %785 = vmatpush1.bf16.msra.mxu0 %v193
  %786 = vmatprep.subr.bf16.mxu0 %v198
  %787 = vmatpush1.bf16.msra.mxu0 %v197
  %788 = vmatprep.subr.bf16.mxu0 %v202
  %789 = vmatpush1.bf16.msra.mxu0 %v201
  %790 = vmatprep.subr.bf16.mxu0 0
  %791 = vmatpush1.bf16.msra.mxu0 0
  %792 = vmatprep.subr.bf16.mxu0 0
  %793 = vmatpush1.bf16.msra.mxu0 0
  %794 = vmatprep.subr.bf16.mxu0 0
  %795 = vmatpush1.bf16.msra.mxu0 0
  %796 = vmatprep.subr.bf16.mxu0 0
  %797 = vmatpush1.bf16.msra.mxu0 0
  %798 = vmatprep.subr.bf16.mxu0 0
  %799 = vmatpush1.bf16.msra.mxu0 0
  %800 = vmatprep.subr.bf16.mxu0 0
  %801 = vmatpush1.bf16.msra.mxu0 0
  %802 = vmatprep.subr.bf16.mxu0 0
  %803 = vmatpush1.bf16.msra.mxu0 0
  %804 = vmatprep.subr.bf16.mxu0 0
  %805 = vmatpush1.bf16.msra.mxu0 0
  %806 = vmatprep.mubr.bf16.mxu0 0
  %807 = vmatmul.mubr.bf16.gmra.mrb[0].mxu0 %v732
  %v808 = vpop.f32.mrb[0].mxu0
  %v809 = vadd.f32 0.0, %v808
  %v810 = vpop.f32.mrb[0].mxu0
  %v811 = vadd.f32 0.0, %v810
  %v812 = vpop.f32.mrb[0].mxu0
  %v813 = vpop.f32.mrb[0].mxu0
  %814 = vdwg.mxu0
  %v815 = vadd.f32 %v728, %v768
  %v816 = vadd.f32 %v729, %v770
  %v817 = vadd.f32 %v730, %v809
  %v818 = vadd.f32 %v731, %v811
  %v819 = vmul.f32 %v815, 0.5
  %v820 = vtanh.pop %v819
  %v821 = vmul.f32 %v820, 0.5
  %v822 = vadd.f32 %v821, 0.5
  %v823 = vmul.f32 %v816, 0.5
  %v824 = vtanh.pop %v823
  %v825 = vmul.f32 %v824, 0.5
  %v826 = vadd.f32 %v825, 0.5
  %v827 = vtanh.pop %v817
  %v828 = vmul.f32 %v818, 0.5
  %v829 = vtanh.pop %v828
  %v830 = vmul.f32 %v829, 0.5
  %v831 = vadd.f32 %v830, 0.5
  %v832 = vmul.f32 %v826, %v721
  %v833 = vmul.f32 %v822, %v827
  %v834 = vadd.f32 %v832, %v833
  %v835 = vtanh.pop %v834
  %v836 = vmul.f32 %v831, %v835
  %s837 = sadd.s32 %s67, 4
  %v838 = vstv %s837
  %vm839 = vcmp.gt.s32.totalorder %v66, %v838
  %v840 = vsel %vm839, 1, 0
  %841 = vset.pattern.permute.xlu0 0
  %842 = vperm.xlu0 %841, %v840
  %v843 = vpop.permute.xlu0 %842
  %vm844 = vcmp.eq.s32.totalorder %v843, 1
  %v845 = vsel %vm844, %v836, %v720
  %v846 = vsel %vm844, %v834, %v721
  %v847 = vsel %vm844, %v836, 0.0
  %s848 = scalar_lea.vmem %s5, 32
  %849 = vst [vmem:[%s848] sm:$0xff] %v847
  %s850 = scalar_lea.vmem %s1, 80
  %v851 = vld [vmem:[%s850] sm:$0xff]
  %v852 = vld [vmem:[%s850 + $0x8] sm:$0xff]
  %v853 = vunpack.c.l.bf16 %v851
  %v854 = vunpack.c.h.bf16 %v851
  %v855 = vunpack.c.l.bf16 %v852
  %v856 = vunpack.c.h.bf16 %v852
  %v857 = vpack.c.bf16 %v845, %v845
  %858 = vmatprep.subr.bf16.mxu0 %v172
  %859 = vmatpush1.bf16.msra.mxu0 %v171
  %860 = vmatprep.subr.bf16.mxu0 %v176
  %861 = vmatpush1.bf16.msra.mxu0 %v175
  %862 = vmatprep.subr.bf16.mxu0 %v180
  %863 = vmatpush1.bf16.msra.mxu0 %v179
  %864 = vmatprep.subr.bf16.mxu0 %v184
  %865 = vmatpush1.bf16.msra.mxu0 %v183
  %866 = vmatprep.subr.bf16.mxu0 %v188
  %867 = vmatpush1.bf16.msra.mxu0 %v187
  %868 = vmatprep.subr.bf16.mxu0 %v192
  %869 = vmatpush1.bf16.msra.mxu0 %v191
  %870 = vmatprep.subr.bf16.mxu0 %v196
  %871 = vmatpush1.bf16.msra.mxu0 %v195
  %872 = vmatprep.subr.bf16.mxu0 %v200
  %873 = vmatpush1.bf16.msra.mxu0 %v199
  %874 = vmatprep.subr.bf16.mxu0 0
  %875 = vmatpush1.bf16.msra.mxu0 0
  %876 = vmatprep.subr.bf16.mxu0 0
  %877 = vmatpush1.bf16.msra.mxu0 0
  %878 = vmatprep.subr.bf16.mxu0 0
  %879 = vmatpush1.bf16.msra.mxu0 0
  %880 = vmatprep.subr.bf16.mxu0 0
  %881 = vmatpush1.bf16.msra.mxu0 0
  %882 = vmatprep.subr.bf16.mxu0 0
  %883 = vmatpush1.bf16.msra.mxu0 0
  %884 = vmatprep.subr.bf16.mxu0 0
  %885 = vmatpush1.bf16.msra.mxu0 0
  %886 = vmatprep.subr.bf16.mxu0 0
  %887 = vmatpush1.bf16.msra.mxu0 0
  %888 = vmatprep.subr.bf16.mxu0 0
  %889 = vmatpush1.bf16.msra.mxu0 0
  %890 = vmatprep.mubr.bf16.mxu0 0
  %891 = vmatmul.mubr.bf16.gmra.mrb[0].mxu0 %v857
  %v892 = vpop.f32.mrb[0].mxu0
  %v893 = vadd.f32 0.0, %v892
  %v894 = vpop.f32.mrb[0].mxu0
  %v895 = vadd.f32 0.0, %v894
  %v896 = vpop.f32.mrb[0].mxu0
  %v897 = vpop.f32.mrb[0].mxu0
  %898 = vdwg.mxu0
  %899 = vmatprep.subr.bf16.mxu0 %v174
  %900 = vmatpush1.bf16.msra.mxu0 %v173
  %901 = vmatprep.subr.bf16.mxu0 %v178
  %902 = vmatpush1.bf16.msra.mxu0 %v177
  %903 = vmatprep.subr.bf16.mxu0 %v182
  %904 = vmatpush1.bf16.msra.mxu0 %v181
  %905 = vmatprep.subr.bf16.mxu0 %v186
  %906 = vmatpush1.bf16.msra.mxu0 %v185
  %907 = vmatprep.subr.bf16.mxu0 %v190
  %908 = vmatpush1.bf16.msra.mxu0 %v189
  %909 = vmatprep.subr.bf16.mxu0 %v194
  %910 = vmatpush1.bf16.msra.mxu0 %v193
  %911 = vmatprep.subr.bf16.mxu0 %v198
  %912 = vmatpush1.bf16.msra.mxu0 %v197
  %913 = vmatprep.subr.bf16.mxu0 %v202
  %914 = vmatpush1.bf16.msra.mxu0 %v201
  %915 = vmatprep.subr.bf16.mxu0 0
  %916 = vmatpush1.bf16.msra.mxu0 0
  %917 = vmatprep.subr.bf16.mxu0 0
  %918 = vmatpush1.bf16.msra.mxu0 0
  %919 = vmatprep.subr.bf16.mxu0 0
  %920 = vmatpush1.bf16.msra.mxu0 0
  %921 = vmatprep.subr.bf16.mxu0 0
  %922 = vmatpush1.bf16.msra.mxu0 0
  %923 = vmatprep.subr.bf16.mxu0 0
  %924 = vmatpush1.bf16.msra.mxu0 0
  %925 = vmatprep.subr.bf16.mxu0 0
  %926 = vmatpush1.bf16.msra.mxu0 0
  %927 = vmatprep.subr.bf16.mxu0 0
  %928 = vmatpush1.bf16.msra.mxu0 0
  %929 = vmatprep.subr.bf16.mxu0 0
  %930 = vmatpush1.bf16.msra.mxu0 0
  %931 = vmatprep.mubr.bf16.mxu0 0
  %932 = vmatmul.mubr.bf16.gmra.mrb[0].mxu0 %v857
  %v933 = vpop.f32.mrb[0].mxu0
  %v934 = vadd.f32 0.0, %v933
  %v935 = vpop.f32.mrb[0].mxu0
  %v936 = vadd.f32 0.0, %v935
  %v937 = vpop.f32.mrb[0].mxu0
  %v938 = vpop.f32.mrb[0].mxu0
  %939 = vdwg.mxu0
  %v940 = vadd.f32 %v853, %v893
  %v941 = vadd.f32 %v854, %v895
  %v942 = vadd.f32 %v855, %v934
  %v943 = vadd.f32 %v856, %v936
  %v944 = vmul.f32 %v940, 0.5
  %v945 = vtanh.pop %v944
  %v946 = vmul.f32 %v945, 0.5
  %v947 = vadd.f32 %v946, 0.5
  %v948 = vmul.f32 %v941, 0.5
  %v949 = vtanh.pop %v948
  %v950 = vmul.f32 %v949, 0.5
  %v951 = vadd.f32 %v950, 0.5
  %v952 = vtanh.pop %v942
  %v953 = vmul.f32 %v943, 0.5
  %v954 = vtanh.pop %v953
  %v955 = vmul.f32 %v954, 0.5
  %v956 = vadd.f32 %v955, 0.5
  %v957 = vmul.f32 %v951, %v846
  %v958 = vmul.f32 %v947, %v952
  %v959 = vadd.f32 %v957, %v958
  %v960 = vtanh.pop %v959
  %v961 = vmul.f32 %v956, %v960
  %s962 = sadd.s32 %s67, 5
  %v963 = vstv %s962
  %vm964 = vcmp.gt.s32.totalorder %v66, %v963
  %v965 = vsel %vm964, 1, 0
  %966 = vset.pattern.permute.xlu0 0
  %967 = vperm.xlu0 %966, %v965
  %v968 = vpop.permute.xlu0 %967
  %vm969 = vcmp.eq.s32.totalorder %v968, 1
  %v970 = vsel %vm969, %v961, %v845
  %v971 = vsel %vm969, %v959, %v846
  %v972 = vsel %vm969, %v961, 0.0
  %s973 = scalar_lea.vmem %s5, 40
  %974 = vst [vmem:[%s973] sm:$0xff] %v972
  %s975 = scalar_lea.vmem %s1, 96
  %v976 = vld [vmem:[%s975] sm:$0xff]
  %v977 = vld [vmem:[%s975 + $0x8] sm:$0xff]
  %v978 = vunpack.c.l.bf16 %v976
  %v979 = vunpack.c.h.bf16 %v976
  %v980 = vunpack.c.l.bf16 %v977
  %v981 = vunpack.c.h.bf16 %v977
  %v982 = vpack.c.bf16 %v970, %v970
  %983 = vmatprep.subr.bf16.mxu0 %v172
  %984 = vmatpush1.bf16.msra.mxu0 %v171
  %985 = vmatprep.subr.bf16.mxu0 %v176
  %986 = vmatpush1.bf16.msra.mxu0 %v175
  %987 = vmatprep.subr.bf16.mxu0 %v180
  %988 = vmatpush1.bf16.msra.mxu0 %v179
  %989 = vmatprep.subr.bf16.mxu0 %v184
  %990 = vmatpush1.bf16.msra.mxu0 %v183
  %991 = vmatprep.subr.bf16.mxu0 %v188
  %992 = vmatpush1.bf16.msra.mxu0 %v187
  %993 = vmatprep.subr.bf16.mxu0 %v192
  %994 = vmatpush1.bf16.msra.mxu0 %v191
  %995 = vmatprep.subr.bf16.mxu0 %v196
  %996 = vmatpush1.bf16.msra.mxu0 %v195
  %997 = vmatprep.subr.bf16.mxu0 %v200
  %998 = vmatpush1.bf16.msra.mxu0 %v199
  %999 = vmatprep.subr.bf16.mxu0 0
  %1000 = vmatpush1.bf16.msra.mxu0 0
  %1001 = vmatprep.subr.bf16.mxu0 0
  %1002 = vmatpush1.bf16.msra.mxu0 0
  %1003 = vmatprep.subr.bf16.mxu0 0
  %1004 = vmatpush1.bf16.msra.mxu0 0
  %1005 = vmatprep.subr.bf16.mxu0 0
  %1006 = vmatpush1.bf16.msra.mxu0 0
  %1007 = vmatprep.subr.bf16.mxu0 0
  %1008 = vmatpush1.bf16.msra.mxu0 0
  %1009 = vmatprep.subr.bf16.mxu0 0
  %1010 = vmatpush1.bf16.msra.mxu0 0
  %1011 = vmatprep.subr.bf16.mxu0 0
  %1012 = vmatpush1.bf16.msra.mxu0 0
  %1013 = vmatprep.subr.bf16.mxu0 0
  %1014 = vmatpush1.bf16.msra.mxu0 0
  %1015 = vmatprep.mubr.bf16.mxu0 0
  %1016 = vmatmul.mubr.bf16.gmra.mrb[0].mxu0 %v982
  %v1017 = vpop.f32.mrb[0].mxu0
  %v1018 = vadd.f32 0.0, %v1017
  %v1019 = vpop.f32.mrb[0].mxu0
  %v1020 = vadd.f32 0.0, %v1019
  %v1021 = vpop.f32.mrb[0].mxu0
  %v1022 = vpop.f32.mrb[0].mxu0
  %1023 = vdwg.mxu0
  %1024 = vmatprep.subr.bf16.mxu0 %v174
  %1025 = vmatpush1.bf16.msra.mxu0 %v173
  %1026 = vmatprep.subr.bf16.mxu0 %v178
  %1027 = vmatpush1.bf16.msra.mxu0 %v177
  %1028 = vmatprep.subr.bf16.mxu0 %v182
  %1029 = vmatpush1.bf16.msra.mxu0 %v181
  %1030 = vmatprep.subr.bf16.mxu0 %v186
  %1031 = vmatpush1.bf16.msra.mxu0 %v185
  %1032 = vmatprep.subr.bf16.mxu0 %v190
  %1033 = vmatpush1.bf16.msra.mxu0 %v189
  %1034 = vmatprep.subr.bf16.mxu0 %v194
  %1035 = vmatpush1.bf16.msra.mxu0 %v193
  %1036 = vmatprep.subr.bf16.mxu0 %v198
  %1037 = vmatpush1.bf16.msra.mxu0 %v197
  %1038 = vmatprep.subr.bf16.mxu0 %v202
  %1039 = vmatpush1.bf16.msra.mxu0 %v201
  %1040 = vmatprep.subr.bf16.mxu0 0
  %1041 = vmatpush1.bf16.msra.mxu0 0
  %1042 = vmatprep.subr.bf16.mxu0 0
  %1043 = vmatpush1.bf16.msra.mxu0 0
  %1044 = vmatprep.subr.bf16.mxu0 0
  %1045 = vmatpush1.bf16.msra.mxu0 0
  %1046 = vmatprep.subr.bf16.mxu0 0
  %1047 = vmatpush1.bf16.msra.mxu0 0
  %1048 = vmatprep.subr.bf16.mxu0 0
  %1049 = vmatpush1.bf16.msra.mxu0 0
  %1050 = vmatprep.subr.bf16.mxu0 0
  %1051 = vmatpush1.bf16.msra.mxu0 0
  %1052 = vmatprep.subr.bf16.mxu0 0
  %1053 = vmatpush1.bf16.msra.mxu0 0
  %1054 = vmatprep.subr.bf16.mxu0 0
  %1055 = vmatpush1.bf16.msra.mxu0 0
  %1056 = vmatprep.mubr.bf16.mxu0 0
  %1057 = vmatmul.mubr.bf16.gmra.mrb[0].mxu0 %v982
  %v1058 = vpop.f32.mrb[0].mxu0
  %v1059 = vadd.f32 0.0, %v1058
  %v1060 = vpop.f32.mrb[0].mxu0
  %v1061 = vadd.f32 0.0, %v1060
  %v1062 = vpop.f32.mrb[0].mxu0
  %v1063 = vpop.f32.mrb[0].mxu0
  %1064 = vdwg.mxu0
  %v1065 = vadd.f32 %v978, %v1018
  %v1066 = vadd.f32 %v979, %v1020
  %v1067 = vadd.f32 %v980, %v1059
  %v1068 = vadd.f32 %v981, %v1061
  %v1069 = vmul.f32 %v1065, 0.5
  %v1070 = vtanh.pop %v1069
  %v1071 = vmul.f32 %v1070, 0.5
  %v1072 = vadd.f32 %v1071, 0.5
  %v1073 = vmul.f32 %v1066, 0.5
  %v1074 = vtanh.pop %v1073
  %v1075 = vmul.f32 %v1074, 0.5
  %v1076 = vadd.f32 %v1075, 0.5
  %v1077 = vtanh.pop %v1067
  %v1078 = vmul.f32 %v1068, 0.5
  %v1079 = vtanh.pop %v1078
  %v1080 = vmul.f32 %v1079, 0.5
  %v1081 = vadd.f32 %v1080, 0.5
  %v1082 = vmul.f32 %v1076, %v971
  %v1083 = vmul.f32 %v1072, %v1077
  %v1084 = vadd.f32 %v1082, %v1083
  %v1085 = vtanh.pop %v1084
  %v1086 = vmul.f32 %v1081, %v1085
  %s1087 = sadd.s32 %s67, 6
  %v1088 = vstv %s1087
  %vm1089 = vcmp.gt.s32.totalorder %v66, %v1088
  %v1090 = vsel %vm1089, 1, 0
  %1091 = vset.pattern.permute.xlu0 0
  %1092 = vperm.xlu0 %1091, %v1090
  %v1093 = vpop.permute.xlu0 %1092
  %vm1094 = vcmp.eq.s32.totalorder %v1093, 1
  %v1095 = vsel %vm1094, %v1086, %v970
  %v1096 = vsel %vm1094, %v1084, %v971
  %v1097 = vsel %vm1094, %v1086, 0.0
  %s1098 = scalar_lea.vmem %s5, 48
  %1099 = vst [vmem:[%s1098] sm:$0xff] %v1097
  %s1100 = scalar_lea.vmem %s1, 112
  %v1101 = vld [vmem:[%s1100] sm:$0xff]
  %v1102 = vld [vmem:[%s1100 + $0x8] sm:$0xff]
  %v1103 = vunpack.c.l.bf16 %v1101
  %v1104 = vunpack.c.h.bf16 %v1101
  %v1105 = vunpack.c.l.bf16 %v1102
  %v1106 = vunpack.c.h.bf16 %v1102
  %v1107 = vpack.c.bf16 %v1095, %v1095
  %1108 = vmatprep.subr.bf16.mxu0 %v172
  %1109 = vmatpush1.bf16.msra.mxu0 %v171
  %1110 = vmatprep.subr.bf16.mxu0 %v176
  %1111 = vmatpush1.bf16.msra.mxu0 %v175
  %1112 = vmatprep.subr.bf16.mxu0 %v180
  %1113 = vmatpush1.bf16.msra.mxu0 %v179
  %1114 = vmatprep.subr.bf16.mxu0 %v184
  %1115 = vmatpush1.bf16.msra.mxu0 %v183
  %1116 = vmatprep.subr.bf16.mxu0 %v188
  %1117 = vmatpush1.bf16.msra.mxu0 %v187
  %1118 = vmatprep.subr.bf16.mxu0 %v192
  %1119 = vmatpush1.bf16.msra.mxu0 %v191
  %1120 = vmatprep.subr.bf16.mxu0 %v196
  %1121 = vmatpush1.bf16.msra.mxu0 %v195
  %1122 = vmatprep.subr.bf16.mxu0 %v200
  %1123 = vmatpush1.bf16.msra.mxu0 %v199
  %1124 = vmatprep.subr.bf16.mxu0 0
  %1125 = vmatpush1.bf16.msra.mxu0 0
  %1126 = vmatprep.subr.bf16.mxu0 0
  %1127 = vmatpush1.bf16.msra.mxu0 0
  %1128 = vmatprep.subr.bf16.mxu0 0
  %1129 = vmatpush1.bf16.msra.mxu0 0
  %1130 = vmatprep.subr.bf16.mxu0 0
  %1131 = vmatpush1.bf16.msra.mxu0 0
  %1132 = vmatprep.subr.bf16.mxu0 0
  %1133 = vmatpush1.bf16.msra.mxu0 0
  %1134 = vmatprep.subr.bf16.mxu0 0
  %1135 = vmatpush1.bf16.msra.mxu0 0
  %1136 = vmatprep.subr.bf16.mxu0 0
  %1137 = vmatpush1.bf16.msra.mxu0 0
  %1138 = vmatprep.subr.bf16.mxu0 0
  %1139 = vmatpush1.bf16.msra.mxu0 0
  %1140 = vmatprep.mubr.bf16.mxu0 0
  %1141 = vmatmul.mubr.bf16.gmra.mrb[0].mxu0 %v1107
  %v1142 = vpop.f32.mrb[0].mxu0
  %v1143 = vadd.f32 0.0, %v1142
  %v1144 = vpop.f32.mrb[0].mxu0
  %v1145 = vadd.f32 0.0, %v1144
  %v1146 = vpop.f32.mrb[0].mxu0
  %v1147 = vpop.f32.mrb[0].mxu0
  %1148 = vdwg.mxu0
  %1149 = vmatprep.subr.bf16.mxu0 %v174
  %1150 = vmatpush1.bf16.msra.mxu0 %v173
  %1151 = vmatprep.subr.bf16.mxu0 %v178
  %1152 = vmatpush1.bf16.msra.mxu0 %v177
  %1153 = vmatprep.subr.bf16.mxu0 %v182
  %1154 = vmatpush1.bf16.msra.mxu0 %v181
  %1155 = vmatprep.subr.bf16.mxu0 %v186
  %1156 = vmatpush1.bf16.msra.mxu0 %v185
  %1157 = vmatprep.subr.bf16.mxu0 %v190
  %1158 = vmatpush1.bf16.msra.mxu0 %v189
  %1159 = vmatprep.subr.bf16.mxu0 %v194
  %1160 = vmatpush1.bf16.msra.mxu0 %v193
  %1161 = vmatprep.subr.bf16.mxu0 %v198
  %1162 = vmatpush1.bf16.msra.mxu0 %v197
  %1163 = vmatprep.subr.bf16.mxu0 %v202
  %1164 = vmatpush1.bf16.msra.mxu0 %v201
  %1165 = vmatprep.subr.bf16.mxu0 0
  %1166 = vmatpush1.bf16.msra.mxu0 0
  %1167 = vmatprep.subr.bf16.mxu0 0
  %1168 = vmatpush1.bf16.msra.mxu0 0
  %1169 = vmatprep.subr.bf16.mxu0 0
  %1170 = vmatpush1.bf16.msra.mxu0 0
  %1171 = vmatprep.subr.bf16.mxu0 0
  %1172 = vmatpush1.bf16.msra.mxu0 0
  %1173 = vmatprep.subr.bf16.mxu0 0
  %1174 = vmatpush1.bf16.msra.mxu0 0
  %1175 = vmatprep.subr.bf16.mxu0 0
  %1176 = vmatpush1.bf16.msra.mxu0 0
  %1177 = vmatprep.subr.bf16.mxu0 0
  %1178 = vmatpush1.bf16.msra.mxu0 0
  %1179 = vmatprep.subr.bf16.mxu0 0
  %1180 = vmatpush1.bf16.msra.mxu0 0
  %1181 = vmatprep.mubr.bf16.mxu0 0
  %1182 = vmatmul.mubr.bf16.gmra.mrb[0].mxu0 %v1107
  %v1183 = vpop.f32.mrb[0].mxu0
  %v1184 = vadd.f32 0.0, %v1183
  %v1185 = vpop.f32.mrb[0].mxu0
  %v1186 = vadd.f32 0.0, %v1185
  %v1187 = vpop.f32.mrb[0].mxu0
  %v1188 = vpop.f32.mrb[0].mxu0
  %1189 = vdwg.mxu0
  %v1190 = vadd.f32 %v1103, %v1143
  %v1191 = vadd.f32 %v1104, %v1145
  %v1192 = vadd.f32 %v1105, %v1184
  %v1193 = vadd.f32 %v1106, %v1186
  %v1194 = vmul.f32 %v1190, 0.5
  %v1195 = vtanh.pop %v1194
  %v1196 = vmul.f32 %v1195, 0.5
  %v1197 = vadd.f32 %v1196, 0.5
  %v1198 = vmul.f32 %v1191, 0.5
  %v1199 = vtanh.pop %v1198
  %v1200 = vmul.f32 %v1199, 0.5
  %v1201 = vadd.f32 %v1200, 0.5
  %v1202 = vtanh.pop %v1192
  %v1203 = vmul.f32 %v1193, 0.5
  %v1204 = vtanh.pop %v1203
  %v1205 = vmul.f32 %v1204, 0.5
  %v1206 = vadd.f32 %v1205, 0.5
  %v1207 = vmul.f32 %v1201, %v1096
  %v1208 = vmul.f32 %v1197, %v1202
  %v1209 = vadd.f32 %v1207, %v1208
  %v1210 = vtanh.pop %v1209
  %v1211 = vmul.f32 %v1206, %v1210
  %s1212 = sadd.s32 %s67, 7
  %v1213 = vstv %s1212
  %vm1214 = vcmp.gt.s32.totalorder %v66, %v1213
  %v1215 = vsel %vm1214, 1, 0
  %1216 = vset.pattern.permute.xlu0 0
  %1217 = vperm.xlu0 %1216, %v1215
  %v1218 = vpop.permute.xlu0 %1217
  %vm1219 = vcmp.eq.s32.totalorder %v1218, 1
  %v1220 = vsel %vm1219, %v1211, %v1095
  %v1221 = vsel %vm1219, %v1209, %v1096
  %v1222 = vsel %vm1219, %v1211, 0.0
  %s1223 = scalar_lea.vmem %s5, 56
  %1224 = vst [vmem:[%s1223] sm:$0xff] %v1222
  %1225 = vst [vmem:[%s6] sm:$0xff] %v1220
  %1226 = vst [vmem:[%s7] sm:$0xff] %v1221
  // Predicated region
  $region26: #{seq2seq_forward.11} parent=0 // pred_check
    %p1227 = pneg %p24
  $region27: #{seq2seq_forward.11} parent=0 // pred_check_branch
    %1229 = sbr.rel (%p1227) target = $region29
  $region28: #{seq2seq_forward.11} parent=0 // pred_region
    %v1230 = vld [vmem:[%s6] sm:$0xff]
    %v1231 = vld [vmem:[%s7] sm:$0xff]
    %v1232 = vmul.f32 %v1230, %v1230
    %1233 = vadd.xlane.f32.xlu0 %v1232
    %v1234 = vpop.xlane.xlu0 %1233
    %v1235 = vmul.f32 %v1231, %v1231
    %1236 = vadd.xlane.f32.xlu0 %v1235
    %v1237 = vpop.xlane.xlu0 %1236
    %vm1238 = vcmp.gt.f32.partialorder %v1234, 0.0
    %v1239 = vsel %vm1238, %v1234, 1.0
    %v1240 = vrsqrt.pop %v1239
    %v1241 = vmul.f32 %v1230, %v1240
    %1242 = vst [vmem:[%s6] sm:$0xff] %v1241
    %vm1243 = vcmp.gt.f32.partialorder %v1237, 0.0
    %v1244 = vsel %vm1243, %v1237, 1.0
    %v1245 = vrsqrt.pop %v1244
    %v1246 = vmul.f32 %v1231, %v1245
    %1247 = vst [vmem:[%s7] sm:$0xff] %v1246
  $region29: #{seq2seq_forward.11} parent=0 // pred_fallthru
    _
  // Predicated region
  $region30: #{seq2seq_forward.11} parent=0 // pred_check
    _
  $region31: #{seq2seq_forward.11} parent=0 // pred_check_branch
    %1249 = sbr.rel (0) target = $region33
  $region32: #{seq2seq_forward.11} parent=0 // pred_region
    _
  $region33: #{seq2seq_forward.11} parent=0 // pred_fallthru
    _
  // Predicated region
  $region34: #{seq2seq_forward.11} parent=0 // pred_check
    _
  $region35: #{seq2seq_forward.11} parent=0 // pred_check_branch
    %1251 = sbr.rel (0) target = $region37
  $region36: #{seq2seq_forward.11} parent=0 // pred_region
    _
  $region37: #{seq2seq_forward.11} parent=0 // pred_fallthru
    _
  // Predicated region
  $region38: #{seq2seq_forward.11} parent=0 // pred_check
    _
  $region39: #{seq2seq_forward.11} parent=0 // pred_check_branch
    %1253 = sbr.rel (0) target = $region41
  $region40: #{seq2seq_forward.11} parent=0 // pred_region
    _
  $region41: #{seq2seq_forward.11} parent=0 // pred_fallthru
    _
  // Predicated region
  $region42: #{seq2seq_forward.11} parent=0 // pred_check
    _
  $region43: #{seq2seq_forward.11} parent=0 // pred_check_branch
    %1255 = sbr.rel (0) target = $region45
  $region44: #{seq2seq_forward.11} parent=0 // pred_region
    _
  $region45: #{seq2seq_forward.11} parent=0 // pred_fallthru
    _
  // Predicated region
  $region46: #{seq2seq_forward.11} parent=0 // pred_check
    _
  $region47: #{seq2seq_forward.11} parent=0 // pred_check_branch
    %1257 = sbr.rel (0) target = $region49
  $region48: #{seq2seq_forward.11} parent=0 // pred_region
    _
  $region49: #{seq2seq_forward.11} parent=0 // pred_fallthru
    _
  // Predicated region
  $region50: #{seq2seq_forward.11} parent=0 // pred_check
    _
  $region51: #{seq2seq_forward.11} parent=0 // pred_check_branch
    %1259 = sbr.rel (0) target = $region53
  $region52: #{seq2seq_forward.11} parent=0 // pred_region
    _
  $region53: #{seq2seq_forward.11} parent=0 // pred_fallthru
    _

// kernel: seq2seq_forward.13
$region0: #{seq2seq_forward.13}
  #allocation0 [shape = 'u32[]', space=smem, size = 0x4, offset = 0x4, fixed_abs, tag = 'smem constant byte address 0x4 - core index']
  #allocation1 [shape = 'u32[144,128]{1,0:T(1,128)}', space=vmem, size = 0x12000, scoped, tag = 'internal scratch']
  %s0 = inlined_call_operand.vmem [shape: bf16[16,128], index: 0, kind: input, shape index: {}]
  %s1 = inlined_call_operand.vmem [shape: bf16[128,512], index: 1, kind: input, shape index: {}]
  %s2 = inlined_call_operand.vmem [shape: f32[1,512], index: 2, kind: input, shape index: {}]
  %s3 = inlined_call_operand.vmem [shape: f32[16,512], index: 3, kind: output, shape index: {}]
  %s4 = sld [smem:[#allocation0]]
  $region22: #{seq2seq_forward.13} parent=0
    _
  %s6 = ssub.s32 1, %s4
  %s7 = scalar_select 0, %s6, %s4
  // Predicated region
  $region2: #{seq2seq_forward.13} parent=0 // pred_check
    _
  $region3: #{seq2seq_forward.13} parent=0 // pred_check_branch
    %9 = sbr.rel (0) target = $region5
  $region4: #{seq2seq_forward.13} parent=0 // pred_region
    _
  $region5: #{seq2seq_forward.13} parent=0 // pred_fallthru
    _
  // Predicated region
  $region6: #{seq2seq_forward.13} parent=0 // pred_check
    _
  $region7: #{seq2seq_forward.13} parent=0 // pred_check_branch
    %11 = sbr.rel (0) target = $region9
  $region8: #{seq2seq_forward.13} parent=0 // pred_region
    _
  $region9: #{seq2seq_forward.13} parent=0 // pred_fallthru
    _
  // Predicated region
  $region10: #{seq2seq_forward.13} parent=0 // pred_check
    _
  $region11: #{seq2seq_forward.13} parent=0 // pred_check_branch
    %13 = sbr.rel (0) target = $region13
  $region12: #{seq2seq_forward.13} parent=0 // pred_region
    _
  $region13: #{seq2seq_forward.13} parent=0 // pred_fallthru
    _
  %v15 = vld [vmem:[%s0] sm:$0xf]
  %v16 = vld [vmem:[%s0 + $0x4] sm:$0xf]
  %v17 = vld [vmem:[%s1] sm:$0xff]
  %v18 = vld [vmem:[%s1 + $0x8] sm:$0xff]
  %v19 = vld [vmem:[%s1 + $0x10] sm:$0xff]
  %v20 = vld [vmem:[%s1 + $0x18] sm:$0xff]
  %v21 = vld [vmem:[%s1 + $0x20] sm:$0xff]
  %v22 = vld [vmem:[%s1 + $0x28] sm:$0xff]
  %v23 = vld [vmem:[%s1 + $0x30] sm:$0xff]
  %v24 = vld [vmem:[%s1 + $0x38] sm:$0xff]
  %v25 = vld [vmem:[%s1 + $0x40] sm:$0xff]
  %v26 = vld [vmem:[%s1 + $0x48] sm:$0xff]
  %v27 = vld [vmem:[%s1 + $0x50] sm:$0xff]
  %v28 = vld [vmem:[%s1 + $0x58] sm:$0xff]
  %v29 = vld [vmem:[%s1 + $0x60] sm:$0xff]
  %v30 = vld [vmem:[%s1 + $0x68] sm:$0xff]
  %v31 = vld [vmem:[%s1 + $0x70] sm:$0xff]
  %v32 = vld [vmem:[%s1 + $0x78] sm:$0xff]
  %v33 = vld [vmem:[%s1 + $0x80] sm:$0xff]
  %v34 = vld [vmem:[%s1 + $0x88] sm:$0xff]
  %v35 = vld [vmem:[%s1 + $0x90] sm:$0xff]
  %v36 = vld [vmem:[%s1 + $0x98] sm:$0xff]
  %v37 = vld [vmem:[%s1 + $0xa0] sm:$0xff]
  %v38 = vld [vmem:[%s1 + $0xa8] sm:$0xff]
  %v39 = vld [vmem:[%s1 + $0xb0] sm:$0xff]
  %v40 = vld [vmem:[%s1 + $0xb8] sm:$0xff]
  %v41 = vld [vmem:[%s1 + $0xc0] sm:$0xff]
  %v42 = vld [vmem:[%s1 + $0xc8] sm:$0xff]
  %v43 = vld [vmem:[%s1 + $0xd0] sm:$0xff]
  %v44 = vld [vmem:[%s1 + $0xd8] sm:$0xff]
  %v45 = vld [vmem:[%s1 + $0xe0] sm:$0xff]
  %v46 = vld [vmem:[%s1 + $0xe8] sm:$0xff]
  %v47 = vld [vmem:[%s1 + $0xf0] sm:$0xff]
  %v48 = vld [vmem:[%s1 + $0xf8] sm:$0xff]
  %v49 = vld [vmem:[%s2] sm:$0xf]
  %v51 = vlaneseq
  %v52 = vshrl.u32 %v51, 7
  %v53 = vsub.s32 0, %v52
  %v54 = vrot.slane %v49, %v53
  %v55 = vlaneseq
  %v56 = vshrl.u32 %v55, 7
  %v57 = vsub.s32 1, %v56
  %v58 = vrot.slane %v49, %v57
  %v59 = vlaneseq
  %v60 = vshrl.u32 %v59, 7
  %v61 = vsub.s32 2, %v60
  %v62 = vrot.slane %v49, %v61
  %v63 = vlaneseq
  %v64 = vshrl.u32 %v63, 7
  %v65 = vsub.s32 3, %v64
  %v66 = vrot.slane %v49, %v65
  %v73 = vunpack.c.l.b16 %v15
  %v74 = vunpack.c.l.b16 %v16
  %v75 = vpack.c.b16 %v74, %v73
  %v109 = vunpack.c.l.b16 %v17
  %v110 = vunpack.c.h.b16 %v17
  %v111 = vunpack.c.l.b16 %v18
  %v112 = vunpack.c.h.b16 %v18
  %v113 = vunpack.c.l.b16 %v19
  %v114 = vunpack.c.h.b16 %v19
  %v115 = vunpack.c.l.b16 %v20
  %v116 = vunpack.c.h.b16 %v20
  %v117 = vunpack.c.l.b16 %v21
  %v118 = vunpack.c.h.b16 %v21
  %v119 = vunpack.c.l.b16 %v22
  %v120 = vunpack.c.h.b16 %v22
  %v121 = vunpack.c.l.b16 %v23
  %v122 = vunpack.c.h.b16 %v23
  %v123 = vunpack.c.l.b16 %v24
  %v124 = vunpack.c.h.b16 %v24
  %v125 = vunpack.c.l.b16 %v25
  %v126 = vunpack.c.h.b16 %v25
  %v127 = vunpack.c.l.b16 %v26
  %v128 = vunpack.c.h.b16 %v26
  %v129 = vunpack.c.l.b16 %v27
  %v130 = vunpack.c.h.b16 %v27
  %v131 = vunpack.c.l.b16 %v28
  %v132 = vunpack.c.h.b16 %v28
  %v133 = vunpack.c.l.b16 %v29
  %v134 = vunpack.c.h.b16 %v29
  %v135 = vunpack.c.l.b16 %v30
  %v136 = vunpack.c.h.b16 %v30
  %v137 = vunpack.c.l.b16 %v31
  %v138 = vunpack.c.h.b16 %v31
  %v139 = vunpack.c.l.b16 %v32
  %v140 = vunpack.c.h.b16 %v32
  %v141 = vunpack.c.l.b16 %v33
  %v142 = vunpack.c.h.b16 %v33
  %v143 = vunpack.c.l.b16 %v34
  %v144 = vunpack.c.h.b16 %v34
  %v145 = vunpack.c.l.b16 %v35
  %v146 = vunpack.c.h.b16 %v35
  %v147 = vunpack.c.l.b16 %v36
  %v148 = vunpack.c.h.b16 %v36
  %v149 = vunpack.c.l.b16 %v37
  %v150 = vunpack.c.h.b16 %v37
  %v151 = vunpack.c.l.b16 %v38
  %v152 = vunpack.c.h.b16 %v38
  %v153 = vunpack.c.l.b16 %v39
  %v154 = vunpack.c.h.b16 %v39
  %v155 = vunpack.c.l.b16 %v40
  %v156 = vunpack.c.h.b16 %v40
  %v157 = vunpack.c.l.b16 %v41
  %v158 = vunpack.c.h.b16 %v41
  %v159 = vunpack.c.l.b16 %v42
  %v160 = vunpack.c.h.b16 %v42
  %v161 = vunpack.c.l.b16 %v43
  %v162 = vunpack.c.h.b16 %v43
  %v163 = vunpack.c.l.b16 %v44
  %v164 = vunpack.c.h.b16 %v44
  %v165 = vunpack.c.l.b16 %v45
  %v166 = vunpack.c.h.b16 %v45
  %v167 = vunpack.c.l.b16 %v46
  %v168 = vunpack.c.h.b16 %v46
  %v169 = vunpack.c.l.b16 %v47
  %v170 = vunpack.c.h.b16 %v47
  %v171 = vunpack.c.l.b16 %v48
  %v172 = vunpack.c.h.b16 %v48
  %v173 = vpack.c.b16 %v113, %v109
  %v174 = vpack.c.b16 %v114, %v110
  %v175 = vpack.c.b16 %v115, %v111
  %v176 = vpack.c.b16 %v116, %v112
  %v177 = vpack.c.b16 %v121, %v117
  %v178 = vpack.c.b16 %v122, %v118
  %v179 = vpack.c.b16 %v123, %v119
  %v180 = vpack.c.b16 %v124, %v120
  %v181 = vpack.c.b16 %v129, %v125
  %v182 = vpack.c.b16 %v130, %v126
  %v183 = vpack.c.b16 %v131, %v127
  %v184 = vpack.c.b16 %v132, %v128
  %v185 = vpack.c.b16 %v137, %v133
  %v186 = vpack.c.b16 %v138, %v134
  %v187 = vpack.c.b16 %v139, %v135
  %v188 = vpack.c.b16 %v140, %v136
  %v189 = vpack.c.b16 %v145, %v141
  %v190 = vpack.c.b16 %v146, %v142
  %v191 = vpack.c.b16 %v147, %v143
  %v192 = vpack.c.b16 %v148, %v144
  %v193 = vpack.c.b16 %v153, %v149
  %v194 = vpack.c.b16 %v154, %v150
  %v195 = vpack.c.b16 %v155, %v151
  %v196 = vpack.c.b16 %v156, %v152
  %v197 = vpack.c.b16 %v161, %v157
  %v198 = vpack.c.b16 %v162, %v158
  %v199 = vpack.c.b16 %v163, %v159
  %v200 = vpack.c.b16 %v164, %v160
  %v201 = vpack.c.b16 %v169, %v165
  %v202 = vpack.c.b16 %v170, %v166
  %v203 = vpack.c.b16 %v171, %v167
  %v204 = vpack.c.b16 %v172, %v168
  %237 = vmatprep.subr.bf16.mxu0 %v174
  %238 = vmatpush1.bf16.msra.mxu0 %v173
  %239 = vmatprep.subr.bf16.mxu0 %v178
  %240 = vmatpush1.bf16.msra.mxu0 %v177
  %241 = vmatprep.subr.bf16.mxu0 %v182
  %242 = vmatpush1.bf16.msra.mxu0 %v181
  %243 = vmatprep.subr.bf16.mxu0 %v186
  %244 = vmatpush1.bf16.msra.mxu0 %v185
  %245 = vmatprep.subr.bf16.mxu0 %v190
  %246 = vmatpush1.bf16.msra.mxu0 %v189
  %247 = vmatprep.subr.bf16.mxu0 %v194
  %248 = vmatpush1.bf16.msra.mxu0 %v193
  %249 = vmatprep.subr.bf16.mxu0 %v198
  %250 = vmatpush1.bf16.msra.mxu0 %v197
  %251 = vmatprep.subr.bf16.mxu0 %v202
  %252 = vmatpush1.bf16.msra.mxu0 %v201
  %253 = vmatprep.subr.bf16.mxu0 0
  %254 = vmatpush1.bf16.msra.mxu0 0
  %255 = vmatprep.subr.bf16.mxu0 0
  %256 = vmatpush1.bf16.msra.mxu0 0
  %257 = vmatprep.subr.bf16.mxu0 0
  %258 = vmatpush1.bf16.msra.mxu0 0
  %259 = vmatprep.subr.bf16.mxu0 0
  %260 = vmatpush1.bf16.msra.mxu0 0
  %261 = vmatprep.subr.bf16.mxu0 0
  %262 = vmatpush1.bf16.msra.mxu0 0
  %263 = vmatprep.subr.bf16.mxu0 0
  %264 = vmatpush1.bf16.msra.mxu0 0
  %265 = vmatprep.subr.bf16.mxu0 0
  %266 = vmatpush1.bf16.msra.mxu0 0
  %267 = vmatprep.subr.bf16.mxu0 0
  %268 = vmatpush1.bf16.msra.mxu0 0
  %269 = vmatprep.mubr.bf16.mxu0 0
  %270 = vmatmul.mubr.bf16.gmra.mrb[0].mxu0 %v75
  %v271 = vpop.f32.mrb[0].mxu0
  %v272 = vadd.f32 %v54, %v271
  %v273 = vpop.f32.mrb[0].mxu0
  %v274 = vadd.f32 %v58, %v273
  %v275 = vpop.f32.mrb[0].mxu0
  %v276 = vadd.f32 %v54, %v275
  %v277 = vpop.f32.mrb[0].mxu0
  %v278 = vadd.f32 %v58, %v277
  %279 = vdwg.mxu0
  %280 = vmatprep.subr.bf16.mxu0 %v176
  %281 = vmatpush1.bf16.msra.mxu0 %v175
  %282 = vmatprep.subr.bf16.mxu0 %v180
  %283 = vmatpush1.bf16.msra.mxu0 %v179
  %284 = vmatprep.subr.bf16.mxu0 %v184
  %285 = vmatpush1.bf16.msra.mxu0 %v183
  %286 = vmatprep.subr.bf16.mxu0 %v188
  %287 = vmatpush1.bf16.msra.mxu0 %v187
  %288 = vmatprep.subr.bf16.mxu0 %v192
  %289 = vmatpush1.bf16.msra.mxu0 %v191
  %290 = vmatprep.subr.bf16.mxu0 %v196
  %291 = vmatpush1.bf16.msra.mxu0 %v195
  %292 = vmatprep.subr.bf16.mxu0 %v200
  %293 = vmatpush1.bf16.msra.mxu0 %v199
  %294 = vmatprep.subr.bf16.mxu0 %v204
  %295 = vmatpush1.bf16.msra.mxu0 %v203
  %296 = vmatprep.subr.bf16.mxu0 0
  %297 = vmatpush1.bf16.msra.mxu0 0
  %298 = vmatprep.subr.bf16.mxu0 0
  %299 = vmatpush1.bf16.msra.mxu0 0
  %300 = vmatprep.subr.bf16.mxu0 0
  %301 = vmatpush1.bf16.msra.mxu0 0
  %302 = vmatprep.subr.bf16.mxu0 0
  %303 = vmatpush1.bf16.msra.mxu0 0
  %304 = vmatprep.subr.bf16.mxu0 0
  %305 = vmatpush1.bf16.msra.mxu0 0
  %306 = vmatprep.subr.bf16.mxu0 0
  %307 = vmatpush1.bf16.msra.mxu0 0
  %308 = vmatprep.subr.bf16.mxu0 0
  %309 = vmatpush1.bf16.msra.mxu0 0
  %310 = vmatprep.subr.bf16.mxu0 0
  %311 = vmatpush1.bf16.msra.mxu0 0
  %312 = vmatprep.mubr.bf16.mxu0 0
  %313 = vmatmul.mubr.bf16.gmra.mrb[0].mxu0 %v75
  %v314 = vpop.f32.mrb[0].mxu0
  %v315 = vadd.f32 %v62, %v314
  %v316 = vpop.f32.mrb[0].mxu0
  %v317 = vadd.f32 %v66, %v316
  %v318 = vpop.f32.mrb[0].mxu0
  %v319 = vadd.f32 %v62, %v318
  %v320 = vpop.f32.mrb[0].mxu0
  %v321 = vadd.f32 %v66, %v320
  %322 = vdwg.mxu0
  %323 = vst [vmem:[%s3] sm:$0xff] %v272
  %324 = vst [vmem:[%s3 + $0x8] sm:$0xff] %v274
  %325 = vst [vmem:[%s3 + $0x10] sm:$0xff] %v315
  %326 = vst [vmem:[%s3 + $0x18] sm:$0xff] %v317
  %327 = vst [vmem:[%s3 + $0x20] sm:$0xff] %v276
  %328 = vst [vmem:[%s3 + $0x28] sm:$0xff] %v278
  %329 = vst [vmem:[%s3 + $0x30] sm:$0xff] %v319
  %330 = vst [vmem:[%s3 + $0x38] sm:$0xff] %v321
  // Predicated region
  $region14: #{seq2seq_forward.13} parent=0 // pred_check
    _
  $region15: #{seq2seq_forward.13} parent=0 // pred_check_branch
    %332 = sbr.rel (0) target = $region17
  $region16: #{seq2seq_forward.13} parent=0 // pred_region
    _
  $region17: #{seq2seq_forward.13} parent=0 // pred_fallthru
    _
  // Predicated region
  $region18: #{seq2seq_forward.13} parent=0 // pred_check
    _
  $region19: #{seq2seq_forward.13} parent=0 // pred_check_branch
    %334 = sbr.rel (0) target = $region21
  $region20: #{seq2seq_forward.13} parent=0 // pred_region
    _
  $region21: #{seq2seq_forward.13} parent=0 // pred_fallthru
    _

// kernel: seq2seq_forward.15
$region0: #{seq2seq_forward.15}
  #allocation0 [shape = 'u32[]', space=smem, size = 0x4, offset = 0x4, fixed_abs, tag = 'smem constant byte address 0x4 - core index']
  #allocation1 [shape = 'u32[144,128]{1,0:T(1,128)}', space=vmem, size = 0x12000, scoped, tag = 'internal scratch']
  %s0 = inlined_call_operand.vmem [shape: bf16[16,128], index: 0, kind: input, shape index: {}]
  %s1 = inlined_call_operand.vmem [shape: bf16[128,128], index: 1, kind: input, shape index: {}]
  %s2 = inlined_call_operand.vmem [shape: f32[1,128], index: 2, kind: input, shape index: {}]
  %s3 = inlined_call_operand.vmem [shape: f32[16,128], index: 3, kind: output, shape index: {}]
  %s4 = sld [smem:[#allocation0]]
  $region22: #{seq2seq_forward.15} parent=0
    _
  %s6 = ssub.s32 1, %s4
  %s7 = scalar_select 0, %s6, %s4
  // Predicated region
  $region2: #{seq2seq_forward.15} parent=0 // pred_check
    _
  $region3: #{seq2seq_forward.15} parent=0 // pred_check_branch
    %9 = sbr.rel (0) target = $region5
  $region4: #{seq2seq_forward.15} parent=0 // pred_region
    _
  $region5: #{seq2seq_forward.15} parent=0 // pred_fallthru
    _
  // Predicated region
  $region6: #{seq2seq_forward.15} parent=0 // pred_check
    _
  $region7: #{seq2seq_forward.15} parent=0 // pred_check_branch
    %11 = sbr.rel (0) target = $region9
  $region8: #{seq2seq_forward.15} parent=0 // pred_region
    _
  $region9: #{seq2seq_forward.15} parent=0 // pred_fallthru
    _
  // Predicated region
  $region10: #{seq2seq_forward.15} parent=0 // pred_check
    _
  $region11: #{seq2seq_forward.15} parent=0 // pred_check_branch
    %13 = sbr.rel (0) target = $region13
  $region12: #{seq2seq_forward.15} parent=0 // pred_region
    _
  $region13: #{seq2seq_forward.15} parent=0 // pred_fallthru
    _
  %v15 = vld [vmem:[%s0] sm:$0xf]
  %v16 = vld [vmem:[%s0 + $0x4] sm:$0xf]
  %v17 = vld [vmem:[%s1] sm:$0xf]
  %v18 = vld [vmem:[%s1 + $0x4] sm:$0xf]
  %v19 = vld [vmem:[%s1 + $0x8] sm:$0xf]
  %v20 = vld [vmem:[%s1 + $0xc] sm:$0xf]
  %v21 = vld [vmem:[%s1 + $0x10] sm:$0xf]
  %v22 = vld [vmem:[%s1 + $0x14] sm:$0xf]
  %v23 = vld [vmem:[%s1 + $0x18] sm:$0xf]
  %v24 = vld [vmem:[%s1 + $0x1c] sm:$0xf]
  %v25 = vld [vmem:[%s1 + $0x20] sm:$0xf]
  %v26 = vld [vmem:[%s1 + $0x24] sm:$0xf]
  %v27 = vld [vmem:[%s1 + $0x28] sm:$0xf]
  %v28 = vld [vmem:[%s1 + $0x2c] sm:$0xf]
  %v29 = vld [vmem:[%s1 + $0x30] sm:$0xf]
  %v30 = vld [vmem:[%s1 + $0x34] sm:$0xf]
  %v31 = vld [vmem:[%s1 + $0x38] sm:$0xf]
  %v32 = vld [vmem:[%s1 + $0x3c] sm:$0xf]
  %v33 = vld [vmem:[%s2] sm:$0x1]
  %v35 = vlaneseq
  %v36 = vshrl.u32 %v35, 7
  %v37 = vsub.s32 0, %v36
  %v38 = vrot.slane %v33, %v37
  %v42 = vunpack.c.l.b16 %v15
  %v43 = vunpack.c.l.b16 %v16
  %v44 = vpack.c.b16 %v43, %v42
  %v62 = vunpack.c.l.b16 %v17
  %v63 = vunpack.c.l.b16 %v18
  %v64 = vunpack.c.l.b16 %v19
  %v65 = vunpack.c.l.b16 %v20
  %v66 = vunpack.c.l.b16 %v21
  %v67 = vunpack.c.l.b16 %v22
  %v68 = vunpack.c.l.b16 %v23
  %v69 = vunpack.c.l.b16 %v24
  %v70 = vunpack.c.l.b16 %v25
  %v71 = vunpack.c.l.b16 %v26
  %v72 = vunpack.c.l.b16 %v27
  %v73 = vunpack.c.l.b16 %v28
  %v74 = vunpack.c.l.b16 %v29
  %v75 = vunpack.c.l.b16 %v30
  %v76 = vunpack.c.l.b16 %v31
  %v77 = vunpack.c.l.b16 %v32
  %v78 = vpack.c.b16 %v63, %v62
  %v79 = vpack.c.b16 %v65, %v64
  %v80 = vpack.c.b16 %v67, %v66
  %v81 = vpack.c.b16 %v69, %v68
  %v82 = vpack.c.b16 %v71, %v70
  %v83 = vpack.c.b16 %v73, %v72
  %v84 = vpack.c.b16 %v75, %v74
  %v85 = vpack.c.b16 %v77, %v76
  %94 = vmatprep.subr.bf16.mxu0 0
  %95 = vmatpush1.bf16.msra.mxu0 %v78
  %96 = vmatprep.subr.bf16.mxu0 0
  %97 = vmatpush1.bf16.msra.mxu0 %v79
  %98 = vmatprep.subr.bf16.mxu0 0
  %99 = vmatpush1.bf16.msra.mxu0 %v80
  %100 = vmatprep.subr.bf16.mxu0 0
  %101 = vmatpush1.bf16.msra.mxu0 %v81
  %102 = vmatprep.subr.bf16.mxu0 0
  %103 = vmatpush1.bf16.msra.mxu0 %v82
  %104 = vmatprep.subr.bf16.mxu0 0
  %105 = vmatpush1.bf16.msra.mxu0 %v83
  %106 = vmatprep.subr.bf16.mxu0 0
  %107 = vmatpush1.bf16.msra.mxu0 %v84
  %108 = vmatprep.subr.bf16.mxu0 0
  %109 = vmatpush1.bf16.msra.mxu0 %v85
  %110 = vmatprep.subr.bf16.mxu0 0
  %111 = vmatpush1.bf16.msra.mxu0 0
  %112 = vmatprep.subr.bf16.mxu0 0
  %113 = vmatpush1.bf16.msra.mxu0 0
  %114 = vmatprep.subr.bf16.mxu0 0
  %115 = vmatpush1.bf16.msra.mxu0 0
  %116 = vmatprep.subr.bf16.mxu0 0
  %117 = vmatpush1.bf16.msra.mxu0 0
  %118 = vmatprep.subr.bf16.mxu0 0
  %119 = vmatpush1.bf16.msra.mxu0 0
  %120 = vmatprep.subr.bf16.mxu0 0
  %121 = vmatpush1.bf16.msra.mxu0 0
  %122 = vmatprep.subr.bf16.mxu0 0
  %123 = vmatpush1.bf16.msra.mxu0 0
  %124 = vmatprep.subr.bf16.mxu0 0
  %125 = vmatpush1.bf16.msra.mxu0 0
  %126 = vmatprep.mubr.bf16.mxu0 0
  %127 = vmatmul.mubr.bf16.gmra.mrb[0].mxu0 %v44
  %v128 = vpop.f32.mrb[0].mxu0
  %v129 = vadd.f32 %v38, %v128
  %v130 = vpop.f32.mrb[0].mxu0
  %v131 = vpop.f32.mrb[0].mxu0
  %v132 = vadd.f32 %v38, %v131
  %v133 = vpop.f32.mrb[0].mxu0
  %134 = vdwg.mxu0
  %135 = vst [vmem:[%s3] sm:$0xff] %v129
  %136 = vst [vmem:[%s3 + $0x8] sm:$0xff] %v132
  // Predicated region
  $region14: #{seq2seq_forward.15} parent=0 // pred_check
    _
  $region15: #{seq2seq_forward.15} parent=0 // pred_check_branch
    %138 = sbr.rel (0) target = $region17
  $region16: #{seq2seq_forward.15} parent=0 // pred_region
    _
  $region17: #{seq2seq_forward.15} parent=0 // pred_fallthru
    _
  // Predicated region
  $region18: #{seq2seq_forward.15} parent=0 // pred_check
    _
  $region19: #{seq2seq_forward.15} parent=0 // pred_check_branch
    %140 = sbr.rel (0) target = $region21
  $region20: #{seq2seq_forward.15} parent=0 // pred_region
    _
  $region21: #{seq2seq_forward.15} parent=0 // pred_fallthru
    _

// kernel: seq2seq_forward.14
$region0: #{seq2seq_forward.14}
  #allocation0 [shape = 'u32[]', space=smem, size = 0x4, offset = 0x4, fixed_abs, tag = 'smem constant byte address 0x4 - core index']
  #allocation1 [shape = 'u32[144,128]{1,0:T(1,128)}', space=vmem, size = 0x12000, scoped, tag = 'internal scratch']
  %s0 = inlined_call_operand.vmem [shape: s32[8,1], index: 0, kind: input, shape index: {}]
  %s1 = inlined_call_operand.vmem [shape: bf16[8,8,512], index: 1, kind: input, shape index: {}]
  %s2 = inlined_call_operand.vmem [shape: f32[8,512], index: 2, kind: input, shape index: {}]
  %s3 = inlined_call_operand.vmem [shape: bf16[128,512], index: 3, kind: input, shape index: {}]
  %s4 = inlined_call_operand.vmem [shape: f32[8,128], index: 4, kind: input, shape index: {}]
  %s5 = inlined_call_operand.vmem [shape: f32[8,128], index: 5, kind: input, shape index: {}]
  %s6 = inlined_call_operand.vmem [shape: f32[8,8,128], index: 6, kind: output, shape index: {0}]
  %s7 = inlined_call_operand.vmem [shape: f32[8,128], index: 7, kind: output, shape index: {1}]
  %s8 = inlined_call_operand.vmem [shape: f32[8,128], index: 8, kind: output, shape index: {2}]
  %9 = xla_tuple %s6, %s7, %s8
  %s10 = sld [smem:[#allocation0]]
  $region54: #{seq2seq_forward.14} parent=0
    _
  %s12 = ssub.s32 1, %s10
  %s13 = scalar_select 0, %s12, %s10
  // Predicated region
  $region2: #{seq2seq_forward.14} parent=0 // pred_check
    _
  $region3: #{seq2seq_forward.14} parent=0 // pred_check_branch
    %15 = sbr.rel (0) target = $region5
  $region4: #{seq2seq_forward.14} parent=0 // pred_region
    _
  $region5: #{seq2seq_forward.14} parent=0 // pred_fallthru
    _
  // Predicated region
  $region6: #{seq2seq_forward.14} parent=0 // pred_check
    _
  $region7: #{seq2seq_forward.14} parent=0 // pred_check_branch
    %17 = sbr.rel (0) target = $region9
  $region8: #{seq2seq_forward.14} parent=0 // pred_region
    _
  $region9: #{seq2seq_forward.14} parent=0 // pred_fallthru
    _
  // Predicated region
  $region10: #{seq2seq_forward.14} parent=0 // pred_check
    _
  $region11: #{seq2seq_forward.14} parent=0 // pred_check_branch
    %19 = sbr.rel (0) target = $region13
  $region12: #{seq2seq_forward.14} parent=0 // pred_region
    _
  $region13: #{seq2seq_forward.14} parent=0 // pred_fallthru
    _
  // Predicated region
  $region14: #{seq2seq_forward.14} parent=0 // pred_check
    _
  $region15: #{seq2seq_forward.14} parent=0 // pred_check_branch
    %21 = sbr.rel (0) target = $region17
  $region16: #{seq2seq_forward.14} parent=0 // pred_region
    _
  $region17: #{seq2seq_forward.14} parent=0 // pred_fallthru
    _
  // Predicated region
  $region18: #{seq2seq_forward.14} parent=0 // pred_check
    _
  $region19: #{seq2seq_forward.14} parent=0 // pred_check_branch
    %23 = sbr.rel (0) target = $region21
  $region20: #{seq2seq_forward.14} parent=0 // pred_region
    _
  $region21: #{seq2seq_forward.14} parent=0 // pred_fallthru
    _
  // Predicated region
  $region22: #{seq2seq_forward.14} parent=0 // pred_check
    _
  $region23: #{seq2seq_forward.14} parent=0 // pred_check_branch
    %25 = sbr.rel (0) target = $region25
  $region24: #{seq2seq_forward.14} parent=0 // pred_region
    _
  $region25: #{seq2seq_forward.14} parent=0 // pred_fallthru
    _
  %p27 = scmp.eq.s32.totalorder 0, 0
  // Predicated region
  $region26: #{seq2seq_forward.14} parent=0 // pred_check
    %p28 = pneg %p27
  $region27: #{seq2seq_forward.14} parent=0 // pred_check_branch
    %30 = sbr.rel (%p28) target = $region29
  $region28: #{seq2seq_forward.14} parent=0 // pred_region
    %v31 = vld [vmem:[%s4] sm:$0xff]
    %32 = vst [vmem:[%s7] sm:$0xff] %v31
    %v33 = vld [vmem:[%s5] sm:$0xff]
    %34 = vst [vmem:[%s8] sm:$0xff] %v33
  $region29: #{seq2seq_forward.14} parent=0 // pred_fallthru
    _
  %v35 = vld [vmem:[%s7] sm:$0xff]
  %v36 = vld [vmem:[%s8] sm:$0xff]
  %v37 = vld [vmem:[%s3] sm:$0xff]
  %v38 = vld [vmem:[%s3 + $0x8] sm:$0xff]
  %v39 = vld [vmem:[%s3 + $0x10] sm:$0xff]
  %v40 = vld [vmem:[%s3 + $0x18] sm:$0xff]
  %v41 = vld [vmem:[%s3 + $0x20] sm:$0xff]
  %v42 = vld [vmem:[%s3 + $0x28] sm:$0xff]
  %v43 = vld [vmem:[%s3 + $0x30] sm:$0xff]
  %v44 = vld [vmem:[%s3 + $0x38] sm:$0xff]
  %v45 = vld [vmem:[%s3 + $0x40] sm:$0xff]
  %v46 = vld [vmem:[%s3 + $0x48] sm:$0xff]
  %v47 = vld [vmem:[%s3 + $0x50] sm:$0xff]
  %v48 = vld [vmem:[%s3 + $0x58] sm:$0xff]
  %v49 = vld [vmem:[%s3 + $0x60] sm:$0xff]
  %v50 = vld [vmem:[%s3 + $0x68] sm:$0xff]
  %v51 = vld [vmem:[%s3 + $0x70] sm:$0xff]
  %v52 = vld [vmem:[%s3 + $0x78] sm:$0xff]
  %v53 = vld [vmem:[%s3 + $0x80] sm:$0xff]
  %v54 = vld [vmem:[%s3 + $0x88] sm:$0xff]
  %v55 = vld [vmem:[%s3 + $0x90] sm:$0xff]
  %v56 = vld [vmem:[%s3 + $0x98] sm:$0xff]
  %v57 = vld [vmem:[%s3 + $0xa0] sm:$0xff]
  %v58 = vld [vmem:[%s3 + $0xa8] sm:$0xff]
  %v59 = vld [vmem:[%s3 + $0xb0] sm:$0xff]
  %v60 = vld [vmem:[%s3 + $0xb8] sm:$0xff]
  %v61 = vld [vmem:[%s3 + $0xc0] sm:$0xff]
  %v62 = vld [vmem:[%s3 + $0xc8] sm:$0xff]
  %v63 = vld [vmem:[%s3 + $0xd0] sm:$0xff]
  %v64 = vld [vmem:[%s3 + $0xd8] sm:$0xff]
  %v65 = vld [vmem:[%s3 + $0xe0] sm:$0xff]
  %v66 = vld [vmem:[%s3 + $0xe8] sm:$0xff]
  %v67 = vld [vmem:[%s3 + $0xf0] sm:$0xff]
  %v68 = vld [vmem:[%s3 + $0xf8] sm:$0xff]
  %v69 = vld [vmem:[%s0] sm:$0xff]
  %v70 = vld [vmem:[%s2] sm:$0xff]
  %v71 = vld [vmem:[%s2 + $0x8] sm:$0xff]
  %v72 = vld [vmem:[%s2 + $0x10] sm:$0xff]
  %v73 = vld [vmem:[%s2 + $0x18] sm:$0xff]
  %s74 = smul.u32 0, 8
  %v75 = vld [vmem:[%s1] sm:$0xff]
  %v76 = vld [vmem:[%s1 + $0x8] sm:$0xff]
  %v77 = vunpack.c.l.bf16 %v75
  %v78 = vunpack.c.h.bf16 %v75
  %v79 = vunpack.c.l.bf16 %v76
  %v80 = vunpack.c.h.bf16 %v76
  %v81 = vadd.f32 %v77, %v70
  %v82 = vadd.f32 %v78, %v71
  %v83 = vadd.f32 %v79, %v72
  %v84 = vadd.f32 %v80, %v73
  %v85 = vpack.c.bf16 %v35, %v35
  %v118 = vunpack.c.l.b16 %v37
  %v119 = vunpack.c.h.b16 %v37
  %v120 = vunpack.c.l.b16 %v38
  %v121 = vunpack.c.h.b16 %v38
  %v122 = vunpack.c.l.b16 %v39
  %v123 = vunpack.c.h.b16 %v39
  %v124 = vunpack.c.l.b16 %v40
  %v125 = vunpack.c.h.b16 %v40
  %v126 = vunpack.c.l.b16 %v41
  %v127 = vunpack.c.h.b16 %v41
  %v128 = vunpack.c.l.b16 %v42
  %v129 = vunpack.c.h.b16 %v42
  %v130 = vunpack.c.l.b16 %v43
  %v131 = vunpack.c.h.b16 %v43
  %v132 = vunpack.c.l.b16 %v44
  %v133 = vunpack.c.h.b16 %v44
  %v134 = vunpack.c.l.b16 %v45
  %v135 = vunpack.c.h.b16 %v45
  %v136 = vunpack.c.l.b16 %v46
  %v137 = vunpack.c.h.b16 %v46
  %v138 = vunpack.c.l.b16 %v47
  %v139 = vunpack.c.h.b16 %v47
  %v140 = vunpack.c.l.b16 %v48
  %v141 = vunpack.c.h.b16 %v48
  %v142 = vunpack.c.l.b16 %v49
  %v143 = vunpack.c.h.b16 %v49
  %v144 = vunpack.c.l.b16 %v50
  %v145 = vunpack.c.h.b16 %v50
  %v146 = vunpack.c.l.b16 %v51
  %v147 = vunpack.c.h.b16 %v51
  %v148 = vunpack.c.l.b16 %v52
  %v149 = vunpack.c.h.b16 %v52
  %v150 = vunpack.c.l.b16 %v53
  %v151 = vunpack.c.h.b16 %v53
  %v152 = vunpack.c.l.b16 %v54
  %v153 = vunpack.c.h.b16 %v54
  %v154 = vunpack.c.l.b16 %v55
  %v155 = vunpack.c.h.b16 %v55
  %v156 = vunpack.c.l.b16 %v56
  %v157 = vunpack.c.h.b16 %v56
  %v158 = vunpack.c.l.b16 %v57
  %v159 = vunpack.c.h.b16 %v57
  %v160 = vunpack.c.l.b16 %v58
  %v161 = vunpack.c.h.b16 %v58
  %v162 = vunpack.c.l.b16 %v59
  %v163 = vunpack.c.h.b16 %v59
  %v164 = vunpack.c.l.b16 %v60
  %v165 = vunpack.c.h.b16 %v60
  %v166 = vunpack.c.l.b16 %v61
  %v167 = vunpack.c.h.b16 %v61
  %v168 = vunpack.c.l.b16 %v62
  %v169 = vunpack.c.h.b16 %v62
  %v170 = vunpack.c.l.b16 %v63
  %v171 = vunpack.c.h.b16 %v63
  %v172 = vunpack.c.l.b16 %v64
  %v173 = vunpack.c.h.b16 %v64
  %v174 = vunpack.c.l.b16 %v65
  %v175 = vunpack.c.h.b16 %v65
  %v176 = vunpack.c.l.b16 %v66
  %v177 = vunpack.c.h.b16 %v66
  %v178 = vunpack.c.l.b16 %v67
  %v179 = vunpack.c.h.b16 %v67
  %v180 = vunpack.c.l.b16 %v68
  %v181 = vunpack.c.h.b16 %v68
  %v182 = vpack.c.b16 %v122, %v118
  %v183 = vpack.c.b16 %v123, %v119
  %v184 = vpack.c.b16 %v124, %v120
  %v185 = vpack.c.b16 %v125, %v121
  %v186 = vpack.c.b16 %v130, %v126
  %v187 = vpack.c.b16 %v131, %v127
  %v188 = vpack.c.b16 %v132, %v128
  %v189 = vpack.c.b16 %v133, %v129
  %v190 = vpack.c.b16 %v138, %v134
  %v191 = vpack.c.b16 %v139, %v135
  %v192 = vpack.c.b16 %v140, %v136
  %v193 = vpack.c.b16 %v141, %v137
  %v194 = vpack.c.b16 %v146, %v142
  %v195 = vpack.c.b16 %v147, %v143
  %v196 = vpack.c.b16 %v148, %v144
  %v197 = vpack.c.b16 %v149, %v145
  %v198 = vpack.c.b16 %v154, %v150
  %v199 = vpack.c.b16 %v155, %v151
  %v200 = vpack.c.b16 %v156, %v152
  %v201 = vpack.c.b16 %v157, %v153
  %v202 = vpack.c.b16 %v162, %v158
  %v203 = vpack.c.b16 %v163, %v159
  %v204 = vpack.c.b16 %v164, %v160
  %v205 = vpack.c.b16 %v165, %v161
  %v206 = vpack.c.b16 %v170, %v166
  %v207 = vpack.c.b16 %v171, %v167
  %v208 = vpack.c.b16 %v172, %v168
  %v209 = vpack.c.b16 %v173, %v169
  %v210 = vpack.c.b16 %v178, %v174
  %v211 = vpack.c.b16 %v179, %v175
  %v212 = vpack.c.b16 %v180, %v176
  %v213 = vpack.c.b16 %v181, %v177
  %246 = vmatprep.subr.bf16.mxu0 %v183
  %247 = vmatpush1.bf16.msra.mxu0 %v182
  %248 = vmatprep.subr.bf16.mxu0 %v187
  %249 = vmatpush1.bf16.msra.mxu0 %v186
  %250 = vmatprep.subr.bf16.mxu0 %v191
  %251 = vmatpush1.bf16.msra.mxu0 %v190
  %252 = vmatprep.subr.bf16.mxu0 %v195
  %253 = vmatpush1.bf16.msra.mxu0 %v194
  %254 = vmatprep.subr.bf16.mxu0 %v199
  %255 = vmatpush1.bf16.msra.mxu0 %v198
  %256 = vmatprep.subr.bf16.mxu0 %v203
  %257 = vmatpush1.bf16.msra.mxu0 %v202
  %258 = vmatprep.subr.bf16.mxu0 %v207
  %259 = vmatpush1.bf16.msra.mxu0 %v206
  %260 = vmatprep.subr.bf16.mxu0 %v211
  %261 = vmatpush1.bf16.msra.mxu0 %v210
  %262 = vmatprep.subr.bf16.mxu0 0
  %263 = vmatpush1.bf16.msra.mxu0 0
  %264 = vmatprep.subr.bf16.mxu0 0
  %265 = vmatpush1.bf16.msra.mxu0 0
  %266 = vmatprep.subr.bf16.mxu0 0
  %267 = vmatpush1.bf16.msra.mxu0 0
  %268 = vmatprep.subr.bf16.mxu0 0
  %269 = vmatpush1.bf16.msra.mxu0 0
  %270 = vmatprep.subr.bf16.mxu0 0
  %271 = vmatpush1.bf16.msra.mxu0 0
  %272 = vmatprep.subr.bf16.mxu0 0
  %273 = vmatpush1.bf16.msra.mxu0 0
  %274 = vmatprep.subr.bf16.mxu0 0
  %275 = vmatpush1.bf16.msra.mxu0 0
  %276 = vmatprep.subr.bf16.mxu0 0
  %277 = vmatpush1.bf16.msra.mxu0 0
  %278 = vmatprep.mubr.bf16.mxu0 0
  %279 = vmatmul.mubr.bf16.gmra.mrb[0].mxu0 %v85
  %v280 = vpop.f32.mrb[0].mxu0
  %v281 = vadd.f32 0.0, %v280
  %v282 = vpop.f32.mrb[0].mxu0
  %v283 = vadd.f32 0.0, %v282
  %v284 = vpop.f32.mrb[0].mxu0
  %v285 = vpop.f32.mrb[0].mxu0
  %286 = vdwg.mxu0
  %287 = vmatprep.subr.bf16.mxu0 %v185
  %288 = vmatpush1.bf16.msra.mxu0 %v184
  %289 = vmatprep.subr.bf16.mxu0 %v189
  %290 = vmatpush1.bf16.msra.mxu0 %v188
  %291 = vmatprep.subr.bf16.mxu0 %v193
  %292 = vmatpush1.bf16.msra.mxu0 %v192
  %293 = vmatprep.subr.bf16.mxu0 %v197
  %294 = vmatpush1.bf16.msra.mxu0 %v196
  %295 = vmatprep.subr.bf16.mxu0 %v201
  %296 = vmatpush1.bf16.msra.mxu0 %v200
  %297 = vmatprep.subr.bf16.mxu0 %v205
  %298 = vmatpush1.bf16.msra.mxu0 %v204
  %299 = vmatprep.subr.bf16.mxu0 %v209
  %300 = vmatpush1.bf16.msra.mxu0 %v208
  %301 = vmatprep.subr.bf16.mxu0 %v213
  %302 = vmatpush1.bf16.msra.mxu0 %v212
  %303 = vmatprep.subr.bf16.mxu0 0
  %304 = vmatpush1.bf16.msra.mxu0 0
  %305 = vmatprep.subr.bf16.mxu0 0
  %306 = vmatpush1.bf16.msra.mxu0 0
  %307 = vmatprep.subr.bf16.mxu0 0
  %308 = vmatpush1.bf16.msra.mxu0 0
  %309 = vmatprep.subr.bf16.mxu0 0
  %310 = vmatpush1.bf16.msra.mxu0 0
  %311 = vmatprep.subr.bf16.mxu0 0
  %312 = vmatpush1.bf16.msra.mxu0 0
  %313 = vmatprep.subr.bf16.mxu0 0
  %314 = vmatpush1.bf16.msra.mxu0 0
  %315 = vmatprep.subr.bf16.mxu0 0
  %316 = vmatpush1.bf16.msra.mxu0 0
  %317 = vmatprep.subr.bf16.mxu0 0
  %318 = vmatpush1.bf16.msra.mxu0 0
  %319 = vmatprep.mubr.bf16.mxu0 0
  %320 = vmatmul.mubr.bf16.gmra.mrb[0].mxu0 %v85
  %v321 = vpop.f32.mrb[0].mxu0
  %v322 = vadd.f32 0.0, %v321
  %v323 = vpop.f32.mrb[0].mxu0
  %v324 = vadd.f32 0.0, %v323
  %v325 = vpop.f32.mrb[0].mxu0
  %v326 = vpop.f32.mrb[0].mxu0
  %327 = vdwg.mxu0
  %v328 = vadd.f32 %v81, %v281
  %v329 = vadd.f32 %v82, %v283
  %v330 = vadd.f32 %v83, %v322
  %v331 = vadd.f32 %v84, %v324
  %v332 = vmul.f32 %v328, 0.5
  %v333 = vtanh.pop %v332
  %v334 = vmul.f32 %v333, 0.5
  %v335 = vadd.f32 %v334, 0.5
  %v336 = vmul.f32 %v329, 0.5
  %v337 = vtanh.pop %v336
  %v338 = vmul.f32 %v337, 0.5
  %v339 = vadd.f32 %v338, 0.5
  %v340 = vtanh.pop %v330
  %v341 = vmul.f32 %v331, 0.5
  %v342 = vtanh.pop %v341
  %v343 = vmul.f32 %v342, 0.5
  %v344 = vadd.f32 %v343, 0.5
  %v345 = vmul.f32 %v339, %v36
  %v346 = vmul.f32 %v335, %v340
  %v347 = vadd.f32 %v345, %v346
  %v348 = vtanh.pop %v347
  %v349 = vmul.f32 %v344, %v348
  %v350 = vstv %s74
  %vm351 = vcmp.gt.s32.totalorder %v69, %v350
  %v352 = vsel %vm351, 1, 0
  %353 = vset.pattern.permute.xlu0 0
  %354 = vperm.xlu0 %353, %v352
  %v355 = vpop.permute.xlu0 %354
  %vm356 = vcmp.eq.s32.totalorder %v355, 1
  %v357 = vsel %vm356, %v349, %v35
  %v358 = vsel %vm356, %v347, %v36
  %v359 = vsel %vm356, %v349, 0.0
  %360 = vst [vmem:[%s6] sm:$0xff] %v359
  %s361 = scalar_lea.vmem %s1, 16
  %v362 = vld [vmem:[%s361] sm:$0xff]
  %v363 = vld [vmem:[%s361 + $0x8] sm:$0xff]
  %v364 = vunpack.c.l.bf16 %v362
  %v365 = vunpack.c.h.bf16 %v362
  %v366 = vunpack.c.l.bf16 %v363
  %v367 = vunpack.c.h.bf16 %v363
  %v368 = vadd.f32 %v364, %v70
  %v369 = vadd.f32 %v365, %v71
  %v370 = vadd.f32 %v366, %v72
  %v371 = vadd.f32 %v367, %v73
  %v372 = vpack.c.bf16 %v357, %v357
  %373 = vmatprep.subr.bf16.mxu0 %v183
  %374 = vmatpush1.bf16.msra.mxu0 %v182
  %375 = vmatprep.subr.bf16.mxu0 %v187
  %376 = vmatpush1.bf16.msra.mxu0 %v186
  %377 = vmatprep.subr.bf16.mxu0 %v191
  %378 = vmatpush1.bf16.msra.mxu0 %v190
  %379 = vmatprep.subr.bf16.mxu0 %v195
  %380 = vmatpush1.bf16.msra.mxu0 %v194
  %381 = vmatprep.subr.bf16.mxu0 %v199
  %382 = vmatpush1.bf16.msra.mxu0 %v198
  %383 = vmatprep.subr.bf16.mxu0 %v203
  %384 = vmatpush1.bf16.msra.mxu0 %v202
  %385 = vmatprep.subr.bf16.mxu0 %v207
  %386 = vmatpush1.bf16.msra.mxu0 %v206
  %387 = vmatprep.subr.bf16.mxu0 %v211
  %388 = vmatpush1.bf16.msra.mxu0 %v210
  %389 = vmatprep.subr.bf16.mxu0 0
  %390 = vmatpush1.bf16.msra.mxu0 0
  %391 = vmatprep.subr.bf16.mxu0 0
  %392 = vmatpush1.bf16.msra.mxu0 0
  %393 = vmatprep.subr.bf16.mxu0 0
  %394 = vmatpush1.bf16.msra.mxu0 0
  %395 = vmatprep.subr.bf16.mxu0 0
  %396 = vmatpush1.bf16.msra.mxu0 0
  %397 = vmatprep.subr.bf16.mxu0 0
  %398 = vmatpush1.bf16.msra.mxu0 0
  %399 = vmatprep.subr.bf16.mxu0 0
  %400 = vmatpush1.bf16.msra.mxu0 0
  %401 = vmatprep.subr.bf16.mxu0 0
  %402 = vmatpush1.bf16.msra.mxu0 0
  %403 = vmatprep.subr.bf16.mxu0 0
  %404 = vmatpush1.bf16.msra.mxu0 0
  %405 = vmatprep.mubr.bf16.mxu0 0
  %406 = vmatmul.mubr.bf16.gmra.mrb[0].mxu0 %v372
  %v407 = vpop.f32.mrb[0].mxu0
  %v408 = vadd.f32 0.0, %v407
  %v409 = vpop.f32.mrb[0].mxu0
  %v410 = vadd.f32 0.0, %v409
  %v411 = vpop.f32.mrb[0].mxu0
  %v412 = vpop.f32.mrb[0].mxu0
  %413 = vdwg.mxu0
  %414 = vmatprep.subr.bf16.mxu0 %v185
  %415 = vmatpush1.bf16.msra.mxu0 %v184
  %416 = vmatprep.subr.bf16.mxu0 %v189
  %417 = vmatpush1.bf16.msra.mxu0 %v188
  %418 = vmatprep.subr.bf16.mxu0 %v193
  %419 = vmatpush1.bf16.msra.mxu0 %v192
  %420 = vmatprep.subr.bf16.mxu0 %v197
  %421 = vmatpush1.bf16.msra.mxu0 %v196
  %422 = vmatprep.subr.bf16.mxu0 %v201
  %423 = vmatpush1.bf16.msra.mxu0 %v200
  %424 = vmatprep.subr.bf16.mxu0 %v205
  %425 = vmatpush1.bf16.msra.mxu0 %v204
  %426 = vmatprep.subr.bf16.mxu0 %v209
  %427 = vmatpush1.bf16.msra.mxu0 %v208
  %428 = vmatprep.subr.bf16.mxu0 %v213
  %429 = vmatpush1.bf16.msra.mxu0 %v212
  %430 = vmatprep.subr.bf16.mxu0 0
  %431 = vmatpush1.bf16.msra.mxu0 0
  %432 = vmatprep.subr.bf16.mxu0 0
  %433 = vmatpush1.bf16.msra.mxu0 0
  %434 = vmatprep.subr.bf16.mxu0 0
  %435 = vmatpush1.bf16.msra.mxu0 0
  %436 = vmatprep.subr.bf16.mxu0 0
  %437 = vmatpush1.bf16.msra.mxu0 0
  %438 = vmatprep.subr.bf16.mxu0 0
  %439 = vmatpush1.bf16.msra.mxu0 0
  %440 = vmatprep.subr.bf16.mxu0 0
  %441 = vmatpush1.bf16.msra.mxu0 0
  %442 = vmatprep.subr.bf16.mxu0 0
  %443 = vmatpush1.bf16.msra.mxu0 0
  %444 = vmatprep.subr.bf16.mxu0 0
  %445 = vmatpush1.bf16.msra.mxu0 0
  %446 = vmatprep.mubr.bf16.mxu0 0
  %447 = vmatmul.mubr.bf16.gmra.mrb[0].mxu0 %v372
  %v448 = vpop.f32.mrb[0].mxu0
  %v449 = vadd.f32 0.0, %v448
  %v450 = vpop.f32.mrb[0].mxu0
  %v451 = vadd.f32 0.0, %v450
  %v452 = vpop.f32.mrb[0].mxu0
  %v453 = vpop.f32.mrb[0].mxu0
  %454 = vdwg.mxu0
  %v455 = vadd.f32 %v368, %v408
  %v456 = vadd.f32 %v369, %v410
  %v457 = vadd.f32 %v370, %v449
  %v458 = vadd.f32 %v371, %v451
  %v459 = vmul.f32 %v455, 0.5
  %v460 = vtanh.pop %v459
  %v461 = vmul.f32 %v460, 0.5
  %v462 = vadd.f32 %v461, 0.5
  %v463 = vmul.f32 %v456, 0.5
  %v464 = vtanh.pop %v463
  %v465 = vmul.f32 %v464, 0.5
  %v466 = vadd.f32 %v465, 0.5
  %v467 = vtanh.pop %v457
  %v468 = vmul.f32 %v458, 0.5
  %v469 = vtanh.pop %v468
  %v470 = vmul.f32 %v469, 0.5
  %v471 = vadd.f32 %v470, 0.5
  %v472 = vmul.f32 %v466, %v358
  %v473 = vmul.f32 %v462, %v467
  %v474 = vadd.f32 %v472, %v473
  %v475 = vtanh.pop %v474
  %v476 = vmul.f32 %v471, %v475
  %s477 = sadd.s32 %s74, 1
  %v478 = vstv %s477
  %vm479 = vcmp.gt.s32.totalorder %v69, %v478
  %v480 = vsel %vm479, 1, 0
  %481 = vset.pattern.permute.xlu0 0
  %482 = vperm.xlu0 %481, %v480
  %v483 = vpop.permute.xlu0 %482
  %vm484 = vcmp.eq.s32.totalorder %v483, 1
  %v485 = vsel %vm484, %v476, %v357
  %v486 = vsel %vm484, %v474, %v358
  %v487 = vsel %vm484, %v476, 0.0
  %s488 = scalar_lea.vmem %s6, 8
  %489 = vst [vmem:[%s488] sm:$0xff] %v487
  %s490 = scalar_lea.vmem %s1, 32
  %v491 = vld [vmem:[%s490] sm:$0xff]
  %v492 = vld [vmem:[%s490 + $0x8] sm:$0xff]
  %v493 = vunpack.c.l.bf16 %v491
  %v494 = vunpack.c.h.bf16 %v491
  %v495 = vunpack.c.l.bf16 %v492
  %v496 = vunpack.c.h.bf16 %v492
  %v497 = vadd.f32 %v493, %v70
  %v498 = vadd.f32 %v494, %v71
  %v499 = vadd.f32 %v495, %v72
  %v500 = vadd.f32 %v496, %v73
  %v501 = vpack.c.bf16 %v485, %v485
  %502 = vmatprep.subr.bf16.mxu0 %v183
  %503 = vmatpush1.bf16.msra.mxu0 %v182
  %504 = vmatprep.subr.bf16.mxu0 %v187
  %505 = vmatpush1.bf16.msra.mxu0 %v186
  %506 = vmatprep.subr.bf16.mxu0 %v191
  %507 = vmatpush1.bf16.msra.mxu0 %v190
  %508 = vmatprep.subr.bf16.mxu0 %v195
  %509 = vmatpush1.bf16.msra.mxu0 %v194
  %510 = vmatprep.subr.bf16.mxu0 %v199
  %511 = vmatpush1.bf16.msra.mxu0 %v198
  %512 = vmatprep.subr.bf16.mxu0 %v203
  %513 = vmatpush1.bf16.msra.mxu0 %v202
  %514 = vmatprep.subr.bf16.mxu0 %v207
  %515 = vmatpush1.bf16.msra.mxu0 %v206
  %516 = vmatprep.subr.bf16.mxu0 %v211
  %517 = vmatpush1.bf16.msra.mxu0 %v210
  %518 = vmatprep.subr.bf16.mxu0 0
  %519 = vmatpush1.bf16.msra.mxu0 0
  %520 = vmatprep.subr.bf16.mxu0 0
  %521 = vmatpush1.bf16.msra.mxu0 0
  %522 = vmatprep.subr.bf16.mxu0 0
  %523 = vmatpush1.bf16.msra.mxu0 0
  %524 = vmatprep.subr.bf16.mxu0 0
  %525 = vmatpush1.bf16.msra.mxu0 0
  %526 = vmatprep.subr.bf16.mxu0 0
  %527 = vmatpush1.bf16.msra.mxu0 0
  %528 = vmatprep.subr.bf16.mxu0 0
  %529 = vmatpush1.bf16.msra.mxu0 0
  %530 = vmatprep.subr.bf16.mxu0 0
  %531 = vmatpush1.bf16.msra.mxu0 0
  %532 = vmatprep.subr.bf16.mxu0 0
  %533 = vmatpush1.bf16.msra.mxu0 0
  %534 = vmatprep.mubr.bf16.mxu0 0
  %535 = vmatmul.mubr.bf16.gmra.mrb[0].mxu0 %v501
  %v536 = vpop.f32.mrb[0].mxu0
  %v537 = vadd.f32 0.0, %v536
  %v538 = vpop.f32.mrb[0].mxu0
  %v539 = vadd.f32 0.0, %v538
  %v540 = vpop.f32.mrb[0].mxu0
  %v541 = vpop.f32.mrb[0].mxu0
  %542 = vdwg.mxu0
  %543 = vmatprep.subr.bf16.mxu0 %v185
  %544 = vmatpush1.bf16.msra.mxu0 %v184
  %545 = vmatprep.subr.bf16.mxu0 %v189
  %546 = vmatpush1.bf16.msra.mxu0 %v188
  %547 = vmatprep.subr.bf16.mxu0 %v193
  %548 = vmatpush1.bf16.msra.mxu0 %v192
  %549 = vmatprep.subr.bf16.mxu0 %v197
  %550 = vmatpush1.bf16.msra.mxu0 %v196
  %551 = vmatprep.subr.bf16.mxu0 %v201
  %552 = vmatpush1.bf16.msra.mxu0 %v200
  %553 = vmatprep.subr.bf16.mxu0 %v205
  %554 = vmatpush1.bf16.msra.mxu0 %v204
  %555 = vmatprep.subr.bf16.mxu0 %v209
  %556 = vmatpush1.bf16.msra.mxu0 %v208
  %557 = vmatprep.subr.bf16.mxu0 %v213
  %558 = vmatpush1.bf16.msra.mxu0 %v212
  %559 = vmatprep.subr.bf16.mxu0 0
  %560 = vmatpush1.bf16.msra.mxu0 0
  %561 = vmatprep.subr.bf16.mxu0 0
  %562 = vmatpush1.bf16.msra.mxu0 0
  %563 = vmatprep.subr.bf16.mxu0 0
  %564 = vmatpush1.bf16.msra.mxu0 0
  %565 = vmatprep.subr.bf16.mxu0 0
  %566 = vmatpush1.bf16.msra.mxu0 0
  %567 = vmatprep.subr.bf16.mxu0 0
  %568 = vmatpush1.bf16.msra.mxu0 0
  %569 = vmatprep.subr.bf16.mxu0 0
  %570 = vmatpush1.bf16.msra.mxu0 0
  %571 = vmatprep.subr.bf16.mxu0 0
  %572 = vmatpush1.bf16.msra.mxu0 0
  %573 = vmatprep.subr.bf16.mxu0 0
  %574 = vmatpush1.bf16.msra.mxu0 0
  %575 = vmatprep.mubr.bf16.mxu0 0
  %576 = vmatmul.mubr.bf16.gmra.mrb[0].mxu0 %v501
  %v577 = vpop.f32.mrb[0].mxu0
  %v578 = vadd.f32 0.0, %v577
  %v579 = vpop.f32.mrb[0].mxu0
  %v580 = vadd.f32 0.0, %v579
  %v581 = vpop.f32.mrb[0].mxu0
  %v582 = vpop.f32.mrb[0].mxu0
  %583 = vdwg.mxu0
  %v584 = vadd.f32 %v497, %v537
  %v585 = vadd.f32 %v498, %v539
  %v586 = vadd.f32 %v499, %v578
  %v587 = vadd.f32 %v500, %v580
  %v588 = vmul.f32 %v584, 0.5
  %v589 = vtanh.pop %v588
  %v590 = vmul.f32 %v589, 0.5
  %v591 = vadd.f32 %v590, 0.5
  %v592 = vmul.f32 %v585, 0.5
  %v593 = vtanh.pop %v592
  %v594 = vmul.f32 %v593, 0.5
  %v595 = vadd.f32 %v594, 0.5
  %v596 = vtanh.pop %v586
  %v597 = vmul.f32 %v587, 0.5
  %v598 = vtanh.pop %v597
  %v599 = vmul.f32 %v598, 0.5
  %v600 = vadd.f32 %v599, 0.5
  %v601 = vmul.f32 %v595, %v486
  %v602 = vmul.f32 %v591, %v596
  %v603 = vadd.f32 %v601, %v602
  %v604 = vtanh.pop %v603
  %v605 = vmul.f32 %v600, %v604
  %s606 = sadd.s32 %s74, 2
  %v607 = vstv %s606
  %vm608 = vcmp.gt.s32.totalorder %v69, %v607
  %v609 = vsel %vm608, 1, 0
  %610 = vset.pattern.permute.xlu0 0
  %611 = vperm.xlu0 %610, %v609
  %v612 = vpop.permute.xlu0 %611
  %vm613 = vcmp.eq.s32.totalorder %v612, 1
  %v614 = vsel %vm613, %v605, %v485
  %v615 = vsel %vm613, %v603, %v486
  %v616 = vsel %vm613, %v605, 0.0
  %s617 = scalar_lea.vmem %s6, 16
  %618 = vst [vmem:[%s617] sm:$0xff] %v616
  %s619 = scalar_lea.vmem %s1, 48
  %v620 = vld [vmem:[%s619] sm:$0xff]
  %v621 = vld [vmem:[%s619 + $0x8] sm:$0xff]
  %v622 = vunpack.c.l.bf16 %v620
  %v623 = vunpack.c.h.bf16 %v620
  %v624 = vunpack.c.l.bf16 %v621
  %v625 = vunpack.c.h.bf16 %v621
  %v626 = vadd.f32 %v622, %v70
  %v627 = vadd.f32 %v623, %v71
  %v628 = vadd.f32 %v624, %v72
  %v629 = vadd.f32 %v625, %v73
  %v630 = vpack.c.bf16 %v614, %v614
  %631 = vmatprep.subr.bf16.mxu0 %v183
  %632 = vmatpush1.bf16.msra.mxu0 %v182
  %633 = vmatprep.subr.bf16.mxu0 %v187
  %634 = vmatpush1.bf16.msra.mxu0 %v186
  %635 = vmatprep.subr.bf16.mxu0 %v191
  %636 = vmatpush1.bf16.msra.mxu0 %v190
  %637 = vmatprep.subr.bf16.mxu0 %v195
  %638 = vmatpush1.bf16.msra.mxu0 %v194
  %639 = vmatprep.subr.bf16.mxu0 %v199
  %640 = vmatpush1.bf16.msra.mxu0 %v198
  %641 = vmatprep.subr.bf16.mxu0 %v203
  %642 = vmatpush1.bf16.msra.mxu0 %v202
  %643 = vmatprep.subr.bf16.mxu0 %v207
  %644 = vmatpush1.bf16.msra.mxu0 %v206
  %645 = vmatprep.subr.bf16.mxu0 %v211
  %646 = vmatpush1.bf16.msra.mxu0 %v210
  %647 = vmatprep.subr.bf16.mxu0 0
  %648 = vmatpush1.bf16.msra.mxu0 0
  %649 = vmatprep.subr.bf16.mxu0 0
  %650 = vmatpush1.bf16.msra.mxu0 0
  %651 = vmatprep.subr.bf16.mxu0 0
  %652 = vmatpush1.bf16.msra.mxu0 0
  %653 = vmatprep.subr.bf16.mxu0 0
  %654 = vmatpush1.bf16.msra.mxu0 0
  %655 = vmatprep.subr.bf16.mxu0 0
  %656 = vmatpush1.bf16.msra.mxu0 0
  %657 = vmatprep.subr.bf16.mxu0 0
  %658 = vmatpush1.bf16.msra.mxu0 0
  %659 = vmatprep.subr.bf16.mxu0 0
  %660 = vmatpush1.bf16.msra.mxu0 0
  %661 = vmatprep.subr.bf16.mxu0 0
  %662 = vmatpush1.bf16.msra.mxu0 0
  %663 = vmatprep.mubr.bf16.mxu0 0
  %664 = vmatmul.mubr.bf16.gmra.mrb[0].mxu0 %v630
  %v665 = vpop.f32.mrb[0].mxu0
  %v666 = vadd.f32 0.0, %v665
  %v667 = vpop.f32.mrb[0].mxu0
  %v668 = vadd.f32 0.0, %v667
  %v669 = vpop.f32.mrb[0].mxu0
  %v670 = vpop.f32.mrb[0].mxu0
  %671 = vdwg.mxu0
  %672 = vmatprep.subr.bf16.mxu0 %v185
  %673 = vmatpush1.bf16.msra.mxu0 %v184
  %674 = vmatprep.subr.bf16.mxu0 %v189
  %675 = vmatpush1.bf16.msra.mxu0 %v188
  %676 = vmatprep.subr.bf16.mxu0 %v193
  %677 = vmatpush1.bf16.msra.mxu0 %v192
  %678 = vmatprep.subr.bf16.mxu0 %v197
  %679 = vmatpush1.bf16.msra.mxu0 %v196
  %680 = vmatprep.subr.bf16.mxu0 %v201
  %681 = vmatpush1.bf16.msra.mxu0 %v200
  %682 = vmatprep.subr.bf16.mxu0 %v205
  %683 = vmatpush1.bf16.msra.mxu0 %v204
  %684 = vmatprep.subr.bf16.mxu0 %v209
  %685 = vmatpush1.bf16.msra.mxu0 %v208
  %686 = vmatprep.subr.bf16.mxu0 %v213
  %687 = vmatpush1.bf16.msra.mxu0 %v212
  %688 = vmatprep.subr.bf16.mxu0 0
  %689 = vmatpush1.bf16.msra.mxu0 0
  %690 = vmatprep.subr.bf16.mxu0 0
  %691 = vmatpush1.bf16.msra.mxu0 0
  %692 = vmatprep.subr.bf16.mxu0 0
  %693 = vmatpush1.bf16.msra.mxu0 0
  %694 = vmatprep.subr.bf16.mxu0 0
  %695 = vmatpush1.bf16.msra.mxu0 0
  %696 = vmatprep.subr.bf16.mxu0 0
  %697 = vmatpush1.bf16.msra.mxu0 0
  %698 = vmatprep.subr.bf16.mxu0 0
  %699 = vmatpush1.bf16.msra.mxu0 0
  %700 = vmatprep.subr.bf16.mxu0 0
  %701 = vmatpush1.bf16.msra.mxu0 0
  %702 = vmatprep.subr.bf16.mxu0 0
  %703 = vmatpush1.bf16.msra.mxu0 0
  %704 = vmatprep.mubr.bf16.mxu0 0
  %705 = vmatmul.mubr.bf16.gmra.mrb[0].mxu0 %v630
  %v706 = vpop.f32.mrb[0].mxu0
  %v707 = vadd.f32 0.0, %v706
  %v708 = vpop.f32.mrb[0].mxu0
  %v709 = vadd.f32 0.0, %v708
  %v710 = vpop.f32.mrb[0].mxu0
  %v711 = vpop.f32.mrb[0].mxu0
  %712 = vdwg.mxu0
  %v713 = vadd.f32 %v626, %v666
  %v714 = vadd.f32 %v627, %v668
  %v715 = vadd.f32 %v628, %v707
  %v716 = vadd.f32 %v629, %v709
  %v717 = vmul.f32 %v713, 0.5
  %v718 = vtanh.pop %v717
  %v719 = vmul.f32 %v718, 0.5
  %v720 = vadd.f32 %v719, 0.5
  %v721 = vmul.f32 %v714, 0.5
  %v722 = vtanh.pop %v721
  %v723 = vmul.f32 %v722, 0.5
  %v724 = vadd.f32 %v723, 0.5
  %v725 = vtanh.pop %v715
  %v726 = vmul.f32 %v716, 0.5
  %v727 = vtanh.pop %v726
  %v728 = vmul.f32 %v727, 0.5
  %v729 = vadd.f32 %v728, 0.5
  %v730 = vmul.f32 %v724, %v615
  %v731 = vmul.f32 %v720, %v725
  %v732 = vadd.f32 %v730, %v731
  %v733 = vtanh.pop %v732
  %v734 = vmul.f32 %v729, %v733
  %s735 = sadd.s32 %s74, 3
  %v736 = vstv %s735
  %vm737 = vcmp.gt.s32.totalorder %v69, %v736
  %v738 = vsel %vm737, 1, 0
  %739 = vset.pattern.permute.xlu0 0
  %740 = vperm.xlu0 %739, %v738
  %v741 = vpop.permute.xlu0 %740
  %vm742 = vcmp.eq.s32.totalorder %v741, 1
  %v743 = vsel %vm742, %v734, %v614
  %v744 = vsel %vm742, %v732, %v615
  %v745 = vsel %vm742, %v734, 0.0
  %s746 = scalar_lea.vmem %s6, 24
  %747 = vst [vmem:[%s746] sm:$0xff] %v745
  %s748 = scalar_lea.vmem %s1, 64
  %v749 = vld [vmem:[%s748] sm:$0xff]
  %v750 = vld [vmem:[%s748 + $0x8] sm:$0xff]
  %v751 = vunpack.c.l.bf16 %v749
  %v752 = vunpack.c.h.bf16 %v749
  %v753 = vunpack.c.l.bf16 %v750
  %v754 = vunpack.c.h.bf16 %v750
  %v755 = vadd.f32 %v751, %v70
  %v756 = vadd.f32 %v752, %v71
  %v757 = vadd.f32 %v753, %v72
  %v758 = vadd.f32 %v754, %v73
  %v759 = vpack.c.bf16 %v743, %v743
  %760 = vmatprep.subr.bf16.mxu0 %v183
  %761 = vmatpush1.bf16.msra.mxu0 %v182
  %762 = vmatprep.subr.bf16.mxu0 %v187
  %763 = vmatpush1.bf16.msra.mxu0 %v186
  %764 = vmatprep.subr.bf16.mxu0 %v191
  %765 = vmatpush1.bf16.msra.mxu0 %v190
  %766 = vmatprep.subr.bf16.mxu0 %v195
  %767 = vmatpush1.bf16.msra.mxu0 %v194
  %768 = vmatprep.subr.bf16.mxu0 %v199
  %769 = vmatpush1.bf16.msra.mxu0 %v198
  %770 = vmatprep.subr.bf16.mxu0 %v203
  %771 = vmatpush1.bf16.msra.mxu0 %v202
  %772 = vmatprep.subr.bf16.mxu0 %v207
  %773 = vmatpush1.bf16.msra.mxu0 %v206
  %774 = vmatprep.subr.bf16.mxu0 %v211
  %775 = vmatpush1.bf16.msra.mxu0 %v210
  %776 = vmatprep.subr.bf16.mxu0 0
  %777 = vmatpush1.bf16.msra.mxu0 0
  %778 = vmatprep.subr.bf16.mxu0 0
  %779 = vmatpush1.bf16.msra.mxu0 0
  %780 = vmatprep.subr.bf16.mxu0 0
  %781 = vmatpush1.bf16.msra.mxu0 0
  %782 = vmatprep.subr.bf16.mxu0 0
  %783 = vmatpush1.bf16.msra.mxu0 0
  %784 = vmatprep.subr.bf16.mxu0 0
  %785 = vmatpush1.bf16.msra.mxu0 0
  %786 = vmatprep.subr.bf16.mxu0 0
  %787 = vmatpush1.bf16.msra.mxu0 0
  %788 = vmatprep.subr.bf16.mxu0 0
  %789 = vmatpush1.bf16.msra.mxu0 0
  %790 = vmatprep.subr.bf16.mxu0 0
  %791 = vmatpush1.bf16.msra.mxu0 0
  %792 = vmatprep.mubr.bf16.mxu0 0
  %793 = vmatmul.mubr.bf16.gmra.mrb[0].mxu0 %v759
  %v794 = vpop.f32.mrb[0].mxu0
  %v795 = vadd.f32 0.0, %v794
  %v796 = vpop.f32.mrb[0].mxu0
  %v797 = vadd.f32 0.0, %v796
  %v798 = vpop.f32.mrb[0].mxu0
  %v799 = vpop.f32.mrb[0].mxu0
  %800 = vdwg.mxu0
  %801 = vmatprep.subr.bf16.mxu0 %v185
  %802 = vmatpush1.bf16.msra.mxu0 %v184
  %803 = vmatprep.subr.bf16.mxu0 %v189
  %804 = vmatpush1.bf16.msra.mxu0 %v188
  %805 = vmatprep.subr.bf16.mxu0 %v193
  %806 = vmatpush1.bf16.msra.mxu0 %v192
  %807 = vmatprep.subr.bf16.mxu0 %v197
  %808 = vmatpush1.bf16.msra.mxu0 %v196
  %809 = vmatprep.subr.bf16.mxu0 %v201
  %810 = vmatpush1.bf16.msra.mxu0 %v200
  %811 = vmatprep.subr.bf16.mxu0 %v205
  %812 = vmatpush1.bf16.msra.mxu0 %v204
  %813 = vmatprep.subr.bf16.mxu0 %v209
  %814 = vmatpush1.bf16.msra.mxu0 %v208
  %815 = vmatprep.subr.bf16.mxu0 %v213
  %816 = vmatpush1.bf16.msra.mxu0 %v212
  %817 = vmatprep.subr.bf16.mxu0 0
  %818 = vmatpush1.bf16.msra.mxu0 0
  %819 = vmatprep.subr.bf16.mxu0 0
  %820 = vmatpush1.bf16.msra.mxu0 0
  %821 = vmatprep.subr.bf16.mxu0 0
  %822 = vmatpush1.bf16.msra.mxu0 0
  %823 = vmatprep.subr.bf16.mxu0 0
  %824 = vmatpush1.bf16.msra.mxu0 0
  %825 = vmatprep.subr.bf16.mxu0 0
  %826 = vmatpush1.bf16.msra.mxu0 0
  %827 = vmatprep.subr.bf16.mxu0 0
  %828 = vmatpush1.bf16.msra.mxu0 0
  %829 = vmatprep.subr.bf16.mxu0 0
  %830 = vmatpush1.bf16.msra.mxu0 0
  %831 = vmatprep.subr.bf16.mxu0 0
  %832 = vmatpush1.bf16.msra.mxu0 0
  %833 = vmatprep.mubr.bf16.mxu0 0
  %834 = vmatmul.mubr.bf16.gmra.mrb[0].mxu0 %v759
  %v835 = vpop.f32.mrb[0].mxu0
  %v836 = vadd.f32 0.0, %v835
  %v837 = vpop.f32.mrb[0].mxu0
  %v838 = vadd.f32 0.0, %v837
  %v839 = vpop.f32.mrb[0].mxu0
  %v840 = vpop.f32.mrb[0].mxu0
  %841 = vdwg.mxu0
  %v842 = vadd.f32 %v755, %v795
  %v843 = vadd.f32 %v756, %v797
  %v844 = vadd.f32 %v757, %v836
  %v845 = vadd.f32 %v758, %v838
  %v846 = vmul.f32 %v842, 0.5
  %v847 = vtanh.pop %v846
  %v848 = vmul.f32 %v847, 0.5
  %v849 = vadd.f32 %v848, 0.5
  %v850 = vmul.f32 %v843, 0.5
  %v851 = vtanh.pop %v850
  %v852 = vmul.f32 %v851, 0.5
  %v853 = vadd.f32 %v852, 0.5
  %v854 = vtanh.pop %v844
  %v855 = vmul.f32 %v845, 0.5
  %v856 = vtanh.pop %v855
  %v857 = vmul.f32 %v856, 0.5
  %v858 = vadd.f32 %v857, 0.5
  %v859 = vmul.f32 %v853, %v744
  %v860 = vmul.f32 %v849, %v854
  %v861 = vadd.f32 %v859, %v860
  %v862 = vtanh.pop %v861
  %v863 = vmul.f32 %v858, %v862
  %s864 = sadd.s32 %s74, 4
  %v865 = vstv %s864
  %vm866 = vcmp.gt.s32.totalorder %v69, %v865
  %v867 = vsel %vm866, 1, 0
  %868 = vset.pattern.permute.xlu0 0
  %869 = vperm.xlu0 %868, %v867
  %v870 = vpop.permute.xlu0 %869
  %vm871 = vcmp.eq.s32.totalorder %v870, 1
  %v872 = vsel %vm871, %v863, %v743
  %v873 = vsel %vm871, %v861, %v744
  %v874 = vsel %vm871, %v863, 0.0
  %s875 = scalar_lea.vmem %s6, 32
  %876 = vst [vmem:[%s875] sm:$0xff] %v874
  %s877 = scalar_lea.vmem %s1, 80
  %v878 = vld [vmem:[%s877] sm:$0xff]
  %v879 = vld [vmem:[%s877 + $0x8] sm:$0xff]
  %v880 = vunpack.c.l.bf16 %v878
  %v881 = vunpack.c.h.bf16 %v878
  %v882 = vunpack.c.l.bf16 %v879
  %v883 = vunpack.c.h.bf16 %v879
  %v884 = vadd.f32 %v880, %v70
  %v885 = vadd.f32 %v881, %v71
  %v886 = vadd.f32 %v882, %v72
  %v887 = vadd.f32 %v883, %v73
  %v888 = vpack.c.bf16 %v872, %v872
  %889 = vmatprep.subr.bf16.mxu0 %v183
  %890 = vmatpush1.bf16.msra.mxu0 %v182
  %891 = vmatprep.subr.bf16.mxu0 %v187
  %892 = vmatpush1.bf16.msra.mxu0 %v186
  %893 = vmatprep.subr.bf16.mxu0 %v191
  %894 = vmatpush1.bf16.msra.mxu0 %v190
  %895 = vmatprep.subr.bf16.mxu0 %v195
  %896 = vmatpush1.bf16.msra.mxu0 %v194
  %897 = vmatprep.subr.bf16.mxu0 %v199
  %898 = vmatpush1.bf16.msra.mxu0 %v198
  %899 = vmatprep.subr.bf16.mxu0 %v203
  %900 = vmatpush1.bf16.msra.mxu0 %v202
  %901 = vmatprep.subr.bf16.mxu0 %v207
  %902 = vmatpush1.bf16.msra.mxu0 %v206
  %903 = vmatprep.subr.bf16.mxu0 %v211
  %904 = vmatpush1.bf16.msra.mxu0 %v210
  %905 = vmatprep.subr.bf16.mxu0 0
  %906 = vmatpush1.bf16.msra.mxu0 0
  %907 = vmatprep.subr.bf16.mxu0 0
  %908 = vmatpush1.bf16.msra.mxu0 0
  %909 = vmatprep.subr.bf16.mxu0 0
  %910 = vmatpush1.bf16.msra.mxu0 0
  %911 = vmatprep.subr.bf16.mxu0 0
  %912 = vmatpush1.bf16.msra.mxu0 0
  %913 = vmatprep.subr.bf16.mxu0 0
  %914 = vmatpush1.bf16.msra.mxu0 0
  %915 = vmatprep.subr.bf16.mxu0 0
  %916 = vmatpush1.bf16.msra.mxu0 0
  %917 = vmatprep.subr.bf16.mxu0 0
  %918 = vmatpush1.bf16.msra.mxu0 0
  %919 = vmatprep.subr.bf16.mxu0 0
  %920 = vmatpush1.bf16.msra.mxu0 0
  %921 = vmatprep.mubr.bf16.mxu0 0
  %922 = vmatmul.mubr.bf16.gmra.mrb[0].mxu0 %v888
  %v923 = vpop.f32.mrb[0].mxu0
  %v924 = vadd.f32 0.0, %v923
  %v925 = vpop.f32.mrb[0].mxu0
  %v926 = vadd.f32 0.0, %v925
  %v927 = vpop.f32.mrb[0].mxu0
  %v928 = vpop.f32.mrb[0].mxu0
  %929 = vdwg.mxu0
  %930 = vmatprep.subr.bf16.mxu0 %v185
  %931 = vmatpush1.bf16.msra.mxu0 %v184
  %932 = vmatprep.subr.bf16.mxu0 %v189
  %933 = vmatpush1.bf16.msra.mxu0 %v188
  %934 = vmatprep.subr.bf16.mxu0 %v193
  %935 = vmatpush1.bf16.msra.mxu0 %v192
  %936 = vmatprep.subr.bf16.mxu0 %v197
  %937 = vmatpush1.bf16.msra.mxu0 %v196
  %938 = vmatprep.subr.bf16.mxu0 %v201
  %939 = vmatpush1.bf16.msra.mxu0 %v200
  %940 = vmatprep.subr.bf16.mxu0 %v205
  %941 = vmatpush1.bf16.msra.mxu0 %v204
  %942 = vmatprep.subr.bf16.mxu0 %v209
  %943 = vmatpush1.bf16.msra.mxu0 %v208
  %944 = vmatprep.subr.bf16.mxu0 %v213
  %945 = vmatpush1.bf16.msra.mxu0 %v212
  %946 = vmatprep.subr.bf16.mxu0 0
  %947 = vmatpush1.bf16.msra.mxu0 0
  %948 = vmatprep.subr.bf16.mxu0 0
  %949 = vmatpush1.bf16.msra.mxu0 0
  %950 = vmatprep.subr.bf16.mxu0 0
  %951 = vmatpush1.bf16.msra.mxu0 0
  %952 = vmatprep.subr.bf16.mxu0 0
  %953 = vmatpush1.bf16.msra.mxu0 0
  %954 = vmatprep.subr.bf16.mxu0 0
  %955 = vmatpush1.bf16.msra.mxu0 0
  %956 = vmatprep.subr.bf16.mxu0 0
  %957 = vmatpush1.bf16.msra.mxu0 0
  %958 = vmatprep.subr.bf16.mxu0 0
  %959 = vmatpush1.bf16.msra.mxu0 0
  %960 = vmatprep.subr.bf16.mxu0 0
  %961 = vmatpush1.bf16.msra.mxu0 0
  %962 = vmatprep.mubr.bf16.mxu0 0
  %963 = vmatmul.mubr.bf16.gmra.mrb[0].mxu0 %v888
  %v964 = vpop.f32.mrb[0].mxu0
  %v965 = vadd.f32 0.0, %v964
  %v966 = vpop.f32.mrb[0].mxu0
  %v967 = vadd.f32 0.0, %v966
  %v968 = vpop.f32.mrb[0].mxu0
  %v969 = vpop.f32.mrb[0].mxu0
  %970 = vdwg.mxu0
  %v971 = vadd.f32 %v884, %v924
  %v972 = vadd.f32 %v885, %v926
  %v973 = vadd.f32 %v886, %v965
  %v974 = vadd.f32 %v887, %v967
  %v975 = vmul.f32 %v971, 0.5
  %v976 = vtanh.pop %v975
  %v977 = vmul.f32 %v976, 0.5
  %v978 = vadd.f32 %v977, 0.5
  %v979 = vmul.f32 %v972, 0.5
  %v980 = vtanh.pop %v979
  %v981 = vmul.f32 %v980, 0.5
  %v982 = vadd.f32 %v981, 0.5
  %v983 = vtanh.pop %v973
  %v984 = vmul.f32 %v974, 0.5
  %v985 = vtanh.pop %v984
  %v986 = vmul.f32 %v985, 0.5
  %v987 = vadd.f32 %v986, 0.5
  %v988 = vmul.f32 %v982, %v873
  %v989 = vmul.f32 %v978, %v983
  %v990 = vadd.f32 %v988, %v989
  %v991 = vtanh.pop %v990
  %v992 = vmul.f32 %v987, %v991
  %s993 = sadd.s32 %s74, 5
  %v994 = vstv %s993
  %vm995 = vcmp.gt.s32.totalorder %v69, %v994
  %v996 = vsel %vm995, 1, 0
  %997 = vset.pattern.permute.xlu0 0
  %998 = vperm.xlu0 %997, %v996
  %v999 = vpop.permute.xlu0 %998
  %vm1000 = vcmp.eq.s32.totalorder %v999, 1
  %v1001 = vsel %vm1000, %v992, %v872
  %v1002 = vsel %vm1000, %v990, %v873
  %v1003 = vsel %vm1000, %v992, 0.0
  %s1004 = scalar_lea.vmem %s6, 40
  %1005 = vst [vmem:[%s1004] sm:$0xff] %v1003
  %s1006 = scalar_lea.vmem %s1, 96
  %v1007 = vld [vmem:[%s1006] sm:$0xff]
  %v1008 = vld [vmem:[%s1006 + $0x8] sm:$0xff]
  %v1009 = vunpack.c.l.bf16 %v1007
  %v1010 = vunpack.c.h.bf16 %v1007
  %v1011 = vunpack.c.l.bf16 %v1008
  %v1012 = vunpack.c.h.bf16 %v1008
  %v1013 = vadd.f32 %v1009, %v70
  %v1014 = vadd.f32 %v1010, %v71
  %v1015 = vadd.f32 %v1011, %v72
  %v1016 = vadd.f32 %v1012, %v73
  %v1017 = vpack.c.bf16 %v1001, %v1001
  %1018 = vmatprep.subr.bf16.mxu0 %v183
  %1019 = vmatpush1.bf16.msra.mxu0 %v182
  %1020 = vmatprep.subr.bf16.mxu0 %v187
  %1021 = vmatpush1.bf16.msra.mxu0 %v186
  %1022 = vmatprep.subr.bf16.mxu0 %v191
  %1023 = vmatpush1.bf16.msra.mxu0 %v190
  %1024 = vmatprep.subr.bf16.mxu0 %v195
  %1025 = vmatpush1.bf16.msra.mxu0 %v194
  %1026 = vmatprep.subr.bf16.mxu0 %v199
  %1027 = vmatpush1.bf16.msra.mxu0 %v198
  %1028 = vmatprep.subr.bf16.mxu0 %v203
  %1029 = vmatpush1.bf16.msra.mxu0 %v202
  %1030 = vmatprep.subr.bf16.mxu0 %v207
  %1031 = vmatpush1.bf16.msra.mxu0 %v206
  %1032 = vmatprep.subr.bf16.mxu0 %v211
  %1033 = vmatpush1.bf16.msra.mxu0 %v210
  %1034 = vmatprep.subr.bf16.mxu0 0
  %1035 = vmatpush1.bf16.msra.mxu0 0
  %1036 = vmatprep.subr.bf16.mxu0 0
  %1037 = vmatpush1.bf16.msra.mxu0 0
  %1038 = vmatprep.subr.bf16.mxu0 0
  %1039 = vmatpush1.bf16.msra.mxu0 0
  %1040 = vmatprep.subr.bf16.mxu0 0
  %1041 = vmatpush1.bf16.msra.mxu0 0
  %1042 = vmatprep.subr.bf16.mxu0 0
  %1043 = vmatpush1.bf16.msra.mxu0 0
  %1044 = vmatprep.subr.bf16.mxu0 0
  %1045 = vmatpush1.bf16.msra.mxu0 0
  %1046 = vmatprep.subr.bf16.mxu0 0
  %1047 = vmatpush1.bf16.msra.mxu0 0
  %1048 = vmatprep.subr.bf16.mxu0 0
  %1049 = vmatpush1.bf16.msra.mxu0 0
  %1050 = vmatprep.mubr.bf16.mxu0 0
  %1051 = vmatmul.mubr.bf16.gmra.mrb[0].mxu0 %v1017
  %v1052 = vpop.f32.mrb[0].mxu0
  %v1053 = vadd.f32 0.0, %v1052
  %v1054 = vpop.f32.mrb[0].mxu0
  %v1055 = vadd.f32 0.0, %v1054
  %v1056 = vpop.f32.mrb[0].mxu0
  %v1057 = vpop.f32.mrb[0].mxu0
  %1058 = vdwg.mxu0
  %1059 = vmatprep.subr.bf16.mxu0 %v185
  %1060 = vmatpush1.bf16.msra.mxu0 %v184
  %1061 = vmatprep.subr.bf16.mxu0 %v189
  %1062 = vmatpush1.bf16.msra.mxu0 %v188
  %1063 = vmatprep.subr.bf16.mxu0 %v193
  %1064 = vmatpush1.bf16.msra.mxu0 %v192
  %1065 = vmatprep.subr.bf16.mxu0 %v197
  %1066 = vmatpush1.bf16.msra.mxu0 %v196
  %1067 = vmatprep.subr.bf16.mxu0 %v201
  %1068 = vmatpush1.bf16.msra.mxu0 %v200
  %1069 = vmatprep.subr.bf16.mxu0 %v205
  %1070 = vmatpush1.bf16.msra.mxu0 %v204
  %1071 = vmatprep.subr.bf16.mxu0 %v209
  %1072 = vmatpush1.bf16.msra.mxu0 %v208
  %1073 = vmatprep.subr.bf16.mxu0 %v213
  %1074 = vmatpush1.bf16.msra.mxu0 %v212
  %1075 = vmatprep.subr.bf16.mxu0 0
  %1076 = vmatpush1.bf16.msra.mxu0 0
  %1077 = vmatprep.subr.bf16.mxu0 0
  %1078 = vmatpush1.bf16.msra.mxu0 0
  %1079 = vmatprep.subr.bf16.mxu0 0
  %1080 = vmatpush1.bf16.msra.mxu0 0
  %1081 = vmatprep.subr.bf16.mxu0 0
  %1082 = vmatpush1.bf16.msra.mxu0 0
  %1083 = vmatprep.subr.bf16.mxu0 0
  %1084 = vmatpush1.bf16.msra.mxu0 0
  %1085 = vmatprep.subr.bf16.mxu0 0
  %1086 = vmatpush1.bf16.msra.mxu0 0
  %1087 = vmatprep.subr.bf16.mxu0 0
  %1088 = vmatpush1.bf16.msra.mxu0 0
  %1089 = vmatprep.subr.bf16.mxu0 0
  %1090 = vmatpush1.bf16.msra.mxu0 0
  %1091 = vmatprep.mubr.bf16.mxu0 0
  %1092 = vmatmul.mubr.bf16.gmra.mrb[0].mxu0 %v1017
  %v1093 = vpop.f32.mrb[0].mxu0
  %v1094 = vadd.f32 0.0, %v1093
  %v1095 = vpop.f32.mrb[0].mxu0
  %v1096 = vadd.f32 0.0, %v1095
  %v1097 = vpop.f32.mrb[0].mxu0
  %v1098 = vpop.f32.mrb[0].mxu0
  %1099 = vdwg.mxu0
  %v1100 = vadd.f32 %v1013, %v1053
  %v1101 = vadd.f32 %v1014, %v1055
  %v1102 = vadd.f32 %v1015, %v1094
  %v1103 = vadd.f32 %v1016, %v1096
  %v1104 = vmul.f32 %v1100, 0.5
  %v1105 = vtanh.pop %v1104
  %v1106 = vmul.f32 %v1105, 0.5
  %v1107 = vadd.f32 %v1106, 0.5
  %v1108 = vmul.f32 %v1101, 0.5
  %v1109 = vtanh.pop %v1108
  %v1110 = vmul.f32 %v1109, 0.5
  %v1111 = vadd.f32 %v1110, 0.5
  %v1112 = vtanh.pop %v1102
  %v1113 = vmul.f32 %v1103, 0.5
  %v1114 = vtanh.pop %v1113
  %v1115 = vmul.f32 %v1114, 0.5
  %v1116 = vadd.f32 %v1115, 0.5
  %v1117 = vmul.f32 %v1111, %v1002
  %v1118 = vmul.f32 %v1107, %v1112
  %v1119 = vadd.f32 %v1117, %v1118
  %v1120 = vtanh.pop %v1119
  %v1121 = vmul.f32 %v1116, %v1120
  %s1122 = sadd.s32 %s74, 6
  %v1123 = vstv %s1122
  %vm1124 = vcmp.gt.s32.totalorder %v69, %v1123
  %v1125 = vsel %vm1124, 1, 0
  %1126 = vset.pattern.permute.xlu0 0
  %1127 = vperm.xlu0 %1126, %v1125
  %v1128 = vpop.permute.xlu0 %1127
  %vm1129 = vcmp.eq.s32.totalorder %v1128, 1
  %v1130 = vsel %vm1129, %v1121, %v1001
  %v1131 = vsel %vm1129, %v1119, %v1002
  %v1132 = vsel %vm1129, %v1121, 0.0
  %s1133 = scalar_lea.vmem %s6, 48
  %1134 = vst [vmem:[%s1133] sm:$0xff] %v1132
  %s1135 = scalar_lea.vmem %s1, 112
  %v1136 = vld [vmem:[%s1135] sm:$0xff]
  %v1137 = vld [vmem:[%s1135 + $0x8] sm:$0xff]
  %v1138 = vunpack.c.l.bf16 %v1136
  %v1139 = vunpack.c.h.bf16 %v1136
  %v1140 = vunpack.c.l.bf16 %v1137
  %v1141 = vunpack.c.h.bf16 %v1137
  %v1142 = vadd.f32 %v1138, %v70
  %v1143 = vadd.f32 %v1139, %v71
  %v1144 = vadd.f32 %v1140, %v72
  %v1145 = vadd.f32 %v1141, %v73
  %v1146 = vpack.c.bf16 %v1130, %v1130
  %1147 = vmatprep.subr.bf16.mxu0 %v183
  %1148 = vmatpush1.bf16.msra.mxu0 %v182
  %1149 = vmatprep.subr.bf16.mxu0 %v187
  %1150 = vmatpush1.bf16.msra.mxu0 %v186
  %1151 = vmatprep.subr.bf16.mxu0 %v191
  %1152 = vmatpush1.bf16.msra.mxu0 %v190
  %1153 = vmatprep.subr.bf16.mxu0 %v195
  %1154 = vmatpush1.bf16.msra.mxu0 %v194
  %1155 = vmatprep.subr.bf16.mxu0 %v199
  %1156 = vmatpush1.bf16.msra.mxu0 %v198
  %1157 = vmatprep.subr.bf16.mxu0 %v203
  %1158 = vmatpush1.bf16.msra.mxu0 %v202
  %1159 = vmatprep.subr.bf16.mxu0 %v207
  %1160 = vmatpush1.bf16.msra.mxu0 %v206
  %1161 = vmatprep.subr.bf16.mxu0 %v211
  %1162 = vmatpush1.bf16.msra.mxu0 %v210
  %1163 = vmatprep.subr.bf16.mxu0 0
  %1164 = vmatpush1.bf16.msra.mxu0 0
  %1165 = vmatprep.subr.bf16.mxu0 0
  %1166 = vmatpush1.bf16.msra.mxu0 0
  %1167 = vmatprep.subr.bf16.mxu0 0
  %1168 = vmatpush1.bf16.msra.mxu0 0
  %1169 = vmatprep.subr.bf16.mxu0 0
  %1170 = vmatpush1.bf16.msra.mxu0 0
  %1171 = vmatprep.subr.bf16.mxu0 0
  %1172 = vmatpush1.bf16.msra.mxu0 0
  %1173 = vmatprep.subr.bf16.mxu0 0
  %1174 = vmatpush1.bf16.msra.mxu0 0
  %1175 = vmatprep.subr.bf16.mxu0 0
  %1176 = vmatpush1.bf16.msra.mxu0 0
  %1177 = vmatprep.subr.bf16.mxu0 0
  %1178 = vmatpush1.bf16.msra.mxu0 0
  %1179 = vmatprep.mubr.bf16.mxu0 0
  %1180 = vmatmul.mubr.bf16.gmra.mrb[0].mxu0 %v1146
  %v1181 = vpop.f32.mrb[0].mxu0
  %v1182 = vadd.f32 0.0, %v1181
  %v1183 = vpop.f32.mrb[0].mxu0
  %v1184 = vadd.f32 0.0, %v1183
  %v1185 = vpop.f32.mrb[0].mxu0
  %v1186 = vpop.f32.mrb[0].mxu0
  %1187 = vdwg.mxu0
  %1188 = vmatprep.subr.bf16.mxu0 %v185
  %1189 = vmatpush1.bf16.msra.mxu0 %v184
  %1190 = vmatprep.subr.bf16.mxu0 %v189
  %1191 = vmatpush1.bf16.msra.mxu0 %v188
  %1192 = vmatprep.subr.bf16.mxu0 %v193
  %1193 = vmatpush1.bf16.msra.mxu0 %v192
  %1194 = vmatprep.subr.bf16.mxu0 %v197
  %1195 = vmatpush1.bf16.msra.mxu0 %v196
  %1196 = vmatprep.subr.bf16.mxu0 %v201
  %1197 = vmatpush1.bf16.msra.mxu0 %v200
  %1198 = vmatprep.subr.bf16.mxu0 %v205
  %1199 = vmatpush1.bf16.msra.mxu0 %v204
  %1200 = vmatprep.subr.bf16.mxu0 %v209
  %1201 = vmatpush1.bf16.msra.mxu0 %v208
  %1202 = vmatprep.subr.bf16.mxu0 %v213
  %1203 = vmatpush1.bf16.msra.mxu0 %v212
  %1204 = vmatprep.subr.bf16.mxu0 0
  %1205 = vmatpush1.bf16.msra.mxu0 0
  %1206 = vmatprep.subr.bf16.mxu0 0
  %1207 = vmatpush1.bf16.msra.mxu0 0
  %1208 = vmatprep.subr.bf16.mxu0 0
  %1209 = vmatpush1.bf16.msra.mxu0 0
  %1210 = vmatprep.subr.bf16.mxu0 0
  %1211 = vmatpush1.bf16.msra.mxu0 0
  %1212 = vmatprep.subr.bf16.mxu0 0
  %1213 = vmatpush1.bf16.msra.mxu0 0
  %1214 = vmatprep.subr.bf16.mxu0 0
  %1215 = vmatpush1.bf16.msra.mxu0 0
  %1216 = vmatprep.subr.bf16.mxu0 0
  %1217 = vmatpush1.bf16.msra.mxu0 0
  %1218 = vmatprep.subr.bf16.mxu0 0
  %1219 = vmatpush1.bf16.msra.mxu0 0
  %1220 = vmatprep.mubr.bf16.mxu0 0
  %1221 = vmatmul.mubr.bf16.gmra.mrb[0].mxu0 %v1146
  %v1222 = vpop.f32.mrb[0].mxu0
  %v1223 = vadd.f32 0.0, %v1222
  %v1224 = vpop.f32.mrb[0].mxu0
  %v1225 = vadd.f32 0.0, %v1224
  %v1226 = vpop.f32.mrb[0].mxu0
  %v1227 = vpop.f32.mrb[0].mxu0
  %1228 = vdwg.mxu0
  %v1229 = vadd.f32 %v1142, %v1182
  %v1230 = vadd.f32 %v1143, %v1184
  %v1231 = vadd.f32 %v1144, %v1223
  %v1232 = vadd.f32 %v1145, %v1225
  %v1233 = vmul.f32 %v1229, 0.5
  %v1234 = vtanh.pop %v1233
  %v1235 = vmul.f32 %v1234, 0.5
  %v1236 = vadd.f32 %v1235, 0.5
  %v1237 = vmul.f32 %v1230, 0.5
  %v1238 = vtanh.pop %v1237
  %v1239 = vmul.f32 %v1238, 0.5
  %v1240 = vadd.f32 %v1239, 0.5
  %v1241 = vtanh.pop %v1231
  %v1242 = vmul.f32 %v1232, 0.5
  %v1243 = vtanh.pop %v1242
  %v1244 = vmul.f32 %v1243, 0.5
  %v1245 = vadd.f32 %v1244, 0.5
  %v1246 = vmul.f32 %v1240, %v1131
  %v1247 = vmul.f32 %v1236, %v1241
  %v1248 = vadd.f32 %v1246, %v1247
  %v1249 = vtanh.pop %v1248
  %v1250 = vmul.f32 %v1245, %v1249
  %s1251 = sadd.s32 %s74, 7
  %v1252 = vstv %s1251
  %vm1253 = vcmp.gt.s32.totalorder %v69, %v1252
  %v1254 = vsel %vm1253, 1, 0
  %1255 = vset.pattern.permute.xlu0 0
  %1256 = vperm.xlu0 %1255, %v1254
  %v1257 = vpop.permute.xlu0 %1256
  %vm1258 = vcmp.eq.s32.totalorder %v1257, 1
  %v1259 = vsel %vm1258, %v1250, %v1130
  %v1260 = vsel %vm1258, %v1248, %v1131
  %v1261 = vsel %vm1258, %v1250, 0.0
  %s1262 = scalar_lea.vmem %s6, 56
  %1263 = vst [vmem:[%s1262] sm:$0xff] %v1261
  %1264 = vst [vmem:[%s7] sm:$0xff] %v1259
  %1265 = vst [vmem:[%s8] sm:$0xff] %v1260
  // Predicated region
  $region30: #{seq2seq_forward.14} parent=0 // pred_check
    _
  $region31: #{seq2seq_forward.14} parent=0 // pred_check_branch
    %1267 = sbr.rel (0) target = $region33
  $region32: #{seq2seq_forward.14} parent=0 // pred_region
    _
  $region33: #{seq2seq_forward.14} parent=0 // pred_fallthru
    _
  // Predicated region
  $region34: #{seq2seq_forward.14} parent=0 // pred_check
    _
  $region35: #{seq2seq_forward.14} parent=0 // pred_check_branch
    %1269 = sbr.rel (0) target = $region37
  $region36: #{seq2seq_forward.14} parent=0 // pred_region
    _
  $region37: #{seq2seq_forward.14} parent=0 // pred_fallthru
    _
  // Predicated region
  $region38: #{seq2seq_forward.14} parent=0 // pred_check
    _
  $region39: #{seq2seq_forward.14} parent=0 // pred_check_branch
    %1271 = sbr.rel (0) target = $region41
  $region40: #{seq2seq_forward.14} parent=0 // pred_region
    _
  $region41: #{seq2seq_forward.14} parent=0 // pred_fallthru
    _
  // Predicated region
  $region42: #{seq2seq_forward.14} parent=0 // pred_check
    _
  $region43: #{seq2seq_forward.14} parent=0 // pred_check_branch
    %1273 = sbr.rel (0) target = $region45
  $region44: #{seq2seq_forward.14} parent=0 // pred_region
    _
  $region45: #{seq2seq_forward.14} parent=0 // pred_fallthru
    _
  // Predicated region
  $region46: #{seq2seq_forward.14} parent=0 // pred_check
    _
  $region47: #{seq2seq_forward.14} parent=0 // pred_check_branch
    %1275 = sbr.rel (0) target = $region49
  $region48: #{seq2seq_forward.14} parent=0 // pred_region
    _
  $region49: #{seq2seq_forward.14} parent=0 // pred_fallthru
    _
  // Predicated region
  $region50: #{seq2seq_forward.14} parent=0 // pred_check
    _
  $region51: #{seq2seq_forward.14} parent=0 // pred_check_branch
    %1277 = sbr.rel (0) target = $region53
  $region52: #{seq2seq_forward.14} parent=0 // pred_region
    _
  $region53: #{seq2seq_forward.14} parent=0 // pred_fallthru
    _

</llo_original>
